<compile_context>
chip_gen: v5e
topology: v5e:2x2
jax: 0.10.0
libtpu: 0.0.40
codegen_flags: <defaults>
</compile_context>

<pallas_src>
import math

import jax
import jax.numpy as jnp
from jax.experimental import pallas as pl
from jax.experimental.pallas import tpu as pltpu

# ----------------------------- model dims (small) -----------------------------
TITLE_LEN = 20
CONTENT_LEN = 20
T = TITLE_LEN + CONTENT_LEN          # total sequence length = 40
B = 2                                # batch
R = B * T                            # flattened rows per block = 80
H = 64                               # hidden size (stand-in for 768)
NH = 4                               # attention heads
DH = H // NH                         # head dim = 16
I = 128                              # FFN intermediate size
V = 128                              # vocab size (len(vocab))
L = 2                                # number of transformer layers
LN_EPS = 1e-12                       # BERT layer-norm eps


def _layer_norm(x, gamma, beta):
    # Single-pass: the two cross-lane reductions (sum x, sum x*x) are independent.
    mu = jnp.mean(x, axis=-1, keepdims=True)
    ex2 = jnp.mean(x * x, axis=-1, keepdims=True)
    var = ex2 - mu * mu
    return (x - mu) * jax.lax.rsqrt(var + LN_EPS) * gamma + beta


def _gelu(x):
    return jax.nn.gelu(x, approximate=True)


def _softmax_lastdim(x):
    # Exact normalization (f32 divide). Approximate reciprocal previously broke the
    # row-sum tolerance; correctness over a marginal EUP-slot win here.
    m = jnp.max(x, axis=-1, keepdims=True)
    e = jnp.exp(x - m)
    return e / jnp.sum(e, axis=-1, keepdims=True)


def _bf16(x):
    return x.astype(jnp.bfloat16)


def lm_kernel(mask_ref, emb_ref, eg_ref, eb_ref,
              wqkv_ref, bqkv_ref, wo_ref, bo_ref,
              ln1g_ref, ln1b_ref, w1_ref, b1_ref, w2_ref, b2_ref,
              ln2g_ref, ln2b_ref, wc_ref, bc_ref, out_ref):
    # One block holds all B flattened sequences: (R, H) activations, hidden on lanes.
    h = _layer_norm(emb_ref[...], eg_ref[...], eb_ref[...])           # (R, H) f32
    add_mask = mask_ref[...]                                          # (R, R) block-diag SFT mask

    # Per-head lane masks, hoisted once (JAX does not CSE broadcasts inside loops).
    lane = jax.lax.broadcasted_iota(jnp.int32, (1, H), 1)
    head_masks = [(lane >= hd * DH) & (lane < (hd + 1) * DH) for hd in range(NH)]

    for l in range(L):
        # ---- self attention: fused QKV projection (1/sqrt(DH) folded into Q weights) ----
        qkv = jnp.dot(_bf16(h), _bf16(wqkv_ref[l]),
                      preferred_element_type=jnp.float32) + bqkv_ref[l]   # (R, 3H) f32
        q_all = _bf16(qkv[:, :H])
        k_all = _bf16(qkv[:, H:2 * H])
        v_all = _bf16(qkv[:, 2 * H:])

        ctx = None
        for hd in range(NH):
            m_h = head_masks[hd]
            # Lane-masked Q: only this head's 16 lanes are nonzero; contracting the
            # full 64-lane hidden dim against K is then exactly the per-head score.
            q_h = jnp.where(m_h, q_all, 0)
            s = jax.lax.dot_general(q_h, k_all, (((1,), (1,)), ((), ())),
                                    preferred_element_type=jnp.float32)   # (R, R)
            p = _softmax_lastdim(s + add_mask)
            # Lane-masked V: the per-head context lands in this head's lanes only,
            # so summing over heads reconstructs the concatenated (R, H) context.
            v_h = jnp.where(m_h, v_all, 0)
            part = jnp.dot(_bf16(p), v_h, preferred_element_type=jnp.float32)  # (R, H)
            ctx = part if ctx is None else ctx + part

        attn = jnp.dot(_bf16(ctx), _bf16(wo_ref[l]),
                       preferred_element_type=jnp.float32) + bo_ref[l]
        h = _layer_norm(h + attn, ln1g_ref[l], ln1b_ref[l])

        # ---- feed forward ----
        f = _gelu(jnp.dot(_bf16(h), _bf16(w1_ref[l]),
                          preferred_element_type=jnp.float32) + b1_ref[l])
        f = jnp.dot(_bf16(f), _bf16(w2_ref[l]),
                    preferred_element_type=jnp.float32) + b2_ref[l]
        h = _layer_norm(h + f, ln2g_ref[l], ln2b_ref[l])

    # ---- classify head + softmax (dropout is identity at inference) ----
    logits = jnp.dot(_bf16(h), _bf16(wc_ref[...]),
                     preferred_element_type=jnp.float32) + bc_ref[...]
    out_ref[...] = _softmax_lastdim(logits)                           # (R, V) lane-dense


def _full_spec(shape):
    nd = len(shape)
    return pl.BlockSpec(shape, lambda b, nd=nd: (0,) * nd)


def generate_sft_mask_01():
    """SFT mask (T, T) of 0/1: title attends title; content attends title + causal content."""
    tt = jnp.ones((TITLE_LEN, TITLE_LEN), jnp.float32)
    tc = jnp.zeros((TITLE_LEN, CONTENT_LEN), jnp.float32)
    ct = jnp.ones((CONTENT_LEN, TITLE_LEN), jnp.float32)
    cc = jnp.tril(jnp.ones((CONTENT_LEN, CONTENT_LEN), jnp.float32))
    top = jnp.concatenate([tt, tc], axis=1)
    bottom = jnp.concatenate([ct, cc], axis=1)
    return jnp.concatenate([top, bottom], axis=0)


def block_diag_additive_mask(nseq):
    """(nseq*T, nseq*T) additive mask: SFT mask on diagonal blocks, -10000 off-diagonal."""
    allow = jnp.kron(jnp.eye(nseq, dtype=jnp.float32), generate_sft_mask_01())
    return (1.0 - allow) * -10000.0


@jax.jit
def language_model_forward(x_ids, params):
    # ---- glue (plain JAX): embedding gather, flatten batch into the row (sublane) axis ----
    emb = (params["word_emb"][x_ids]                             # (B, T, H)
           + params["pos_emb"][None, :, :]
           + params["type_emb"][0][None, None, :])
    emb = emb.reshape(R, H)                                      # (R, H)
    add_mask = block_diag_additive_mask(B)                       # (R, R)

    args = (
        add_mask, emb,
        params["emb_ln_g"], params["emb_ln_b"],
        params["wqkv"], params["bqkv"], params["wo"], params["bo"],
        params["ln1_g"], params["ln1_b"],
        params["w1"], params["b1"], params["w2"], params["b2"],
        params["ln2_g"], params["ln2_b"],
        params["wc"], params["bc"],
    )

    in_specs = [
        _full_spec((R, R)),                                      # block-diag additive mask
        _full_spec((R, H)),                                      # flattened embeddings
        _full_spec((1, H)), _full_spec((1, H)),                  # emb LN
        _full_spec((L, H, 3 * H)), _full_spec((L, 1, 3 * H)),    # fused Wqkv, bqkv
        _full_spec((L, H, H)), _full_spec((L, 1, H)),            # Wo, bo
        _full_spec((L, 1, H)), _full_spec((L, 1, H)),            # LN1 g/b
        _full_spec((L, H, I)), _full_spec((L, 1, I)),            # W1, b1
        _full_spec((L, I, H)), _full_spec((L, 1, H)),            # W2, b2
        _full_spec((L, 1, H)), _full_spec((L, 1, H)),            # LN2 g/b
        _full_spec((H, V)), _full_spec((1, V)),                  # classify W, b
    ]

    out = pl.pallas_call(
        lm_kernel,
        out_shape=jax.ShapeDtypeStruct((R, V), jnp.float32),
        grid_spec=pltpu.PrefetchScalarGridSpec(
            num_scalar_prefetch=0,
            grid=(1,),
            in_specs=in_specs,
            out_specs=pl.BlockSpec((R, V), lambda b: (0, 0)),
        ),
        compiler_params=pltpu.CompilerParams(
            dimension_semantics=("arbitrary",),
        ),
    )(*args)
    return out.reshape(B, T, V)


def init_params(key):
    ks = jax.random.split(key, 12)
    std = 0.02
    scale = 1.0 / math.sqrt(DH)
    wq = jax.random.normal(ks[3], (L, H, H), jnp.float32) * std
    wk = jax.random.normal(ks[4], (L, H, H), jnp.float32) * std
    wv = jax.random.normal(ks[5], (L, H, H), jnp.float32) * std
    bq = jnp.zeros((L, 1, H), jnp.float32)
    bk = jnp.zeros((L, 1, H), jnp.float32)
    bv = jnp.zeros((L, 1, H), jnp.float32)
    p = {
        "word_emb": jax.random.normal(ks[0], (V, H), jnp.float32) * std,
        "pos_emb":  jax.random.normal(ks[1], (T, H), jnp.float32) * std,
        "type_emb": jax.random.normal(ks[2], (1, H), jnp.float32) * std,
        "emb_ln_g": jnp.ones((1, H), jnp.float32),
        "emb_ln_b": jnp.zeros((1, H), jnp.float32),
        # Fused QKV projection; the 1/sqrt(DH) attention scale is folded into Q.
        "wqkv": jnp.concatenate([wq * scale, wk, wv], axis=-1),   # (L, H, 3H)
        "bqkv": jnp.concatenate([bq * scale, bk, bv], axis=-1),   # (L, 1, 3H)
        "wo": jax.random.normal(ks[6], (L, H, H), jnp.float32) * std,
        "bo": jnp.zeros((L, 1, H), jnp.float32),
        "ln1_g": jnp.ones((L, 1, H), jnp.float32),
        "ln1_b": jnp.zeros((L, 1, H), jnp.float32),
        "w1": jax.random.normal(ks[7], (L, H, I), jnp.float32) * std,
        "b1": jnp.zeros((L, 1, I), jnp.float32),
        "w2": jax.random.normal(ks[8], (L, I, H), jnp.float32) * std,
        "b2": jnp.zeros((L, 1, H), jnp.float32),
        "ln2_g": jnp.ones((L, 1, H), jnp.float32),
        "ln2_b": jnp.zeros((L, 1, H), jnp.float32),
        "wc": jax.random.normal(ks[9], (H, V), jnp.float32) * std,
        "bc": jnp.zeros((1, V), jnp.float32),
    }
    return p


def reference_forward(x_ids, params):
    """Pure-JAX f32 reference (exact softmax) for correctness checking."""
    emb = (params["word_emb"][x_ids]
           + params["pos_emb"][None, :, :]
           + params["type_emb"][0][None, None, :])              # (B, T, H)
    h = _layer_norm(emb, params["emb_ln_g"], params["emb_ln_b"])
    mask = (1.0 - generate_sft_mask_01()) * -10000.0             # (T, T)
    for l in range(L):
        qkv = h @ params["wqkv"][l] + params["bqkv"][l]          # (B, T, 3H)
        q = qkv[..., :H].reshape(B, T, NH, DH)
        k = qkv[..., H:2 * H].reshape(B, T, NH, DH)
        v = qkv[..., 2 * H:].reshape(B, T, NH, DH)
        s = jnp.einsum("bqhd,bkhd->bhqk", q, k) + mask[None, None]
        p = jax.nn.softmax(s, axis=-1)
        ctx = jnp.einsum("bhqk,bkhd->bqhd", p, v).reshape(B, T, H)
        attn = ctx @ params["wo"][l] + params["bo"][l]
        h = _layer_norm(h + attn, params["ln1_g"][l], params["ln1_b"][l])
        f = _gelu(h @ params["w1"][l] + params["b1"][l])
        f = f @ params["w2"][l] + params["b2"][l]
        h = _layer_norm(h + f, params["ln2_g"][l], params["ln2_b"][l])
    logits = h @ params["wc"] + params["bc"]
    return jax.nn.softmax(logits, axis=-1)


if __name__ == "__main__":
    key = jax.random.PRNGKey(0)
    k_param, k_ids = jax.random.split(key)
    params = init_params(k_param)
    x_ids = jax.random.randint(k_ids, (B, T), 0, V, dtype=jnp.int32)

    probs = language_model_forward(x_ids, params)
    probs = jax.block_until_ready(probs)

    assert probs.shape == (B, T, V), probs.shape
    row_sums = jnp.sum(probs, axis=-1)
    assert bool(jnp.allclose(row_sums, 1.0, atol=2e-3)), \
        f"softmax rows must sum to 1 (max dev {float(jnp.max(jnp.abs(row_sums - 1.0)))})"

    ref = reference_forward(x_ids, params)
    assert bool(jnp.allclose(probs, ref, rtol=1e-2, atol=2e-3)), \
        f"max abs diff vs reference: {float(jnp.max(jnp.abs(probs - ref)))}"
    print("KERNEL_OK")
</pallas_src>

<mosaic_0001>
module attributes {stable_mosaic.version = 11 : i64} {
  func.func @lm_kernel(%arg0: i32, %arg1: memref<80x80xf32, #tpu.memory_space<vmem>>, %arg2: memref<80x64xf32, #tpu.memory_space<vmem>>, %arg3: memref<1x64xf32, #tpu.memory_space<vmem>>, %arg4: memref<1x64xf32, #tpu.memory_space<vmem>>, %arg5: memref<2x64x192xf32, #tpu.memory_space<vmem>>, %arg6: memref<2x1x192xf32, #tpu.memory_space<vmem>>, %arg7: memref<2x64x64xf32, #tpu.memory_space<vmem>>, %arg8: memref<2x1x64xf32, #tpu.memory_space<vmem>>, %arg9: memref<2x1x64xf32, #tpu.memory_space<vmem>>, %arg10: memref<2x1x64xf32, #tpu.memory_space<vmem>>, %arg11: memref<2x64x128xf32, #tpu.memory_space<vmem>>, %arg12: memref<2x1x128xf32, #tpu.memory_space<vmem>>, %arg13: memref<2x128x64xf32, #tpu.memory_space<vmem>>, %arg14: memref<2x1x64xf32, #tpu.memory_space<vmem>>, %arg15: memref<2x1x64xf32, #tpu.memory_space<vmem>>, %arg16: memref<2x1x64xf32, #tpu.memory_space<vmem>>, %arg17: memref<64x128xf32, #tpu.memory_space<vmem>>, %arg18: memref<1x128xf32, #tpu.memory_space<vmem>>, %arg19: memref<80x128xf32, #tpu.memory_space<vmem>>) attributes {dimension_semantics = [#tpu.dimension_semantics<arbitrary>], iteration_bounds = array<i64: 1>, scalar_prefetch = 0 : i64, scratch_operands = 0 : i64, tpu.core_type = #tpu.core_type<tc>, window_params = [{pipeline_mode = #tpu.pipeline_mode<synchronous>, transform_indices = @transform_0, window_bounds = array<i64: 80, 80>}, {pipeline_mode = #tpu.pipeline_mode<synchronous>, transform_indices = @transform_1, window_bounds = array<i64: 80, 64>}, {pipeline_mode = #tpu.pipeline_mode<synchronous>, transform_indices = @transform_2, window_bounds = array<i64: 1, 64>}, {pipeline_mode = #tpu.pipeline_mode<synchronous>, transform_indices = @transform_3, window_bounds = array<i64: 1, 64>}, {pipeline_mode = #tpu.pipeline_mode<synchronous>, transform_indices = @transform_4, window_bounds = array<i64: 2, 64, 192>}, {pipeline_mode = #tpu.pipeline_mode<synchronous>, transform_indices = @transform_5, window_bounds = array<i64: 2, 1, 192>}, {pipeline_mode = #tpu.pipeline_mode<synchronous>, transform_indices = @transform_6, window_bounds = array<i64: 2, 64, 64>}, {pipeline_mode = #tpu.pipeline_mode<synchronous>, transform_indices = @transform_7, window_bounds = array<i64: 2, 1, 64>}, {pipeline_mode = #tpu.pipeline_mode<synchronous>, transform_indices = @transform_8, window_bounds = array<i64: 2, 1, 64>}, {pipeline_mode = #tpu.pipeline_mode<synchronous>, transform_indices = @transform_9, window_bounds = array<i64: 2, 1, 64>}, {pipeline_mode = #tpu.pipeline_mode<synchronous>, transform_indices = @transform_10, window_bounds = array<i64: 2, 64, 128>}, {pipeline_mode = #tpu.pipeline_mode<synchronous>, transform_indices = @transform_11, window_bounds = array<i64: 2, 1, 128>}, {pipeline_mode = #tpu.pipeline_mode<synchronous>, transform_indices = @transform_12, window_bounds = array<i64: 2, 128, 64>}, {pipeline_mode = #tpu.pipeline_mode<synchronous>, transform_indices = @transform_13, window_bounds = array<i64: 2, 1, 64>}, {pipeline_mode = #tpu.pipeline_mode<synchronous>, transform_indices = @transform_14, window_bounds = array<i64: 2, 1, 64>}, {pipeline_mode = #tpu.pipeline_mode<synchronous>, transform_indices = @transform_15, window_bounds = array<i64: 2, 1, 64>}, {pipeline_mode = #tpu.pipeline_mode<synchronous>, transform_indices = @transform_16, window_bounds = array<i64: 64, 128>}, {pipeline_mode = #tpu.pipeline_mode<synchronous>, transform_indices = @transform_17, window_bounds = array<i64: 1, 128>}, {pipeline_mode = #tpu.pipeline_mode<synchronous>, transform_indices = @transform_18, window_bounds = array<i64: 80, 128>}]} {
    %c0 = arith.constant 0 : index
    %c0_0 = arith.constant 0 : index
    %0 = vector.load %arg2[%c0, %c0_0] : memref<80x64xf32, #tpu.memory_space<vmem>>, vector<80x64xf32>
    %c0_1 = arith.constant 0 : index
    %c0_2 = arith.constant 0 : index
    %1 = vector.load %arg3[%c0_1, %c0_2] : memref<1x64xf32, #tpu.memory_space<vmem>>, vector<1x64xf32>
    %c0_3 = arith.constant 0 : index
    %c0_4 = arith.constant 0 : index
    %2 = vector.load %arg4[%c0_3, %c0_4] : memref<1x64xf32, #tpu.memory_space<vmem>>, vector<1x64xf32>
    %cst = arith.constant dense<0.000000e+00> : vector<80xf32>
    %3 = vector.multi_reduction <add>, %0, %cst [1] : vector<80x64xf32> to vector<80xf32>
    %4 = vector.shape_cast %3 : vector<80xf32> to vector<80x1xf32>
    %cst_5 = arith.constant 6.400000e+01 : f32
    %5 = vector.broadcast %cst_5 : f32 to vector<80x1xf32>
    %6 = arith.divf %4, %5 : vector<80x1xf32>
    %7 = arith.mulf %0, %0 : vector<80x64xf32>
    %cst_6 = arith.constant dense<0.000000e+00> : vector<80xf32>
    %8 = vector.multi_reduction <add>, %7, %cst_6 [1] : vector<80x64xf32> to vector<80xf32>
    %9 = vector.shape_cast %8 : vector<80xf32> to vector<80x1xf32>
    %cst_7 = arith.constant 6.400000e+01 : f32
    %10 = vector.broadcast %cst_7 : f32 to vector<80x1xf32>
    %11 = arith.divf %9, %10 : vector<80x1xf32>
    %12 = arith.mulf %6, %6 : vector<80x1xf32>
    %13 = arith.subf %11, %12 : vector<80x1xf32>
    %14 = vector.broadcast %6 : vector<80x1xf32> to vector<80x64xf32>
    %15 = arith.subf %0, %14 : vector<80x64xf32>
    %cst_8 = arith.constant 9.99999996E-13 : f32
    %16 = vector.broadcast %cst_8 : f32 to vector<80x1xf32>
    %17 = arith.addf %13, %16 : vector<80x1xf32>
    %18 = math.rsqrt %17 : vector<80x1xf32>
    %19 = vector.broadcast %18 : vector<80x1xf32> to vector<80x64xf32>
    %20 = arith.mulf %15, %19 : vector<80x64xf32>
    %21 = vector.broadcast %1 : vector<1x64xf32> to vector<80x64xf32>
    %22 = arith.mulf %20, %21 : vector<80x64xf32>
    %23 = vector.broadcast %2 : vector<1x64xf32> to vector<80x64xf32>
    %24 = arith.addf %22, %23 : vector<80x64xf32>
    %c0_9 = arith.constant 0 : index
    %c0_10 = arith.constant 0 : index
    %25 = vector.load %arg1[%c0_9, %c0_10] : memref<80x80xf32, #tpu.memory_space<vmem>>, vector<80x80xf32>
    %26 = tpu.iota {dimensions = array<i32: 1>} : vector<1x64xi32>
    %c0_i32 = arith.constant 0 : i32
    %27 = vector.broadcast %c0_i32 : i32 to vector<1x64xi32>
    %28 = arith.cmpi sge, %26, %27 : vector<1x64xi32>
    %c16_i32 = arith.constant 16 : i32
    %29 = vector.broadcast %c16_i32 : i32 to vector<1x64xi32>
    %30 = arith.cmpi slt, %26, %29 : vector<1x64xi32>
    %31 = arith.andi %28, %30 : vector<1x64xi1>
    %c16_i32_11 = arith.constant 16 : i32
    %32 = vector.broadcast %c16_i32_11 : i32 to vector<1x64xi32>
    %33 = arith.cmpi sge, %26, %32 : vector<1x64xi32>
    %c32_i32 = arith.constant 32 : i32
    %34 = vector.broadcast %c32_i32 : i32 to vector<1x64xi32>
    %35 = arith.cmpi slt, %26, %34 : vector<1x64xi32>
    %36 = arith.andi %33, %35 : vector<1x64xi1>
    %c32_i32_12 = arith.constant 32 : i32
    %37 = vector.broadcast %c32_i32_12 : i32 to vector<1x64xi32>
    %38 = arith.cmpi sge, %26, %37 : vector<1x64xi32>
    %c48_i32 = arith.constant 48 : i32
    %39 = vector.broadcast %c48_i32 : i32 to vector<1x64xi32>
    %40 = arith.cmpi slt, %26, %39 : vector<1x64xi32>
    %41 = arith.andi %38, %40 : vector<1x64xi1>
    %c48_i32_13 = arith.constant 48 : i32
    %42 = vector.broadcast %c48_i32_13 : i32 to vector<1x64xi32>
    %43 = arith.cmpi sge, %26, %42 : vector<1x64xi32>
    %c64_i32 = arith.constant 64 : i32
    %44 = vector.broadcast %c64_i32 : i32 to vector<1x64xi32>
    %45 = arith.cmpi slt, %26, %44 : vector<1x64xi32>
    %46 = arith.andi %43, %45 : vector<1x64xi1>
    %47 = arith.truncf %24 : vector<80x64xf32> to vector<80x64xbf16>
    %c0_14 = arith.constant 0 : index
    %c0_15 = arith.constant 0 : index
    %c0_16 = arith.constant 0 : index
    %48 = vector.load %arg5[%c0_14, %c0_15, %c0_16] : memref<2x64x192xf32, #tpu.memory_space<vmem>>, vector<1x64x192xf32>
    %49 = vector.shape_cast %48 : vector<1x64x192xf32> to vector<64x192xf32>
    %50 = arith.truncf %49 : vector<64x192xf32> to vector<64x192xbf16>
    %cst_17 = arith.constant dense<0.000000e+00> : vector<80x192xf32>
    %51 = tpu.matmul %47, %50, %cst_17 {dimension_numbers = #tpu.dot_dimension_numbers<[1], [0], [0], [1], [0, 0, 1, 1], [], []>} : vector<80x64xbf16>, vector<64x192xbf16>, vector<80x192xf32> -> vector<80x192xf32>
    %c0_18 = arith.constant 0 : index
    %c0_19 = arith.constant 0 : index
    %c0_20 = arith.constant 0 : index
    %52 = vector.load %arg6[%c0_18, %c0_19, %c0_20] : memref<2x1x192xf32, #tpu.memory_space<vmem>>, vector<1x1x192xf32>
    %53 = vector.shape_cast %52 : vector<1x1x192xf32> to vector<1x192xf32>
    %54 = vector.broadcast %53 : vector<1x192xf32> to vector<80x192xf32>
    %55 = arith.addf %51, %54 : vector<80x192xf32>
    %56 = vector.extract_strided_slice %55 {offsets = [0, 0], sizes = [80, 64], strides = [1, 1]} : vector<80x192xf32> to vector<80x64xf32>
    %57 = arith.truncf %56 : vector<80x64xf32> to vector<80x64xbf16>
    %58 = vector.extract_strided_slice %55 {offsets = [0, 64], sizes = [80, 64], strides = [1, 1]} : vector<80x192xf32> to vector<80x64xf32>
    %59 = arith.truncf %58 : vector<80x64xf32> to vector<80x64xbf16>
    %60 = vector.extract_strided_slice %55 {offsets = [0, 128], sizes = [80, 64], strides = [1, 1]} : vector<80x192xf32> to vector<80x64xf32>
    %61 = arith.truncf %60 : vector<80x64xf32> to vector<80x64xbf16>
    %c0_i32_21 = arith.constant 0 : i32
    %62 = arith.sitofp %c0_i32_21 : i32 to bf16
    %63 = vector.shape_cast %31 : vector<1x64xi1> to vector<1x64xi1>
    %64 = vector.broadcast %63 : vector<1x64xi1> to vector<80x64xi1>
    %65 = vector.broadcast %62 : bf16 to vector<80x64xbf16>
    %66 = arith.select %64, %57, %65 : vector<80x64xi1>, vector<80x64xbf16>
    %cst_22 = arith.constant dense<0.000000e+00> : vector<80x80xf32>
    %67 = tpu.matmul %66, %59, %cst_22 {dimension_numbers = #tpu.dot_dimension_numbers<[1], [1], [0], [0], [0, 0, 1, 0], [], []>} : vector<80x64xbf16>, vector<80x64xbf16>, vector<80x80xf32> -> vector<80x80xf32>
    %68 = arith.addf %67, %25 : vector<80x80xf32>
    %cst_23 = arith.constant dense<0xFF800000> : vector<80xf32>
    %69 = vector.multi_reduction <maximumf>, %68, %cst_23 [1] : vector<80x80xf32> to vector<80xf32>
    %70 = vector.shape_cast %69 : vector<80xf32> to vector<80x1xf32>
    %71 = vector.broadcast %70 : vector<80x1xf32> to vector<80x80xf32>
    %72 = arith.subf %68, %71 : vector<80x80xf32>
    %73 = math.exp %72 : vector<80x80xf32>
    %cst_24 = arith.constant dense<0.000000e+00> : vector<80xf32>
    %74 = vector.multi_reduction <add>, %73, %cst_24 [1] : vector<80x80xf32> to vector<80xf32>
    %75 = vector.shape_cast %74 : vector<80xf32> to vector<80x1xf32>
    %76 = vector.broadcast %75 : vector<80x1xf32> to vector<80x80xf32>
    %77 = arith.divf %73, %76 : vector<80x80xf32>
    %c0_i32_25 = arith.constant 0 : i32
    %78 = arith.sitofp %c0_i32_25 : i32 to bf16
    %79 = vector.shape_cast %31 : vector<1x64xi1> to vector<1x64xi1>
    %80 = vector.broadcast %79 : vector<1x64xi1> to vector<80x64xi1>
    %81 = vector.broadcast %78 : bf16 to vector<80x64xbf16>
    %82 = arith.select %80, %61, %81 : vector<80x64xi1>, vector<80x64xbf16>
    %83 = arith.truncf %77 : vector<80x80xf32> to vector<80x80xbf16>
    %cst_26 = arith.constant dense<0.000000e+00> : vector<80x64xf32>
    %84 = tpu.matmul %83, %82, %cst_26 {dimension_numbers = #tpu.dot_dimension_numbers<[1], [0], [0], [1], [0, 0, 1, 1], [], []>} : vector<80x80xbf16>, vector<80x64xbf16>, vector<80x64xf32> -> vector<80x64xf32>
    %c0_i32_27 = arith.constant 0 : i32
    %85 = arith.sitofp %c0_i32_27 : i32 to bf16
    %86 = vector.shape_cast %36 : vector<1x64xi1> to vector<1x64xi1>
    %87 = vector.broadcast %86 : vector<1x64xi1> to vector<80x64xi1>
    %88 = vector.broadcast %85 : bf16 to vector<80x64xbf16>
    %89 = arith.select %87, %57, %88 : vector<80x64xi1>, vector<80x64xbf16>
    %cst_28 = arith.constant dense<0.000000e+00> : vector<80x80xf32>
    %90 = tpu.matmul %89, %59, %cst_28 {dimension_numbers = #tpu.dot_dimension_numbers<[1], [1], [0], [0], [0, 0, 1, 0], [], []>} : vector<80x64xbf16>, vector<80x64xbf16>, vector<80x80xf32> -> vector<80x80xf32>
    %91 = arith.addf %90, %25 : vector<80x80xf32>
    %cst_29 = arith.constant dense<0xFF800000> : vector<80xf32>
    %92 = vector.multi_reduction <maximumf>, %91, %cst_29 [1] : vector<80x80xf32> to vector<80xf32>
    %93 = vector.shape_cast %92 : vector<80xf32> to vector<80x1xf32>
    %94 = vector.broadcast %93 : vector<80x1xf32> to vector<80x80xf32>
    %95 = arith.subf %91, %94 : vector<80x80xf32>
    %96 = math.exp %95 : vector<80x80xf32>
    %cst_30 = arith.constant dense<0.000000e+00> : vector<80xf32>
    %97 = vector.multi_reduction <add>, %96, %cst_30 [1] : vector<80x80xf32> to vector<80xf32>
    %98 = vector.shape_cast %97 : vector<80xf32> to vector<80x1xf32>
    %99 = vector.broadcast %98 : vector<80x1xf32> to vector<80x80xf32>
    %100 = arith.divf %96, %99 : vector<80x80xf32>
    %c0_i32_31 = arith.constant 0 : i32
    %101 = arith.sitofp %c0_i32_31 : i32 to bf16
    %102 = vector.shape_cast %36 : vector<1x64xi1> to vector<1x64xi1>
    %103 = vector.broadcast %102 : vector<1x64xi1> to vector<80x64xi1>
    %104 = vector.broadcast %101 : bf16 to vector<80x64xbf16>
    %105 = arith.select %103, %61, %104 : vector<80x64xi1>, vector<80x64xbf16>
    %106 = arith.truncf %100 : vector<80x80xf32> to vector<80x80xbf16>
    %cst_32 = arith.constant dense<0.000000e+00> : vector<80x64xf32>
    %107 = tpu.matmul %106, %105, %cst_32 {dimension_numbers = #tpu.dot_dimension_numbers<[1], [0], [0], [1], [0, 0, 1, 1], [], []>} : vector<80x80xbf16>, vector<80x64xbf16>, vector<80x64xf32> -> vector<80x64xf32>
    %108 = arith.addf %84, %107 : vector<80x64xf32>
    %c0_i32_33 = arith.constant 0 : i32
    %109 = arith.sitofp %c0_i32_33 : i32 to bf16
    %110 = vector.shape_cast %41 : vector<1x64xi1> to vector<1x64xi1>
    %111 = vector.broadcast %110 : vector<1x64xi1> to vector<80x64xi1>
    %112 = vector.broadcast %109 : bf16 to vector<80x64xbf16>
    %113 = arith.select %111, %57, %112 : vector<80x64xi1>, vector<80x64xbf16>
    %cst_34 = arith.constant dense<0.000000e+00> : vector<80x80xf32>
    %114 = tpu.matmul %113, %59, %cst_34 {dimension_numbers = #tpu.dot_dimension_numbers<[1], [1], [0], [0], [0, 0, 1, 0], [], []>} : vector<80x64xbf16>, vector<80x64xbf16>, vector<80x80xf32> -> vector<80x80xf32>
    %115 = arith.addf %114, %25 : vector<80x80xf32>
    %cst_35 = arith.constant dense<0xFF800000> : vector<80xf32>
    %116 = vector.multi_reduction <maximumf>, %115, %cst_35 [1] : vector<80x80xf32> to vector<80xf32>
    %117 = vector.shape_cast %116 : vector<80xf32> to vector<80x1xf32>
    %118 = vector.broadcast %117 : vector<80x1xf32> to vector<80x80xf32>
    %119 = arith.subf %115, %118 : vector<80x80xf32>
    %120 = math.exp %119 : vector<80x80xf32>
    %cst_36 = arith.constant dense<0.000000e+00> : vector<80xf32>
    %121 = vector.multi_reduction <add>, %120, %cst_36 [1] : vector<80x80xf32> to vector<80xf32>
    %122 = vector.shape_cast %121 : vector<80xf32> to vector<80x1xf32>
    %123 = vector.broadcast %122 : vector<80x1xf32> to vector<80x80xf32>
    %124 = arith.divf %120, %123 : vector<80x80xf32>
    %c0_i32_37 = arith.constant 0 : i32
    %125 = arith.sitofp %c0_i32_37 : i32 to bf16
    %126 = vector.shape_cast %41 : vector<1x64xi1> to vector<1x64xi1>
    %127 = vector.broadcast %126 : vector<1x64xi1> to vector<80x64xi1>
    %128 = vector.broadcast %125 : bf16 to vector<80x64xbf16>
    %129 = arith.select %127, %61, %128 : vector<80x64xi1>, vector<80x64xbf16>
    %130 = arith.truncf %124 : vector<80x80xf32> to vector<80x80xbf16>
    %cst_38 = arith.constant dense<0.000000e+00> : vector<80x64xf32>
    %131 = tpu.matmul %130, %129, %cst_38 {dimension_numbers = #tpu.dot_dimension_numbers<[1], [0], [0], [1], [0, 0, 1, 1], [], []>} : vector<80x80xbf16>, vector<80x64xbf16>, vector<80x64xf32> -> vector<80x64xf32>
    %132 = arith.addf %108, %131 : vector<80x64xf32>
    %c0_i32_39 = arith.constant 0 : i32
    %133 = arith.sitofp %c0_i32_39 : i32 to bf16
    %134 = vector.shape_cast %46 : vector<1x64xi1> to vector<1x64xi1>
    %135 = vector.broadcast %134 : vector<1x64xi1> to vector<80x64xi1>
    %136 = vector.broadcast %133 : bf16 to vector<80x64xbf16>
    %137 = arith.select %135, %57, %136 : vector<80x64xi1>, vector<80x64xbf16>
    %cst_40 = arith.constant dense<0.000000e+00> : vector<80x80xf32>
    %138 = tpu.matmul %137, %59, %cst_40 {dimension_numbers = #tpu.dot_dimension_numbers<[1], [1], [0], [0], [0, 0, 1, 0], [], []>} : vector<80x64xbf16>, vector<80x64xbf16>, vector<80x80xf32> -> vector<80x80xf32>
    %139 = arith.addf %138, %25 : vector<80x80xf32>
    %cst_41 = arith.constant dense<0xFF800000> : vector<80xf32>
    %140 = vector.multi_reduction <maximumf>, %139, %cst_41 [1] : vector<80x80xf32> to vector<80xf32>
    %141 = vector.shape_cast %140 : vector<80xf32> to vector<80x1xf32>
    %142 = vector.broadcast %141 : vector<80x1xf32> to vector<80x80xf32>
    %143 = arith.subf %139, %142 : vector<80x80xf32>
    %144 = math.exp %143 : vector<80x80xf32>
    %cst_42 = arith.constant dense<0.000000e+00> : vector<80xf32>
    %145 = vector.multi_reduction <add>, %144, %cst_42 [1] : vector<80x80xf32> to vector<80xf32>
    %146 = vector.shape_cast %145 : vector<80xf32> to vector<80x1xf32>
    %147 = vector.broadcast %146 : vector<80x1xf32> to vector<80x80xf32>
    %148 = arith.divf %144, %147 : vector<80x80xf32>
    %c0_i32_43 = arith.constant 0 : i32
    %149 = arith.sitofp %c0_i32_43 : i32 to bf16
    %150 = vector.shape_cast %46 : vector<1x64xi1> to vector<1x64xi1>
    %151 = vector.broadcast %150 : vector<1x64xi1> to vector<80x64xi1>
    %152 = vector.broadcast %149 : bf16 to vector<80x64xbf16>
    %153 = arith.select %151, %61, %152 : vector<80x64xi1>, vector<80x64xbf16>
    %154 = arith.truncf %148 : vector<80x80xf32> to vector<80x80xbf16>
    %cst_44 = arith.constant dense<0.000000e+00> : vector<80x64xf32>
    %155 = tpu.matmul %154, %153, %cst_44 {dimension_numbers = #tpu.dot_dimension_numbers<[1], [0], [0], [1], [0, 0, 1, 1], [], []>} : vector<80x80xbf16>, vector<80x64xbf16>, vector<80x64xf32> -> vector<80x64xf32>
    %156 = arith.addf %132, %155 : vector<80x64xf32>
    %157 = arith.truncf %156 : vector<80x64xf32> to vector<80x64xbf16>
    %c0_45 = arith.constant 0 : index
    %c0_46 = arith.constant 0 : index
    %c0_47 = arith.constant 0 : index
    %158 = vector.load %arg7[%c0_45, %c0_46, %c0_47] : memref<2x64x64xf32, #tpu.memory_space<vmem>>, vector<1x64x64xf32>
    %159 = vector.shape_cast %158 : vector<1x64x64xf32> to vector<64x64xf32>
    %160 = arith.truncf %159 : vector<64x64xf32> to vector<64x64xbf16>
    %cst_48 = arith.constant dense<0.000000e+00> : vector<80x64xf32>
    %161 = tpu.matmul %157, %160, %cst_48 {dimension_numbers = #tpu.dot_dimension_numbers<[1], [0], [0], [1], [0, 0, 1, 1], [], []>} : vector<80x64xbf16>, vector<64x64xbf16>, vector<80x64xf32> -> vector<80x64xf32>
    %c0_49 = arith.constant 0 : index
    %c0_50 = arith.constant 0 : index
    %c0_51 = arith.constant 0 : index
    %162 = vector.load %arg8[%c0_49, %c0_50, %c0_51] : memref<2x1x64xf32, #tpu.memory_space<vmem>>, vector<1x1x64xf32>
    %163 = vector.shape_cast %162 : vector<1x1x64xf32> to vector<1x64xf32>
    %164 = vector.broadcast %163 : vector<1x64xf32> to vector<80x64xf32>
    %165 = arith.addf %161, %164 : vector<80x64xf32>
    %166 = arith.addf %24, %165 : vector<80x64xf32>
    %c0_52 = arith.constant 0 : index
    %c0_53 = arith.constant 0 : index
    %c0_54 = arith.constant 0 : index
    %167 = vector.load %arg9[%c0_52, %c0_53, %c0_54] : memref<2x1x64xf32, #tpu.memory_space<vmem>>, vector<1x1x64xf32>
    %168 = vector.shape_cast %167 : vector<1x1x64xf32> to vector<1x64xf32>
    %c0_55 = arith.constant 0 : index
    %c0_56 = arith.constant 0 : index
    %c0_57 = arith.constant 0 : index
    %169 = vector.load %arg10[%c0_55, %c0_56, %c0_57] : memref<2x1x64xf32, #tpu.memory_space<vmem>>, vector<1x1x64xf32>
    %170 = vector.shape_cast %169 : vector<1x1x64xf32> to vector<1x64xf32>
    %cst_58 = arith.constant dense<0.000000e+00> : vector<80xf32>
    %171 = vector.multi_reduction <add>, %166, %cst_58 [1] : vector<80x64xf32> to vector<80xf32>
    %172 = vector.shape_cast %171 : vector<80xf32> to vector<80x1xf32>
    %cst_59 = arith.constant 6.400000e+01 : f32
    %173 = vector.broadcast %cst_59 : f32 to vector<80x1xf32>
    %174 = arith.divf %172, %173 : vector<80x1xf32>
    %175 = arith.mulf %166, %166 : vector<80x64xf32>
    %cst_60 = arith.constant dense<0.000000e+00> : vector<80xf32>
    %176 = vector.multi_reduction <add>, %175, %cst_60 [1] : vector<80x64xf32> to vector<80xf32>
    %177 = vector.shape_cast %176 : vector<80xf32> to vector<80x1xf32>
    %cst_61 = arith.constant 6.400000e+01 : f32
    %178 = vector.broadcast %cst_61 : f32 to vector<80x1xf32>
    %179 = arith.divf %177, %178 : vector<80x1xf32>
    %180 = arith.mulf %174, %174 : vector<80x1xf32>
    %181 = arith.subf %179, %180 : vector<80x1xf32>
    %182 = vector.broadcast %174 : vector<80x1xf32> to vector<80x64xf32>
    %183 = arith.subf %166, %182 : vector<80x64xf32>
    %cst_62 = arith.constant 9.99999996E-13 : f32
    %184 = vector.broadcast %cst_62 : f32 to vector<80x1xf32>
    %185 = arith.addf %181, %184 : vector<80x1xf32>
    %186 = math.rsqrt %185 : vector<80x1xf32>
    %187 = vector.broadcast %186 : vector<80x1xf32> to vector<80x64xf32>
    %188 = arith.mulf %183, %187 : vector<80x64xf32>
    %189 = vector.broadcast %168 : vector<1x64xf32> to vector<80x64xf32>
    %190 = arith.mulf %188, %189 : vector<80x64xf32>
    %191 = vector.broadcast %170 : vector<1x64xf32> to vector<80x64xf32>
    %192 = arith.addf %190, %191 : vector<80x64xf32>
    %193 = arith.truncf %192 : vector<80x64xf32> to vector<80x64xbf16>
    %c0_63 = arith.constant 0 : index
    %c0_64 = arith.constant 0 : index
    %c0_65 = arith.constant 0 : index
    %194 = vector.load %arg11[%c0_63, %c0_64, %c0_65] : memref<2x64x128xf32, #tpu.memory_space<vmem>>, vector<1x64x128xf32>
    %195 = vector.shape_cast %194 : vector<1x64x128xf32> to vector<64x128xf32>
    %196 = arith.truncf %195 : vector<64x128xf32> to vector<64x128xbf16>
    %cst_66 = arith.constant dense<0.000000e+00> : vector<80x128xf32>
    %197 = tpu.matmul %193, %196, %cst_66 {dimension_numbers = #tpu.dot_dimension_numbers<[1], [0], [0], [1], [0, 0, 1, 1], [], []>} : vector<80x64xbf16>, vector<64x128xbf16>, vector<80x128xf32> -> vector<80x128xf32>
    %c0_67 = arith.constant 0 : index
    %c0_68 = arith.constant 0 : index
    %c0_69 = arith.constant 0 : index
    %198 = vector.load %arg12[%c0_67, %c0_68, %c0_69] : memref<2x1x128xf32, #tpu.memory_space<vmem>>, vector<1x1x128xf32>
    %199 = vector.shape_cast %198 : vector<1x1x128xf32> to vector<1x128xf32>
    %200 = vector.broadcast %199 : vector<1x128xf32> to vector<80x128xf32>
    %201 = arith.addf %197, %200 : vector<80x128xf32>
    %202 = arith.mulf %201, %201 : vector<80x128xf32>
    %203 = arith.mulf %201, %202 : vector<80x128xf32>
    %cst_70 = arith.constant 4.471500e-02 : f32
    %204 = vector.broadcast %cst_70 : f32 to vector<80x128xf32>
    %205 = arith.mulf %204, %203 : vector<80x128xf32>
    %206 = arith.addf %201, %205 : vector<80x128xf32>
    %cst_71 = arith.constant 0.797884583 : f32
    %207 = vector.broadcast %cst_71 : f32 to vector<80x128xf32>
    %208 = arith.mulf %207, %206 : vector<80x128xf32>
    %209 = math.tanh %208 : vector<80x128xf32>
    %cst_72 = arith.constant 1.000000e+00 : f32
    %210 = vector.broadcast %cst_72 : f32 to vector<80x128xf32>
    %211 = arith.addf %210, %209 : vector<80x128xf32>
    %cst_73 = arith.constant 5.000000e-01 : f32
    %212 = vector.broadcast %cst_73 : f32 to vector<80x128xf32>
    %213 = arith.mulf %212, %211 : vector<80x128xf32>
    %214 = arith.mulf %201, %213 : vector<80x128xf32>
    %215 = arith.truncf %214 : vector<80x128xf32> to vector<80x128xbf16>
    %c0_74 = arith.constant 0 : index
    %c0_75 = arith.constant 0 : index
    %c0_76 = arith.constant 0 : index
    %216 = vector.load %arg13[%c0_74, %c0_75, %c0_76] : memref<2x128x64xf32, #tpu.memory_space<vmem>>, vector<1x128x64xf32>
    %217 = vector.shape_cast %216 : vector<1x128x64xf32> to vector<128x64xf32>
    %218 = arith.truncf %217 : vector<128x64xf32> to vector<128x64xbf16>
    %cst_77 = arith.constant dense<0.000000e+00> : vector<80x64xf32>
    %219 = tpu.matmul %215, %218, %cst_77 {dimension_numbers = #tpu.dot_dimension_numbers<[1], [0], [0], [1], [0, 0, 1, 1], [], []>} : vector<80x128xbf16>, vector<128x64xbf16>, vector<80x64xf32> -> vector<80x64xf32>
    %c0_78 = arith.constant 0 : index
    %c0_79 = arith.constant 0 : index
    %c0_80 = arith.constant 0 : index
    %220 = vector.load %arg14[%c0_78, %c0_79, %c0_80] : memref<2x1x64xf32, #tpu.memory_space<vmem>>, vector<1x1x64xf32>
    %221 = vector.shape_cast %220 : vector<1x1x64xf32> to vector<1x64xf32>
    %222 = vector.broadcast %221 : vector<1x64xf32> to vector<80x64xf32>
    %223 = arith.addf %219, %222 : vector<80x64xf32>
    %224 = arith.addf %192, %223 : vector<80x64xf32>
    %c0_81 = arith.constant 0 : index
    %c0_82 = arith.constant 0 : index
    %c0_83 = arith.constant 0 : index
    %225 = vector.load %arg15[%c0_81, %c0_82, %c0_83] : memref<2x1x64xf32, #tpu.memory_space<vmem>>, vector<1x1x64xf32>
    %226 = vector.shape_cast %225 : vector<1x1x64xf32> to vector<1x64xf32>
    %c0_84 = arith.constant 0 : index
    %c0_85 = arith.constant 0 : index
    %c0_86 = arith.constant 0 : index
    %227 = vector.load %arg16[%c0_84, %c0_85, %c0_86] : memref<2x1x64xf32, #tpu.memory_space<vmem>>, vector<1x1x64xf32>
    %228 = vector.shape_cast %227 : vector<1x1x64xf32> to vector<1x64xf32>
    %cst_87 = arith.constant dense<0.000000e+00> : vector<80xf32>
    %229 = vector.multi_reduction <add>, %224, %cst_87 [1] : vector<80x64xf32> to vector<80xf32>
    %230 = vector.shape_cast %229 : vector<80xf32> to vector<80x1xf32>
    %cst_88 = arith.constant 6.400000e+01 : f32
    %231 = vector.broadcast %cst_88 : f32 to vector<80x1xf32>
    %232 = arith.divf %230, %231 : vector<80x1xf32>
    %233 = arith.mulf %224, %224 : vector<80x64xf32>
    %cst_89 = arith.constant dense<0.000000e+00> : vector<80xf32>
    %234 = vector.multi_reduction <add>, %233, %cst_89 [1] : vector<80x64xf32> to vector<80xf32>
    %235 = vector.shape_cast %234 : vector<80xf32> to vector<80x1xf32>
    %cst_90 = arith.constant 6.400000e+01 : f32
    %236 = vector.broadcast %cst_90 : f32 to vector<80x1xf32>
    %237 = arith.divf %235, %236 : vector<80x1xf32>
    %238 = arith.mulf %232, %232 : vector<80x1xf32>
    %239 = arith.subf %237, %238 : vector<80x1xf32>
    %240 = vector.broadcast %232 : vector<80x1xf32> to vector<80x64xf32>
    %241 = arith.subf %224, %240 : vector<80x64xf32>
    %cst_91 = arith.constant 9.99999996E-13 : f32
    %242 = vector.broadcast %cst_91 : f32 to vector<80x1xf32>
    %243 = arith.addf %239, %242 : vector<80x1xf32>
    %244 = math.rsqrt %243 : vector<80x1xf32>
    %245 = vector.broadcast %244 : vector<80x1xf32> to vector<80x64xf32>
    %246 = arith.mulf %241, %245 : vector<80x64xf32>
    %247 = vector.broadcast %226 : vector<1x64xf32> to vector<80x64xf32>
    %248 = arith.mulf %246, %247 : vector<80x64xf32>
    %249 = vector.broadcast %228 : vector<1x64xf32> to vector<80x64xf32>
    %250 = arith.addf %248, %249 : vector<80x64xf32>
    %251 = arith.truncf %250 : vector<80x64xf32> to vector<80x64xbf16>
    %c1 = arith.constant 1 : index
    %c0_92 = arith.constant 0 : index
    %c0_93 = arith.constant 0 : index
    %252 = vector.load %arg5[%c1, %c0_92, %c0_93] : memref<2x64x192xf32, #tpu.memory_space<vmem>>, vector<1x64x192xf32>
    %253 = vector.shape_cast %252 : vector<1x64x192xf32> to vector<64x192xf32>
    %254 = arith.truncf %253 : vector<64x192xf32> to vector<64x192xbf16>
    %cst_94 = arith.constant dense<0.000000e+00> : vector<80x192xf32>
    %255 = tpu.matmul %251, %254, %cst_94 {dimension_numbers = #tpu.dot_dimension_numbers<[1], [0], [0], [1], [0, 0, 1, 1], [], []>} : vector<80x64xbf16>, vector<64x192xbf16>, vector<80x192xf32> -> vector<80x192xf32>
    %c1_95 = arith.constant 1 : index
    %c0_96 = arith.constant 0 : index
    %c0_97 = arith.constant 0 : index
    %256 = vector.load %arg6[%c1_95, %c0_96, %c0_97] : memref<2x1x192xf32, #tpu.memory_space<vmem>>, vector<1x1x192xf32>
    %257 = vector.shape_cast %256 : vector<1x1x192xf32> to vector<1x192xf32>
    %258 = vector.broadcast %257 : vector<1x192xf32> to vector<80x192xf32>
    %259 = arith.addf %255, %258 : vector<80x192xf32>
    %260 = vector.extract_strided_slice %259 {offsets = [0, 0], sizes = [80, 64], strides = [1, 1]} : vector<80x192xf32> to vector<80x64xf32>
    %261 = arith.truncf %260 : vector<80x64xf32> to vector<80x64xbf16>
    %262 = vector.extract_strided_slice %259 {offsets = [0, 64], sizes = [80, 64], strides = [1, 1]} : vector<80x192xf32> to vector<80x64xf32>
    %263 = arith.truncf %262 : vector<80x64xf32> to vector<80x64xbf16>
    %264 = vector.extract_strided_slice %259 {offsets = [0, 128], sizes = [80, 64], strides = [1, 1]} : vector<80x192xf32> to vector<80x64xf32>
    %265 = arith.truncf %264 : vector<80x64xf32> to vector<80x64xbf16>
    %c0_i32_98 = arith.constant 0 : i32
    %266 = arith.sitofp %c0_i32_98 : i32 to bf16
    %267 = vector.shape_cast %31 : vector<1x64xi1> to vector<1x64xi1>
    %268 = vector.broadcast %267 : vector<1x64xi1> to vector<80x64xi1>
    %269 = vector.broadcast %266 : bf16 to vector<80x64xbf16>
    %270 = arith.select %268, %261, %269 : vector<80x64xi1>, vector<80x64xbf16>
    %cst_99 = arith.constant dense<0.000000e+00> : vector<80x80xf32>
    %271 = tpu.matmul %270, %263, %cst_99 {dimension_numbers = #tpu.dot_dimension_numbers<[1], [1], [0], [0], [0, 0, 1, 0], [], []>} : vector<80x64xbf16>, vector<80x64xbf16>, vector<80x80xf32> -> vector<80x80xf32>
    %272 = arith.addf %271, %25 : vector<80x80xf32>
    %cst_100 = arith.constant dense<0xFF800000> : vector<80xf32>
    %273 = vector.multi_reduction <maximumf>, %272, %cst_100 [1] : vector<80x80xf32> to vector<80xf32>
    %274 = vector.shape_cast %273 : vector<80xf32> to vector<80x1xf32>
    %275 = vector.broadcast %274 : vector<80x1xf32> to vector<80x80xf32>
    %276 = arith.subf %272, %275 : vector<80x80xf32>
    %277 = math.exp %276 : vector<80x80xf32>
    %cst_101 = arith.constant dense<0.000000e+00> : vector<80xf32>
    %278 = vector.multi_reduction <add>, %277, %cst_101 [1] : vector<80x80xf32> to vector<80xf32>
    %279 = vector.shape_cast %278 : vector<80xf32> to vector<80x1xf32>
    %280 = vector.broadcast %279 : vector<80x1xf32> to vector<80x80xf32>
    %281 = arith.divf %277, %280 : vector<80x80xf32>
    %c0_i32_102 = arith.constant 0 : i32
    %282 = arith.sitofp %c0_i32_102 : i32 to bf16
    %283 = vector.shape_cast %31 : vector<1x64xi1> to vector<1x64xi1>
    %284 = vector.broadcast %283 : vector<1x64xi1> to vector<80x64xi1>
    %285 = vector.broadcast %282 : bf16 to vector<80x64xbf16>
    %286 = arith.select %284, %265, %285 : vector<80x64xi1>, vector<80x64xbf16>
    %287 = arith.truncf %281 : vector<80x80xf32> to vector<80x80xbf16>
    %cst_103 = arith.constant dense<0.000000e+00> : vector<80x64xf32>
    %288 = tpu.matmul %287, %286, %cst_103 {dimension_numbers = #tpu.dot_dimension_numbers<[1], [0], [0], [1], [0, 0, 1, 1], [], []>} : vector<80x80xbf16>, vector<80x64xbf16>, vector<80x64xf32> -> vector<80x64xf32>
    %c0_i32_104 = arith.constant 0 : i32
    %289 = arith.sitofp %c0_i32_104 : i32 to bf16
    %290 = vector.shape_cast %36 : vector<1x64xi1> to vector<1x64xi1>
    %291 = vector.broadcast %290 : vector<1x64xi1> to vector<80x64xi1>
    %292 = vector.broadcast %289 : bf16 to vector<80x64xbf16>
    %293 = arith.select %291, %261, %292 : vector<80x64xi1>, vector<80x64xbf16>
    %cst_105 = arith.constant dense<0.000000e+00> : vector<80x80xf32>
    %294 = tpu.matmul %293, %263, %cst_105 {dimension_numbers = #tpu.dot_dimension_numbers<[1], [1], [0], [0], [0, 0, 1, 0], [], []>} : vector<80x64xbf16>, vector<80x64xbf16>, vector<80x80xf32> -> vector<80x80xf32>
    %295 = arith.addf %294, %25 : vector<80x80xf32>
    %cst_106 = arith.constant dense<0xFF800000> : vector<80xf32>
    %296 = vector.multi_reduction <maximumf>, %295, %cst_106 [1] : vector<80x80xf32> to vector<80xf32>
    %297 = vector.shape_cast %296 : vector<80xf32> to vector<80x1xf32>
    %298 = vector.broadcast %297 : vector<80x1xf32> to vector<80x80xf32>
    %299 = arith.subf %295, %298 : vector<80x80xf32>
    %300 = math.exp %299 : vector<80x80xf32>
    %cst_107 = arith.constant dense<0.000000e+00> : vector<80xf32>
    %301 = vector.multi_reduction <add>, %300, %cst_107 [1] : vector<80x80xf32> to vector<80xf32>
    %302 = vector.shape_cast %301 : vector<80xf32> to vector<80x1xf32>
    %303 = vector.broadcast %302 : vector<80x1xf32> to vector<80x80xf32>
    %304 = arith.divf %300, %303 : vector<80x80xf32>
    %c0_i32_108 = arith.constant 0 : i32
    %305 = arith.sitofp %c0_i32_108 : i32 to bf16
    %306 = vector.shape_cast %36 : vector<1x64xi1> to vector<1x64xi1>
    %307 = vector.broadcast %306 : vector<1x64xi1> to vector<80x64xi1>
    %308 = vector.broadcast %305 : bf16 to vector<80x64xbf16>
    %309 = arith.select %307, %265, %308 : vector<80x64xi1>, vector<80x64xbf16>
    %310 = arith.truncf %304 : vector<80x80xf32> to vector<80x80xbf16>
    %cst_109 = arith.constant dense<0.000000e+00> : vector<80x64xf32>
    %311 = tpu.matmul %310, %309, %cst_109 {dimension_numbers = #tpu.dot_dimension_numbers<[1], [0], [0], [1], [0, 0, 1, 1], [], []>} : vector<80x80xbf16>, vector<80x64xbf16>, vector<80x64xf32> -> vector<80x64xf32>
    %312 = arith.addf %288, %311 : vector<80x64xf32>
    %c0_i32_110 = arith.constant 0 : i32
    %313 = arith.sitofp %c0_i32_110 : i32 to bf16
    %314 = vector.shape_cast %41 : vector<1x64xi1> to vector<1x64xi1>
    %315 = vector.broadcast %314 : vector<1x64xi1> to vector<80x64xi1>
    %316 = vector.broadcast %313 : bf16 to vector<80x64xbf16>
    %317 = arith.select %315, %261, %316 : vector<80x64xi1>, vector<80x64xbf16>
    %cst_111 = arith.constant dense<0.000000e+00> : vector<80x80xf32>
    %318 = tpu.matmul %317, %263, %cst_111 {dimension_numbers = #tpu.dot_dimension_numbers<[1], [1], [0], [0], [0, 0, 1, 0], [], []>} : vector<80x64xbf16>, vector<80x64xbf16>, vector<80x80xf32> -> vector<80x80xf32>
    %319 = arith.addf %318, %25 : vector<80x80xf32>
    %cst_112 = arith.constant dense<0xFF800000> : vector<80xf32>
    %320 = vector.multi_reduction <maximumf>, %319, %cst_112 [1] : vector<80x80xf32> to vector<80xf32>
    %321 = vector.shape_cast %320 : vector<80xf32> to vector<80x1xf32>
    %322 = vector.broadcast %321 : vector<80x1xf32> to vector<80x80xf32>
    %323 = arith.subf %319, %322 : vector<80x80xf32>
    %324 = math.exp %323 : vector<80x80xf32>
    %cst_113 = arith.constant dense<0.000000e+00> : vector<80xf32>
    %325 = vector.multi_reduction <add>, %324, %cst_113 [1] : vector<80x80xf32> to vector<80xf32>
    %326 = vector.shape_cast %325 : vector<80xf32> to vector<80x1xf32>
    %327 = vector.broadcast %326 : vector<80x1xf32> to vector<80x80xf32>
    %328 = arith.divf %324, %327 : vector<80x80xf32>
    %c0_i32_114 = arith.constant 0 : i32
    %329 = arith.sitofp %c0_i32_114 : i32 to bf16
    %330 = vector.shape_cast %41 : vector<1x64xi1> to vector<1x64xi1>
    %331 = vector.broadcast %330 : vector<1x64xi1> to vector<80x64xi1>
    %332 = vector.broadcast %329 : bf16 to vector<80x64xbf16>
    %333 = arith.select %331, %265, %332 : vector<80x64xi1>, vector<80x64xbf16>
    %334 = arith.truncf %328 : vector<80x80xf32> to vector<80x80xbf16>
    %cst_115 = arith.constant dense<0.000000e+00> : vector<80x64xf32>
    %335 = tpu.matmul %334, %333, %cst_115 {dimension_numbers = #tpu.dot_dimension_numbers<[1], [0], [0], [1], [0, 0, 1, 1], [], []>} : vector<80x80xbf16>, vector<80x64xbf16>, vector<80x64xf32> -> vector<80x64xf32>
    %336 = arith.addf %312, %335 : vector<80x64xf32>
    %c0_i32_116 = arith.constant 0 : i32
    %337 = arith.sitofp %c0_i32_116 : i32 to bf16
    %338 = vector.shape_cast %46 : vector<1x64xi1> to vector<1x64xi1>
    %339 = vector.broadcast %338 : vector<1x64xi1> to vector<80x64xi1>
    %340 = vector.broadcast %337 : bf16 to vector<80x64xbf16>
    %341 = arith.select %339, %261, %340 : vector<80x64xi1>, vector<80x64xbf16>
    %cst_117 = arith.constant dense<0.000000e+00> : vector<80x80xf32>
    %342 = tpu.matmul %341, %263, %cst_117 {dimension_numbers = #tpu.dot_dimension_numbers<[1], [1], [0], [0], [0, 0, 1, 0], [], []>} : vector<80x64xbf16>, vector<80x64xbf16>, vector<80x80xf32> -> vector<80x80xf32>
    %343 = arith.addf %342, %25 : vector<80x80xf32>
    %cst_118 = arith.constant dense<0xFF800000> : vector<80xf32>
    %344 = vector.multi_reduction <maximumf>, %343, %cst_118 [1] : vector<80x80xf32> to vector<80xf32>
    %345 = vector.shape_cast %344 : vector<80xf32> to vector<80x1xf32>
    %346 = vector.broadcast %345 : vector<80x1xf32> to vector<80x80xf32>
    %347 = arith.subf %343, %346 : vector<80x80xf32>
    %348 = math.exp %347 : vector<80x80xf32>
    %cst_119 = arith.constant dense<0.000000e+00> : vector<80xf32>
    %349 = vector.multi_reduction <add>, %348, %cst_119 [1] : vector<80x80xf32> to vector<80xf32>
    %350 = vector.shape_cast %349 : vector<80xf32> to vector<80x1xf32>
    %351 = vector.broadcast %350 : vector<80x1xf32> to vector<80x80xf32>
    %352 = arith.divf %348, %351 : vector<80x80xf32>
    %c0_i32_120 = arith.constant 0 : i32
    %353 = arith.sitofp %c0_i32_120 : i32 to bf16
    %354 = vector.shape_cast %46 : vector<1x64xi1> to vector<1x64xi1>
    %355 = vector.broadcast %354 : vector<1x64xi1> to vector<80x64xi1>
    %356 = vector.broadcast %353 : bf16 to vector<80x64xbf16>
    %357 = arith.select %355, %265, %356 : vector<80x64xi1>, vector<80x64xbf16>
    %358 = arith.truncf %352 : vector<80x80xf32> to vector<80x80xbf16>
    %cst_121 = arith.constant dense<0.000000e+00> : vector<80x64xf32>
    %359 = tpu.matmul %358, %357, %cst_121 {dimension_numbers = #tpu.dot_dimension_numbers<[1], [0], [0], [1], [0, 0, 1, 1], [], []>} : vector<80x80xbf16>, vector<80x64xbf16>, vector<80x64xf32> -> vector<80x64xf32>
    %360 = arith.addf %336, %359 : vector<80x64xf32>
    %361 = arith.truncf %360 : vector<80x64xf32> to vector<80x64xbf16>
    %c1_122 = arith.constant 1 : index
    %c0_123 = arith.constant 0 : index
    %c0_124 = arith.constant 0 : index
    %362 = vector.load %arg7[%c1_122, %c0_123, %c0_124] : memref<2x64x64xf32, #tpu.memory_space<vmem>>, vector<1x64x64xf32>
    %363 = vector.shape_cast %362 : vector<1x64x64xf32> to vector<64x64xf32>
    %364 = arith.truncf %363 : vector<64x64xf32> to vector<64x64xbf16>
    %cst_125 = arith.constant dense<0.000000e+00> : vector<80x64xf32>
    %365 = tpu.matmul %361, %364, %cst_125 {dimension_numbers = #tpu.dot_dimension_numbers<[1], [0], [0], [1], [0, 0, 1, 1], [], []>} : vector<80x64xbf16>, vector<64x64xbf16>, vector<80x64xf32> -> vector<80x64xf32>
    %c1_126 = arith.constant 1 : index
    %c0_127 = arith.constant 0 : index
    %c0_128 = arith.constant 0 : index
    %366 = vector.load %arg8[%c1_126, %c0_127, %c0_128] : memref<2x1x64xf32, #tpu.memory_space<vmem>>, vector<1x1x64xf32>
    %367 = vector.shape_cast %366 : vector<1x1x64xf32> to vector<1x64xf32>
    %368 = vector.broadcast %367 : vector<1x64xf32> to vector<80x64xf32>
    %369 = arith.addf %365, %368 : vector<80x64xf32>
    %370 = arith.addf %250, %369 : vector<80x64xf32>
    %c1_129 = arith.constant 1 : index
    %c0_130 = arith.constant 0 : index
    %c0_131 = arith.constant 0 : index
    %371 = vector.load %arg9[%c1_129, %c0_130, %c0_131] : memref<2x1x64xf32, #tpu.memory_space<vmem>>, vector<1x1x64xf32>
    %372 = vector.shape_cast %371 : vector<1x1x64xf32> to vector<1x64xf32>
    %c1_132 = arith.constant 1 : index
    %c0_133 = arith.constant 0 : index
    %c0_134 = arith.constant 0 : index
    %373 = vector.load %arg10[%c1_132, %c0_133, %c0_134] : memref<2x1x64xf32, #tpu.memory_space<vmem>>, vector<1x1x64xf32>
    %374 = vector.shape_cast %373 : vector<1x1x64xf32> to vector<1x64xf32>
    %cst_135 = arith.constant dense<0.000000e+00> : vector<80xf32>
    %375 = vector.multi_reduction <add>, %370, %cst_135 [1] : vector<80x64xf32> to vector<80xf32>
    %376 = vector.shape_cast %375 : vector<80xf32> to vector<80x1xf32>
    %cst_136 = arith.constant 6.400000e+01 : f32
    %377 = vector.broadcast %cst_136 : f32 to vector<80x1xf32>
    %378 = arith.divf %376, %377 : vector<80x1xf32>
    %379 = arith.mulf %370, %370 : vector<80x64xf32>
    %cst_137 = arith.constant dense<0.000000e+00> : vector<80xf32>
    %380 = vector.multi_reduction <add>, %379, %cst_137 [1] : vector<80x64xf32> to vector<80xf32>
    %381 = vector.shape_cast %380 : vector<80xf32> to vector<80x1xf32>
    %cst_138 = arith.constant 6.400000e+01 : f32
    %382 = vector.broadcast %cst_138 : f32 to vector<80x1xf32>
    %383 = arith.divf %381, %382 : vector<80x1xf32>
    %384 = arith.mulf %378, %378 : vector<80x1xf32>
    %385 = arith.subf %383, %384 : vector<80x1xf32>
    %386 = vector.broadcast %378 : vector<80x1xf32> to vector<80x64xf32>
    %387 = arith.subf %370, %386 : vector<80x64xf32>
    %cst_139 = arith.constant 9.99999996E-13 : f32
    %388 = vector.broadcast %cst_139 : f32 to vector<80x1xf32>
    %389 = arith.addf %385, %388 : vector<80x1xf32>
    %390 = math.rsqrt %389 : vector<80x1xf32>
    %391 = vector.broadcast %390 : vector<80x1xf32> to vector<80x64xf32>
    %392 = arith.mulf %387, %391 : vector<80x64xf32>
    %393 = vector.broadcast %372 : vector<1x64xf32> to vector<80x64xf32>
    %394 = arith.mulf %392, %393 : vector<80x64xf32>
    %395 = vector.broadcast %374 : vector<1x64xf32> to vector<80x64xf32>
    %396 = arith.addf %394, %395 : vector<80x64xf32>
    %397 = arith.truncf %396 : vector<80x64xf32> to vector<80x64xbf16>
    %c1_140 = arith.constant 1 : index
    %c0_141 = arith.constant 0 : index
    %c0_142 = arith.constant 0 : index
    %398 = vector.load %arg11[%c1_140, %c0_141, %c0_142] : memref<2x64x128xf32, #tpu.memory_space<vmem>>, vector<1x64x128xf32>
    %399 = vector.shape_cast %398 : vector<1x64x128xf32> to vector<64x128xf32>
    %400 = arith.truncf %399 : vector<64x128xf32> to vector<64x128xbf16>
    %cst_143 = arith.constant dense<0.000000e+00> : vector<80x128xf32>
    %401 = tpu.matmul %397, %400, %cst_143 {dimension_numbers = #tpu.dot_dimension_numbers<[1], [0], [0], [1], [0, 0, 1, 1], [], []>} : vector<80x64xbf16>, vector<64x128xbf16>, vector<80x128xf32> -> vector<80x128xf32>
    %c1_144 = arith.constant 1 : index
    %c0_145 = arith.constant 0 : index
    %c0_146 = arith.constant 0 : index
    %402 = vector.load %arg12[%c1_144, %c0_145, %c0_146] : memref<2x1x128xf32, #tpu.memory_space<vmem>>, vector<1x1x128xf32>
    %403 = vector.shape_cast %402 : vector<1x1x128xf32> to vector<1x128xf32>
    %404 = vector.broadcast %403 : vector<1x128xf32> to vector<80x128xf32>
    %405 = arith.addf %401, %404 : vector<80x128xf32>
    %406 = arith.mulf %405, %405 : vector<80x128xf32>
    %407 = arith.mulf %405, %406 : vector<80x128xf32>
    %cst_147 = arith.constant 4.471500e-02 : f32
    %408 = vector.broadcast %cst_147 : f32 to vector<80x128xf32>
    %409 = arith.mulf %408, %407 : vector<80x128xf32>
    %410 = arith.addf %405, %409 : vector<80x128xf32>
    %cst_148 = arith.constant 0.797884583 : f32
    %411 = vector.broadcast %cst_148 : f32 to vector<80x128xf32>
    %412 = arith.mulf %411, %410 : vector<80x128xf32>
    %413 = math.tanh %412 : vector<80x128xf32>
    %cst_149 = arith.constant 1.000000e+00 : f32
    %414 = vector.broadcast %cst_149 : f32 to vector<80x128xf32>
    %415 = arith.addf %414, %413 : vector<80x128xf32>
    %cst_150 = arith.constant 5.000000e-01 : f32
    %416 = vector.broadcast %cst_150 : f32 to vector<80x128xf32>
    %417 = arith.mulf %416, %415 : vector<80x128xf32>
    %418 = arith.mulf %405, %417 : vector<80x128xf32>
    %419 = arith.truncf %418 : vector<80x128xf32> to vector<80x128xbf16>
    %c1_151 = arith.constant 1 : index
    %c0_152 = arith.constant 0 : index
    %c0_153 = arith.constant 0 : index
    %420 = vector.load %arg13[%c1_151, %c0_152, %c0_153] : memref<2x128x64xf32, #tpu.memory_space<vmem>>, vector<1x128x64xf32>
    %421 = vector.shape_cast %420 : vector<1x128x64xf32> to vector<128x64xf32>
    %422 = arith.truncf %421 : vector<128x64xf32> to vector<128x64xbf16>
    %cst_154 = arith.constant dense<0.000000e+00> : vector<80x64xf32>
    %423 = tpu.matmul %419, %422, %cst_154 {dimension_numbers = #tpu.dot_dimension_numbers<[1], [0], [0], [1], [0, 0, 1, 1], [], []>} : vector<80x128xbf16>, vector<128x64xbf16>, vector<80x64xf32> -> vector<80x64xf32>
    %c1_155 = arith.constant 1 : index
    %c0_156 = arith.constant 0 : index
    %c0_157 = arith.constant 0 : index
    %424 = vector.load %arg14[%c1_155, %c0_156, %c0_157] : memref<2x1x64xf32, #tpu.memory_space<vmem>>, vector<1x1x64xf32>
    %425 = vector.shape_cast %424 : vector<1x1x64xf32> to vector<1x64xf32>
    %426 = vector.broadcast %425 : vector<1x64xf32> to vector<80x64xf32>
    %427 = arith.addf %423, %426 : vector<80x64xf32>
    %428 = arith.addf %396, %427 : vector<80x64xf32>
    %c1_158 = arith.constant 1 : index
    %c0_159 = arith.constant 0 : index
    %c0_160 = arith.constant 0 : index
    %429 = vector.load %arg15[%c1_158, %c0_159, %c0_160] : memref<2x1x64xf32, #tpu.memory_space<vmem>>, vector<1x1x64xf32>
    %430 = vector.shape_cast %429 : vector<1x1x64xf32> to vector<1x64xf32>
    %c1_161 = arith.constant 1 : index
    %c0_162 = arith.constant 0 : index
    %c0_163 = arith.constant 0 : index
    %431 = vector.load %arg16[%c1_161, %c0_162, %c0_163] : memref<2x1x64xf32, #tpu.memory_space<vmem>>, vector<1x1x64xf32>
    %432 = vector.shape_cast %431 : vector<1x1x64xf32> to vector<1x64xf32>
    %cst_164 = arith.constant dense<0.000000e+00> : vector<80xf32>
    %433 = vector.multi_reduction <add>, %428, %cst_164 [1] : vector<80x64xf32> to vector<80xf32>
    %434 = vector.shape_cast %433 : vector<80xf32> to vector<80x1xf32>
    %cst_165 = arith.constant 6.400000e+01 : f32
    %435 = vector.broadcast %cst_165 : f32 to vector<80x1xf32>
    %436 = arith.divf %434, %435 : vector<80x1xf32>
    %437 = arith.mulf %428, %428 : vector<80x64xf32>
    %cst_166 = arith.constant dense<0.000000e+00> : vector<80xf32>
    %438 = vector.multi_reduction <add>, %437, %cst_166 [1] : vector<80x64xf32> to vector<80xf32>
    %439 = vector.shape_cast %438 : vector<80xf32> to vector<80x1xf32>
    %cst_167 = arith.constant 6.400000e+01 : f32
    %440 = vector.broadcast %cst_167 : f32 to vector<80x1xf32>
    %441 = arith.divf %439, %440 : vector<80x1xf32>
    %442 = arith.mulf %436, %436 : vector<80x1xf32>
    %443 = arith.subf %441, %442 : vector<80x1xf32>
    %444 = vector.broadcast %436 : vector<80x1xf32> to vector<80x64xf32>
    %445 = arith.subf %428, %444 : vector<80x64xf32>
    %cst_168 = arith.constant 9.99999996E-13 : f32
    %446 = vector.broadcast %cst_168 : f32 to vector<80x1xf32>
    %447 = arith.addf %443, %446 : vector<80x1xf32>
    %448 = math.rsqrt %447 : vector<80x1xf32>
    %449 = vector.broadcast %448 : vector<80x1xf32> to vector<80x64xf32>
    %450 = arith.mulf %445, %449 : vector<80x64xf32>
    %451 = vector.broadcast %430 : vector<1x64xf32> to vector<80x64xf32>
    %452 = arith.mulf %450, %451 : vector<80x64xf32>
    %453 = vector.broadcast %432 : vector<1x64xf32> to vector<80x64xf32>
    %454 = arith.addf %452, %453 : vector<80x64xf32>
    %455 = arith.truncf %454 : vector<80x64xf32> to vector<80x64xbf16>
    %c0_169 = arith.constant 0 : index
    %c0_170 = arith.constant 0 : index
    %456 = vector.load %arg17[%c0_169, %c0_170] : memref<64x128xf32, #tpu.memory_space<vmem>>, vector<64x128xf32>
    %457 = arith.truncf %456 : vector<64x128xf32> to vector<64x128xbf16>
    %cst_171 = arith.constant dense<0.000000e+00> : vector<80x128xf32>
    %458 = tpu.matmul %455, %457, %cst_171 {dimension_numbers = #tpu.dot_dimension_numbers<[1], [0], [0], [1], [0, 0, 1, 1], [], []>} : vector<80x64xbf16>, vector<64x128xbf16>, vector<80x128xf32> -> vector<80x128xf32>
    %c0_172 = arith.constant 0 : index
    %c0_173 = arith.constant 0 : index
    %459 = vector.load %arg18[%c0_172, %c0_173] : memref<1x128xf32, #tpu.memory_space<vmem>>, vector<1x128xf32>
    %460 = vector.broadcast %459 : vector<1x128xf32> to vector<80x128xf32>
    %461 = arith.addf %458, %460 : vector<80x128xf32>
    %cst_174 = arith.constant dense<0xFF800000> : vector<80xf32>
    %462 = vector.multi_reduction <maximumf>, %461, %cst_174 [1] : vector<80x128xf32> to vector<80xf32>
    %463 = vector.shape_cast %462 : vector<80xf32> to vector<80x1xf32>
    %464 = vector.broadcast %463 : vector<80x1xf32> to vector<80x128xf32>
    %465 = arith.subf %461, %464 : vector<80x128xf32>
    %466 = math.exp %465 : vector<80x128xf32>
    %cst_175 = arith.constant dense<0.000000e+00> : vector<80xf32>
    %467 = vector.multi_reduction <add>, %466, %cst_175 [1] : vector<80x128xf32> to vector<80xf32>
    %468 = vector.shape_cast %467 : vector<80xf32> to vector<80x1xf32>
    %469 = vector.broadcast %468 : vector<80x1xf32> to vector<80x128xf32>
    %470 = arith.divf %466, %469 : vector<80x128xf32>
    %c0_176 = arith.constant 0 : index
    %c0_177 = arith.constant 0 : index
    %471 = vector.load %arg19[%c0_176, %c0_177] : memref<80x128xf32, #tpu.memory_space<vmem>>, vector<80x128xf32>
    tpu.vector_store %arg19[%c0_176, %c0_177], %470 {strides = array<i32>} : memref<80x128xf32, #tpu.memory_space<vmem>>, vector<80x128xf32>,
    return
  }
  func.func @transform_0(%arg0: i32) -> (i32, i32) {
    %c0_i32 = arith.constant 0 : i32
    %c0_i32_0 = arith.constant 0 : i32
    %c0_i32_1 = arith.constant 0 : i32
    return %c0_i32, %c0_i32_0 : i32, i32
  }
  func.func @transform_1(%arg0: i32) -> (i32, i32) {
    %c0_i32 = arith.constant 0 : i32
    %c0_i32_0 = arith.constant 0 : i32
    %c0_i32_1 = arith.constant 0 : i32
    return %c0_i32, %c0_i32_0 : i32, i32
  }
  func.func @transform_2(%arg0: i32) -> (i32, i32) {
    %c0_i32 = arith.constant 0 : i32
    %c0_i32_0 = arith.constant 0 : i32
    %c0_i32_1 = arith.constant 0 : i32
    return %c0_i32, %c0_i32_0 : i32, i32
  }
  func.func @transform_3(%arg0: i32) -> (i32, i32) {
    %c0_i32 = arith.constant 0 : i32
    %c0_i32_0 = arith.constant 0 : i32
    %c0_i32_1 = arith.constant 0 : i32
    return %c0_i32, %c0_i32_0 : i32, i32
  }
  func.func @transform_4(%arg0: i32) -> (i32, i32, i32) {
    %c0_i32 = arith.constant 0 : i32
    %c0_i32_0 = arith.constant 0 : i32
    %c0_i32_1 = arith.constant 0 : i32
    %c0_i32_2 = arith.constant 0 : i32
    return %c0_i32, %c0_i32_0, %c0_i32_1 : i32, i32, i32
  }
  func.func @transform_5(%arg0: i32) -> (i32, i32, i32) {
    %c0_i32 = arith.constant 0 : i32
    %c0_i32_0 = arith.constant 0 : i32
    %c0_i32_1 = arith.constant 0 : i32
    %c0_i32_2 = arith.constant 0 : i32
    return %c0_i32, %c0_i32_0, %c0_i32_1 : i32, i32, i32
  }
  func.func @transform_6(%arg0: i32) -> (i32, i32, i32) {
    %c0_i32 = arith.constant 0 : i32
    %c0_i32_0 = arith.constant 0 : i32
    %c0_i32_1 = arith.constant 0 : i32
    %c0_i32_2 = arith.constant 0 : i32
    return %c0_i32, %c0_i32_0, %c0_i32_1 : i32, i32, i32
  }
  func.func @transform_7(%arg0: i32) -> (i32, i32, i32) {
    %c0_i32 = arith.constant 0 : i32
    %c0_i32_0 = arith.constant 0 : i32
    %c0_i32_1 = arith.constant 0 : i32
    %c0_i32_2 = arith.constant 0 : i32
    return %c0_i32, %c0_i32_0, %c0_i32_1 : i32, i32, i32
  }
  func.func @transform_8(%arg0: i32) -> (i32, i32, i32) {
    %c0_i32 = arith.constant 0 : i32
    %c0_i32_0 = arith.constant 0 : i32
    %c0_i32_1 = arith.constant 0 : i32
    %c0_i32_2 = arith.constant 0 : i32
    return %c0_i32, %c0_i32_0, %c0_i32_1 : i32, i32, i32
  }
  func.func @transform_9(%arg0: i32) -> (i32, i32, i32) {
    %c0_i32 = arith.constant 0 : i32
    %c0_i32_0 = arith.constant 0 : i32
    %c0_i32_1 = arith.constant 0 : i32
    %c0_i32_2 = arith.constant 0 : i32
    return %c0_i32, %c0_i32_0, %c0_i32_1 : i32, i32, i32
  }
  func.func @transform_10(%arg0: i32) -> (i32, i32, i32) {
    %c0_i32 = arith.constant 0 : i32
    %c0_i32_0 = arith.constant 0 : i32
    %c0_i32_1 = arith.constant 0 : i32
    %c0_i32_2 = arith.constant 0 : i32
    return %c0_i32, %c0_i32_0, %c0_i32_1 : i32, i32, i32
  }
  func.func @transform_11(%arg0: i32) -> (i32, i32, i32) {
    %c0_i32 = arith.constant 0 : i32
    %c0_i32_0 = arith.constant 0 : i32
    %c0_i32_1 = arith.constant 0 : i32
    %c0_i32_2 = arith.constant 0 : i32
    return %c0_i32, %c0_i32_0, %c0_i32_1 : i32, i32, i32
  }
  func.func @transform_12(%arg0: i32) -> (i32, i32, i32) {
    %c0_i32 = arith.constant 0 : i32
    %c0_i32_0 = arith.constant 0 : i32
    %c0_i32_1 = arith.constant 0 : i32
    %c0_i32_2 = arith.constant 0 : i32
    return %c0_i32, %c0_i32_0, %c0_i32_1 : i32, i32, i32
  }
  func.func @transform_13(%arg0: i32) -> (i32, i32, i32) {
    %c0_i32 = arith.constant 0 : i32
    %c0_i32_0 = arith.constant 0 : i32
    %c0_i32_1 = arith.constant 0 : i32
    %c0_i32_2 = arith.constant 0 : i32
    return %c0_i32, %c0_i32_0, %c0_i32_1 : i32, i32, i32
  }
  func.func @transform_14(%arg0: i32) -> (i32, i32, i32) {
    %c0_i32 = arith.constant 0 : i32
    %c0_i32_0 = arith.constant 0 : i32
    %c0_i32_1 = arith.constant 0 : i32
    %c0_i32_2 = arith.constant 0 : i32
    return %c0_i32, %c0_i32_0, %c0_i32_1 : i32, i32, i32
  }
  func.func @transform_15(%arg0: i32) -> (i32, i32, i32) {
    %c0_i32 = arith.constant 0 : i32
    %c0_i32_0 = arith.constant 0 : i32
    %c0_i32_1 = arith.constant 0 : i32
    %c0_i32_2 = arith.constant 0 : i32
    return %c0_i32, %c0_i32_0, %c0_i32_1 : i32, i32, i32
  }
  func.func @transform_16(%arg0: i32) -> (i32, i32) {
    %c0_i32 = arith.constant 0 : i32
    %c0_i32_0 = arith.constant 0 : i32
    %c0_i32_1 = arith.constant 0 : i32
    return %c0_i32, %c0_i32_0 : i32, i32
  }
  func.func @transform_17(%arg0: i32) -> (i32, i32) {
    %c0_i32 = arith.constant 0 : i32
    %c0_i32_0 = arith.constant 0 : i32
    %c0_i32_1 = arith.constant 0 : i32
    return %c0_i32, %c0_i32_0 : i32, i32
  }
  func.func @transform_18(%arg0: i32) -> (i32, i32) {
    %c0_i32 = arith.constant 0 : i32
    %c0_i32_0 = arith.constant 0 : i32
    %c0_i32_1 = arith.constant 0 : i32
    return %c0_i32, %c0_i32_0 : i32, i32
  }
}

</mosaic_0001>

<llo_original>
// kernel: language_model_forward.1
$region0: #{language_model_forward.1}
  #allocation0 [shape = 'u32[]', space=smem, size = 0x4, offset = 0x4, fixed_abs, tag = 'smem constant byte address 0x4 - core index']
  #allocation1 [shape = 'u32[72,128]{1,0:T(1,128)}', space=vmem, size = 0x9000, scoped, tag = 'internal scratch']
  %s0 = inlined_call_operand.vmem [shape: f32[80,80], index: 0, kind: input, shape index: {}]
  %s1 = inlined_call_operand.vmem [shape: f32[80,64], index: 1, kind: input, shape index: {}]
  %s2 = inlined_call_operand.vmem [shape: f32[1,64], index: 2, kind: input, shape index: {}]
  %s3 = inlined_call_operand.vmem [shape: f32[1,64], index: 3, kind: input, shape index: {}]
  %s4 = inlined_call_operand.vmem [shape: f32[2,64,192], index: 4, kind: input, shape index: {}]
  %s5 = inlined_call_operand.vmem [shape: f32[2,1,192], index: 5, kind: input, shape index: {}]
  %s6 = inlined_call_operand.vmem [shape: f32[2,64,64], index: 6, kind: input, shape index: {}]
  %s7 = inlined_call_operand.vmem [shape: f32[2,1,64], index: 7, kind: input, shape index: {}]
  %s8 = inlined_call_operand.vmem [shape: f32[2,1,64], index: 8, kind: input, shape index: {}]
  %s9 = inlined_call_operand.vmem [shape: f32[2,1,64], index: 9, kind: input, shape index: {}]
  %s10 = inlined_call_operand.vmem [shape: f32[2,64,128], index: 10, kind: input, shape index: {}]
  %s11 = inlined_call_operand.vmem [shape: f32[2,1,128], index: 11, kind: input, shape index: {}]
  %s12 = inlined_call_operand.vmem [shape: f32[2,128,64], index: 12, kind: input, shape index: {}]
  %s13 = inlined_call_operand.vmem [shape: f32[2,1,64], index: 13, kind: input, shape index: {}]
  %s14 = inlined_call_operand.vmem [shape: f32[2,1,64], index: 14, kind: input, shape index: {}]
  %s15 = inlined_call_operand.vmem [shape: f32[2,1,64], index: 15, kind: input, shape index: {}]
  %s16 = inlined_call_operand.vmem [shape: f32[64,128], index: 16, kind: input, shape index: {}]
  %s17 = inlined_call_operand.vmem [shape: f32[1,128], index: 17, kind: input, shape index: {}]
  %s18 = inlined_call_operand.hbm [shape: f32[80,128], index: 18, kind: output, shape index: {}]
  %s19 = sld [smem:[#allocation0]]
  $region82: #{language_model_forward.1} parent=0
    _
  %s21 = ssub.s32 1, %s19
  %s22 = scalar_select 0, %s21, %s19
  $region1: #{language_model_forward.1} parent=0
    #allocation2 [shape = 'u8[40960]{0}', space=vmem, size = 0xa000, scoped, tag = 'output window, operand 0, single buffered']
    #allocation3 [shape = 's32[1]{0}', space=sflag, size = 0x4, scoped, tag = 'scoped memory for language_model_forward.1']
    %23 = vsyncpa [#allocation3], 0
    // Predicated region
    $region2: #{language_model_forward.1} parent=1 // pred_check
      _
    $region3: #{language_model_forward.1} parent=1 // pred_check_branch
      %25 = sbr.rel (0) target = $region5
    $region4: #{language_model_forward.1} parent=1 // pred_region
      _
    $region5: #{language_model_forward.1} parent=1 // pred_fallthru
      _
    // Predicated region
    $region6: #{language_model_forward.1} parent=1 // pred_check
      _
    $region7: #{language_model_forward.1} parent=1 // pred_check_branch
      %27 = sbr.rel (0) target = $region9
    $region8: #{language_model_forward.1} parent=1 // pred_region
      _
    $region9: #{language_model_forward.1} parent=1 // pred_fallthru
      _
    // Predicated region
    $region10: #{language_model_forward.1} parent=1 // pred_check
      _
    $region11: #{language_model_forward.1} parent=1 // pred_check_branch
      %29 = sbr.rel (0) target = $region13
    $region12: #{language_model_forward.1} parent=1 // pred_region
      _
    $region13: #{language_model_forward.1} parent=1 // pred_fallthru
      _
    // Predicated region
    $region14: #{language_model_forward.1} parent=1 // pred_check
      _
    $region15: #{language_model_forward.1} parent=1 // pred_check_branch
      %31 = sbr.rel (0) target = $region17
    $region16: #{language_model_forward.1} parent=1 // pred_region
      _
    $region17: #{language_model_forward.1} parent=1 // pred_fallthru
      _
    // Predicated region
    $region18: #{language_model_forward.1} parent=1 // pred_check
      _
    $region19: #{language_model_forward.1} parent=1 // pred_check_branch
      %33 = sbr.rel (0) target = $region21
    $region20: #{language_model_forward.1} parent=1 // pred_region
      _
    $region21: #{language_model_forward.1} parent=1 // pred_fallthru
      _
    // Predicated region
    $region22: #{language_model_forward.1} parent=1 // pred_check
      _
    $region23: #{language_model_forward.1} parent=1 // pred_check_branch
      %35 = sbr.rel (0) target = $region25
    $region24: #{language_model_forward.1} parent=1 // pred_region
      _
    $region25: #{language_model_forward.1} parent=1 // pred_fallthru
      _
    // Predicated region
    $region26: #{language_model_forward.1} parent=1 // pred_check
      _
    $region27: #{language_model_forward.1} parent=1 // pred_check_branch
      %37 = sbr.rel (0) target = $region29
    $region28: #{language_model_forward.1} parent=1 // pred_region
      _
    $region29: #{language_model_forward.1} parent=1 // pred_fallthru
      _
    // Predicated region
    $region30: #{language_model_forward.1} parent=1 // pred_check
      _
    $region31: #{language_model_forward.1} parent=1 // pred_check_branch
      %39 = sbr.rel (0) target = $region33
    $region32: #{language_model_forward.1} parent=1 // pred_region
      _
    $region33: #{language_model_forward.1} parent=1 // pred_fallthru
      _
    // Predicated region
    $region34: #{language_model_forward.1} parent=1 // pred_check
      _
    $region35: #{language_model_forward.1} parent=1 // pred_check_branch
      %41 = sbr.rel (0) target = $region37
    $region36: #{language_model_forward.1} parent=1 // pred_region
      _
    $region37: #{language_model_forward.1} parent=1 // pred_fallthru
      _
    // Predicated region
    $region38: #{language_model_forward.1} parent=1 // pred_check
      _
    $region39: #{language_model_forward.1} parent=1 // pred_check_branch
      %43 = sbr.rel (0) target = $region41
    $region40: #{language_model_forward.1} parent=1 // pred_region
      _
    $region41: #{language_model_forward.1} parent=1 // pred_fallthru
      _
    // Predicated region
    $region42: #{language_model_forward.1} parent=1 // pred_check
      _
    $region43: #{language_model_forward.1} parent=1 // pred_check_branch
      %45 = sbr.rel (0) target = $region45
    $region44: #{language_model_forward.1} parent=1 // pred_region
      _
    $region45: #{language_model_forward.1} parent=1 // pred_fallthru
      _
    // Predicated region
    $region46: #{language_model_forward.1} parent=1 // pred_check
      _
    $region47: #{language_model_forward.1} parent=1 // pred_check_branch
      %47 = sbr.rel (0) target = $region49
    $region48: #{language_model_forward.1} parent=1 // pred_region
      _
    $region49: #{language_model_forward.1} parent=1 // pred_fallthru
      _
    // Predicated region
    $region50: #{language_model_forward.1} parent=1 // pred_check
      _
    $region51: #{language_model_forward.1} parent=1 // pred_check_branch
      %49 = sbr.rel (0) target = $region53
    $region52: #{language_model_forward.1} parent=1 // pred_region
      _
    $region53: #{language_model_forward.1} parent=1 // pred_fallthru
      _
    // Predicated region
    $region54: #{language_model_forward.1} parent=1 // pred_check
      _
    $region55: #{language_model_forward.1} parent=1 // pred_check_branch
      %51 = sbr.rel (0) target = $region57
    $region56: #{language_model_forward.1} parent=1 // pred_region
      _
    $region57: #{language_model_forward.1} parent=1 // pred_fallthru
      _
    // Predicated region
    $region58: #{language_model_forward.1} parent=1 // pred_check
      _
    $region59: #{language_model_forward.1} parent=1 // pred_check_branch
      %53 = sbr.rel (0) target = $region61
    $region60: #{language_model_forward.1} parent=1 // pred_region
      _
    $region61: #{language_model_forward.1} parent=1 // pred_fallthru
      _
    // Predicated region
    $region62: #{language_model_forward.1} parent=1 // pred_check
      _
    $region63: #{language_model_forward.1} parent=1 // pred_check_branch
      %55 = sbr.rel (0) target = $region65
    $region64: #{language_model_forward.1} parent=1 // pred_region
      _
    $region65: #{language_model_forward.1} parent=1 // pred_fallthru
      _
    // Predicated region
    $region66: #{language_model_forward.1} parent=1 // pred_check
      _
    $region67: #{language_model_forward.1} parent=1 // pred_check_branch
      %57 = sbr.rel (0) target = $region69
    $region68: #{language_model_forward.1} parent=1 // pred_region
      _
    $region69: #{language_model_forward.1} parent=1 // pred_fallthru
      _
    // Predicated region
    $region70: #{language_model_forward.1} parent=1 // pred_check
      _
    $region71: #{language_model_forward.1} parent=1 // pred_check_branch
      %59 = sbr.rel (0) target = $region73
    $region72: #{language_model_forward.1} parent=1 // pred_region
      _
    $region73: #{language_model_forward.1} parent=1 // pred_fallthru
      _
    %v61 = vld [vmem:[%s1] sm:$0xff]
    %v62 = vld [vmem:[%s1 + $0x8] sm:$0xff]
    %v63 = vld [vmem:[%s1 + $0x10] sm:$0xff]
    %v64 = vld [vmem:[%s1 + $0x18] sm:$0xff]
    %v65 = vld [vmem:[%s1 + $0x20] sm:$0xff]
    %v66 = vld [vmem:[%s1 + $0x28] sm:$0xff]
    %v67 = vld [vmem:[%s1 + $0x30] sm:$0xff]
    %v68 = vld [vmem:[%s1 + $0x38] sm:$0xff]
    %v69 = vld [vmem:[%s1 + $0x40] sm:$0xff]
    %v70 = vld [vmem:[%s1 + $0x48] sm:$0xff]
    %v71 = vld [vmem:[%s2] sm:$0x1]
    %v72 = vld [vmem:[%s3] sm:$0x1]
    %vm73 = vcmask 523264
    %v74 = vsel %vm73, %v61, 0.0
    %75 = vadd.xlane.f32.xlu0 %v74
    %v76 = vpop.xlane.xlu0 %75
    %v77 = vsel %vm73, %v62, 0.0
    %78 = vadd.xlane.f32.xlu0 %v77
    %v79 = vpop.xlane.xlu0 %78
    %v80 = vsel %vm73, %v63, 0.0
    %81 = vadd.xlane.f32.xlu0 %v80
    %v82 = vpop.xlane.xlu0 %81
    %v83 = vsel %vm73, %v64, 0.0
    %84 = vadd.xlane.f32.xlu0 %v83
    %v85 = vpop.xlane.xlu0 %84
    %v86 = vsel %vm73, %v65, 0.0
    %87 = vadd.xlane.f32.xlu0 %v86
    %v88 = vpop.xlane.xlu0 %87
    %v89 = vsel %vm73, %v66, 0.0
    %90 = vadd.xlane.f32.xlu0 %v89
    %v91 = vpop.xlane.xlu0 %90
    %v92 = vsel %vm73, %v67, 0.0
    %93 = vadd.xlane.f32.xlu0 %v92
    %v94 = vpop.xlane.xlu0 %93
    %v95 = vsel %vm73, %v68, 0.0
    %96 = vadd.xlane.f32.xlu0 %v95
    %v97 = vpop.xlane.xlu0 %96
    %v98 = vsel %vm73, %v69, 0.0
    %99 = vadd.xlane.f32.xlu0 %v98
    %v100 = vpop.xlane.xlu0 %99
    %v101 = vsel %vm73, %v70, 0.0
    %102 = vadd.xlane.f32.xlu0 %v101
    %v103 = vpop.xlane.xlu0 %102
    %v104 = vrcp.pop 64.0
    %v105 = vmul.f32 64.0, %v104
    %v106 = vsub.f32 1.0, %v105
    %v107 = vmul.f32 %v104, %v106
    %v108 = vadd.f32 %v104, %v107
    %vm109 = vweird.f32 %v104
    %v110 = vsel %vm109, %v104, %v108
    %v111 = vmul.f32 %v76, %v110
    %v112 = vmul.f32 %v79, %v110
    %v113 = vmul.f32 %v82, %v110
    %v114 = vmul.f32 %v85, %v110
    %v115 = vmul.f32 %v88, %v110
    %v116 = vmul.f32 %v91, %v110
    %v117 = vmul.f32 %v94, %v110
    %v118 = vmul.f32 %v97, %v110
    %v119 = vmul.f32 %v100, %v110
    %v120 = vmul.f32 %v103, %v110
    %v121 = vmul.f32 %v61, %v61
    %v122 = vmul.f32 %v62, %v62
    %v123 = vmul.f32 %v63, %v63
    %v124 = vmul.f32 %v64, %v64
    %v125 = vmul.f32 %v65, %v65
    %v126 = vmul.f32 %v66, %v66
    %v127 = vmul.f32 %v67, %v67
    %v128 = vmul.f32 %v68, %v68
    %v129 = vmul.f32 %v69, %v69
    %v130 = vmul.f32 %v70, %v70
    %v131 = vsel %vm73, %v121, 0.0
    %132 = vadd.xlane.f32.xlu0 %v131
    %v133 = vpop.xlane.xlu0 %132
    %v134 = vsel %vm73, %v122, 0.0
    %135 = vadd.xlane.f32.xlu0 %v134
    %v136 = vpop.xlane.xlu0 %135
    %v137 = vsel %vm73, %v123, 0.0
    %138 = vadd.xlane.f32.xlu0 %v137
    %v139 = vpop.xlane.xlu0 %138
    %v140 = vsel %vm73, %v124, 0.0
    %141 = vadd.xlane.f32.xlu0 %v140
    %v142 = vpop.xlane.xlu0 %141
    %v143 = vsel %vm73, %v125, 0.0
    %144 = vadd.xlane.f32.xlu0 %v143
    %v145 = vpop.xlane.xlu0 %144
    %v146 = vsel %vm73, %v126, 0.0
    %147 = vadd.xlane.f32.xlu0 %v146
    %v148 = vpop.xlane.xlu0 %147
    %v149 = vsel %vm73, %v127, 0.0
    %150 = vadd.xlane.f32.xlu0 %v149
    %v151 = vpop.xlane.xlu0 %150
    %v152 = vsel %vm73, %v128, 0.0
    %153 = vadd.xlane.f32.xlu0 %v152
    %v154 = vpop.xlane.xlu0 %153
    %v155 = vsel %vm73, %v129, 0.0
    %156 = vadd.xlane.f32.xlu0 %v155
    %v157 = vpop.xlane.xlu0 %156
    %v158 = vsel %vm73, %v130, 0.0
    %159 = vadd.xlane.f32.xlu0 %v158
    %v160 = vpop.xlane.xlu0 %159
    %v161 = vmul.f32 %v133, %v110
    %v162 = vmul.f32 %v136, %v110
    %v163 = vmul.f32 %v139, %v110
    %v164 = vmul.f32 %v142, %v110
    %v165 = vmul.f32 %v145, %v110
    %v166 = vmul.f32 %v148, %v110
    %v167 = vmul.f32 %v151, %v110
    %v168 = vmul.f32 %v154, %v110
    %v169 = vmul.f32 %v157, %v110
    %v170 = vmul.f32 %v160, %v110
    %v171 = vmul.f32 %v111, %v111
    %v172 = vmul.f32 %v112, %v112
    %v173 = vmul.f32 %v113, %v113
    %v174 = vmul.f32 %v114, %v114
    %v175 = vmul.f32 %v115, %v115
    %v176 = vmul.f32 %v116, %v116
    %v177 = vmul.f32 %v117, %v117
    %v178 = vmul.f32 %v118, %v118
    %v179 = vmul.f32 %v119, %v119
    %v180 = vmul.f32 %v120, %v120
    %v181 = vsub.f32 %v161, %v171
    %v182 = vsub.f32 %v162, %v172
    %v183 = vsub.f32 %v163, %v173
    %v184 = vsub.f32 %v164, %v174
    %v185 = vsub.f32 %v165, %v175
    %v186 = vsub.f32 %v166, %v176
    %v187 = vsub.f32 %v167, %v177
    %v188 = vsub.f32 %v168, %v178
    %v189 = vsub.f32 %v169, %v179
    %v190 = vsub.f32 %v170, %v180
    %v191 = vsub.f32 %v61, %v111
    %v192 = vsub.f32 %v62, %v112
    %v193 = vsub.f32 %v63, %v113
    %v194 = vsub.f32 %v64, %v114
    %v195 = vsub.f32 %v65, %v115
    %v196 = vsub.f32 %v66, %v116
    %v197 = vsub.f32 %v67, %v117
    %v198 = vsub.f32 %v68, %v118
    %v199 = vsub.f32 %v69, %v119
    %v200 = vsub.f32 %v70, %v120
    %v201 = vadd.f32 %v181, 1e-12
    %v202 = vadd.f32 %v182, 1e-12
    %v203 = vadd.f32 %v183, 1e-12
    %v204 = vadd.f32 %v184, 1e-12
    %v205 = vadd.f32 %v185, 1e-12
    %v206 = vadd.f32 %v186, 1e-12
    %v207 = vadd.f32 %v187, 1e-12
    %v208 = vadd.f32 %v188, 1e-12
    %v209 = vadd.f32 %v189, 1e-12
    %v210 = vadd.f32 %v190, 1e-12
    %v211 = vrsqrt.pop %v201
    %v212 = vmul.f32 %v211, %v201
    %v213 = vmul.f32 %v212, %v211
    %v214 = vmul.f32 0.5, %v213
    %v215 = vsub.f32 1.5, %v214
    %v216 = vmul.f32 %v211, %v215
    %vm217 = vweird.f32 %v201
    %vm218 = vweird.f32 %v211
    %vm219 = vmor %vm217, %vm218
    %v220 = vsel %vm219, %v211, %v216
    %v221 = vrsqrt.pop %v202
    %v222 = vmul.f32 %v221, %v202
    %v223 = vmul.f32 %v222, %v221
    %v224 = vmul.f32 0.5, %v223
    %v225 = vsub.f32 1.5, %v224
    %v226 = vmul.f32 %v221, %v225
    %vm227 = vweird.f32 %v202
    %vm228 = vweird.f32 %v221
    %vm229 = vmor %vm227, %vm228
    %v230 = vsel %vm229, %v221, %v226
    %v231 = vrsqrt.pop %v203
    %v232 = vmul.f32 %v231, %v203
    %v233 = vmul.f32 %v232, %v231
    %v234 = vmul.f32 0.5, %v233
    %v235 = vsub.f32 1.5, %v234
    %v236 = vmul.f32 %v231, %v235
    %vm237 = vweird.f32 %v203
    %vm238 = vweird.f32 %v231
    %vm239 = vmor %vm237, %vm238
    %v240 = vsel %vm239, %v231, %v236
    %v241 = vrsqrt.pop %v204
    %v242 = vmul.f32 %v241, %v204
    %v243 = vmul.f32 %v242, %v241
    %v244 = vmul.f32 0.5, %v243
    %v245 = vsub.f32 1.5, %v244
    %v246 = vmul.f32 %v241, %v245
    %vm247 = vweird.f32 %v204
    %vm248 = vweird.f32 %v241
    %vm249 = vmor %vm247, %vm248
    %v250 = vsel %vm249, %v241, %v246
    %v251 = vrsqrt.pop %v205
    %v252 = vmul.f32 %v251, %v205
    %v253 = vmul.f32 %v252, %v251
    %v254 = vmul.f32 0.5, %v253
    %v255 = vsub.f32 1.5, %v254
    %v256 = vmul.f32 %v251, %v255
    %vm257 = vweird.f32 %v205
    %vm258 = vweird.f32 %v251
    %vm259 = vmor %vm257, %vm258
    %v260 = vsel %vm259, %v251, %v256
    %v261 = vrsqrt.pop %v206
    %v262 = vmul.f32 %v261, %v206
    %v263 = vmul.f32 %v262, %v261
    %v264 = vmul.f32 0.5, %v263
    %v265 = vsub.f32 1.5, %v264
    %v266 = vmul.f32 %v261, %v265
    %vm267 = vweird.f32 %v206
    %vm268 = vweird.f32 %v261
    %vm269 = vmor %vm267, %vm268
    %v270 = vsel %vm269, %v261, %v266
    %v271 = vrsqrt.pop %v207
    %v272 = vmul.f32 %v271, %v207
    %v273 = vmul.f32 %v272, %v271
    %v274 = vmul.f32 0.5, %v273
    %v275 = vsub.f32 1.5, %v274
    %v276 = vmul.f32 %v271, %v275
    %vm277 = vweird.f32 %v207
    %vm278 = vweird.f32 %v271
    %vm279 = vmor %vm277, %vm278
    %v280 = vsel %vm279, %v271, %v276
    %v281 = vrsqrt.pop %v208
    %v282 = vmul.f32 %v281, %v208
    %v283 = vmul.f32 %v282, %v281
    %v284 = vmul.f32 0.5, %v283
    %v285 = vsub.f32 1.5, %v284
    %v286 = vmul.f32 %v281, %v285
    %vm287 = vweird.f32 %v208
    %vm288 = vweird.f32 %v281
    %vm289 = vmor %vm287, %vm288
    %v290 = vsel %vm289, %v281, %v286
    %v291 = vrsqrt.pop %v209
    %v292 = vmul.f32 %v291, %v209
    %v293 = vmul.f32 %v292, %v291
    %v294 = vmul.f32 0.5, %v293
    %v295 = vsub.f32 1.5, %v294
    %v296 = vmul.f32 %v291, %v295
    %vm297 = vweird.f32 %v209
    %vm298 = vweird.f32 %v291
    %vm299 = vmor %vm297, %vm298
    %v300 = vsel %vm299, %v291, %v296
    %v301 = vrsqrt.pop %v210
    %v302 = vmul.f32 %v301, %v210
    %v303 = vmul.f32 %v302, %v301
    %v304 = vmul.f32 0.5, %v303
    %v305 = vsub.f32 1.5, %v304
    %v306 = vmul.f32 %v301, %v305
    %vm307 = vweird.f32 %v210
    %vm308 = vweird.f32 %v301
    %vm309 = vmor %vm307, %vm308
    %v310 = vsel %vm309, %v301, %v306
    %v311 = vmul.f32 %v191, %v220
    %v312 = vmul.f32 %v192, %v230
    %v313 = vmul.f32 %v193, %v240
    %v314 = vmul.f32 %v194, %v250
    %v315 = vmul.f32 %v195, %v260
    %v316 = vmul.f32 %v196, %v270
    %v317 = vmul.f32 %v197, %v280
    %v318 = vmul.f32 %v198, %v290
    %v319 = vmul.f32 %v199, %v300
    %v320 = vmul.f32 %v200, %v310
    %v322 = vperm.slane %v71, 0
    %v324 = vmul.f32 %v311, %v322
    %v325 = vmul.f32 %v312, %v322
    %v326 = vmul.f32 %v313, %v322
    %v327 = vmul.f32 %v314, %v322
    %v328 = vmul.f32 %v315, %v322
    %v329 = vmul.f32 %v316, %v322
    %v330 = vmul.f32 %v317, %v322
    %v331 = vmul.f32 %v318, %v322
    %v332 = vmul.f32 %v319, %v322
    %v333 = vmul.f32 %v320, %v322
    %v335 = vperm.slane %v72, 0
    %v337 = vadd.f32 %v324, %v335
    %v338 = vadd.f32 %v325, %v335
    %v339 = vadd.f32 %v326, %v335
    %v340 = vadd.f32 %v327, %v335
    %v341 = vadd.f32 %v328, %v335
    %v342 = vadd.f32 %v329, %v335
    %v343 = vadd.f32 %v330, %v335
    %v344 = vadd.f32 %v331, %v335
    %v345 = vadd.f32 %v332, %v335
    %v346 = vadd.f32 %v333, %v335
    %v347 = vld [vmem:[%s0] sm:$0xff]
    %v348 = vld [vmem:[%s0 + $0x8] sm:$0xff]
    %v349 = vld [vmem:[%s0 + $0x10] sm:$0xff]
    %v350 = vld [vmem:[%s0 + $0x18] sm:$0xff]
    %v351 = vld [vmem:[%s0 + $0x20] sm:$0xff]
    %v352 = vld [vmem:[%s0 + $0x28] sm:$0xff]
    %v353 = vld [vmem:[%s0 + $0x30] sm:$0xff]
    %v354 = vld [vmem:[%s0 + $0x38] sm:$0xff]
    %v355 = vld [vmem:[%s0 + $0x40] sm:$0xff]
    %v356 = vld [vmem:[%s0 + $0x48] sm:$0xff]
    %v357 = vlaneseq
    %v358 = vand.u32 %v357, 127
    %vm359 = vcmp.ge.s32.totalorder %v358, 0
    %vm360 = vcmp.lt.s32.totalorder %v358, 16
    %vm361 = vmand %vm359, %vm360
    %vm362 = vcmp.ge.s32.totalorder %v358, 16
    %vm363 = vcmp.lt.s32.totalorder %v358, 32
    %vm364 = vmand %vm362, %vm363
    %vm365 = vcmp.ge.s32.totalorder %v358, 32
    %vm366 = vcmp.lt.s32.totalorder %v358, 48
    %vm367 = vmand %vm365, %vm366
    %vm368 = vcmp.ge.s32.totalorder %v358, 48
    %vm369 = vcmp.lt.s32.totalorder %v358, 64
    %vm370 = vmand %vm368, %vm369
    %v371 = vpack.c.bf16 %v338, %v337
    %v372 = vpack.c.bf16 %v340, %v339
    %v373 = vpack.c.bf16 %v342, %v341
    %v374 = vpack.c.bf16 %v344, %v343
    %v375 = vpack.c.bf16 %v346, %v345
    %v376 = vld [vmem:[%s4] sm:$0xff]
    %v377 = vld [vmem:[%s4 + $0x8] sm:$0xff]
    %v378 = vld [vmem:[%s4 + $0x10] sm:$0xff]
    %v379 = vld [vmem:[%s4 + $0x18] sm:$0xff]
    %v380 = vld [vmem:[%s4 + $0x20] sm:$0xff]
    %v381 = vld [vmem:[%s4 + $0x28] sm:$0xff]
    %v382 = vld [vmem:[%s4 + $0x30] sm:$0xff]
    %v383 = vld [vmem:[%s4 + $0x38] sm:$0xff]
    %v384 = vld [vmem:[%s4 + $0x40] sm:$0xff]
    %v385 = vld [vmem:[%s4 + $0x48] sm:$0xff]
    %v386 = vld [vmem:[%s4 + $0x50] sm:$0xff]
    %v387 = vld [vmem:[%s4 + $0x58] sm:$0xff]
    %v388 = vld [vmem:[%s4 + $0x60] sm:$0xff]
    %v389 = vld [vmem:[%s4 + $0x68] sm:$0xff]
    %v390 = vld [vmem:[%s4 + $0x70] sm:$0xff]
    %v391 = vld [vmem:[%s4 + $0x78] sm:$0xff]
    %v392 = vpack.c.bf16 %v378, %v376
    %v393 = vpack.c.bf16 %v379, %v377
    %v394 = vpack.c.bf16 %v382, %v380
    %v395 = vpack.c.bf16 %v383, %v381
    %v396 = vpack.c.bf16 %v386, %v384
    %v397 = vpack.c.bf16 %v387, %v385
    %v398 = vpack.c.bf16 %v390, %v388
    %v399 = vpack.c.bf16 %v391, %v389
    %v400 = vld [vmem:[%s5] sm:$0x3]
    %v402 = vperm.slane %v400, 0
    %v403 = vperm.slane %v400, 1
    %v407 = vsel %vm73, %v371, 0
    %v410 = vsel %vm73, %v372, 0
    %v413 = vsel %vm73, %v373, 0
    %v416 = vsel %vm73, %v374, 0
    %v419 = vsel %vm73, %v375, 0
    %421 = vmatpush.bf16.msra.mxu0 0
    %422 = vmatpush.bf16.msra.mxu0 0
    %423 = vmatpush.bf16.msra.mxu0 0
    %424 = vmatpush.bf16.msra.mxu0 0
    %425 = vmatpush.bf16.msra.mxu0 %v398
    %426 = vmatpush.bf16.msra.mxu0 %v396
    %427 = vmatpush.bf16.msra.mxu0 %v394
    %428 = vmatpush.bf16.msra.mxu0 %v392
    %429 = vmatmul.bf16.gmra.mxu0 %v407
    %v430 = vpop.f32.mrf.mxu0
    %v431 = vadd.f32 %v402, %v430
    %v432 = vpop.f32.mrf.mxu0
    %v433 = vadd.f32 %v402, %v432
    %434 = vmatmul.bf16.gmra.mxu0 %v410
    %v435 = vpop.f32.mrf.mxu0
    %v436 = vadd.f32 %v402, %v435
    %v437 = vpop.f32.mrf.mxu0
    %v438 = vadd.f32 %v402, %v437
    %439 = vmatmul.bf16.gmra.mxu0 %v413
    %v440 = vpop.f32.mrf.mxu0
    %v441 = vadd.f32 %v402, %v440
    %v442 = vpop.f32.mrf.mxu0
    %v443 = vadd.f32 %v402, %v442
    %444 = vmatmul.bf16.gmra.mxu0 %v416
    %v445 = vpop.f32.mrf.mxu0
    %v446 = vadd.f32 %v402, %v445
    %v447 = vpop.f32.mrf.mxu0
    %v448 = vadd.f32 %v402, %v447
    %449 = vmatmul.bf16.gmra.mxu0 %v419
    %v450 = vpop.f32.mrf.mxu0
    %v451 = vadd.f32 %v402, %v450
    %v452 = vpop.f32.mrf.mxu0
    %v453 = vadd.f32 %v402, %v452
    %454 = vdwg.mxu0
    %455 = vmatpush.bf16.msra.mxu0 0
    %456 = vmatpush.bf16.msra.mxu0 0
    %457 = vmatpush.bf16.msra.mxu0 0
    %458 = vmatpush.bf16.msra.mxu0 0
    %459 = vmatpush.bf16.msra.mxu0 %v399
    %460 = vmatpush.bf16.msra.mxu0 %v397
    %461 = vmatpush.bf16.msra.mxu0 %v395
    %462 = vmatpush.bf16.msra.mxu0 %v393
    %463 = vmatmul.bf16.gmra.mxu0 %v407
    %v464 = vpop.f32.mrf.mxu0
    %v465 = vadd.f32 %v403, %v464
    %v466 = vpop.f32.mrf.mxu0
    %v467 = vadd.f32 %v403, %v466
    %468 = vmatmul.bf16.gmra.mxu0 %v410
    %v469 = vpop.f32.mrf.mxu0
    %v470 = vadd.f32 %v403, %v469
    %v471 = vpop.f32.mrf.mxu0
    %v472 = vadd.f32 %v403, %v471
    %473 = vmatmul.bf16.gmra.mxu0 %v413
    %v474 = vpop.f32.mrf.mxu0
    %v475 = vadd.f32 %v403, %v474
    %v476 = vpop.f32.mrf.mxu0
    %v477 = vadd.f32 %v403, %v476
    %478 = vmatmul.bf16.gmra.mxu0 %v416
    %v479 = vpop.f32.mrf.mxu0
    %v480 = vadd.f32 %v403, %v479
    %v481 = vpop.f32.mrf.mxu0
    %v482 = vadd.f32 %v403, %v481
    %483 = vmatmul.bf16.gmra.mxu0 %v419
    %v484 = vpop.f32.mrf.mxu0
    %v485 = vadd.f32 %v403, %v484
    %v486 = vpop.f32.mrf.mxu0
    %v487 = vadd.f32 %v403, %v486
    %488 = vdwg.mxu0
    %v489 = vpack.c.bf16 %v431, %v431
    %v490 = vpack.c.bf16 %v433, %v433
    %v491 = vpack.c.bf16 %v436, %v436
    %v492 = vpack.c.bf16 %v438, %v438
    %v493 = vpack.c.bf16 %v441, %v441
    %v494 = vpack.c.bf16 %v443, %v443
    %v495 = vpack.c.bf16 %v446, %v446
    %v496 = vpack.c.bf16 %v448, %v448
    %v497 = vpack.c.bf16 %v451, %v451
    %v498 = vpack.c.bf16 %v453, %v453
    %v499 = vpack.c.bf16 %v433, %v431
    %v500 = vpack.c.bf16 %v438, %v436
    %v501 = vpack.c.bf16 %v443, %v441
    %v502 = vpack.c.bf16 %v448, %v446
    %v503 = vpack.c.bf16 %v453, %v451
    %v504 = vpack.c.bf16 %v465, %v465
    %v505 = vpack.c.bf16 %v467, %v467
    %v506 = vpack.c.bf16 %v470, %v470
    %v507 = vpack.c.bf16 %v472, %v472
    %v508 = vpack.c.bf16 %v475, %v475
    %v509 = vpack.c.bf16 %v477, %v477
    %v510 = vpack.c.bf16 %v480, %v480
    %v511 = vpack.c.bf16 %v482, %v482
    %v512 = vpack.c.bf16 %v485, %v485
    %v513 = vpack.c.bf16 %v487, %v487
    %v514 = vsel %vm361, 1, 0
    %vm515 = vcmp.eq.s32.totalorder %v514, 1
    %vm516 = vmpackc.low %vm515, %vm515
    %v517 = vsel %vm516, %v489, 0
    %v518 = vsel %vm516, %v490, 0
    %v519 = vsel %vm516, %v491, 0
    %v520 = vsel %vm516, %v492, 0
    %v521 = vsel %vm516, %v493, 0
    %v522 = vsel %vm516, %v494, 0
    %v523 = vsel %vm516, %v495, 0
    %v524 = vsel %vm516, %v496, 0
    %v525 = vsel %vm516, %v497, 0
    %v526 = vsel %vm516, %v498, 0
    %v537 = vunpack.c.l.b16 %v517
    %v538 = vunpack.c.l.b16 %v518
    %v539 = vunpack.c.l.b16 %v519
    %v540 = vunpack.c.l.b16 %v520
    %v541 = vunpack.c.l.b16 %v521
    %v542 = vunpack.c.l.b16 %v522
    %v543 = vunpack.c.l.b16 %v523
    %v544 = vunpack.c.l.b16 %v524
    %v545 = vunpack.c.l.b16 %v525
    %v546 = vunpack.c.l.b16 %v526
    %v547 = vpack.c.b16 %v538, %v537
    %v548 = vpack.c.b16 %v540, %v539
    %v549 = vpack.c.b16 %v542, %v541
    %v550 = vpack.c.b16 %v544, %v543
    %v551 = vpack.c.b16 %v546, %v545
    %557 = vrot.lane.b32.xlu0 %v499, 64
    %v558 = vpop.permute.xlu0 %557
    %559 = vrot.lane.b32.xlu0 %v500, 64
    %v560 = vpop.permute.xlu0 %559
    %561 = vrot.lane.b32.xlu0 %v501, 64
    %v562 = vpop.permute.xlu0 %561
    %563 = vrot.lane.b32.xlu0 %v502, 64
    %v564 = vpop.permute.xlu0 %563
    %565 = vrot.lane.b32.xlu0 %v503, 64
    %v566 = vpop.permute.xlu0 %565
    %v568 = vsel %vm73, %v547, 0
    %v571 = vsel %vm73, %v548, 0
    %v574 = vsel %vm73, %v549, 0
    %v577 = vsel %vm73, %v550, 0
    %v580 = vsel %vm73, %v551, 0
    %v583 = vsel %vm73, %v558, 0
    %v586 = vsel %vm73, %v560, 0
    %v589 = vsel %vm73, %v562, 0
    %v592 = vsel %vm73, %v564, 0
    %v595 = vsel %vm73, %v566, 0
    %597 = vmatpush.bf16.xpose.msra.mxu0 0
    %598 = vmatpush.bf16.xpose.msra.mxu0 0
    %599 = vmatpush.bf16.xpose.msra.mxu0 0
    %600 = vmatpush.bf16.xpose.msra.mxu0 %v595
    %601 = vmatpush.bf16.xpose.msra.mxu0 %v592
    %602 = vmatpush.bf16.xpose.msra.mxu0 %v589
    %603 = vmatpush.bf16.xpose.msra.mxu0 %v586
    %604 = vmatpush.bf16.xpose.msra.mxu0 %v583
    %605 = vmatmul.bf16.gmra.mxu0 %v568
    %v606 = vpop.f32.mrf.mxu0
    %v607 = vadd.f32 %v347, %v606
    %v608 = vpop.f32.mrf.mxu0
    %v609 = vadd.f32 %v348, %v608
    %610 = vmatmul.bf16.gmra.mxu0 %v571
    %v611 = vpop.f32.mrf.mxu0
    %v612 = vadd.f32 %v349, %v611
    %v613 = vpop.f32.mrf.mxu0
    %v614 = vadd.f32 %v350, %v613
    %615 = vmatmul.bf16.gmra.mxu0 %v574
    %v616 = vpop.f32.mrf.mxu0
    %v617 = vadd.f32 %v351, %v616
    %v618 = vpop.f32.mrf.mxu0
    %v619 = vadd.f32 %v352, %v618
    %620 = vmatmul.bf16.gmra.mxu0 %v577
    %v621 = vpop.f32.mrf.mxu0
    %v622 = vadd.f32 %v353, %v621
    %v623 = vpop.f32.mrf.mxu0
    %v624 = vadd.f32 %v354, %v623
    %625 = vmatmul.bf16.gmra.mxu0 %v580
    %v626 = vpop.f32.mrf.mxu0
    %v627 = vadd.f32 %v355, %v626
    %v628 = vpop.f32.mrf.mxu0
    %v629 = vadd.f32 %v356, %v628
    %630 = vdwg.mxu0
    %vm631 = vcmask 654336
    %v632 = vsel %vm631, %v607, -inf
    %633 = vmax.xlane.f32.xlu0 %v632
    %v634 = vpop.xlane.xlu0 %633
    %v635 = vsel %vm631, %v609, -inf
    %636 = vmax.xlane.f32.xlu0 %v635
    %v637 = vpop.xlane.xlu0 %636
    %v638 = vsel %vm631, %v612, -inf
    %639 = vmax.xlane.f32.xlu0 %v638
    %v640 = vpop.xlane.xlu0 %639
    %v641 = vsel %vm631, %v614, -inf
    %642 = vmax.xlane.f32.xlu0 %v641
    %v643 = vpop.xlane.xlu0 %642
    %v644 = vsel %vm631, %v617, -inf
    %645 = vmax.xlane.f32.xlu0 %v644
    %v646 = vpop.xlane.xlu0 %645
    %v647 = vsel %vm631, %v619, -inf
    %648 = vmax.xlane.f32.xlu0 %v647
    %v649 = vpop.xlane.xlu0 %648
    %v650 = vsel %vm631, %v622, -inf
    %651 = vmax.xlane.f32.xlu0 %v650
    %v652 = vpop.xlane.xlu0 %651
    %v653 = vsel %vm631, %v624, -inf
    %654 = vmax.xlane.f32.xlu0 %v653
    %v655 = vpop.xlane.xlu0 %654
    %v656 = vsel %vm631, %v627, -inf
    %657 = vmax.xlane.f32.xlu0 %v656
    %v658 = vpop.xlane.xlu0 %657
    %v659 = vsel %vm631, %v629, -inf
    %660 = vmax.xlane.f32.xlu0 %v659
    %v661 = vpop.xlane.xlu0 %660
    %v662 = vsub.f32 %v607, %v634
    %v663 = vsub.f32 %v609, %v637
    %v664 = vsub.f32 %v612, %v640
    %v665 = vsub.f32 %v614, %v643
    %v666 = vsub.f32 %v617, %v646
    %v667 = vsub.f32 %v619, %v649
    %v668 = vsub.f32 %v622, %v652
    %v669 = vsub.f32 %v624, %v655
    %v670 = vsub.f32 %v627, %v658
    %v671 = vsub.f32 %v629, %v661
    %v672 = vmul.f32 %v662, 1.442695
    %v673 = vpow.pop %v672
    %v674 = vmul.f32 %v663, 1.442695
    %v675 = vpow.pop %v674
    %v676 = vmul.f32 %v664, 1.442695
    %v677 = vpow.pop %v676
    %v678 = vmul.f32 %v665, 1.442695
    %v679 = vpow.pop %v678
    %v680 = vmul.f32 %v666, 1.442695
    %v681 = vpow.pop %v680
    %v682 = vmul.f32 %v667, 1.442695
    %v683 = vpow.pop %v682
    %v684 = vmul.f32 %v668, 1.442695
    %v685 = vpow.pop %v684
    %v686 = vmul.f32 %v669, 1.442695
    %v687 = vpow.pop %v686
    %v688 = vmul.f32 %v670, 1.442695
    %v689 = vpow.pop %v688
    %v690 = vmul.f32 %v671, 1.442695
    %v691 = vpow.pop %v690
    %v692 = vsel %vm631, %v673, 0.0
    %693 = vadd.xlane.f32.xlu0 %v692
    %v694 = vpop.xlane.xlu0 %693
    %v695 = vsel %vm631, %v675, 0.0
    %696 = vadd.xlane.f32.xlu0 %v695
    %v697 = vpop.xlane.xlu0 %696
    %v698 = vsel %vm631, %v677, 0.0
    %699 = vadd.xlane.f32.xlu0 %v698
    %v700 = vpop.xlane.xlu0 %699
    %v701 = vsel %vm631, %v679, 0.0
    %702 = vadd.xlane.f32.xlu0 %v701
    %v703 = vpop.xlane.xlu0 %702
    %v704 = vsel %vm631, %v681, 0.0
    %705 = vadd.xlane.f32.xlu0 %v704
    %v706 = vpop.xlane.xlu0 %705
    %v707 = vsel %vm631, %v683, 0.0
    %708 = vadd.xlane.f32.xlu0 %v707
    %v709 = vpop.xlane.xlu0 %708
    %v710 = vsel %vm631, %v685, 0.0
    %711 = vadd.xlane.f32.xlu0 %v710
    %v712 = vpop.xlane.xlu0 %711
    %v713 = vsel %vm631, %v687, 0.0
    %714 = vadd.xlane.f32.xlu0 %v713
    %v715 = vpop.xlane.xlu0 %714
    %v716 = vsel %vm631, %v689, 0.0
    %717 = vadd.xlane.f32.xlu0 %v716
    %v718 = vpop.xlane.xlu0 %717
    %v719 = vsel %vm631, %v691, 0.0
    %720 = vadd.xlane.f32.xlu0 %v719
    %v721 = vpop.xlane.xlu0 %720
    %v722 = vrcp.pop %v694
    %v723 = vmul.f32 %v694, %v722
    %v724 = vsub.f32 1.0, %v723
    %v725 = vmul.f32 %v722, %v724
    %v726 = vadd.f32 %v722, %v725
    %vm727 = vweird.f32 %v694
    %vm728 = vweird.f32 %v722
    %vm729 = vmor %vm727, %vm728
    %v730 = vsel %vm729, %v722, %v726
    %v731 = vand.u32 2147483647, %v694
    %vm732 = vcmp.eq.f32.partialorder %v731, 8.507059e+37
    %v733 = vand.u32 %v694, 2147483648
    %v734 = vor.u32 1.1754944e-38, %v733
    %v735 = vsel %vm732, %v734, %v730
    %v736 = vmul.f32 %v673, %v735
    %v737 = vrcp.pop %v697
    %v738 = vmul.f32 %v697, %v737
    %v739 = vsub.f32 1.0, %v738
    %v740 = vmul.f32 %v737, %v739
    %v741 = vadd.f32 %v737, %v740
    %vm742 = vweird.f32 %v697
    %vm743 = vweird.f32 %v737
    %vm744 = vmor %vm742, %vm743
    %v745 = vsel %vm744, %v737, %v741
    %v746 = vand.u32 2147483647, %v697
    %vm747 = vcmp.eq.f32.partialorder %v746, 8.507059e+37
    %v748 = vand.u32 %v697, 2147483648
    %v749 = vor.u32 1.1754944e-38, %v748
    %v750 = vsel %vm747, %v749, %v745
    %v751 = vmul.f32 %v675, %v750
    %v752 = vrcp.pop %v700
    %v753 = vmul.f32 %v700, %v752
    %v754 = vsub.f32 1.0, %v753
    %v755 = vmul.f32 %v752, %v754
    %v756 = vadd.f32 %v752, %v755
    %vm757 = vweird.f32 %v700
    %vm758 = vweird.f32 %v752
    %vm759 = vmor %vm757, %vm758
    %v760 = vsel %vm759, %v752, %v756
    %v761 = vand.u32 2147483647, %v700
    %vm762 = vcmp.eq.f32.partialorder %v761, 8.507059e+37
    %v763 = vand.u32 %v700, 2147483648
    %v764 = vor.u32 1.1754944e-38, %v763
    %v765 = vsel %vm762, %v764, %v760
    %v766 = vmul.f32 %v677, %v765
    %v767 = vrcp.pop %v703
    %v768 = vmul.f32 %v703, %v767
    %v769 = vsub.f32 1.0, %v768
    %v770 = vmul.f32 %v767, %v769
    %v771 = vadd.f32 %v767, %v770
    %vm772 = vweird.f32 %v703
    %vm773 = vweird.f32 %v767
    %vm774 = vmor %vm772, %vm773
    %v775 = vsel %vm774, %v767, %v771
    %v776 = vand.u32 2147483647, %v703
    %vm777 = vcmp.eq.f32.partialorder %v776, 8.507059e+37
    %v778 = vand.u32 %v703, 2147483648
    %v779 = vor.u32 1.1754944e-38, %v778
    %v780 = vsel %vm777, %v779, %v775
    %v781 = vmul.f32 %v679, %v780
    %v782 = vrcp.pop %v706
    %v783 = vmul.f32 %v706, %v782
    %v784 = vsub.f32 1.0, %v783
    %v785 = vmul.f32 %v782, %v784
    %v786 = vadd.f32 %v782, %v785
    %vm787 = vweird.f32 %v706
    %vm788 = vweird.f32 %v782
    %vm789 = vmor %vm787, %vm788
    %v790 = vsel %vm789, %v782, %v786
    %v791 = vand.u32 2147483647, %v706
    %vm792 = vcmp.eq.f32.partialorder %v791, 8.507059e+37
    %v793 = vand.u32 %v706, 2147483648
    %v794 = vor.u32 1.1754944e-38, %v793
    %v795 = vsel %vm792, %v794, %v790
    %v796 = vmul.f32 %v681, %v795
    %v797 = vrcp.pop %v709
    %v798 = vmul.f32 %v709, %v797
    %v799 = vsub.f32 1.0, %v798
    %v800 = vmul.f32 %v797, %v799
    %v801 = vadd.f32 %v797, %v800
    %vm802 = vweird.f32 %v709
    %vm803 = vweird.f32 %v797
    %vm804 = vmor %vm802, %vm803
    %v805 = vsel %vm804, %v797, %v801
    %v806 = vand.u32 2147483647, %v709
    %vm807 = vcmp.eq.f32.partialorder %v806, 8.507059e+37
    %v808 = vand.u32 %v709, 2147483648
    %v809 = vor.u32 1.1754944e-38, %v808
    %v810 = vsel %vm807, %v809, %v805
    %v811 = vmul.f32 %v683, %v810
    %v812 = vrcp.pop %v712
    %v813 = vmul.f32 %v712, %v812
    %v814 = vsub.f32 1.0, %v813
    %v815 = vmul.f32 %v812, %v814
    %v816 = vadd.f32 %v812, %v815
    %vm817 = vweird.f32 %v712
    %vm818 = vweird.f32 %v812
    %vm819 = vmor %vm817, %vm818
    %v820 = vsel %vm819, %v812, %v816
    %v821 = vand.u32 2147483647, %v712
    %vm822 = vcmp.eq.f32.partialorder %v821, 8.507059e+37
    %v823 = vand.u32 %v712, 2147483648
    %v824 = vor.u32 1.1754944e-38, %v823
    %v825 = vsel %vm822, %v824, %v820
    %v826 = vmul.f32 %v685, %v825
    %v827 = vrcp.pop %v715
    %v828 = vmul.f32 %v715, %v827
    %v829 = vsub.f32 1.0, %v828
    %v830 = vmul.f32 %v827, %v829
    %v831 = vadd.f32 %v827, %v830
    %vm832 = vweird.f32 %v715
    %vm833 = vweird.f32 %v827
    %vm834 = vmor %vm832, %vm833
    %v835 = vsel %vm834, %v827, %v831
    %v836 = vand.u32 2147483647, %v715
    %vm837 = vcmp.eq.f32.partialorder %v836, 8.507059e+37
    %v838 = vand.u32 %v715, 2147483648
    %v839 = vor.u32 1.1754944e-38, %v838
    %v840 = vsel %vm837, %v839, %v835
    %v841 = vmul.f32 %v687, %v840
    %v842 = vrcp.pop %v718
    %v843 = vmul.f32 %v718, %v842
    %v844 = vsub.f32 1.0, %v843
    %v845 = vmul.f32 %v842, %v844
    %v846 = vadd.f32 %v842, %v845
    %vm847 = vweird.f32 %v718
    %vm848 = vweird.f32 %v842
    %vm849 = vmor %vm847, %vm848
    %v850 = vsel %vm849, %v842, %v846
    %v851 = vand.u32 2147483647, %v718
    %vm852 = vcmp.eq.f32.partialorder %v851, 8.507059e+37
    %v853 = vand.u32 %v718, 2147483648
    %v854 = vor.u32 1.1754944e-38, %v853
    %v855 = vsel %vm852, %v854, %v850
    %v856 = vmul.f32 %v689, %v855
    %v857 = vrcp.pop %v721
    %v858 = vmul.f32 %v721, %v857
    %v859 = vsub.f32 1.0, %v858
    %v860 = vmul.f32 %v857, %v859
    %v861 = vadd.f32 %v857, %v860
    %vm862 = vweird.f32 %v721
    %vm863 = vweird.f32 %v857
    %vm864 = vmor %vm862, %vm863
    %v865 = vsel %vm864, %v857, %v861
    %v866 = vand.u32 2147483647, %v721
    %vm867 = vcmp.eq.f32.partialorder %v866, 8.507059e+37
    %v868 = vand.u32 %v721, 2147483648
    %v869 = vor.u32 1.1754944e-38, %v868
    %v870 = vsel %vm867, %v869, %v865
    %v871 = vmul.f32 %v691, %v870
    %v872 = vsel %vm516, %v504, 0
    %v873 = vsel %vm516, %v505, 0
    %v874 = vsel %vm516, %v506, 0
    %v875 = vsel %vm516, %v507, 0
    %v876 = vsel %vm516, %v508, 0
    %v877 = vsel %vm516, %v509, 0
    %v878 = vsel %vm516, %v510, 0
    %v879 = vsel %vm516, %v511, 0
    %v880 = vsel %vm516, %v512, 0
    %v881 = vsel %vm516, %v513, 0
    %v882 = vpack.c.bf16 %v751, %v736
    %v883 = vpack.c.bf16 %v781, %v766
    %v884 = vpack.c.bf16 %v811, %v796
    %v885 = vpack.c.bf16 %v841, %v826
    %v886 = vpack.c.bf16 %v871, %v856
    %v887 = vsel %vm364, 1, 0
    %vm888 = vcmp.eq.s32.totalorder %v887, 1
    %vm889 = vmpackc.low %vm888, %vm888
    %v890 = vsel %vm889, %v489, 0
    %v891 = vsel %vm889, %v490, 0
    %v892 = vsel %vm889, %v491, 0
    %v893 = vsel %vm889, %v492, 0
    %v894 = vsel %vm889, %v493, 0
    %v895 = vsel %vm889, %v494, 0
    %v896 = vsel %vm889, %v495, 0
    %v897 = vsel %vm889, %v496, 0
    %v898 = vsel %vm889, %v497, 0
    %v899 = vsel %vm889, %v498, 0
    %v910 = vunpack.c.l.b16 %v890
    %v911 = vunpack.c.l.b16 %v891
    %v912 = vunpack.c.l.b16 %v892
    %v913 = vunpack.c.l.b16 %v893
    %v914 = vunpack.c.l.b16 %v894
    %v915 = vunpack.c.l.b16 %v895
    %v916 = vunpack.c.l.b16 %v896
    %v917 = vunpack.c.l.b16 %v897
    %v918 = vunpack.c.l.b16 %v898
    %v919 = vunpack.c.l.b16 %v899
    %v920 = vpack.c.b16 %v911, %v910
    %v921 = vpack.c.b16 %v913, %v912
    %v922 = vpack.c.b16 %v915, %v914
    %v923 = vpack.c.b16 %v917, %v916
    %v924 = vpack.c.b16 %v919, %v918
    %v926 = vsel %vm73, %v920, 0
    %v929 = vsel %vm73, %v921, 0
    %v932 = vsel %vm73, %v922, 0
    %v935 = vsel %vm73, %v923, 0
    %v938 = vsel %vm73, %v924, 0
    %940 = vmatpush.bf16.xpose.msra.mxu0 0
    %941 = vmatpush.bf16.xpose.msra.mxu0 0
    %942 = vmatpush.bf16.xpose.msra.mxu0 0
    %943 = vmatpush.bf16.xpose.msra.mxu0 %v595
    %944 = vmatpush.bf16.xpose.msra.mxu0 %v592
    %945 = vmatpush.bf16.xpose.msra.mxu0 %v589
    %946 = vmatpush.bf16.xpose.msra.mxu0 %v586
    %947 = vmatpush.bf16.xpose.msra.mxu0 %v583
    %948 = vmatmul.bf16.gmra.mxu0 %v926
    %v949 = vpop.f32.mrf.mxu0
    %v950 = vadd.f32 %v347, %v949
    %v951 = vpop.f32.mrf.mxu0
    %v952 = vadd.f32 %v348, %v951
    %953 = vmatmul.bf16.gmra.mxu0 %v929
    %v954 = vpop.f32.mrf.mxu0
    %v955 = vadd.f32 %v349, %v954
    %v956 = vpop.f32.mrf.mxu0
    %v957 = vadd.f32 %v350, %v956
    %958 = vmatmul.bf16.gmra.mxu0 %v932
    %v959 = vpop.f32.mrf.mxu0
    %v960 = vadd.f32 %v351, %v959
    %v961 = vpop.f32.mrf.mxu0
    %v962 = vadd.f32 %v352, %v961
    %963 = vmatmul.bf16.gmra.mxu0 %v935
    %v964 = vpop.f32.mrf.mxu0
    %v965 = vadd.f32 %v353, %v964
    %v966 = vpop.f32.mrf.mxu0
    %v967 = vadd.f32 %v354, %v966
    %968 = vmatmul.bf16.gmra.mxu0 %v938
    %v969 = vpop.f32.mrf.mxu0
    %v970 = vadd.f32 %v355, %v969
    %v971 = vpop.f32.mrf.mxu0
    %v972 = vadd.f32 %v356, %v971
    %973 = vdwg.mxu0
    %v974 = vsel %vm631, %v950, -inf
    %975 = vmax.xlane.f32.xlu0 %v974
    %v976 = vpop.xlane.xlu0 %975
    %v977 = vsel %vm631, %v952, -inf
    %978 = vmax.xlane.f32.xlu0 %v977
    %v979 = vpop.xlane.xlu0 %978
    %v980 = vsel %vm631, %v955, -inf
    %981 = vmax.xlane.f32.xlu0 %v980
    %v982 = vpop.xlane.xlu0 %981
    %v983 = vsel %vm631, %v957, -inf
    %984 = vmax.xlane.f32.xlu0 %v983
    %v985 = vpop.xlane.xlu0 %984
    %v986 = vsel %vm631, %v960, -inf
    %987 = vmax.xlane.f32.xlu0 %v986
    %v988 = vpop.xlane.xlu0 %987
    %v989 = vsel %vm631, %v962, -inf
    %990 = vmax.xlane.f32.xlu0 %v989
    %v991 = vpop.xlane.xlu0 %990
    %v992 = vsel %vm631, %v965, -inf
    %993 = vmax.xlane.f32.xlu0 %v992
    %v994 = vpop.xlane.xlu0 %993
    %v995 = vsel %vm631, %v967, -inf
    %996 = vmax.xlane.f32.xlu0 %v995
    %v997 = vpop.xlane.xlu0 %996
    %v998 = vsel %vm631, %v970, -inf
    %999 = vmax.xlane.f32.xlu0 %v998
    %v1000 = vpop.xlane.xlu0 %999
    %v1001 = vsel %vm631, %v972, -inf
    %1002 = vmax.xlane.f32.xlu0 %v1001
    %v1003 = vpop.xlane.xlu0 %1002
    %v1004 = vsub.f32 %v950, %v976
    %v1005 = vsub.f32 %v952, %v979
    %v1006 = vsub.f32 %v955, %v982
    %v1007 = vsub.f32 %v957, %v985
    %v1008 = vsub.f32 %v960, %v988
    %v1009 = vsub.f32 %v962, %v991
    %v1010 = vsub.f32 %v965, %v994
    %v1011 = vsub.f32 %v967, %v997
    %v1012 = vsub.f32 %v970, %v1000
    %v1013 = vsub.f32 %v972, %v1003
    %v1014 = vmul.f32 %v1004, 1.442695
    %v1015 = vpow.pop %v1014
    %v1016 = vmul.f32 %v1005, 1.442695
    %v1017 = vpow.pop %v1016
    %v1018 = vmul.f32 %v1006, 1.442695
    %v1019 = vpow.pop %v1018
    %v1020 = vmul.f32 %v1007, 1.442695
    %v1021 = vpow.pop %v1020
    %v1022 = vmul.f32 %v1008, 1.442695
    %v1023 = vpow.pop %v1022
    %v1024 = vmul.f32 %v1009, 1.442695
    %v1025 = vpow.pop %v1024
    %v1026 = vmul.f32 %v1010, 1.442695
    %v1027 = vpow.pop %v1026
    %v1028 = vmul.f32 %v1011, 1.442695
    %v1029 = vpow.pop %v1028
    %v1030 = vmul.f32 %v1012, 1.442695
    %v1031 = vpow.pop %v1030
    %v1032 = vmul.f32 %v1013, 1.442695
    %v1033 = vpow.pop %v1032
    %v1034 = vsel %vm631, %v1015, 0.0
    %1035 = vadd.xlane.f32.xlu0 %v1034
    %v1036 = vpop.xlane.xlu0 %1035
    %v1037 = vsel %vm631, %v1017, 0.0
    %1038 = vadd.xlane.f32.xlu0 %v1037
    %v1039 = vpop.xlane.xlu0 %1038
    %v1040 = vsel %vm631, %v1019, 0.0
    %1041 = vadd.xlane.f32.xlu0 %v1040
    %v1042 = vpop.xlane.xlu0 %1041
    %v1043 = vsel %vm631, %v1021, 0.0
    %1044 = vadd.xlane.f32.xlu0 %v1043
    %v1045 = vpop.xlane.xlu0 %1044
    %v1046 = vsel %vm631, %v1023, 0.0
    %1047 = vadd.xlane.f32.xlu0 %v1046
    %v1048 = vpop.xlane.xlu0 %1047
    %v1049 = vsel %vm631, %v1025, 0.0
    %1050 = vadd.xlane.f32.xlu0 %v1049
    %v1051 = vpop.xlane.xlu0 %1050
    %v1052 = vsel %vm631, %v1027, 0.0
    %1053 = vadd.xlane.f32.xlu0 %v1052
    %v1054 = vpop.xlane.xlu0 %1053
    %v1055 = vsel %vm631, %v1029, 0.0
    %1056 = vadd.xlane.f32.xlu0 %v1055
    %v1057 = vpop.xlane.xlu0 %1056
    %v1058 = vsel %vm631, %v1031, 0.0
    %1059 = vadd.xlane.f32.xlu0 %v1058
    %v1060 = vpop.xlane.xlu0 %1059
    %v1061 = vsel %vm631, %v1033, 0.0
    %1062 = vadd.xlane.f32.xlu0 %v1061
    %v1063 = vpop.xlane.xlu0 %1062
    %v1064 = vrcp.pop %v1036
    %v1065 = vmul.f32 %v1036, %v1064
    %v1066 = vsub.f32 1.0, %v1065
    %v1067 = vmul.f32 %v1064, %v1066
    %v1068 = vadd.f32 %v1064, %v1067
    %vm1069 = vweird.f32 %v1036
    %vm1070 = vweird.f32 %v1064
    %vm1071 = vmor %vm1069, %vm1070
    %v1072 = vsel %vm1071, %v1064, %v1068
    %v1073 = vand.u32 2147483647, %v1036
    %vm1074 = vcmp.eq.f32.partialorder %v1073, 8.507059e+37
    %v1075 = vand.u32 %v1036, 2147483648
    %v1076 = vor.u32 1.1754944e-38, %v1075
    %v1077 = vsel %vm1074, %v1076, %v1072
    %v1078 = vmul.f32 %v1015, %v1077
    %v1079 = vrcp.pop %v1039
    %v1080 = vmul.f32 %v1039, %v1079
    %v1081 = vsub.f32 1.0, %v1080
    %v1082 = vmul.f32 %v1079, %v1081
    %v1083 = vadd.f32 %v1079, %v1082
    %vm1084 = vweird.f32 %v1039
    %vm1085 = vweird.f32 %v1079
    %vm1086 = vmor %vm1084, %vm1085
    %v1087 = vsel %vm1086, %v1079, %v1083
    %v1088 = vand.u32 2147483647, %v1039
    %vm1089 = vcmp.eq.f32.partialorder %v1088, 8.507059e+37
    %v1090 = vand.u32 %v1039, 2147483648
    %v1091 = vor.u32 1.1754944e-38, %v1090
    %v1092 = vsel %vm1089, %v1091, %v1087
    %v1093 = vmul.f32 %v1017, %v1092
    %v1094 = vrcp.pop %v1042
    %v1095 = vmul.f32 %v1042, %v1094
    %v1096 = vsub.f32 1.0, %v1095
    %v1097 = vmul.f32 %v1094, %v1096
    %v1098 = vadd.f32 %v1094, %v1097
    %vm1099 = vweird.f32 %v1042
    %vm1100 = vweird.f32 %v1094
    %vm1101 = vmor %vm1099, %vm1100
    %v1102 = vsel %vm1101, %v1094, %v1098
    %v1103 = vand.u32 2147483647, %v1042
    %vm1104 = vcmp.eq.f32.partialorder %v1103, 8.507059e+37
    %v1105 = vand.u32 %v1042, 2147483648
    %v1106 = vor.u32 1.1754944e-38, %v1105
    %v1107 = vsel %vm1104, %v1106, %v1102
    %v1108 = vmul.f32 %v1019, %v1107
    %v1109 = vrcp.pop %v1045
    %v1110 = vmul.f32 %v1045, %v1109
    %v1111 = vsub.f32 1.0, %v1110
    %v1112 = vmul.f32 %v1109, %v1111
    %v1113 = vadd.f32 %v1109, %v1112
    %vm1114 = vweird.f32 %v1045
    %vm1115 = vweird.f32 %v1109
    %vm1116 = vmor %vm1114, %vm1115
    %v1117 = vsel %vm1116, %v1109, %v1113
    %v1118 = vand.u32 2147483647, %v1045
    %vm1119 = vcmp.eq.f32.partialorder %v1118, 8.507059e+37
    %v1120 = vand.u32 %v1045, 2147483648
    %v1121 = vor.u32 1.1754944e-38, %v1120
    %v1122 = vsel %vm1119, %v1121, %v1117
    %v1123 = vmul.f32 %v1021, %v1122
    %v1124 = vrcp.pop %v1048
    %v1125 = vmul.f32 %v1048, %v1124
    %v1126 = vsub.f32 1.0, %v1125
    %v1127 = vmul.f32 %v1124, %v1126
    %v1128 = vadd.f32 %v1124, %v1127
    %vm1129 = vweird.f32 %v1048
    %vm1130 = vweird.f32 %v1124
    %vm1131 = vmor %vm1129, %vm1130
    %v1132 = vsel %vm1131, %v1124, %v1128
    %v1133 = vand.u32 2147483647, %v1048
    %vm1134 = vcmp.eq.f32.partialorder %v1133, 8.507059e+37
    %v1135 = vand.u32 %v1048, 2147483648
    %v1136 = vor.u32 1.1754944e-38, %v1135
    %v1137 = vsel %vm1134, %v1136, %v1132
    %v1138 = vmul.f32 %v1023, %v1137
    %v1139 = vrcp.pop %v1051
    %v1140 = vmul.f32 %v1051, %v1139
    %v1141 = vsub.f32 1.0, %v1140
    %v1142 = vmul.f32 %v1139, %v1141
    %v1143 = vadd.f32 %v1139, %v1142
    %vm1144 = vweird.f32 %v1051
    %vm1145 = vweird.f32 %v1139
    %vm1146 = vmor %vm1144, %vm1145
    %v1147 = vsel %vm1146, %v1139, %v1143
    %v1148 = vand.u32 2147483647, %v1051
    %vm1149 = vcmp.eq.f32.partialorder %v1148, 8.507059e+37
    %v1150 = vand.u32 %v1051, 2147483648
    %v1151 = vor.u32 1.1754944e-38, %v1150
    %v1152 = vsel %vm1149, %v1151, %v1147
    %v1153 = vmul.f32 %v1025, %v1152
    %v1154 = vrcp.pop %v1054
    %v1155 = vmul.f32 %v1054, %v1154
    %v1156 = vsub.f32 1.0, %v1155
    %v1157 = vmul.f32 %v1154, %v1156
    %v1158 = vadd.f32 %v1154, %v1157
    %vm1159 = vweird.f32 %v1054
    %vm1160 = vweird.f32 %v1154
    %vm1161 = vmor %vm1159, %vm1160
    %v1162 = vsel %vm1161, %v1154, %v1158
    %v1163 = vand.u32 2147483647, %v1054
    %vm1164 = vcmp.eq.f32.partialorder %v1163, 8.507059e+37
    %v1165 = vand.u32 %v1054, 2147483648
    %v1166 = vor.u32 1.1754944e-38, %v1165
    %v1167 = vsel %vm1164, %v1166, %v1162
    %v1168 = vmul.f32 %v1027, %v1167
    %v1169 = vrcp.pop %v1057
    %v1170 = vmul.f32 %v1057, %v1169
    %v1171 = vsub.f32 1.0, %v1170
    %v1172 = vmul.f32 %v1169, %v1171
    %v1173 = vadd.f32 %v1169, %v1172
    %vm1174 = vweird.f32 %v1057
    %vm1175 = vweird.f32 %v1169
    %vm1176 = vmor %vm1174, %vm1175
    %v1177 = vsel %vm1176, %v1169, %v1173
    %v1178 = vand.u32 2147483647, %v1057
    %vm1179 = vcmp.eq.f32.partialorder %v1178, 8.507059e+37
    %v1180 = vand.u32 %v1057, 2147483648
    %v1181 = vor.u32 1.1754944e-38, %v1180
    %v1182 = vsel %vm1179, %v1181, %v1177
    %v1183 = vmul.f32 %v1029, %v1182
    %v1184 = vrcp.pop %v1060
    %v1185 = vmul.f32 %v1060, %v1184
    %v1186 = vsub.f32 1.0, %v1185
    %v1187 = vmul.f32 %v1184, %v1186
    %v1188 = vadd.f32 %v1184, %v1187
    %vm1189 = vweird.f32 %v1060
    %vm1190 = vweird.f32 %v1184
    %vm1191 = vmor %vm1189, %vm1190
    %v1192 = vsel %vm1191, %v1184, %v1188
    %v1193 = vand.u32 2147483647, %v1060
    %vm1194 = vcmp.eq.f32.partialorder %v1193, 8.507059e+37
    %v1195 = vand.u32 %v1060, 2147483648
    %v1196 = vor.u32 1.1754944e-38, %v1195
    %v1197 = vsel %vm1194, %v1196, %v1192
    %v1198 = vmul.f32 %v1031, %v1197
    %v1199 = vrcp.pop %v1063
    %v1200 = vmul.f32 %v1063, %v1199
    %v1201 = vsub.f32 1.0, %v1200
    %v1202 = vmul.f32 %v1199, %v1201
    %v1203 = vadd.f32 %v1199, %v1202
    %vm1204 = vweird.f32 %v1063
    %vm1205 = vweird.f32 %v1199
    %vm1206 = vmor %vm1204, %vm1205
    %v1207 = vsel %vm1206, %v1199, %v1203
    %v1208 = vand.u32 2147483647, %v1063
    %vm1209 = vcmp.eq.f32.partialorder %v1208, 8.507059e+37
    %v1210 = vand.u32 %v1063, 2147483648
    %v1211 = vor.u32 1.1754944e-38, %v1210
    %v1212 = vsel %vm1209, %v1211, %v1207
    %v1213 = vmul.f32 %v1033, %v1212
    %v1214 = vsel %vm889, %v504, 0
    %v1215 = vsel %vm889, %v505, 0
    %v1216 = vsel %vm889, %v506, 0
    %v1217 = vsel %vm889, %v507, 0
    %v1218 = vsel %vm889, %v508, 0
    %v1219 = vsel %vm889, %v509, 0
    %v1220 = vsel %vm889, %v510, 0
    %v1221 = vsel %vm889, %v511, 0
    %v1222 = vsel %vm889, %v512, 0
    %v1223 = vsel %vm889, %v513, 0
    %v1224 = vpack.c.bf16 %v1093, %v1078
    %v1225 = vpack.c.bf16 %v1123, %v1108
    %v1226 = vpack.c.bf16 %v1153, %v1138
    %v1227 = vpack.c.bf16 %v1183, %v1168
    %v1228 = vpack.c.bf16 %v1213, %v1198
    %v1239 = vunpack.c.l.b16 %v1214
    %v1240 = vunpack.c.l.b16 %v1215
    %v1241 = vunpack.c.l.b16 %v1216
    %v1242 = vunpack.c.l.b16 %v1217
    %v1243 = vunpack.c.l.b16 %v1218
    %v1244 = vunpack.c.l.b16 %v1219
    %v1245 = vunpack.c.l.b16 %v1220
    %v1246 = vunpack.c.l.b16 %v1221
    %v1247 = vunpack.c.l.b16 %v1222
    %v1248 = vunpack.c.l.b16 %v1223
    %v1249 = vpack.c.b16 %v1240, %v1239
    %v1250 = vpack.c.b16 %v1242, %v1241
    %v1251 = vpack.c.b16 %v1244, %v1243
    %v1252 = vpack.c.b16 %v1246, %v1245
    %v1253 = vpack.c.b16 %v1248, %v1247
    %v1260 = vsel %vm631, %v1224, 0
    %v1263 = vsel %vm631, %v1225, 0
    %v1266 = vsel %vm631, %v1226, 0
    %v1269 = vsel %vm631, %v1227, 0
    %v1272 = vsel %vm631, %v1228, 0
    %1274 = vmatpush.bf16.msra.mxu0 0
    %1275 = vmatpush.bf16.msra.mxu0 0
    %1276 = vmatpush.bf16.msra.mxu0 0
    %1277 = vmatpush.bf16.msra.mxu0 %v1253
    %1278 = vmatpush.bf16.msra.mxu0 %v1252
    %1279 = vmatpush.bf16.msra.mxu0 %v1251
    %1280 = vmatpush.bf16.msra.mxu0 %v1250
    %1281 = vmatpush.bf16.msra.mxu0 %v1249
    %1282 = vmatmul.bf16.gmra.mxu0 %v1260
    %v1283 = vpop.f32.mrf.mxu0
    %v1284 = vadd.f32 0.0, %v1283
    %v1285 = vpop.f32.mrf.mxu0
    %v1286 = vadd.f32 0.0, %v1285
    %1287 = vmatmul.bf16.gmra.mxu0 %v1263
    %v1288 = vpop.f32.mrf.mxu0
    %v1289 = vadd.f32 0.0, %v1288
    %v1290 = vpop.f32.mrf.mxu0
    %v1291 = vadd.f32 0.0, %v1290
    %1292 = vmatmul.bf16.gmra.mxu0 %v1266
    %v1293 = vpop.f32.mrf.mxu0
    %v1294 = vadd.f32 0.0, %v1293
    %v1295 = vpop.f32.mrf.mxu0
    %v1296 = vadd.f32 0.0, %v1295
    %1297 = vmatmul.bf16.gmra.mxu0 %v1269
    %v1298 = vpop.f32.mrf.mxu0
    %v1299 = vadd.f32 0.0, %v1298
    %v1300 = vpop.f32.mrf.mxu0
    %v1301 = vadd.f32 0.0, %v1300
    %1302 = vmatmul.bf16.gmra.mxu0 %v1272
    %v1303 = vpop.f32.mrf.mxu0
    %v1304 = vadd.f32 0.0, %v1303
    %v1305 = vpop.f32.mrf.mxu0
    %v1306 = vadd.f32 0.0, %v1305
    %1307 = vdwg.mxu0
    %v1318 = vunpack.c.l.b16 %v872
    %v1319 = vunpack.c.l.b16 %v873
    %v1320 = vunpack.c.l.b16 %v874
    %v1321 = vunpack.c.l.b16 %v875
    %v1322 = vunpack.c.l.b16 %v876
    %v1323 = vunpack.c.l.b16 %v877
    %v1324 = vunpack.c.l.b16 %v878
    %v1325 = vunpack.c.l.b16 %v879
    %v1326 = vunpack.c.l.b16 %v880
    %v1327 = vunpack.c.l.b16 %v881
    %v1328 = vpack.c.b16 %v1319, %v1318
    %v1329 = vpack.c.b16 %v1321, %v1320
    %v1330 = vpack.c.b16 %v1323, %v1322
    %v1331 = vpack.c.b16 %v1325, %v1324
    %v1332 = vpack.c.b16 %v1327, %v1326
    %v1339 = vsel %vm631, %v882, 0
    %v1342 = vsel %vm631, %v883, 0
    %v1345 = vsel %vm631, %v884, 0
    %v1348 = vsel %vm631, %v885, 0
    %v1351 = vsel %vm631, %v886, 0
    %1353 = vmatpush.bf16.msra.mxu0 0
    %1354 = vmatpush.bf16.msra.mxu0 0
    %1355 = vmatpush.bf16.msra.mxu0 0
    %1356 = vmatpush.bf16.msra.mxu0 %v1332
    %1357 = vmatpush.bf16.msra.mxu0 %v1331
    %1358 = vmatpush.bf16.msra.mxu0 %v1330
    %1359 = vmatpush.bf16.msra.mxu0 %v1329
    %1360 = vmatpush.bf16.msra.mxu0 %v1328
    %1361 = vmatmul.bf16.gmra.mxu0 %v1339
    %v1362 = vpop.f32.mrf.mxu0
    %v1363 = vadd.f32 %v1284, %v1362
    %v1364 = vpop.f32.mrf.mxu0
    %v1365 = vadd.f32 %v1286, %v1364
    %1366 = vmatmul.bf16.gmra.mxu0 %v1342
    %v1367 = vpop.f32.mrf.mxu0
    %v1368 = vadd.f32 %v1289, %v1367
    %v1369 = vpop.f32.mrf.mxu0
    %v1370 = vadd.f32 %v1291, %v1369
    %1371 = vmatmul.bf16.gmra.mxu0 %v1345
    %v1372 = vpop.f32.mrf.mxu0
    %v1373 = vadd.f32 %v1294, %v1372
    %v1374 = vpop.f32.mrf.mxu0
    %v1375 = vadd.f32 %v1296, %v1374
    %1376 = vmatmul.bf16.gmra.mxu0 %v1348
    %v1377 = vpop.f32.mrf.mxu0
    %v1378 = vadd.f32 %v1299, %v1377
    %v1379 = vpop.f32.mrf.mxu0
    %v1380 = vadd.f32 %v1301, %v1379
    %1381 = vmatmul.bf16.gmra.mxu0 %v1351
    %v1382 = vpop.f32.mrf.mxu0
    %v1383 = vadd.f32 %v1304, %v1382
    %v1384 = vpop.f32.mrf.mxu0
    %v1385 = vadd.f32 %v1306, %v1384
    %1386 = vdwg.mxu0
    %v1387 = vsel %vm367, 1, 0
    %vm1388 = vcmp.eq.s32.totalorder %v1387, 1
    %vm1389 = vmpackc.low %vm1388, %vm1388
    %v1390 = vsel %vm1389, %v489, 0
    %v1391 = vsel %vm1389, %v490, 0
    %v1392 = vsel %vm1389, %v491, 0
    %v1393 = vsel %vm1389, %v492, 0
    %v1394 = vsel %vm1389, %v493, 0
    %v1395 = vsel %vm1389, %v494, 0
    %v1396 = vsel %vm1389, %v495, 0
    %v1397 = vsel %vm1389, %v496, 0
    %v1398 = vsel %vm1389, %v497, 0
    %v1399 = vsel %vm1389, %v498, 0
    %v1410 = vunpack.c.l.b16 %v1390
    %v1411 = vunpack.c.l.b16 %v1391
    %v1412 = vunpack.c.l.b16 %v1392
    %v1413 = vunpack.c.l.b16 %v1393
    %v1414 = vunpack.c.l.b16 %v1394
    %v1415 = vunpack.c.l.b16 %v1395
    %v1416 = vunpack.c.l.b16 %v1396
    %v1417 = vunpack.c.l.b16 %v1397
    %v1418 = vunpack.c.l.b16 %v1398
    %v1419 = vunpack.c.l.b16 %v1399
    %v1420 = vpack.c.b16 %v1411, %v1410
    %v1421 = vpack.c.b16 %v1413, %v1412
    %v1422 = vpack.c.b16 %v1415, %v1414
    %v1423 = vpack.c.b16 %v1417, %v1416
    %v1424 = vpack.c.b16 %v1419, %v1418
    %v1426 = vsel %vm73, %v1420, 0
    %v1429 = vsel %vm73, %v1421, 0
    %v1432 = vsel %vm73, %v1422, 0
    %v1435 = vsel %vm73, %v1423, 0
    %v1438 = vsel %vm73, %v1424, 0
    %1440 = vmatpush.bf16.xpose.msra.mxu0 0
    %1441 = vmatpush.bf16.xpose.msra.mxu0 0
    %1442 = vmatpush.bf16.xpose.msra.mxu0 0
    %1443 = vmatpush.bf16.xpose.msra.mxu0 %v595
    %1444 = vmatpush.bf16.xpose.msra.mxu0 %v592
    %1445 = vmatpush.bf16.xpose.msra.mxu0 %v589
    %1446 = vmatpush.bf16.xpose.msra.mxu0 %v586
    %1447 = vmatpush.bf16.xpose.msra.mxu0 %v583
    %1448 = vmatmul.bf16.gmra.mxu0 %v1426
    %v1449 = vpop.f32.mrf.mxu0
    %v1450 = vadd.f32 %v347, %v1449
    %v1451 = vpop.f32.mrf.mxu0
    %v1452 = vadd.f32 %v348, %v1451
    %1453 = vmatmul.bf16.gmra.mxu0 %v1429
    %v1454 = vpop.f32.mrf.mxu0
    %v1455 = vadd.f32 %v349, %v1454
    %v1456 = vpop.f32.mrf.mxu0
    %v1457 = vadd.f32 %v350, %v1456
    %1458 = vmatmul.bf16.gmra.mxu0 %v1432
    %v1459 = vpop.f32.mrf.mxu0
    %v1460 = vadd.f32 %v351, %v1459
    %v1461 = vpop.f32.mrf.mxu0
    %v1462 = vadd.f32 %v352, %v1461
    %1463 = vmatmul.bf16.gmra.mxu0 %v1435
    %v1464 = vpop.f32.mrf.mxu0
    %v1465 = vadd.f32 %v353, %v1464
    %v1466 = vpop.f32.mrf.mxu0
    %v1467 = vadd.f32 %v354, %v1466
    %1468 = vmatmul.bf16.gmra.mxu0 %v1438
    %v1469 = vpop.f32.mrf.mxu0
    %v1470 = vadd.f32 %v355, %v1469
    %v1471 = vpop.f32.mrf.mxu0
    %v1472 = vadd.f32 %v356, %v1471
    %1473 = vdwg.mxu0
    %v1474 = vsel %vm631, %v1450, -inf
    %1475 = vmax.xlane.f32.xlu0 %v1474
    %v1476 = vpop.xlane.xlu0 %1475
    %v1477 = vsel %vm631, %v1452, -inf
    %1478 = vmax.xlane.f32.xlu0 %v1477
    %v1479 = vpop.xlane.xlu0 %1478
    %v1480 = vsel %vm631, %v1455, -inf
    %1481 = vmax.xlane.f32.xlu0 %v1480
    %v1482 = vpop.xlane.xlu0 %1481
    %v1483 = vsel %vm631, %v1457, -inf
    %1484 = vmax.xlane.f32.xlu0 %v1483
    %v1485 = vpop.xlane.xlu0 %1484
    %v1486 = vsel %vm631, %v1460, -inf
    %1487 = vmax.xlane.f32.xlu0 %v1486
    %v1488 = vpop.xlane.xlu0 %1487
    %v1489 = vsel %vm631, %v1462, -inf
    %1490 = vmax.xlane.f32.xlu0 %v1489
    %v1491 = vpop.xlane.xlu0 %1490
    %v1492 = vsel %vm631, %v1465, -inf
    %1493 = vmax.xlane.f32.xlu0 %v1492
    %v1494 = vpop.xlane.xlu0 %1493
    %v1495 = vsel %vm631, %v1467, -inf
    %1496 = vmax.xlane.f32.xlu0 %v1495
    %v1497 = vpop.xlane.xlu0 %1496
    %v1498 = vsel %vm631, %v1470, -inf
    %1499 = vmax.xlane.f32.xlu0 %v1498
    %v1500 = vpop.xlane.xlu0 %1499
    %v1501 = vsel %vm631, %v1472, -inf
    %1502 = vmax.xlane.f32.xlu0 %v1501
    %v1503 = vpop.xlane.xlu0 %1502
    %v1504 = vsub.f32 %v1450, %v1476
    %v1505 = vsub.f32 %v1452, %v1479
    %v1506 = vsub.f32 %v1455, %v1482
    %v1507 = vsub.f32 %v1457, %v1485
    %v1508 = vsub.f32 %v1460, %v1488
    %v1509 = vsub.f32 %v1462, %v1491
    %v1510 = vsub.f32 %v1465, %v1494
    %v1511 = vsub.f32 %v1467, %v1497
    %v1512 = vsub.f32 %v1470, %v1500
    %v1513 = vsub.f32 %v1472, %v1503
    %v1514 = vmul.f32 %v1504, 1.442695
    %v1515 = vpow.pop %v1514
    %v1516 = vmul.f32 %v1505, 1.442695
    %v1517 = vpow.pop %v1516
    %v1518 = vmul.f32 %v1506, 1.442695
    %v1519 = vpow.pop %v1518
    %v1520 = vmul.f32 %v1507, 1.442695
    %v1521 = vpow.pop %v1520
    %v1522 = vmul.f32 %v1508, 1.442695
    %v1523 = vpow.pop %v1522
    %v1524 = vmul.f32 %v1509, 1.442695
    %v1525 = vpow.pop %v1524
    %v1526 = vmul.f32 %v1510, 1.442695
    %v1527 = vpow.pop %v1526
    %v1528 = vmul.f32 %v1511, 1.442695
    %v1529 = vpow.pop %v1528
    %v1530 = vmul.f32 %v1512, 1.442695
    %v1531 = vpow.pop %v1530
    %v1532 = vmul.f32 %v1513, 1.442695
    %v1533 = vpow.pop %v1532
    %v1534 = vsel %vm631, %v1515, 0.0
    %1535 = vadd.xlane.f32.xlu0 %v1534
    %v1536 = vpop.xlane.xlu0 %1535
    %v1537 = vsel %vm631, %v1517, 0.0
    %1538 = vadd.xlane.f32.xlu0 %v1537
    %v1539 = vpop.xlane.xlu0 %1538
    %v1540 = vsel %vm631, %v1519, 0.0
    %1541 = vadd.xlane.f32.xlu0 %v1540
    %v1542 = vpop.xlane.xlu0 %1541
    %v1543 = vsel %vm631, %v1521, 0.0
    %1544 = vadd.xlane.f32.xlu0 %v1543
    %v1545 = vpop.xlane.xlu0 %1544
    %v1546 = vsel %vm631, %v1523, 0.0
    %1547 = vadd.xlane.f32.xlu0 %v1546
    %v1548 = vpop.xlane.xlu0 %1547
    %v1549 = vsel %vm631, %v1525, 0.0
    %1550 = vadd.xlane.f32.xlu0 %v1549
    %v1551 = vpop.xlane.xlu0 %1550
    %v1552 = vsel %vm631, %v1527, 0.0
    %1553 = vadd.xlane.f32.xlu0 %v1552
    %v1554 = vpop.xlane.xlu0 %1553
    %v1555 = vsel %vm631, %v1529, 0.0
    %1556 = vadd.xlane.f32.xlu0 %v1555
    %v1557 = vpop.xlane.xlu0 %1556
    %v1558 = vsel %vm631, %v1531, 0.0
    %1559 = vadd.xlane.f32.xlu0 %v1558
    %v1560 = vpop.xlane.xlu0 %1559
    %v1561 = vsel %vm631, %v1533, 0.0
    %1562 = vadd.xlane.f32.xlu0 %v1561
    %v1563 = vpop.xlane.xlu0 %1562
    %v1564 = vrcp.pop %v1536
    %v1565 = vmul.f32 %v1536, %v1564
    %v1566 = vsub.f32 1.0, %v1565
    %v1567 = vmul.f32 %v1564, %v1566
    %v1568 = vadd.f32 %v1564, %v1567
    %vm1569 = vweird.f32 %v1536
    %vm1570 = vweird.f32 %v1564
    %vm1571 = vmor %vm1569, %vm1570
    %v1572 = vsel %vm1571, %v1564, %v1568
    %v1573 = vand.u32 2147483647, %v1536
    %vm1574 = vcmp.eq.f32.partialorder %v1573, 8.507059e+37
    %v1575 = vand.u32 %v1536, 2147483648
    %v1576 = vor.u32 1.1754944e-38, %v1575
    %v1577 = vsel %vm1574, %v1576, %v1572
    %v1578 = vmul.f32 %v1515, %v1577
    %v1579 = vrcp.pop %v1539
    %v1580 = vmul.f32 %v1539, %v1579
    %v1581 = vsub.f32 1.0, %v1580
    %v1582 = vmul.f32 %v1579, %v1581
    %v1583 = vadd.f32 %v1579, %v1582
    %vm1584 = vweird.f32 %v1539
    %vm1585 = vweird.f32 %v1579
    %vm1586 = vmor %vm1584, %vm1585
    %v1587 = vsel %vm1586, %v1579, %v1583
    %v1588 = vand.u32 2147483647, %v1539
    %vm1589 = vcmp.eq.f32.partialorder %v1588, 8.507059e+37
    %v1590 = vand.u32 %v1539, 2147483648
    %v1591 = vor.u32 1.1754944e-38, %v1590
    %v1592 = vsel %vm1589, %v1591, %v1587
    %v1593 = vmul.f32 %v1517, %v1592
    %v1594 = vrcp.pop %v1542
    %v1595 = vmul.f32 %v1542, %v1594
    %v1596 = vsub.f32 1.0, %v1595
    %v1597 = vmul.f32 %v1594, %v1596
    %v1598 = vadd.f32 %v1594, %v1597
    %vm1599 = vweird.f32 %v1542
    %vm1600 = vweird.f32 %v1594
    %vm1601 = vmor %vm1599, %vm1600
    %v1602 = vsel %vm1601, %v1594, %v1598
    %v1603 = vand.u32 2147483647, %v1542
    %vm1604 = vcmp.eq.f32.partialorder %v1603, 8.507059e+37
    %v1605 = vand.u32 %v1542, 2147483648
    %v1606 = vor.u32 1.1754944e-38, %v1605
    %v1607 = vsel %vm1604, %v1606, %v1602
    %v1608 = vmul.f32 %v1519, %v1607
    %v1609 = vrcp.pop %v1545
    %v1610 = vmul.f32 %v1545, %v1609
    %v1611 = vsub.f32 1.0, %v1610
    %v1612 = vmul.f32 %v1609, %v1611
    %v1613 = vadd.f32 %v1609, %v1612
    %vm1614 = vweird.f32 %v1545
    %vm1615 = vweird.f32 %v1609
    %vm1616 = vmor %vm1614, %vm1615
    %v1617 = vsel %vm1616, %v1609, %v1613
    %v1618 = vand.u32 2147483647, %v1545
    %vm1619 = vcmp.eq.f32.partialorder %v1618, 8.507059e+37
    %v1620 = vand.u32 %v1545, 2147483648
    %v1621 = vor.u32 1.1754944e-38, %v1620
    %v1622 = vsel %vm1619, %v1621, %v1617
    %v1623 = vmul.f32 %v1521, %v1622
    %v1624 = vrcp.pop %v1548
    %v1625 = vmul.f32 %v1548, %v1624
    %v1626 = vsub.f32 1.0, %v1625
    %v1627 = vmul.f32 %v1624, %v1626
    %v1628 = vadd.f32 %v1624, %v1627
    %vm1629 = vweird.f32 %v1548
    %vm1630 = vweird.f32 %v1624
    %vm1631 = vmor %vm1629, %vm1630
    %v1632 = vsel %vm1631, %v1624, %v1628
    %v1633 = vand.u32 2147483647, %v1548
    %vm1634 = vcmp.eq.f32.partialorder %v1633, 8.507059e+37
    %v1635 = vand.u32 %v1548, 2147483648
    %v1636 = vor.u32 1.1754944e-38, %v1635
    %v1637 = vsel %vm1634, %v1636, %v1632
    %v1638 = vmul.f32 %v1523, %v1637
    %v1639 = vrcp.pop %v1551
    %v1640 = vmul.f32 %v1551, %v1639
    %v1641 = vsub.f32 1.0, %v1640
    %v1642 = vmul.f32 %v1639, %v1641
    %v1643 = vadd.f32 %v1639, %v1642
    %vm1644 = vweird.f32 %v1551
    %vm1645 = vweird.f32 %v1639
    %vm1646 = vmor %vm1644, %vm1645
    %v1647 = vsel %vm1646, %v1639, %v1643
    %v1648 = vand.u32 2147483647, %v1551
    %vm1649 = vcmp.eq.f32.partialorder %v1648, 8.507059e+37
    %v1650 = vand.u32 %v1551, 2147483648
    %v1651 = vor.u32 1.1754944e-38, %v1650
    %v1652 = vsel %vm1649, %v1651, %v1647
    %v1653 = vmul.f32 %v1525, %v1652
    %v1654 = vrcp.pop %v1554
    %v1655 = vmul.f32 %v1554, %v1654
    %v1656 = vsub.f32 1.0, %v1655
    %v1657 = vmul.f32 %v1654, %v1656
    %v1658 = vadd.f32 %v1654, %v1657
    %vm1659 = vweird.f32 %v1554
    %vm1660 = vweird.f32 %v1654
    %vm1661 = vmor %vm1659, %vm1660
    %v1662 = vsel %vm1661, %v1654, %v1658
    %v1663 = vand.u32 2147483647, %v1554
    %vm1664 = vcmp.eq.f32.partialorder %v1663, 8.507059e+37
    %v1665 = vand.u32 %v1554, 2147483648
    %v1666 = vor.u32 1.1754944e-38, %v1665
    %v1667 = vsel %vm1664, %v1666, %v1662
    %v1668 = vmul.f32 %v1527, %v1667
    %v1669 = vrcp.pop %v1557
    %v1670 = vmul.f32 %v1557, %v1669
    %v1671 = vsub.f32 1.0, %v1670
    %v1672 = vmul.f32 %v1669, %v1671
    %v1673 = vadd.f32 %v1669, %v1672
    %vm1674 = vweird.f32 %v1557
    %vm1675 = vweird.f32 %v1669
    %vm1676 = vmor %vm1674, %vm1675
    %v1677 = vsel %vm1676, %v1669, %v1673
    %v1678 = vand.u32 2147483647, %v1557
    %vm1679 = vcmp.eq.f32.partialorder %v1678, 8.507059e+37
    %v1680 = vand.u32 %v1557, 2147483648
    %v1681 = vor.u32 1.1754944e-38, %v1680
    %v1682 = vsel %vm1679, %v1681, %v1677
    %v1683 = vmul.f32 %v1529, %v1682
    %v1684 = vrcp.pop %v1560
    %v1685 = vmul.f32 %v1560, %v1684
    %v1686 = vsub.f32 1.0, %v1685
    %v1687 = vmul.f32 %v1684, %v1686
    %v1688 = vadd.f32 %v1684, %v1687
    %vm1689 = vweird.f32 %v1560
    %vm1690 = vweird.f32 %v1684
    %vm1691 = vmor %vm1689, %vm1690
    %v1692 = vsel %vm1691, %v1684, %v1688
    %v1693 = vand.u32 2147483647, %v1560
    %vm1694 = vcmp.eq.f32.partialorder %v1693, 8.507059e+37
    %v1695 = vand.u32 %v1560, 2147483648
    %v1696 = vor.u32 1.1754944e-38, %v1695
    %v1697 = vsel %vm1694, %v1696, %v1692
    %v1698 = vmul.f32 %v1531, %v1697
    %v1699 = vrcp.pop %v1563
    %v1700 = vmul.f32 %v1563, %v1699
    %v1701 = vsub.f32 1.0, %v1700
    %v1702 = vmul.f32 %v1699, %v1701
    %v1703 = vadd.f32 %v1699, %v1702
    %vm1704 = vweird.f32 %v1563
    %vm1705 = vweird.f32 %v1699
    %vm1706 = vmor %vm1704, %vm1705
    %v1707 = vsel %vm1706, %v1699, %v1703
    %v1708 = vand.u32 2147483647, %v1563
    %vm1709 = vcmp.eq.f32.partialorder %v1708, 8.507059e+37
    %v1710 = vand.u32 %v1563, 2147483648
    %v1711 = vor.u32 1.1754944e-38, %v1710
    %v1712 = vsel %vm1709, %v1711, %v1707
    %v1713 = vmul.f32 %v1533, %v1712
    %v1714 = vsel %vm1389, %v504, 0
    %v1715 = vsel %vm1389, %v505, 0
    %v1716 = vsel %vm1389, %v506, 0
    %v1717 = vsel %vm1389, %v507, 0
    %v1718 = vsel %vm1389, %v508, 0
    %v1719 = vsel %vm1389, %v509, 0
    %v1720 = vsel %vm1389, %v510, 0
    %v1721 = vsel %vm1389, %v511, 0
    %v1722 = vsel %vm1389, %v512, 0
    %v1723 = vsel %vm1389, %v513, 0
    %v1724 = vpack.c.bf16 %v1593, %v1578
    %v1725 = vpack.c.bf16 %v1623, %v1608
    %v1726 = vpack.c.bf16 %v1653, %v1638
    %v1727 = vpack.c.bf16 %v1683, %v1668
    %v1728 = vpack.c.bf16 %v1713, %v1698
    %v1739 = vunpack.c.l.b16 %v1714
    %v1740 = vunpack.c.l.b16 %v1715
    %v1741 = vunpack.c.l.b16 %v1716
    %v1742 = vunpack.c.l.b16 %v1717
    %v1743 = vunpack.c.l.b16 %v1718
    %v1744 = vunpack.c.l.b16 %v1719
    %v1745 = vunpack.c.l.b16 %v1720
    %v1746 = vunpack.c.l.b16 %v1721
    %v1747 = vunpack.c.l.b16 %v1722
    %v1748 = vunpack.c.l.b16 %v1723
    %v1749 = vpack.c.b16 %v1740, %v1739
    %v1750 = vpack.c.b16 %v1742, %v1741
    %v1751 = vpack.c.b16 %v1744, %v1743
    %v1752 = vpack.c.b16 %v1746, %v1745
    %v1753 = vpack.c.b16 %v1748, %v1747
    %v1760 = vsel %vm631, %v1724, 0
    %v1763 = vsel %vm631, %v1725, 0
    %v1766 = vsel %vm631, %v1726, 0
    %v1769 = vsel %vm631, %v1727, 0
    %v1772 = vsel %vm631, %v1728, 0
    %1774 = vmatpush.bf16.msra.mxu0 0
    %1775 = vmatpush.bf16.msra.mxu0 0
    %1776 = vmatpush.bf16.msra.mxu0 0
    %1777 = vmatpush.bf16.msra.mxu0 %v1753
    %1778 = vmatpush.bf16.msra.mxu0 %v1752
    %1779 = vmatpush.bf16.msra.mxu0 %v1751
    %1780 = vmatpush.bf16.msra.mxu0 %v1750
    %1781 = vmatpush.bf16.msra.mxu0 %v1749
    %1782 = vmatmul.bf16.gmra.mxu0 %v1760
    %v1783 = vpop.f32.mrf.mxu0
    %v1784 = vadd.f32 0.0, %v1783
    %v1785 = vpop.f32.mrf.mxu0
    %v1786 = vadd.f32 0.0, %v1785
    %1787 = vmatmul.bf16.gmra.mxu0 %v1763
    %v1788 = vpop.f32.mrf.mxu0
    %v1789 = vadd.f32 0.0, %v1788
    %v1790 = vpop.f32.mrf.mxu0
    %v1791 = vadd.f32 0.0, %v1790
    %1792 = vmatmul.bf16.gmra.mxu0 %v1766
    %v1793 = vpop.f32.mrf.mxu0
    %v1794 = vadd.f32 0.0, %v1793
    %v1795 = vpop.f32.mrf.mxu0
    %v1796 = vadd.f32 0.0, %v1795
    %1797 = vmatmul.bf16.gmra.mxu0 %v1769
    %v1798 = vpop.f32.mrf.mxu0
    %v1799 = vadd.f32 0.0, %v1798
    %v1800 = vpop.f32.mrf.mxu0
    %v1801 = vadd.f32 0.0, %v1800
    %1802 = vmatmul.bf16.gmra.mxu0 %v1772
    %v1803 = vpop.f32.mrf.mxu0
    %v1804 = vadd.f32 0.0, %v1803
    %v1805 = vpop.f32.mrf.mxu0
    %v1806 = vadd.f32 0.0, %v1805
    %1807 = vdwg.mxu0
    %v1808 = vadd.f32 %v1363, %v1784
    %v1809 = vadd.f32 %v1365, %v1786
    %v1810 = vadd.f32 %v1368, %v1789
    %v1811 = vadd.f32 %v1370, %v1791
    %v1812 = vadd.f32 %v1373, %v1794
    %v1813 = vadd.f32 %v1375, %v1796
    %v1814 = vadd.f32 %v1378, %v1799
    %v1815 = vadd.f32 %v1380, %v1801
    %v1816 = vadd.f32 %v1383, %v1804
    %v1817 = vadd.f32 %v1385, %v1806
    %v1818 = vsel %vm370, 1, 0
    %vm1819 = vcmp.eq.s32.totalorder %v1818, 1
    %vm1820 = vmpackc.low %vm1819, %vm1819
    %v1821 = vsel %vm1820, %v489, 0
    %v1822 = vsel %vm1820, %v490, 0
    %v1823 = vsel %vm1820, %v491, 0
    %v1824 = vsel %vm1820, %v492, 0
    %v1825 = vsel %vm1820, %v493, 0
    %v1826 = vsel %vm1820, %v494, 0
    %v1827 = vsel %vm1820, %v495, 0
    %v1828 = vsel %vm1820, %v496, 0
    %v1829 = vsel %vm1820, %v497, 0
    %v1830 = vsel %vm1820, %v498, 0
    %v1841 = vunpack.c.l.b16 %v1821
    %v1842 = vunpack.c.l.b16 %v1822
    %v1843 = vunpack.c.l.b16 %v1823
    %v1844 = vunpack.c.l.b16 %v1824
    %v1845 = vunpack.c.l.b16 %v1825
    %v1846 = vunpack.c.l.b16 %v1826
    %v1847 = vunpack.c.l.b16 %v1827
    %v1848 = vunpack.c.l.b16 %v1828
    %v1849 = vunpack.c.l.b16 %v1829
    %v1850 = vunpack.c.l.b16 %v1830
    %v1851 = vpack.c.b16 %v1842, %v1841
    %v1852 = vpack.c.b16 %v1844, %v1843
    %v1853 = vpack.c.b16 %v1846, %v1845
    %v1854 = vpack.c.b16 %v1848, %v1847
    %v1855 = vpack.c.b16 %v1850, %v1849
    %v1857 = vsel %vm73, %v1851, 0
    %v1860 = vsel %vm73, %v1852, 0
    %v1863 = vsel %vm73, %v1853, 0
    %v1866 = vsel %vm73, %v1854, 0
    %v1869 = vsel %vm73, %v1855, 0
    %1871 = vmatpush.bf16.xpose.msra.mxu0 0
    %1872 = vmatpush.bf16.xpose.msra.mxu0 0
    %1873 = vmatpush.bf16.xpose.msra.mxu0 0
    %1874 = vmatpush.bf16.xpose.msra.mxu0 %v595
    %1875 = vmatpush.bf16.xpose.msra.mxu0 %v592
    %1876 = vmatpush.bf16.xpose.msra.mxu0 %v589
    %1877 = vmatpush.bf16.xpose.msra.mxu0 %v586
    %1878 = vmatpush.bf16.xpose.msra.mxu0 %v583
    %1879 = vmatmul.bf16.gmra.mxu0 %v1857
    %v1880 = vpop.f32.mrf.mxu0
    %v1881 = vadd.f32 %v347, %v1880
    %v1882 = vpop.f32.mrf.mxu0
    %v1883 = vadd.f32 %v348, %v1882
    %1884 = vmatmul.bf16.gmra.mxu0 %v1860
    %v1885 = vpop.f32.mrf.mxu0
    %v1886 = vadd.f32 %v349, %v1885
    %v1887 = vpop.f32.mrf.mxu0
    %v1888 = vadd.f32 %v350, %v1887
    %1889 = vmatmul.bf16.gmra.mxu0 %v1863
    %v1890 = vpop.f32.mrf.mxu0
    %v1891 = vadd.f32 %v351, %v1890
    %v1892 = vpop.f32.mrf.mxu0
    %v1893 = vadd.f32 %v352, %v1892
    %1894 = vmatmul.bf16.gmra.mxu0 %v1866
    %v1895 = vpop.f32.mrf.mxu0
    %v1896 = vadd.f32 %v353, %v1895
    %v1897 = vpop.f32.mrf.mxu0
    %v1898 = vadd.f32 %v354, %v1897
    %1899 = vmatmul.bf16.gmra.mxu0 %v1869
    %v1900 = vpop.f32.mrf.mxu0
    %v1901 = vadd.f32 %v355, %v1900
    %v1902 = vpop.f32.mrf.mxu0
    %v1903 = vadd.f32 %v356, %v1902
    %1904 = vdwg.mxu0
    %v1905 = vsel %vm631, %v1881, -inf
    %1906 = vmax.xlane.f32.xlu0 %v1905
    %v1907 = vpop.xlane.xlu0 %1906
    %v1908 = vsel %vm631, %v1883, -inf
    %1909 = vmax.xlane.f32.xlu0 %v1908
    %v1910 = vpop.xlane.xlu0 %1909
    %v1911 = vsel %vm631, %v1886, -inf
    %1912 = vmax.xlane.f32.xlu0 %v1911
    %v1913 = vpop.xlane.xlu0 %1912
    %v1914 = vsel %vm631, %v1888, -inf
    %1915 = vmax.xlane.f32.xlu0 %v1914
    %v1916 = vpop.xlane.xlu0 %1915
    %v1917 = vsel %vm631, %v1891, -inf
    %1918 = vmax.xlane.f32.xlu0 %v1917
    %v1919 = vpop.xlane.xlu0 %1918
    %v1920 = vsel %vm631, %v1893, -inf
    %1921 = vmax.xlane.f32.xlu0 %v1920
    %v1922 = vpop.xlane.xlu0 %1921
    %v1923 = vsel %vm631, %v1896, -inf
    %1924 = vmax.xlane.f32.xlu0 %v1923
    %v1925 = vpop.xlane.xlu0 %1924
    %v1926 = vsel %vm631, %v1898, -inf
    %1927 = vmax.xlane.f32.xlu0 %v1926
    %v1928 = vpop.xlane.xlu0 %1927
    %v1929 = vsel %vm631, %v1901, -inf
    %1930 = vmax.xlane.f32.xlu0 %v1929
    %v1931 = vpop.xlane.xlu0 %1930
    %v1932 = vsel %vm631, %v1903, -inf
    %1933 = vmax.xlane.f32.xlu0 %v1932
    %v1934 = vpop.xlane.xlu0 %1933
    %v1935 = vsub.f32 %v1881, %v1907
    %v1936 = vsub.f32 %v1883, %v1910
    %v1937 = vsub.f32 %v1886, %v1913
    %v1938 = vsub.f32 %v1888, %v1916
    %v1939 = vsub.f32 %v1891, %v1919
    %v1940 = vsub.f32 %v1893, %v1922
    %v1941 = vsub.f32 %v1896, %v1925
    %v1942 = vsub.f32 %v1898, %v1928
    %v1943 = vsub.f32 %v1901, %v1931
    %v1944 = vsub.f32 %v1903, %v1934
    %v1945 = vmul.f32 %v1935, 1.442695
    %v1946 = vpow.pop %v1945
    %v1947 = vmul.f32 %v1936, 1.442695
    %v1948 = vpow.pop %v1947
    %v1949 = vmul.f32 %v1937, 1.442695
    %v1950 = vpow.pop %v1949
    %v1951 = vmul.f32 %v1938, 1.442695
    %v1952 = vpow.pop %v1951
    %v1953 = vmul.f32 %v1939, 1.442695
    %v1954 = vpow.pop %v1953
    %v1955 = vmul.f32 %v1940, 1.442695
    %v1956 = vpow.pop %v1955
    %v1957 = vmul.f32 %v1941, 1.442695
    %v1958 = vpow.pop %v1957
    %v1959 = vmul.f32 %v1942, 1.442695
    %v1960 = vpow.pop %v1959
    %v1961 = vmul.f32 %v1943, 1.442695
    %v1962 = vpow.pop %v1961
    %v1963 = vmul.f32 %v1944, 1.442695
    %v1964 = vpow.pop %v1963
    %v1965 = vsel %vm631, %v1946, 0.0
    %1966 = vadd.xlane.f32.xlu0 %v1965
    %v1967 = vpop.xlane.xlu0 %1966
    %v1968 = vsel %vm631, %v1948, 0.0
    %1969 = vadd.xlane.f32.xlu0 %v1968
    %v1970 = vpop.xlane.xlu0 %1969
    %v1971 = vsel %vm631, %v1950, 0.0
    %1972 = vadd.xlane.f32.xlu0 %v1971
    %v1973 = vpop.xlane.xlu0 %1972
    %v1974 = vsel %vm631, %v1952, 0.0
    %1975 = vadd.xlane.f32.xlu0 %v1974
    %v1976 = vpop.xlane.xlu0 %1975
    %v1977 = vsel %vm631, %v1954, 0.0
    %1978 = vadd.xlane.f32.xlu0 %v1977
    %v1979 = vpop.xlane.xlu0 %1978
    %v1980 = vsel %vm631, %v1956, 0.0
    %1981 = vadd.xlane.f32.xlu0 %v1980
    %v1982 = vpop.xlane.xlu0 %1981
    %v1983 = vsel %vm631, %v1958, 0.0
    %1984 = vadd.xlane.f32.xlu0 %v1983
    %v1985 = vpop.xlane.xlu0 %1984
    %v1986 = vsel %vm631, %v1960, 0.0
    %1987 = vadd.xlane.f32.xlu0 %v1986
    %v1988 = vpop.xlane.xlu0 %1987
    %v1989 = vsel %vm631, %v1962, 0.0
    %1990 = vadd.xlane.f32.xlu0 %v1989
    %v1991 = vpop.xlane.xlu0 %1990
    %v1992 = vsel %vm631, %v1964, 0.0
    %1993 = vadd.xlane.f32.xlu0 %v1992
    %v1994 = vpop.xlane.xlu0 %1993
    %v1995 = vrcp.pop %v1967
    %v1996 = vmul.f32 %v1967, %v1995
    %v1997 = vsub.f32 1.0, %v1996
    %v1998 = vmul.f32 %v1995, %v1997
    %v1999 = vadd.f32 %v1995, %v1998
    %vm2000 = vweird.f32 %v1967
    %vm2001 = vweird.f32 %v1995
    %vm2002 = vmor %vm2000, %vm2001
    %v2003 = vsel %vm2002, %v1995, %v1999
    %v2004 = vand.u32 2147483647, %v1967
    %vm2005 = vcmp.eq.f32.partialorder %v2004, 8.507059e+37
    %v2006 = vand.u32 %v1967, 2147483648
    %v2007 = vor.u32 1.1754944e-38, %v2006
    %v2008 = vsel %vm2005, %v2007, %v2003
    %v2009 = vmul.f32 %v1946, %v2008
    %v2010 = vrcp.pop %v1970
    %v2011 = vmul.f32 %v1970, %v2010
    %v2012 = vsub.f32 1.0, %v2011
    %v2013 = vmul.f32 %v2010, %v2012
    %v2014 = vadd.f32 %v2010, %v2013
    %vm2015 = vweird.f32 %v1970
    %vm2016 = vweird.f32 %v2010
    %vm2017 = vmor %vm2015, %vm2016
    %v2018 = vsel %vm2017, %v2010, %v2014
    %v2019 = vand.u32 2147483647, %v1970
    %vm2020 = vcmp.eq.f32.partialorder %v2019, 8.507059e+37
    %v2021 = vand.u32 %v1970, 2147483648
    %v2022 = vor.u32 1.1754944e-38, %v2021
    %v2023 = vsel %vm2020, %v2022, %v2018
    %v2024 = vmul.f32 %v1948, %v2023
    %v2025 = vrcp.pop %v1973
    %v2026 = vmul.f32 %v1973, %v2025
    %v2027 = vsub.f32 1.0, %v2026
    %v2028 = vmul.f32 %v2025, %v2027
    %v2029 = vadd.f32 %v2025, %v2028
    %vm2030 = vweird.f32 %v1973
    %vm2031 = vweird.f32 %v2025
    %vm2032 = vmor %vm2030, %vm2031
    %v2033 = vsel %vm2032, %v2025, %v2029
    %v2034 = vand.u32 2147483647, %v1973
    %vm2035 = vcmp.eq.f32.partialorder %v2034, 8.507059e+37
    %v2036 = vand.u32 %v1973, 2147483648
    %v2037 = vor.u32 1.1754944e-38, %v2036
    %v2038 = vsel %vm2035, %v2037, %v2033
    %v2039 = vmul.f32 %v1950, %v2038
    %v2040 = vrcp.pop %v1976
    %v2041 = vmul.f32 %v1976, %v2040
    %v2042 = vsub.f32 1.0, %v2041
    %v2043 = vmul.f32 %v2040, %v2042
    %v2044 = vadd.f32 %v2040, %v2043
    %vm2045 = vweird.f32 %v1976
    %vm2046 = vweird.f32 %v2040
    %vm2047 = vmor %vm2045, %vm2046
    %v2048 = vsel %vm2047, %v2040, %v2044
    %v2049 = vand.u32 2147483647, %v1976
    %vm2050 = vcmp.eq.f32.partialorder %v2049, 8.507059e+37
    %v2051 = vand.u32 %v1976, 2147483648
    %v2052 = vor.u32 1.1754944e-38, %v2051
    %v2053 = vsel %vm2050, %v2052, %v2048
    %v2054 = vmul.f32 %v1952, %v2053
    %v2055 = vrcp.pop %v1979
    %v2056 = vmul.f32 %v1979, %v2055
    %v2057 = vsub.f32 1.0, %v2056
    %v2058 = vmul.f32 %v2055, %v2057
    %v2059 = vadd.f32 %v2055, %v2058
    %vm2060 = vweird.f32 %v1979
    %vm2061 = vweird.f32 %v2055
    %vm2062 = vmor %vm2060, %vm2061
    %v2063 = vsel %vm2062, %v2055, %v2059
    %v2064 = vand.u32 2147483647, %v1979
    %vm2065 = vcmp.eq.f32.partialorder %v2064, 8.507059e+37
    %v2066 = vand.u32 %v1979, 2147483648
    %v2067 = vor.u32 1.1754944e-38, %v2066
    %v2068 = vsel %vm2065, %v2067, %v2063
    %v2069 = vmul.f32 %v1954, %v2068
    %v2070 = vrcp.pop %v1982
    %v2071 = vmul.f32 %v1982, %v2070
    %v2072 = vsub.f32 1.0, %v2071
    %v2073 = vmul.f32 %v2070, %v2072
    %v2074 = vadd.f32 %v2070, %v2073
    %vm2075 = vweird.f32 %v1982
    %vm2076 = vweird.f32 %v2070
    %vm2077 = vmor %vm2075, %vm2076
    %v2078 = vsel %vm2077, %v2070, %v2074
    %v2079 = vand.u32 2147483647, %v1982
    %vm2080 = vcmp.eq.f32.partialorder %v2079, 8.507059e+37
    %v2081 = vand.u32 %v1982, 2147483648
    %v2082 = vor.u32 1.1754944e-38, %v2081
    %v2083 = vsel %vm2080, %v2082, %v2078
    %v2084 = vmul.f32 %v1956, %v2083
    %v2085 = vrcp.pop %v1985
    %v2086 = vmul.f32 %v1985, %v2085
    %v2087 = vsub.f32 1.0, %v2086
    %v2088 = vmul.f32 %v2085, %v2087
    %v2089 = vadd.f32 %v2085, %v2088
    %vm2090 = vweird.f32 %v1985
    %vm2091 = vweird.f32 %v2085
    %vm2092 = vmor %vm2090, %vm2091
    %v2093 = vsel %vm2092, %v2085, %v2089
    %v2094 = vand.u32 2147483647, %v1985
    %vm2095 = vcmp.eq.f32.partialorder %v2094, 8.507059e+37
    %v2096 = vand.u32 %v1985, 2147483648
    %v2097 = vor.u32 1.1754944e-38, %v2096
    %v2098 = vsel %vm2095, %v2097, %v2093
    %v2099 = vmul.f32 %v1958, %v2098
    %v2100 = vrcp.pop %v1988
    %v2101 = vmul.f32 %v1988, %v2100
    %v2102 = vsub.f32 1.0, %v2101
    %v2103 = vmul.f32 %v2100, %v2102
    %v2104 = vadd.f32 %v2100, %v2103
    %vm2105 = vweird.f32 %v1988
    %vm2106 = vweird.f32 %v2100
    %vm2107 = vmor %vm2105, %vm2106
    %v2108 = vsel %vm2107, %v2100, %v2104
    %v2109 = vand.u32 2147483647, %v1988
    %vm2110 = vcmp.eq.f32.partialorder %v2109, 8.507059e+37
    %v2111 = vand.u32 %v1988, 2147483648
    %v2112 = vor.u32 1.1754944e-38, %v2111
    %v2113 = vsel %vm2110, %v2112, %v2108
    %v2114 = vmul.f32 %v1960, %v2113
    %v2115 = vrcp.pop %v1991
    %v2116 = vmul.f32 %v1991, %v2115
    %v2117 = vsub.f32 1.0, %v2116
    %v2118 = vmul.f32 %v2115, %v2117
    %v2119 = vadd.f32 %v2115, %v2118
    %vm2120 = vweird.f32 %v1991
    %vm2121 = vweird.f32 %v2115
    %vm2122 = vmor %vm2120, %vm2121
    %v2123 = vsel %vm2122, %v2115, %v2119
    %v2124 = vand.u32 2147483647, %v1991
    %vm2125 = vcmp.eq.f32.partialorder %v2124, 8.507059e+37
    %v2126 = vand.u32 %v1991, 2147483648
    %v2127 = vor.u32 1.1754944e-38, %v2126
    %v2128 = vsel %vm2125, %v2127, %v2123
    %v2129 = vmul.f32 %v1962, %v2128
    %v2130 = vrcp.pop %v1994
    %v2131 = vmul.f32 %v1994, %v2130
    %v2132 = vsub.f32 1.0, %v2131
    %v2133 = vmul.f32 %v2130, %v2132
    %v2134 = vadd.f32 %v2130, %v2133
    %vm2135 = vweird.f32 %v1994
    %vm2136 = vweird.f32 %v2130
    %vm2137 = vmor %vm2135, %vm2136
    %v2138 = vsel %vm2137, %v2130, %v2134
    %v2139 = vand.u32 2147483647, %v1994
    %vm2140 = vcmp.eq.f32.partialorder %v2139, 8.507059e+37
    %v2141 = vand.u32 %v1994, 2147483648
    %v2142 = vor.u32 1.1754944e-38, %v2141
    %v2143 = vsel %vm2140, %v2142, %v2138
    %v2144 = vmul.f32 %v1964, %v2143
    %v2145 = vsel %vm1820, %v504, 0
    %v2146 = vsel %vm1820, %v505, 0
    %v2147 = vsel %vm1820, %v506, 0
    %v2148 = vsel %vm1820, %v507, 0
    %v2149 = vsel %vm1820, %v508, 0
    %v2150 = vsel %vm1820, %v509, 0
    %v2151 = vsel %vm1820, %v510, 0
    %v2152 = vsel %vm1820, %v511, 0
    %v2153 = vsel %vm1820, %v512, 0
    %v2154 = vsel %vm1820, %v513, 0
    %v2155 = vpack.c.bf16 %v2024, %v2009
    %v2156 = vpack.c.bf16 %v2054, %v2039
    %v2157 = vpack.c.bf16 %v2084, %v2069
    %v2158 = vpack.c.bf16 %v2114, %v2099
    %v2159 = vpack.c.bf16 %v2144, %v2129
    %v2170 = vunpack.c.l.b16 %v2145
    %v2171 = vunpack.c.l.b16 %v2146
    %v2172 = vunpack.c.l.b16 %v2147
    %v2173 = vunpack.c.l.b16 %v2148
    %v2174 = vunpack.c.l.b16 %v2149
    %v2175 = vunpack.c.l.b16 %v2150
    %v2176 = vunpack.c.l.b16 %v2151
    %v2177 = vunpack.c.l.b16 %v2152
    %v2178 = vunpack.c.l.b16 %v2153
    %v2179 = vunpack.c.l.b16 %v2154
    %v2180 = vpack.c.b16 %v2171, %v2170
    %v2181 = vpack.c.b16 %v2173, %v2172
    %v2182 = vpack.c.b16 %v2175, %v2174
    %v2183 = vpack.c.b16 %v2177, %v2176
    %v2184 = vpack.c.b16 %v2179, %v2178
    %v2191 = vsel %vm631, %v2155, 0
    %v2194 = vsel %vm631, %v2156, 0
    %v2197 = vsel %vm631, %v2157, 0
    %v2200 = vsel %vm631, %v2158, 0
    %v2203 = vsel %vm631, %v2159, 0
    %2205 = vmatpush.bf16.msra.mxu0 0
    %2206 = vmatpush.bf16.msra.mxu0 0
    %2207 = vmatpush.bf16.msra.mxu0 0
    %2208 = vmatpush.bf16.msra.mxu0 %v2184
    %2209 = vmatpush.bf16.msra.mxu0 %v2183
    %2210 = vmatpush.bf16.msra.mxu0 %v2182
    %2211 = vmatpush.bf16.msra.mxu0 %v2181
    %2212 = vmatpush.bf16.msra.mxu0 %v2180
    %2213 = vmatmul.bf16.gmra.mxu0 %v2191
    %v2214 = vpop.f32.mrf.mxu0
    %v2215 = vadd.f32 0.0, %v2214
    %v2216 = vpop.f32.mrf.mxu0
    %v2217 = vadd.f32 0.0, %v2216
    %2218 = vmatmul.bf16.gmra.mxu0 %v2194
    %v2219 = vpop.f32.mrf.mxu0
    %v2220 = vadd.f32 0.0, %v2219
    %v2221 = vpop.f32.mrf.mxu0
    %v2222 = vadd.f32 0.0, %v2221
    %2223 = vmatmul.bf16.gmra.mxu0 %v2197
    %v2224 = vpop.f32.mrf.mxu0
    %v2225 = vadd.f32 0.0, %v2224
    %v2226 = vpop.f32.mrf.mxu0
    %v2227 = vadd.f32 0.0, %v2226
    %2228 = vmatmul.bf16.gmra.mxu0 %v2200
    %v2229 = vpop.f32.mrf.mxu0
    %v2230 = vadd.f32 0.0, %v2229
    %v2231 = vpop.f32.mrf.mxu0
    %v2232 = vadd.f32 0.0, %v2231
    %2233 = vmatmul.bf16.gmra.mxu0 %v2203
    %v2234 = vpop.f32.mrf.mxu0
    %v2235 = vadd.f32 0.0, %v2234
    %v2236 = vpop.f32.mrf.mxu0
    %v2237 = vadd.f32 0.0, %v2236
    %2238 = vdwg.mxu0
    %v2239 = vadd.f32 %v1808, %v2215
    %v2240 = vadd.f32 %v1809, %v2217
    %v2241 = vadd.f32 %v1810, %v2220
    %v2242 = vadd.f32 %v1811, %v2222
    %v2243 = vadd.f32 %v1812, %v2225
    %v2244 = vadd.f32 %v1813, %v2227
    %v2245 = vadd.f32 %v1814, %v2230
    %v2246 = vadd.f32 %v1815, %v2232
    %v2247 = vadd.f32 %v1816, %v2235
    %v2248 = vadd.f32 %v1817, %v2237
    %v2249 = vpack.c.bf16 %v2240, %v2239
    %v2250 = vpack.c.bf16 %v2242, %v2241
    %v2251 = vpack.c.bf16 %v2244, %v2243
    %v2252 = vpack.c.bf16 %v2246, %v2245
    %v2253 = vpack.c.bf16 %v2248, %v2247
    %v2254 = vld [vmem:[%s6] sm:$0xff]
    %v2255 = vld [vmem:[%s6 + $0x8] sm:$0xff]
    %v2256 = vld [vmem:[%s6 + $0x10] sm:$0xff]
    %v2257 = vld [vmem:[%s6 + $0x18] sm:$0xff]
    %v2258 = vld [vmem:[%s6 + $0x20] sm:$0xff]
    %v2259 = vld [vmem:[%s6 + $0x28] sm:$0xff]
    %v2260 = vld [vmem:[%s6 + $0x30] sm:$0xff]
    %v2261 = vld [vmem:[%s6 + $0x38] sm:$0xff]
    %v2262 = vpack.c.bf16 %v2255, %v2254
    %v2263 = vpack.c.bf16 %v2257, %v2256
    %v2264 = vpack.c.bf16 %v2259, %v2258
    %v2265 = vpack.c.bf16 %v2261, %v2260
    %v2266 = vld [vmem:[%s7] sm:$0x1]
    %v2268 = vperm.slane %v2266, 0
    %v2271 = vsel %vm73, %v2249, 0
    %v2274 = vsel %vm73, %v2250, 0
    %v2277 = vsel %vm73, %v2251, 0
    %v2280 = vsel %vm73, %v2252, 0
    %v2283 = vsel %vm73, %v2253, 0
    %2285 = vmatpush.bf16.msra.mxu0 0
    %2286 = vmatpush.bf16.msra.mxu0 0
    %2287 = vmatpush.bf16.msra.mxu0 0
    %2288 = vmatpush.bf16.msra.mxu0 0
    %2289 = vmatpush.bf16.msra.mxu0 %v2265
    %2290 = vmatpush.bf16.msra.mxu0 %v2264
    %2291 = vmatpush.bf16.msra.mxu0 %v2263
    %2292 = vmatpush.bf16.msra.mxu0 %v2262
    %2293 = vmatmul.bf16.gmra.mxu0 %v2271
    %v2294 = vpop.f32.mrf.mxu0
    %v2295 = vadd.f32 %v2268, %v2294
    %v2296 = vpop.f32.mrf.mxu0
    %v2297 = vadd.f32 %v2268, %v2296
    %2298 = vmatmul.bf16.gmra.mxu0 %v2274
    %v2299 = vpop.f32.mrf.mxu0
    %v2300 = vadd.f32 %v2268, %v2299
    %v2301 = vpop.f32.mrf.mxu0
    %v2302 = vadd.f32 %v2268, %v2301
    %2303 = vmatmul.bf16.gmra.mxu0 %v2277
    %v2304 = vpop.f32.mrf.mxu0
    %v2305 = vadd.f32 %v2268, %v2304
    %v2306 = vpop.f32.mrf.mxu0
    %v2307 = vadd.f32 %v2268, %v2306
    %2308 = vmatmul.bf16.gmra.mxu0 %v2280
    %v2309 = vpop.f32.mrf.mxu0
    %v2310 = vadd.f32 %v2268, %v2309
    %v2311 = vpop.f32.mrf.mxu0
    %v2312 = vadd.f32 %v2268, %v2311
    %2313 = vmatmul.bf16.gmra.mxu0 %v2283
    %v2314 = vpop.f32.mrf.mxu0
    %v2315 = vadd.f32 %v2268, %v2314
    %v2316 = vpop.f32.mrf.mxu0
    %v2317 = vadd.f32 %v2268, %v2316
    %2318 = vdwg.mxu0
    %v2319 = vadd.f32 %v337, %v2295
    %v2320 = vadd.f32 %v338, %v2297
    %v2321 = vadd.f32 %v339, %v2300
    %v2322 = vadd.f32 %v340, %v2302
    %v2323 = vadd.f32 %v341, %v2305
    %v2324 = vadd.f32 %v342, %v2307
    %v2325 = vadd.f32 %v343, %v2310
    %v2326 = vadd.f32 %v344, %v2312
    %v2327 = vadd.f32 %v345, %v2315
    %v2328 = vadd.f32 %v346, %v2317
    %v2329 = vld [vmem:[%s8] sm:$0x1]
    %v2330 = vld [vmem:[%s9] sm:$0x1]
    %v2331 = vsel %vm73, %v2319, 0.0
    %2332 = vadd.xlane.f32.xlu0 %v2331
    %v2333 = vpop.xlane.xlu0 %2332
    %v2334 = vsel %vm73, %v2320, 0.0
    %2335 = vadd.xlane.f32.xlu0 %v2334
    %v2336 = vpop.xlane.xlu0 %2335
    %v2337 = vsel %vm73, %v2321, 0.0
    %2338 = vadd.xlane.f32.xlu0 %v2337
    %v2339 = vpop.xlane.xlu0 %2338
    %v2340 = vsel %vm73, %v2322, 0.0
    %2341 = vadd.xlane.f32.xlu0 %v2340
    %v2342 = vpop.xlane.xlu0 %2341
    %v2343 = vsel %vm73, %v2323, 0.0
    %2344 = vadd.xlane.f32.xlu0 %v2343
    %v2345 = vpop.xlane.xlu0 %2344
    %v2346 = vsel %vm73, %v2324, 0.0
    %2347 = vadd.xlane.f32.xlu0 %v2346
    %v2348 = vpop.xlane.xlu0 %2347
    %v2349 = vsel %vm73, %v2325, 0.0
    %2350 = vadd.xlane.f32.xlu0 %v2349
    %v2351 = vpop.xlane.xlu0 %2350
    %v2352 = vsel %vm73, %v2326, 0.0
    %2353 = vadd.xlane.f32.xlu0 %v2352
    %v2354 = vpop.xlane.xlu0 %2353
    %v2355 = vsel %vm73, %v2327, 0.0
    %2356 = vadd.xlane.f32.xlu0 %v2355
    %v2357 = vpop.xlane.xlu0 %2356
    %v2358 = vsel %vm73, %v2328, 0.0
    %2359 = vadd.xlane.f32.xlu0 %v2358
    %v2360 = vpop.xlane.xlu0 %2359
    %v2361 = vmul.f32 %v2333, %v110
    %v2362 = vmul.f32 %v2336, %v110
    %v2363 = vmul.f32 %v2339, %v110
    %v2364 = vmul.f32 %v2342, %v110
    %v2365 = vmul.f32 %v2345, %v110
    %v2366 = vmul.f32 %v2348, %v110
    %v2367 = vmul.f32 %v2351, %v110
    %v2368 = vmul.f32 %v2354, %v110
    %v2369 = vmul.f32 %v2357, %v110
    %v2370 = vmul.f32 %v2360, %v110
    %v2371 = vmul.f32 %v2319, %v2319
    %v2372 = vmul.f32 %v2320, %v2320
    %v2373 = vmul.f32 %v2321, %v2321
    %v2374 = vmul.f32 %v2322, %v2322
    %v2375 = vmul.f32 %v2323, %v2323
    %v2376 = vmul.f32 %v2324, %v2324
    %v2377 = vmul.f32 %v2325, %v2325
    %v2378 = vmul.f32 %v2326, %v2326
    %v2379 = vmul.f32 %v2327, %v2327
    %v2380 = vmul.f32 %v2328, %v2328
    %v2381 = vsel %vm73, %v2371, 0.0
    %2382 = vadd.xlane.f32.xlu0 %v2381
    %v2383 = vpop.xlane.xlu0 %2382
    %v2384 = vsel %vm73, %v2372, 0.0
    %2385 = vadd.xlane.f32.xlu0 %v2384
    %v2386 = vpop.xlane.xlu0 %2385
    %v2387 = vsel %vm73, %v2373, 0.0
    %2388 = vadd.xlane.f32.xlu0 %v2387
    %v2389 = vpop.xlane.xlu0 %2388
    %v2390 = vsel %vm73, %v2374, 0.0
    %2391 = vadd.xlane.f32.xlu0 %v2390
    %v2392 = vpop.xlane.xlu0 %2391
    %v2393 = vsel %vm73, %v2375, 0.0
    %2394 = vadd.xlane.f32.xlu0 %v2393
    %v2395 = vpop.xlane.xlu0 %2394
    %v2396 = vsel %vm73, %v2376, 0.0
    %2397 = vadd.xlane.f32.xlu0 %v2396
    %v2398 = vpop.xlane.xlu0 %2397
    %v2399 = vsel %vm73, %v2377, 0.0
    %2400 = vadd.xlane.f32.xlu0 %v2399
    %v2401 = vpop.xlane.xlu0 %2400
    %v2402 = vsel %vm73, %v2378, 0.0
    %2403 = vadd.xlane.f32.xlu0 %v2402
    %v2404 = vpop.xlane.xlu0 %2403
    %v2405 = vsel %vm73, %v2379, 0.0
    %2406 = vadd.xlane.f32.xlu0 %v2405
    %v2407 = vpop.xlane.xlu0 %2406
    %v2408 = vsel %vm73, %v2380, 0.0
    %2409 = vadd.xlane.f32.xlu0 %v2408
    %v2410 = vpop.xlane.xlu0 %2409
    %v2411 = vmul.f32 %v2383, %v110
    %v2412 = vmul.f32 %v2386, %v110
    %v2413 = vmul.f32 %v2389, %v110
    %v2414 = vmul.f32 %v2392, %v110
    %v2415 = vmul.f32 %v2395, %v110
    %v2416 = vmul.f32 %v2398, %v110
    %v2417 = vmul.f32 %v2401, %v110
    %v2418 = vmul.f32 %v2404, %v110
    %v2419 = vmul.f32 %v2407, %v110
    %v2420 = vmul.f32 %v2410, %v110
    %v2421 = vmul.f32 %v2361, %v2361
    %v2422 = vmul.f32 %v2362, %v2362
    %v2423 = vmul.f32 %v2363, %v2363
    %v2424 = vmul.f32 %v2364, %v2364
    %v2425 = vmul.f32 %v2365, %v2365
    %v2426 = vmul.f32 %v2366, %v2366
    %v2427 = vmul.f32 %v2367, %v2367
    %v2428 = vmul.f32 %v2368, %v2368
    %v2429 = vmul.f32 %v2369, %v2369
    %v2430 = vmul.f32 %v2370, %v2370
    %v2431 = vsub.f32 %v2411, %v2421
    %v2432 = vsub.f32 %v2412, %v2422
    %v2433 = vsub.f32 %v2413, %v2423
    %v2434 = vsub.f32 %v2414, %v2424
    %v2435 = vsub.f32 %v2415, %v2425
    %v2436 = vsub.f32 %v2416, %v2426
    %v2437 = vsub.f32 %v2417, %v2427
    %v2438 = vsub.f32 %v2418, %v2428
    %v2439 = vsub.f32 %v2419, %v2429
    %v2440 = vsub.f32 %v2420, %v2430
    %v2441 = vsub.f32 %v2319, %v2361
    %v2442 = vsub.f32 %v2320, %v2362
    %v2443 = vsub.f32 %v2321, %v2363
    %v2444 = vsub.f32 %v2322, %v2364
    %v2445 = vsub.f32 %v2323, %v2365
    %v2446 = vsub.f32 %v2324, %v2366
    %v2447 = vsub.f32 %v2325, %v2367
    %v2448 = vsub.f32 %v2326, %v2368
    %v2449 = vsub.f32 %v2327, %v2369
    %v2450 = vsub.f32 %v2328, %v2370
    %v2451 = vadd.f32 %v2431, 1e-12
    %v2452 = vadd.f32 %v2432, 1e-12
    %v2453 = vadd.f32 %v2433, 1e-12
    %v2454 = vadd.f32 %v2434, 1e-12
    %v2455 = vadd.f32 %v2435, 1e-12
    %v2456 = vadd.f32 %v2436, 1e-12
    %v2457 = vadd.f32 %v2437, 1e-12
    %v2458 = vadd.f32 %v2438, 1e-12
    %v2459 = vadd.f32 %v2439, 1e-12
    %v2460 = vadd.f32 %v2440, 1e-12
    %v2461 = vrsqrt.pop %v2451
    %v2462 = vmul.f32 %v2461, %v2451
    %v2463 = vmul.f32 %v2462, %v2461
    %v2464 = vmul.f32 0.5, %v2463
    %v2465 = vsub.f32 1.5, %v2464
    %v2466 = vmul.f32 %v2461, %v2465
    %vm2467 = vweird.f32 %v2451
    %vm2468 = vweird.f32 %v2461
    %vm2469 = vmor %vm2467, %vm2468
    %v2470 = vsel %vm2469, %v2461, %v2466
    %v2471 = vrsqrt.pop %v2452
    %v2472 = vmul.f32 %v2471, %v2452
    %v2473 = vmul.f32 %v2472, %v2471
    %v2474 = vmul.f32 0.5, %v2473
    %v2475 = vsub.f32 1.5, %v2474
    %v2476 = vmul.f32 %v2471, %v2475
    %vm2477 = vweird.f32 %v2452
    %vm2478 = vweird.f32 %v2471
    %vm2479 = vmor %vm2477, %vm2478
    %v2480 = vsel %vm2479, %v2471, %v2476
    %v2481 = vrsqrt.pop %v2453
    %v2482 = vmul.f32 %v2481, %v2453
    %v2483 = vmul.f32 %v2482, %v2481
    %v2484 = vmul.f32 0.5, %v2483
    %v2485 = vsub.f32 1.5, %v2484
    %v2486 = vmul.f32 %v2481, %v2485
    %vm2487 = vweird.f32 %v2453
    %vm2488 = vweird.f32 %v2481
    %vm2489 = vmor %vm2487, %vm2488
    %v2490 = vsel %vm2489, %v2481, %v2486
    %v2491 = vrsqrt.pop %v2454
    %v2492 = vmul.f32 %v2491, %v2454
    %v2493 = vmul.f32 %v2492, %v2491
    %v2494 = vmul.f32 0.5, %v2493
    %v2495 = vsub.f32 1.5, %v2494
    %v2496 = vmul.f32 %v2491, %v2495
    %vm2497 = vweird.f32 %v2454
    %vm2498 = vweird.f32 %v2491
    %vm2499 = vmor %vm2497, %vm2498
    %v2500 = vsel %vm2499, %v2491, %v2496
    %v2501 = vrsqrt.pop %v2455
    %v2502 = vmul.f32 %v2501, %v2455
    %v2503 = vmul.f32 %v2502, %v2501
    %v2504 = vmul.f32 0.5, %v2503
    %v2505 = vsub.f32 1.5, %v2504
    %v2506 = vmul.f32 %v2501, %v2505
    %vm2507 = vweird.f32 %v2455
    %vm2508 = vweird.f32 %v2501
    %vm2509 = vmor %vm2507, %vm2508
    %v2510 = vsel %vm2509, %v2501, %v2506
    %v2511 = vrsqrt.pop %v2456
    %v2512 = vmul.f32 %v2511, %v2456
    %v2513 = vmul.f32 %v2512, %v2511
    %v2514 = vmul.f32 0.5, %v2513
    %v2515 = vsub.f32 1.5, %v2514
    %v2516 = vmul.f32 %v2511, %v2515
    %vm2517 = vweird.f32 %v2456
    %vm2518 = vweird.f32 %v2511
    %vm2519 = vmor %vm2517, %vm2518
    %v2520 = vsel %vm2519, %v2511, %v2516
    %v2521 = vrsqrt.pop %v2457
    %v2522 = vmul.f32 %v2521, %v2457
    %v2523 = vmul.f32 %v2522, %v2521
    %v2524 = vmul.f32 0.5, %v2523
    %v2525 = vsub.f32 1.5, %v2524
    %v2526 = vmul.f32 %v2521, %v2525
    %vm2527 = vweird.f32 %v2457
    %vm2528 = vweird.f32 %v2521
    %vm2529 = vmor %vm2527, %vm2528
    %v2530 = vsel %vm2529, %v2521, %v2526
    %v2531 = vrsqrt.pop %v2458
    %v2532 = vmul.f32 %v2531, %v2458
    %v2533 = vmul.f32 %v2532, %v2531
    %v2534 = vmul.f32 0.5, %v2533
    %v2535 = vsub.f32 1.5, %v2534
    %v2536 = vmul.f32 %v2531, %v2535
    %vm2537 = vweird.f32 %v2458
    %vm2538 = vweird.f32 %v2531
    %vm2539 = vmor %vm2537, %vm2538
    %v2540 = vsel %vm2539, %v2531, %v2536
    %v2541 = vrsqrt.pop %v2459
    %v2542 = vmul.f32 %v2541, %v2459
    %v2543 = vmul.f32 %v2542, %v2541
    %v2544 = vmul.f32 0.5, %v2543
    %v2545 = vsub.f32 1.5, %v2544
    %v2546 = vmul.f32 %v2541, %v2545
    %vm2547 = vweird.f32 %v2459
    %vm2548 = vweird.f32 %v2541
    %vm2549 = vmor %vm2547, %vm2548
    %v2550 = vsel %vm2549, %v2541, %v2546
    %v2551 = vrsqrt.pop %v2460
    %v2552 = vmul.f32 %v2551, %v2460
    %v2553 = vmul.f32 %v2552, %v2551
    %v2554 = vmul.f32 0.5, %v2553
    %v2555 = vsub.f32 1.5, %v2554
    %v2556 = vmul.f32 %v2551, %v2555
    %vm2557 = vweird.f32 %v2460
    %vm2558 = vweird.f32 %v2551
    %vm2559 = vmor %vm2557, %vm2558
    %v2560 = vsel %vm2559, %v2551, %v2556
    %v2561 = vmul.f32 %v2441, %v2470
    %v2562 = vmul.f32 %v2442, %v2480
    %v2563 = vmul.f32 %v2443, %v2490
    %v2564 = vmul.f32 %v2444, %v2500
    %v2565 = vmul.f32 %v2445, %v2510
    %v2566 = vmul.f32 %v2446, %v2520
    %v2567 = vmul.f32 %v2447, %v2530
    %v2568 = vmul.f32 %v2448, %v2540
    %v2569 = vmul.f32 %v2449, %v2550
    %v2570 = vmul.f32 %v2450, %v2560
    %v2572 = vperm.slane %v2329, 0
    %v2574 = vmul.f32 %v2561, %v2572
    %v2575 = vmul.f32 %v2562, %v2572
    %v2576 = vmul.f32 %v2563, %v2572
    %v2577 = vmul.f32 %v2564, %v2572
    %v2578 = vmul.f32 %v2565, %v2572
    %v2579 = vmul.f32 %v2566, %v2572
    %v2580 = vmul.f32 %v2567, %v2572
    %v2581 = vmul.f32 %v2568, %v2572
    %v2582 = vmul.f32 %v2569, %v2572
    %v2583 = vmul.f32 %v2570, %v2572
    %v2585 = vperm.slane %v2330, 0
    %v2587 = vadd.f32 %v2574, %v2585
    %v2588 = vadd.f32 %v2575, %v2585
    %v2589 = vadd.f32 %v2576, %v2585
    %v2590 = vadd.f32 %v2577, %v2585
    %v2591 = vadd.f32 %v2578, %v2585
    %v2592 = vadd.f32 %v2579, %v2585
    %v2593 = vadd.f32 %v2580, %v2585
    %v2594 = vadd.f32 %v2581, %v2585
    %v2595 = vadd.f32 %v2582, %v2585
    %v2596 = vadd.f32 %v2583, %v2585
    %v2597 = vpack.c.bf16 %v2588, %v2587
    %v2598 = vpack.c.bf16 %v2590, %v2589
    %v2599 = vpack.c.bf16 %v2592, %v2591
    %v2600 = vpack.c.bf16 %v2594, %v2593
    %v2601 = vpack.c.bf16 %v2596, %v2595
    %v2602 = vld [vmem:[%s10] sm:$0xff]
    %v2603 = vld [vmem:[%s10 + $0x8] sm:$0xff]
    %v2604 = vld [vmem:[%s10 + $0x10] sm:$0xff]
    %v2605 = vld [vmem:[%s10 + $0x18] sm:$0xff]
    %v2606 = vld [vmem:[%s10 + $0x20] sm:$0xff]
    %v2607 = vld [vmem:[%s10 + $0x28] sm:$0xff]
    %v2608 = vld [vmem:[%s10 + $0x30] sm:$0xff]
    %v2609 = vld [vmem:[%s10 + $0x38] sm:$0xff]
    %v2610 = vpack.c.bf16 %v2603, %v2602
    %v2611 = vpack.c.bf16 %v2605, %v2604
    %v2612 = vpack.c.bf16 %v2607, %v2606
    %v2613 = vpack.c.bf16 %v2609, %v2608
    %v2614 = vld [vmem:[%s11] sm:$0x1]
    %v2616 = vperm.slane %v2614, 0
    %v2619 = vsel %vm73, %v2597, 0
    %v2622 = vsel %vm73, %v2598, 0
    %v2625 = vsel %vm73, %v2599, 0
    %v2628 = vsel %vm73, %v2600, 0
    %v2631 = vsel %vm73, %v2601, 0
    %2633 = vmatpush.bf16.msra.mxu0 0
    %2634 = vmatpush.bf16.msra.mxu0 0
    %2635 = vmatpush.bf16.msra.mxu0 0
    %2636 = vmatpush.bf16.msra.mxu0 0
    %2637 = vmatpush.bf16.msra.mxu0 %v2613
    %2638 = vmatpush.bf16.msra.mxu0 %v2612
    %2639 = vmatpush.bf16.msra.mxu0 %v2611
    %2640 = vmatpush.bf16.msra.mxu0 %v2610
    %2641 = vmatmul.bf16.gmra.mxu0 %v2619
    %v2642 = vpop.f32.mrf.mxu0
    %v2643 = vadd.f32 %v2616, %v2642
    %v2644 = vpop.f32.mrf.mxu0
    %v2645 = vadd.f32 %v2616, %v2644
    %2646 = vmatmul.bf16.gmra.mxu0 %v2622
    %v2647 = vpop.f32.mrf.mxu0
    %v2648 = vadd.f32 %v2616, %v2647
    %v2649 = vpop.f32.mrf.mxu0
    %v2650 = vadd.f32 %v2616, %v2649
    %2651 = vmatmul.bf16.gmra.mxu0 %v2625
    %v2652 = vpop.f32.mrf.mxu0
    %v2653 = vadd.f32 %v2616, %v2652
    %v2654 = vpop.f32.mrf.mxu0
    %v2655 = vadd.f32 %v2616, %v2654
    %2656 = vmatmul.bf16.gmra.mxu0 %v2628
    %v2657 = vpop.f32.mrf.mxu0
    %v2658 = vadd.f32 %v2616, %v2657
    %v2659 = vpop.f32.mrf.mxu0
    %v2660 = vadd.f32 %v2616, %v2659
    %2661 = vmatmul.bf16.gmra.mxu0 %v2631
    %v2662 = vpop.f32.mrf.mxu0
    %v2663 = vadd.f32 %v2616, %v2662
    %v2664 = vpop.f32.mrf.mxu0
    %v2665 = vadd.f32 %v2616, %v2664
    %2666 = vdwg.mxu0
    %v2667 = vmul.f32 %v2643, %v2643
    %v2668 = vmul.f32 %v2645, %v2645
    %v2669 = vmul.f32 %v2648, %v2648
    %v2670 = vmul.f32 %v2650, %v2650
    %v2671 = vmul.f32 %v2653, %v2653
    %v2672 = vmul.f32 %v2655, %v2655
    %v2673 = vmul.f32 %v2658, %v2658
    %v2674 = vmul.f32 %v2660, %v2660
    %v2675 = vmul.f32 %v2663, %v2663
    %v2676 = vmul.f32 %v2665, %v2665
    %v2677 = vmul.f32 %v2643, %v2667
    %v2678 = vmul.f32 %v2645, %v2668
    %v2679 = vmul.f32 %v2648, %v2669
    %v2680 = vmul.f32 %v2650, %v2670
    %v2681 = vmul.f32 %v2653, %v2671
    %v2682 = vmul.f32 %v2655, %v2672
    %v2683 = vmul.f32 %v2658, %v2673
    %v2684 = vmul.f32 %v2660, %v2674
    %v2685 = vmul.f32 %v2663, %v2675
    %v2686 = vmul.f32 %v2665, %v2676
    %v2687 = vmul.f32 %v2677, 0.044715
    %v2688 = vmul.f32 %v2678, 0.044715
    %v2689 = vmul.f32 %v2679, 0.044715
    %v2690 = vmul.f32 %v2680, 0.044715
    %v2691 = vmul.f32 %v2681, 0.044715
    %v2692 = vmul.f32 %v2682, 0.044715
    %v2693 = vmul.f32 %v2683, 0.044715
    %v2694 = vmul.f32 %v2684, 0.044715
    %v2695 = vmul.f32 %v2685, 0.044715
    %v2696 = vmul.f32 %v2686, 0.044715
    %v2697 = vadd.f32 %v2643, %v2687
    %v2698 = vadd.f32 %v2645, %v2688
    %v2699 = vadd.f32 %v2648, %v2689
    %v2700 = vadd.f32 %v2650, %v2690
    %v2701 = vadd.f32 %v2653, %v2691
    %v2702 = vadd.f32 %v2655, %v2692
    %v2703 = vadd.f32 %v2658, %v2693
    %v2704 = vadd.f32 %v2660, %v2694
    %v2705 = vadd.f32 %v2663, %v2695
    %v2706 = vadd.f32 %v2665, %v2696
    %v2707 = vmul.f32 %v2697, 0.7978846
    %v2708 = vmul.f32 %v2698, 0.7978846
    %v2709 = vmul.f32 %v2699, 0.7978846
    %v2710 = vmul.f32 %v2700, 0.7978846
    %v2711 = vmul.f32 %v2701, 0.7978846
    %v2712 = vmul.f32 %v2702, 0.7978846
    %v2713 = vmul.f32 %v2703, 0.7978846
    %v2714 = vmul.f32 %v2704, 0.7978846
    %v2715 = vmul.f32 %v2705, 0.7978846
    %v2716 = vmul.f32 %v2706, 0.7978846
    %v2717 = vtanh.pop %v2707
    %v2718 = vtanh.pop %v2708
    %v2719 = vtanh.pop %v2709
    %v2720 = vtanh.pop %v2710
    %v2721 = vtanh.pop %v2711
    %v2722 = vtanh.pop %v2712
    %v2723 = vtanh.pop %v2713
    %v2724 = vtanh.pop %v2714
    %v2725 = vtanh.pop %v2715
    %v2726 = vtanh.pop %v2716
    %v2727 = vadd.f32 %v2717, 1.0
    %v2728 = vadd.f32 %v2718, 1.0
    %v2729 = vadd.f32 %v2719, 1.0
    %v2730 = vadd.f32 %v2720, 1.0
    %v2731 = vadd.f32 %v2721, 1.0
    %v2732 = vadd.f32 %v2722, 1.0
    %v2733 = vadd.f32 %v2723, 1.0
    %v2734 = vadd.f32 %v2724, 1.0
    %v2735 = vadd.f32 %v2725, 1.0
    %v2736 = vadd.f32 %v2726, 1.0
    %v2737 = vmul.f32 %v2727, 0.5
    %v2738 = vmul.f32 %v2728, 0.5
    %v2739 = vmul.f32 %v2729, 0.5
    %v2740 = vmul.f32 %v2730, 0.5
    %v2741 = vmul.f32 %v2731, 0.5
    %v2742 = vmul.f32 %v2732, 0.5
    %v2743 = vmul.f32 %v2733, 0.5
    %v2744 = vmul.f32 %v2734, 0.5
    %v2745 = vmul.f32 %v2735, 0.5
    %v2746 = vmul.f32 %v2736, 0.5
    %v2747 = vmul.f32 %v2643, %v2737
    %v2748 = vmul.f32 %v2645, %v2738
    %v2749 = vmul.f32 %v2648, %v2739
    %v2750 = vmul.f32 %v2650, %v2740
    %v2751 = vmul.f32 %v2653, %v2741
    %v2752 = vmul.f32 %v2655, %v2742
    %v2753 = vmul.f32 %v2658, %v2743
    %v2754 = vmul.f32 %v2660, %v2744
    %v2755 = vmul.f32 %v2663, %v2745
    %v2756 = vmul.f32 %v2665, %v2746
    %v2757 = vpack.c.bf16 %v2748, %v2747
    %v2758 = vpack.c.bf16 %v2750, %v2749
    %v2759 = vpack.c.bf16 %v2752, %v2751
    %v2760 = vpack.c.bf16 %v2754, %v2753
    %v2761 = vpack.c.bf16 %v2756, %v2755
    %v2762 = vld [vmem:[%s12] sm:$0xff]
    %v2763 = vld [vmem:[%s12 + $0x8] sm:$0xff]
    %v2764 = vld [vmem:[%s12 + $0x10] sm:$0xff]
    %v2765 = vld [vmem:[%s12 + $0x18] sm:$0xff]
    %v2766 = vld [vmem:[%s12 + $0x20] sm:$0xff]
    %v2767 = vld [vmem:[%s12 + $0x28] sm:$0xff]
    %v2768 = vld [vmem:[%s12 + $0x30] sm:$0xff]
    %v2769 = vld [vmem:[%s12 + $0x38] sm:$0xff]
    %v2770 = vld [vmem:[%s12 + $0x40] sm:$0xff]
    %v2771 = vld [vmem:[%s12 + $0x48] sm:$0xff]
    %v2772 = vld [vmem:[%s12 + $0x50] sm:$0xff]
    %v2773 = vld [vmem:[%s12 + $0x58] sm:$0xff]
    %v2774 = vld [vmem:[%s12 + $0x60] sm:$0xff]
    %v2775 = vld [vmem:[%s12 + $0x68] sm:$0xff]
    %v2776 = vld [vmem:[%s12 + $0x70] sm:$0xff]
    %v2777 = vld [vmem:[%s12 + $0x78] sm:$0xff]
    %v2778 = vpack.c.bf16 %v2763, %v2762
    %v2779 = vpack.c.bf16 %v2765, %v2764
    %v2780 = vpack.c.bf16 %v2767, %v2766
    %v2781 = vpack.c.bf16 %v2769, %v2768
    %v2782 = vpack.c.bf16 %v2771, %v2770
    %v2783 = vpack.c.bf16 %v2773, %v2772
    %v2784 = vpack.c.bf16 %v2775, %v2774
    %v2785 = vpack.c.bf16 %v2777, %v2776
    %v2786 = vld [vmem:[%s13] sm:$0x1]
    %v2788 = vperm.slane %v2786, 0
    %2790 = vmatpush.bf16.msra.mxu0 %v2785
    %2791 = vmatpush.bf16.msra.mxu0 %v2784
    %2792 = vmatpush.bf16.msra.mxu0 %v2783
    %2793 = vmatpush.bf16.msra.mxu0 %v2782
    %2794 = vmatpush.bf16.msra.mxu0 %v2781
    %2795 = vmatpush.bf16.msra.mxu0 %v2780
    %2796 = vmatpush.bf16.msra.mxu0 %v2779
    %2797 = vmatpush.bf16.msra.mxu0 %v2778
    %2798 = vmatmul.bf16.gmra.mxu0 %v2757
    %v2799 = vpop.f32.mrf.mxu0
    %v2800 = vadd.f32 %v2788, %v2799
    %v2801 = vpop.f32.mrf.mxu0
    %v2802 = vadd.f32 %v2788, %v2801
    %2803 = vmatmul.bf16.gmra.mxu0 %v2758
    %v2804 = vpop.f32.mrf.mxu0
    %v2805 = vadd.f32 %v2788, %v2804
    %v2806 = vpop.f32.mrf.mxu0
    %v2807 = vadd.f32 %v2788, %v2806
    %2808 = vmatmul.bf16.gmra.mxu0 %v2759
    %v2809 = vpop.f32.mrf.mxu0
    %v2810 = vadd.f32 %v2788, %v2809
    %v2811 = vpop.f32.mrf.mxu0
    %v2812 = vadd.f32 %v2788, %v2811
    %2813 = vmatmul.bf16.gmra.mxu0 %v2760
    %v2814 = vpop.f32.mrf.mxu0
    %v2815 = vadd.f32 %v2788, %v2814
    %v2816 = vpop.f32.mrf.mxu0
    %v2817 = vadd.f32 %v2788, %v2816
    %2818 = vmatmul.bf16.gmra.mxu0 %v2761
    %v2819 = vpop.f32.mrf.mxu0
    %v2820 = vadd.f32 %v2788, %v2819
    %v2821 = vpop.f32.mrf.mxu0
    %v2822 = vadd.f32 %v2788, %v2821
    %2823 = vdwg.mxu0
    %v2824 = vadd.f32 %v2587, %v2800
    %v2825 = vadd.f32 %v2588, %v2802
    %v2826 = vadd.f32 %v2589, %v2805
    %v2827 = vadd.f32 %v2590, %v2807
    %v2828 = vadd.f32 %v2591, %v2810
    %v2829 = vadd.f32 %v2592, %v2812
    %v2830 = vadd.f32 %v2593, %v2815
    %v2831 = vadd.f32 %v2594, %v2817
    %v2832 = vadd.f32 %v2595, %v2820
    %v2833 = vadd.f32 %v2596, %v2822
    %v2834 = vld [vmem:[%s14] sm:$0x1]
    %v2835 = vld [vmem:[%s15] sm:$0x1]
    %v2836 = vsel %vm73, %v2824, 0.0
    %2837 = vadd.xlane.f32.xlu0 %v2836
    %v2838 = vpop.xlane.xlu0 %2837
    %v2839 = vsel %vm73, %v2825, 0.0
    %2840 = vadd.xlane.f32.xlu0 %v2839
    %v2841 = vpop.xlane.xlu0 %2840
    %v2842 = vsel %vm73, %v2826, 0.0
    %2843 = vadd.xlane.f32.xlu0 %v2842
    %v2844 = vpop.xlane.xlu0 %2843
    %v2845 = vsel %vm73, %v2827, 0.0
    %2846 = vadd.xlane.f32.xlu0 %v2845
    %v2847 = vpop.xlane.xlu0 %2846
    %v2848 = vsel %vm73, %v2828, 0.0
    %2849 = vadd.xlane.f32.xlu0 %v2848
    %v2850 = vpop.xlane.xlu0 %2849
    %v2851 = vsel %vm73, %v2829, 0.0
    %2852 = vadd.xlane.f32.xlu0 %v2851
    %v2853 = vpop.xlane.xlu0 %2852
    %v2854 = vsel %vm73, %v2830, 0.0
    %2855 = vadd.xlane.f32.xlu0 %v2854
    %v2856 = vpop.xlane.xlu0 %2855
    %v2857 = vsel %vm73, %v2831, 0.0
    %2858 = vadd.xlane.f32.xlu0 %v2857
    %v2859 = vpop.xlane.xlu0 %2858
    %v2860 = vsel %vm73, %v2832, 0.0
    %2861 = vadd.xlane.f32.xlu0 %v2860
    %v2862 = vpop.xlane.xlu0 %2861
    %v2863 = vsel %vm73, %v2833, 0.0
    %2864 = vadd.xlane.f32.xlu0 %v2863
    %v2865 = vpop.xlane.xlu0 %2864
    %v2866 = vmul.f32 %v2838, %v110
    %v2867 = vmul.f32 %v2841, %v110
    %v2868 = vmul.f32 %v2844, %v110
    %v2869 = vmul.f32 %v2847, %v110
    %v2870 = vmul.f32 %v2850, %v110
    %v2871 = vmul.f32 %v2853, %v110
    %v2872 = vmul.f32 %v2856, %v110
    %v2873 = vmul.f32 %v2859, %v110
    %v2874 = vmul.f32 %v2862, %v110
    %v2875 = vmul.f32 %v2865, %v110
    %v2876 = vmul.f32 %v2824, %v2824
    %v2877 = vmul.f32 %v2825, %v2825
    %v2878 = vmul.f32 %v2826, %v2826
    %v2879 = vmul.f32 %v2827, %v2827
    %v2880 = vmul.f32 %v2828, %v2828
    %v2881 = vmul.f32 %v2829, %v2829
    %v2882 = vmul.f32 %v2830, %v2830
    %v2883 = vmul.f32 %v2831, %v2831
    %v2884 = vmul.f32 %v2832, %v2832
    %v2885 = vmul.f32 %v2833, %v2833
    %v2886 = vsel %vm73, %v2876, 0.0
    %2887 = vadd.xlane.f32.xlu0 %v2886
    %v2888 = vpop.xlane.xlu0 %2887
    %v2889 = vsel %vm73, %v2877, 0.0
    %2890 = vadd.xlane.f32.xlu0 %v2889
    %v2891 = vpop.xlane.xlu0 %2890
    %v2892 = vsel %vm73, %v2878, 0.0
    %2893 = vadd.xlane.f32.xlu0 %v2892
    %v2894 = vpop.xlane.xlu0 %2893
    %v2895 = vsel %vm73, %v2879, 0.0
    %2896 = vadd.xlane.f32.xlu0 %v2895
    %v2897 = vpop.xlane.xlu0 %2896
    %v2898 = vsel %vm73, %v2880, 0.0
    %2899 = vadd.xlane.f32.xlu0 %v2898
    %v2900 = vpop.xlane.xlu0 %2899
    %v2901 = vsel %vm73, %v2881, 0.0
    %2902 = vadd.xlane.f32.xlu0 %v2901
    %v2903 = vpop.xlane.xlu0 %2902
    %v2904 = vsel %vm73, %v2882, 0.0
    %2905 = vadd.xlane.f32.xlu0 %v2904
    %v2906 = vpop.xlane.xlu0 %2905
    %v2907 = vsel %vm73, %v2883, 0.0
    %2908 = vadd.xlane.f32.xlu0 %v2907
    %v2909 = vpop.xlane.xlu0 %2908
    %v2910 = vsel %vm73, %v2884, 0.0
    %2911 = vadd.xlane.f32.xlu0 %v2910
    %v2912 = vpop.xlane.xlu0 %2911
    %v2913 = vsel %vm73, %v2885, 0.0
    %2914 = vadd.xlane.f32.xlu0 %v2913
    %v2915 = vpop.xlane.xlu0 %2914
    %v2916 = vmul.f32 %v2888, %v110
    %v2917 = vmul.f32 %v2891, %v110
    %v2918 = vmul.f32 %v2894, %v110
    %v2919 = vmul.f32 %v2897, %v110
    %v2920 = vmul.f32 %v2900, %v110
    %v2921 = vmul.f32 %v2903, %v110
    %v2922 = vmul.f32 %v2906, %v110
    %v2923 = vmul.f32 %v2909, %v110
    %v2924 = vmul.f32 %v2912, %v110
    %v2925 = vmul.f32 %v2915, %v110
    %v2926 = vmul.f32 %v2866, %v2866
    %v2927 = vmul.f32 %v2867, %v2867
    %v2928 = vmul.f32 %v2868, %v2868
    %v2929 = vmul.f32 %v2869, %v2869
    %v2930 = vmul.f32 %v2870, %v2870
    %v2931 = vmul.f32 %v2871, %v2871
    %v2932 = vmul.f32 %v2872, %v2872
    %v2933 = vmul.f32 %v2873, %v2873
    %v2934 = vmul.f32 %v2874, %v2874
    %v2935 = vmul.f32 %v2875, %v2875
    %v2936 = vsub.f32 %v2916, %v2926
    %v2937 = vsub.f32 %v2917, %v2927
    %v2938 = vsub.f32 %v2918, %v2928
    %v2939 = vsub.f32 %v2919, %v2929
    %v2940 = vsub.f32 %v2920, %v2930
    %v2941 = vsub.f32 %v2921, %v2931
    %v2942 = vsub.f32 %v2922, %v2932
    %v2943 = vsub.f32 %v2923, %v2933
    %v2944 = vsub.f32 %v2924, %v2934
    %v2945 = vsub.f32 %v2925, %v2935
    %v2946 = vsub.f32 %v2824, %v2866
    %v2947 = vsub.f32 %v2825, %v2867
    %v2948 = vsub.f32 %v2826, %v2868
    %v2949 = vsub.f32 %v2827, %v2869
    %v2950 = vsub.f32 %v2828, %v2870
    %v2951 = vsub.f32 %v2829, %v2871
    %v2952 = vsub.f32 %v2830, %v2872
    %v2953 = vsub.f32 %v2831, %v2873
    %v2954 = vsub.f32 %v2832, %v2874
    %v2955 = vsub.f32 %v2833, %v2875
    %v2956 = vadd.f32 %v2936, 1e-12
    %v2957 = vadd.f32 %v2937, 1e-12
    %v2958 = vadd.f32 %v2938, 1e-12
    %v2959 = vadd.f32 %v2939, 1e-12
    %v2960 = vadd.f32 %v2940, 1e-12
    %v2961 = vadd.f32 %v2941, 1e-12
    %v2962 = vadd.f32 %v2942, 1e-12
    %v2963 = vadd.f32 %v2943, 1e-12
    %v2964 = vadd.f32 %v2944, 1e-12
    %v2965 = vadd.f32 %v2945, 1e-12
    %v2966 = vrsqrt.pop %v2956
    %v2967 = vmul.f32 %v2966, %v2956
    %v2968 = vmul.f32 %v2967, %v2966
    %v2969 = vmul.f32 0.5, %v2968
    %v2970 = vsub.f32 1.5, %v2969
    %v2971 = vmul.f32 %v2966, %v2970
    %vm2972 = vweird.f32 %v2956
    %vm2973 = vweird.f32 %v2966
    %vm2974 = vmor %vm2972, %vm2973
    %v2975 = vsel %vm2974, %v2966, %v2971
    %v2976 = vrsqrt.pop %v2957
    %v2977 = vmul.f32 %v2976, %v2957
    %v2978 = vmul.f32 %v2977, %v2976
    %v2979 = vmul.f32 0.5, %v2978
    %v2980 = vsub.f32 1.5, %v2979
    %v2981 = vmul.f32 %v2976, %v2980
    %vm2982 = vweird.f32 %v2957
    %vm2983 = vweird.f32 %v2976
    %vm2984 = vmor %vm2982, %vm2983
    %v2985 = vsel %vm2984, %v2976, %v2981
    %v2986 = vrsqrt.pop %v2958
    %v2987 = vmul.f32 %v2986, %v2958
    %v2988 = vmul.f32 %v2987, %v2986
    %v2989 = vmul.f32 0.5, %v2988
    %v2990 = vsub.f32 1.5, %v2989
    %v2991 = vmul.f32 %v2986, %v2990
    %vm2992 = vweird.f32 %v2958
    %vm2993 = vweird.f32 %v2986
    %vm2994 = vmor %vm2992, %vm2993
    %v2995 = vsel %vm2994, %v2986, %v2991
    %v2996 = vrsqrt.pop %v2959
    %v2997 = vmul.f32 %v2996, %v2959
    %v2998 = vmul.f32 %v2997, %v2996
    %v2999 = vmul.f32 0.5, %v2998
    %v3000 = vsub.f32 1.5, %v2999
    %v3001 = vmul.f32 %v2996, %v3000
    %vm3002 = vweird.f32 %v2959
    %vm3003 = vweird.f32 %v2996
    %vm3004 = vmor %vm3002, %vm3003
    %v3005 = vsel %vm3004, %v2996, %v3001
    %v3006 = vrsqrt.pop %v2960
    %v3007 = vmul.f32 %v3006, %v2960
    %v3008 = vmul.f32 %v3007, %v3006
    %v3009 = vmul.f32 0.5, %v3008
    %v3010 = vsub.f32 1.5, %v3009
    %v3011 = vmul.f32 %v3006, %v3010
    %vm3012 = vweird.f32 %v2960
    %vm3013 = vweird.f32 %v3006
    %vm3014 = vmor %vm3012, %vm3013
    %v3015 = vsel %vm3014, %v3006, %v3011
    %v3016 = vrsqrt.pop %v2961
    %v3017 = vmul.f32 %v3016, %v2961
    %v3018 = vmul.f32 %v3017, %v3016
    %v3019 = vmul.f32 0.5, %v3018
    %v3020 = vsub.f32 1.5, %v3019
    %v3021 = vmul.f32 %v3016, %v3020
    %vm3022 = vweird.f32 %v2961
    %vm3023 = vweird.f32 %v3016
    %vm3024 = vmor %vm3022, %vm3023
    %v3025 = vsel %vm3024, %v3016, %v3021
    %v3026 = vrsqrt.pop %v2962
    %v3027 = vmul.f32 %v3026, %v2962
    %v3028 = vmul.f32 %v3027, %v3026
    %v3029 = vmul.f32 0.5, %v3028
    %v3030 = vsub.f32 1.5, %v3029
    %v3031 = vmul.f32 %v3026, %v3030
    %vm3032 = vweird.f32 %v2962
    %vm3033 = vweird.f32 %v3026
    %vm3034 = vmor %vm3032, %vm3033
    %v3035 = vsel %vm3034, %v3026, %v3031
    %v3036 = vrsqrt.pop %v2963
    %v3037 = vmul.f32 %v3036, %v2963
    %v3038 = vmul.f32 %v3037, %v3036
    %v3039 = vmul.f32 0.5, %v3038
    %v3040 = vsub.f32 1.5, %v3039
    %v3041 = vmul.f32 %v3036, %v3040
    %vm3042 = vweird.f32 %v2963
    %vm3043 = vweird.f32 %v3036
    %vm3044 = vmor %vm3042, %vm3043
    %v3045 = vsel %vm3044, %v3036, %v3041
    %v3046 = vrsqrt.pop %v2964
    %v3047 = vmul.f32 %v3046, %v2964
    %v3048 = vmul.f32 %v3047, %v3046
    %v3049 = vmul.f32 0.5, %v3048
    %v3050 = vsub.f32 1.5, %v3049
    %v3051 = vmul.f32 %v3046, %v3050
    %vm3052 = vweird.f32 %v2964
    %vm3053 = vweird.f32 %v3046
    %vm3054 = vmor %vm3052, %vm3053
    %v3055 = vsel %vm3054, %v3046, %v3051
    %v3056 = vrsqrt.pop %v2965
    %v3057 = vmul.f32 %v3056, %v2965
    %v3058 = vmul.f32 %v3057, %v3056
    %v3059 = vmul.f32 0.5, %v3058
    %v3060 = vsub.f32 1.5, %v3059
    %v3061 = vmul.f32 %v3056, %v3060
    %vm3062 = vweird.f32 %v2965
    %vm3063 = vweird.f32 %v3056
    %vm3064 = vmor %vm3062, %vm3063
    %v3065 = vsel %vm3064, %v3056, %v3061
    %v3066 = vmul.f32 %v2946, %v2975
    %v3067 = vmul.f32 %v2947, %v2985
    %v3068 = vmul.f32 %v2948, %v2995
    %v3069 = vmul.f32 %v2949, %v3005
    %v3070 = vmul.f32 %v2950, %v3015
    %v3071 = vmul.f32 %v2951, %v3025
    %v3072 = vmul.f32 %v2952, %v3035
    %v3073 = vmul.f32 %v2953, %v3045
    %v3074 = vmul.f32 %v2954, %v3055
    %v3075 = vmul.f32 %v2955, %v3065
    %v3077 = vperm.slane %v2834, 0
    %v3079 = vmul.f32 %v3066, %v3077
    %v3080 = vmul.f32 %v3067, %v3077
    %v3081 = vmul.f32 %v3068, %v3077
    %v3082 = vmul.f32 %v3069, %v3077
    %v3083 = vmul.f32 %v3070, %v3077
    %v3084 = vmul.f32 %v3071, %v3077
    %v3085 = vmul.f32 %v3072, %v3077
    %v3086 = vmul.f32 %v3073, %v3077
    %v3087 = vmul.f32 %v3074, %v3077
    %v3088 = vmul.f32 %v3075, %v3077
    %v3090 = vperm.slane %v2835, 0
    %v3092 = vadd.f32 %v3079, %v3090
    %v3093 = vadd.f32 %v3080, %v3090
    %v3094 = vadd.f32 %v3081, %v3090
    %v3095 = vadd.f32 %v3082, %v3090
    %v3096 = vadd.f32 %v3083, %v3090
    %v3097 = vadd.f32 %v3084, %v3090
    %v3098 = vadd.f32 %v3085, %v3090
    %v3099 = vadd.f32 %v3086, %v3090
    %v3100 = vadd.f32 %v3087, %v3090
    %v3101 = vadd.f32 %v3088, %v3090
    %v3102 = vpack.c.bf16 %v3093, %v3092
    %v3103 = vpack.c.bf16 %v3095, %v3094
    %v3104 = vpack.c.bf16 %v3097, %v3096
    %v3105 = vpack.c.bf16 %v3099, %v3098
    %v3106 = vpack.c.bf16 %v3101, %v3100
    %s3107 = scalar_lea.vmem %s4, 128
    %v3108 = vld [vmem:[%s3107] sm:$0xff]
    %v3109 = vld [vmem:[%s3107 + $0x8] sm:$0xff]
    %v3110 = vld [vmem:[%s3107 + $0x10] sm:$0xff]
    %v3111 = vld [vmem:[%s3107 + $0x18] sm:$0xff]
    %v3112 = vld [vmem:[%s3107 + $0x20] sm:$0xff]
    %v3113 = vld [vmem:[%s3107 + $0x28] sm:$0xff]
    %v3114 = vld [vmem:[%s3107 + $0x30] sm:$0xff]
    %v3115 = vld [vmem:[%s3107 + $0x38] sm:$0xff]
    %v3116 = vld [vmem:[%s3107 + $0x40] sm:$0xff]
    %v3117 = vld [vmem:[%s3107 + $0x48] sm:$0xff]
    %v3118 = vld [vmem:[%s3107 + $0x50] sm:$0xff]
    %v3119 = vld [vmem:[%s3107 + $0x58] sm:$0xff]
    %v3120 = vld [vmem:[%s3107 + $0x60] sm:$0xff]
    %v3121 = vld [vmem:[%s3107 + $0x68] sm:$0xff]
    %v3122 = vld [vmem:[%s3107 + $0x70] sm:$0xff]
    %v3123 = vld [vmem:[%s3107 + $0x78] sm:$0xff]
    %v3124 = vpack.c.bf16 %v3110, %v3108
    %v3125 = vpack.c.bf16 %v3111, %v3109
    %v3126 = vpack.c.bf16 %v3114, %v3112
    %v3127 = vpack.c.bf16 %v3115, %v3113
    %v3128 = vpack.c.bf16 %v3118, %v3116
    %v3129 = vpack.c.bf16 %v3119, %v3117
    %v3130 = vpack.c.bf16 %v3122, %v3120
    %v3131 = vpack.c.bf16 %v3123, %v3121
    %s3132 = scalar_lea.vmem %s5, 2
    %v3133 = vld [vmem:[%s3132] sm:$0x3]
    %v3135 = vperm.slane %v3133, 0
    %v3136 = vperm.slane %v3133, 1
    %v3140 = vsel %vm73, %v3102, 0
    %v3143 = vsel %vm73, %v3103, 0
    %v3146 = vsel %vm73, %v3104, 0
    %v3149 = vsel %vm73, %v3105, 0
    %v3152 = vsel %vm73, %v3106, 0
    %3154 = vmatpush.bf16.msra.mxu0 0
    %3155 = vmatpush.bf16.msra.mxu0 0
    %3156 = vmatpush.bf16.msra.mxu0 0
    %3157 = vmatpush.bf16.msra.mxu0 0
    %3158 = vmatpush.bf16.msra.mxu0 %v3130
    %3159 = vmatpush.bf16.msra.mxu0 %v3128
    %3160 = vmatpush.bf16.msra.mxu0 %v3126
    %3161 = vmatpush.bf16.msra.mxu0 %v3124
    %3162 = vmatmul.bf16.gmra.mxu0 %v3140
    %v3163 = vpop.f32.mrf.mxu0
    %v3164 = vadd.f32 %v3135, %v3163
    %v3165 = vpop.f32.mrf.mxu0
    %v3166 = vadd.f32 %v3135, %v3165
    %3167 = vmatmul.bf16.gmra.mxu0 %v3143
    %v3168 = vpop.f32.mrf.mxu0
    %v3169 = vadd.f32 %v3135, %v3168
    %v3170 = vpop.f32.mrf.mxu0
    %v3171 = vadd.f32 %v3135, %v3170
    %3172 = vmatmul.bf16.gmra.mxu0 %v3146
    %v3173 = vpop.f32.mrf.mxu0
    %v3174 = vadd.f32 %v3135, %v3173
    %v3175 = vpop.f32.mrf.mxu0
    %v3176 = vadd.f32 %v3135, %v3175
    %3177 = vmatmul.bf16.gmra.mxu0 %v3149
    %v3178 = vpop.f32.mrf.mxu0
    %v3179 = vadd.f32 %v3135, %v3178
    %v3180 = vpop.f32.mrf.mxu0
    %v3181 = vadd.f32 %v3135, %v3180
    %3182 = vmatmul.bf16.gmra.mxu0 %v3152
    %v3183 = vpop.f32.mrf.mxu0
    %v3184 = vadd.f32 %v3135, %v3183
    %v3185 = vpop.f32.mrf.mxu0
    %v3186 = vadd.f32 %v3135, %v3185
    %3187 = vdwg.mxu0
    %3188 = vmatpush.bf16.msra.mxu0 0
    %3189 = vmatpush.bf16.msra.mxu0 0
    %3190 = vmatpush.bf16.msra.mxu0 0
    %3191 = vmatpush.bf16.msra.mxu0 0
    %3192 = vmatpush.bf16.msra.mxu0 %v3131
    %3193 = vmatpush.bf16.msra.mxu0 %v3129
    %3194 = vmatpush.bf16.msra.mxu0 %v3127
    %3195 = vmatpush.bf16.msra.mxu0 %v3125
    %3196 = vmatmul.bf16.gmra.mxu0 %v3140
    %v3197 = vpop.f32.mrf.mxu0
    %v3198 = vadd.f32 %v3136, %v3197
    %v3199 = vpop.f32.mrf.mxu0
    %v3200 = vadd.f32 %v3136, %v3199
    %3201 = vmatmul.bf16.gmra.mxu0 %v3143
    %v3202 = vpop.f32.mrf.mxu0
    %v3203 = vadd.f32 %v3136, %v3202
    %v3204 = vpop.f32.mrf.mxu0
    %v3205 = vadd.f32 %v3136, %v3204
    %3206 = vmatmul.bf16.gmra.mxu0 %v3146
    %v3207 = vpop.f32.mrf.mxu0
    %v3208 = vadd.f32 %v3136, %v3207
    %v3209 = vpop.f32.mrf.mxu0
    %v3210 = vadd.f32 %v3136, %v3209
    %3211 = vmatmul.bf16.gmra.mxu0 %v3149
    %v3212 = vpop.f32.mrf.mxu0
    %v3213 = vadd.f32 %v3136, %v3212
    %v3214 = vpop.f32.mrf.mxu0
    %v3215 = vadd.f32 %v3136, %v3214
    %3216 = vmatmul.bf16.gmra.mxu0 %v3152
    %v3217 = vpop.f32.mrf.mxu0
    %v3218 = vadd.f32 %v3136, %v3217
    %v3219 = vpop.f32.mrf.mxu0
    %v3220 = vadd.f32 %v3136, %v3219
    %3221 = vdwg.mxu0
    %v3222 = vpack.c.bf16 %v3164, %v3164
    %v3223 = vpack.c.bf16 %v3166, %v3166
    %v3224 = vpack.c.bf16 %v3169, %v3169
    %v3225 = vpack.c.bf16 %v3171, %v3171
    %v3226 = vpack.c.bf16 %v3174, %v3174
    %v3227 = vpack.c.bf16 %v3176, %v3176
    %v3228 = vpack.c.bf16 %v3179, %v3179
    %v3229 = vpack.c.bf16 %v3181, %v3181
    %v3230 = vpack.c.bf16 %v3184, %v3184
    %v3231 = vpack.c.bf16 %v3186, %v3186
    %v3232 = vpack.c.bf16 %v3166, %v3164
    %v3233 = vpack.c.bf16 %v3171, %v3169
    %v3234 = vpack.c.bf16 %v3176, %v3174
    %v3235 = vpack.c.bf16 %v3181, %v3179
    %v3236 = vpack.c.bf16 %v3186, %v3184
    %v3237 = vpack.c.bf16 %v3198, %v3198
    %v3238 = vpack.c.bf16 %v3200, %v3200
    %v3239 = vpack.c.bf16 %v3203, %v3203
    %v3240 = vpack.c.bf16 %v3205, %v3205
    %v3241 = vpack.c.bf16 %v3208, %v3208
    %v3242 = vpack.c.bf16 %v3210, %v3210
    %v3243 = vpack.c.bf16 %v3213, %v3213
    %v3244 = vpack.c.bf16 %v3215, %v3215
    %v3245 = vpack.c.bf16 %v3218, %v3218
    %v3246 = vpack.c.bf16 %v3220, %v3220
    %v3247 = vsel %vm516, %v3222, 0
    %v3248 = vsel %vm516, %v3223, 0
    %v3249 = vsel %vm516, %v3224, 0
    %v3250 = vsel %vm516, %v3225, 0
    %v3251 = vsel %vm516, %v3226, 0
    %v3252 = vsel %vm516, %v3227, 0
    %v3253 = vsel %vm516, %v3228, 0
    %v3254 = vsel %vm516, %v3229, 0
    %v3255 = vsel %vm516, %v3230, 0
    %v3256 = vsel %vm516, %v3231, 0
    %v3267 = vunpack.c.l.b16 %v3247
    %v3268 = vunpack.c.l.b16 %v3248
    %v3269 = vunpack.c.l.b16 %v3249
    %v3270 = vunpack.c.l.b16 %v3250
    %v3271 = vunpack.c.l.b16 %v3251
    %v3272 = vunpack.c.l.b16 %v3252
    %v3273 = vunpack.c.l.b16 %v3253
    %v3274 = vunpack.c.l.b16 %v3254
    %v3275 = vunpack.c.l.b16 %v3255
    %v3276 = vunpack.c.l.b16 %v3256
    %v3277 = vpack.c.b16 %v3268, %v3267
    %v3278 = vpack.c.b16 %v3270, %v3269
    %v3279 = vpack.c.b16 %v3272, %v3271
    %v3280 = vpack.c.b16 %v3274, %v3273
    %v3281 = vpack.c.b16 %v3276, %v3275
    %3287 = vrot.lane.b32.xlu0 %v3232, 64
    %v3288 = vpop.permute.xlu0 %3287
    %3289 = vrot.lane.b32.xlu0 %v3233, 64
    %v3290 = vpop.permute.xlu0 %3289
    %3291 = vrot.lane.b32.xlu0 %v3234, 64
    %v3292 = vpop.permute.xlu0 %3291
    %3293 = vrot.lane.b32.xlu0 %v3235, 64
    %v3294 = vpop.permute.xlu0 %3293
    %3295 = vrot.lane.b32.xlu0 %v3236, 64
    %v3296 = vpop.permute.xlu0 %3295
    %v3298 = vsel %vm73, %v3277, 0
    %v3301 = vsel %vm73, %v3278, 0
    %v3304 = vsel %vm73, %v3279, 0
    %v3307 = vsel %vm73, %v3280, 0
    %v3310 = vsel %vm73, %v3281, 0
    %v3313 = vsel %vm73, %v3288, 0
    %v3316 = vsel %vm73, %v3290, 0
    %v3319 = vsel %vm73, %v3292, 0
    %v3322 = vsel %vm73, %v3294, 0
    %v3325 = vsel %vm73, %v3296, 0
    %3327 = vmatpush.bf16.xpose.msra.mxu0 0
    %3328 = vmatpush.bf16.xpose.msra.mxu0 0
    %3329 = vmatpush.bf16.xpose.msra.mxu0 0
    %3330 = vmatpush.bf16.xpose.msra.mxu0 %v3325
    %3331 = vmatpush.bf16.xpose.msra.mxu0 %v3322
    %3332 = vmatpush.bf16.xpose.msra.mxu0 %v3319
    %3333 = vmatpush.bf16.xpose.msra.mxu0 %v3316
    %3334 = vmatpush.bf16.xpose.msra.mxu0 %v3313
    %3335 = vmatmul.bf16.gmra.mxu0 %v3298
    %v3336 = vpop.f32.mrf.mxu0
    %v3337 = vadd.f32 %v347, %v3336
    %v3338 = vpop.f32.mrf.mxu0
    %v3339 = vadd.f32 %v348, %v3338
    %3340 = vmatmul.bf16.gmra.mxu0 %v3301
    %v3341 = vpop.f32.mrf.mxu0
    %v3342 = vadd.f32 %v349, %v3341
    %v3343 = vpop.f32.mrf.mxu0
    %v3344 = vadd.f32 %v350, %v3343
    %3345 = vmatmul.bf16.gmra.mxu0 %v3304
    %v3346 = vpop.f32.mrf.mxu0
    %v3347 = vadd.f32 %v351, %v3346
    %v3348 = vpop.f32.mrf.mxu0
    %v3349 = vadd.f32 %v352, %v3348
    %3350 = vmatmul.bf16.gmra.mxu0 %v3307
    %v3351 = vpop.f32.mrf.mxu0
    %v3352 = vadd.f32 %v353, %v3351
    %v3353 = vpop.f32.mrf.mxu0
    %v3354 = vadd.f32 %v354, %v3353
    %3355 = vmatmul.bf16.gmra.mxu0 %v3310
    %v3356 = vpop.f32.mrf.mxu0
    %v3357 = vadd.f32 %v355, %v3356
    %v3358 = vpop.f32.mrf.mxu0
    %v3359 = vadd.f32 %v356, %v3358
    %3360 = vdwg.mxu0
    %v3361 = vsel %vm631, %v3337, -inf
    %3362 = vmax.xlane.f32.xlu0 %v3361
    %v3363 = vpop.xlane.xlu0 %3362
    %v3364 = vsel %vm631, %v3339, -inf
    %3365 = vmax.xlane.f32.xlu0 %v3364
    %v3366 = vpop.xlane.xlu0 %3365
    %v3367 = vsel %vm631, %v3342, -inf
    %3368 = vmax.xlane.f32.xlu0 %v3367
    %v3369 = vpop.xlane.xlu0 %3368
    %v3370 = vsel %vm631, %v3344, -inf
    %3371 = vmax.xlane.f32.xlu0 %v3370
    %v3372 = vpop.xlane.xlu0 %3371
    %v3373 = vsel %vm631, %v3347, -inf
    %3374 = vmax.xlane.f32.xlu0 %v3373
    %v3375 = vpop.xlane.xlu0 %3374
    %v3376 = vsel %vm631, %v3349, -inf
    %3377 = vmax.xlane.f32.xlu0 %v3376
    %v3378 = vpop.xlane.xlu0 %3377
    %v3379 = vsel %vm631, %v3352, -inf
    %3380 = vmax.xlane.f32.xlu0 %v3379
    %v3381 = vpop.xlane.xlu0 %3380
    %v3382 = vsel %vm631, %v3354, -inf
    %3383 = vmax.xlane.f32.xlu0 %v3382
    %v3384 = vpop.xlane.xlu0 %3383
    %v3385 = vsel %vm631, %v3357, -inf
    %3386 = vmax.xlane.f32.xlu0 %v3385
    %v3387 = vpop.xlane.xlu0 %3386
    %v3388 = vsel %vm631, %v3359, -inf
    %3389 = vmax.xlane.f32.xlu0 %v3388
    %v3390 = vpop.xlane.xlu0 %3389
    %v3391 = vsub.f32 %v3337, %v3363
    %v3392 = vsub.f32 %v3339, %v3366
    %v3393 = vsub.f32 %v3342, %v3369
    %v3394 = vsub.f32 %v3344, %v3372
    %v3395 = vsub.f32 %v3347, %v3375
    %v3396 = vsub.f32 %v3349, %v3378
    %v3397 = vsub.f32 %v3352, %v3381
    %v3398 = vsub.f32 %v3354, %v3384
    %v3399 = vsub.f32 %v3357, %v3387
    %v3400 = vsub.f32 %v3359, %v3390
    %v3401 = vmul.f32 %v3391, 1.442695
    %v3402 = vpow.pop %v3401
    %v3403 = vmul.f32 %v3392, 1.442695
    %v3404 = vpow.pop %v3403
    %v3405 = vmul.f32 %v3393, 1.442695
    %v3406 = vpow.pop %v3405
    %v3407 = vmul.f32 %v3394, 1.442695
    %v3408 = vpow.pop %v3407
    %v3409 = vmul.f32 %v3395, 1.442695
    %v3410 = vpow.pop %v3409
    %v3411 = vmul.f32 %v3396, 1.442695
    %v3412 = vpow.pop %v3411
    %v3413 = vmul.f32 %v3397, 1.442695
    %v3414 = vpow.pop %v3413
    %v3415 = vmul.f32 %v3398, 1.442695
    %v3416 = vpow.pop %v3415
    %v3417 = vmul.f32 %v3399, 1.442695
    %v3418 = vpow.pop %v3417
    %v3419 = vmul.f32 %v3400, 1.442695
    %v3420 = vpow.pop %v3419
    %v3421 = vsel %vm631, %v3402, 0.0
    %3422 = vadd.xlane.f32.xlu0 %v3421
    %v3423 = vpop.xlane.xlu0 %3422
    %v3424 = vsel %vm631, %v3404, 0.0
    %3425 = vadd.xlane.f32.xlu0 %v3424
    %v3426 = vpop.xlane.xlu0 %3425
    %v3427 = vsel %vm631, %v3406, 0.0
    %3428 = vadd.xlane.f32.xlu0 %v3427
    %v3429 = vpop.xlane.xlu0 %3428
    %v3430 = vsel %vm631, %v3408, 0.0
    %3431 = vadd.xlane.f32.xlu0 %v3430
    %v3432 = vpop.xlane.xlu0 %3431
    %v3433 = vsel %vm631, %v3410, 0.0
    %3434 = vadd.xlane.f32.xlu0 %v3433
    %v3435 = vpop.xlane.xlu0 %3434
    %v3436 = vsel %vm631, %v3412, 0.0
    %3437 = vadd.xlane.f32.xlu0 %v3436
    %v3438 = vpop.xlane.xlu0 %3437
    %v3439 = vsel %vm631, %v3414, 0.0
    %3440 = vadd.xlane.f32.xlu0 %v3439
    %v3441 = vpop.xlane.xlu0 %3440
    %v3442 = vsel %vm631, %v3416, 0.0
    %3443 = vadd.xlane.f32.xlu0 %v3442
    %v3444 = vpop.xlane.xlu0 %3443
    %v3445 = vsel %vm631, %v3418, 0.0
    %3446 = vadd.xlane.f32.xlu0 %v3445
    %v3447 = vpop.xlane.xlu0 %3446
    %v3448 = vsel %vm631, %v3420, 0.0
    %3449 = vadd.xlane.f32.xlu0 %v3448
    %v3450 = vpop.xlane.xlu0 %3449
    %v3451 = vrcp.pop %v3423
    %v3452 = vmul.f32 %v3423, %v3451
    %v3453 = vsub.f32 1.0, %v3452
    %v3454 = vmul.f32 %v3451, %v3453
    %v3455 = vadd.f32 %v3451, %v3454
    %vm3456 = vweird.f32 %v3423
    %vm3457 = vweird.f32 %v3451
    %vm3458 = vmor %vm3456, %vm3457
    %v3459 = vsel %vm3458, %v3451, %v3455
    %v3460 = vand.u32 2147483647, %v3423
    %vm3461 = vcmp.eq.f32.partialorder %v3460, 8.507059e+37
    %v3462 = vand.u32 %v3423, 2147483648
    %v3463 = vor.u32 1.1754944e-38, %v3462
    %v3464 = vsel %vm3461, %v3463, %v3459
    %v3465 = vmul.f32 %v3402, %v3464
    %v3466 = vrcp.pop %v3426
    %v3467 = vmul.f32 %v3426, %v3466
    %v3468 = vsub.f32 1.0, %v3467
    %v3469 = vmul.f32 %v3466, %v3468
    %v3470 = vadd.f32 %v3466, %v3469
    %vm3471 = vweird.f32 %v3426
    %vm3472 = vweird.f32 %v3466
    %vm3473 = vmor %vm3471, %vm3472
    %v3474 = vsel %vm3473, %v3466, %v3470
    %v3475 = vand.u32 2147483647, %v3426
    %vm3476 = vcmp.eq.f32.partialorder %v3475, 8.507059e+37
    %v3477 = vand.u32 %v3426, 2147483648
    %v3478 = vor.u32 1.1754944e-38, %v3477
    %v3479 = vsel %vm3476, %v3478, %v3474
    %v3480 = vmul.f32 %v3404, %v3479
    %v3481 = vrcp.pop %v3429
    %v3482 = vmul.f32 %v3429, %v3481
    %v3483 = vsub.f32 1.0, %v3482
    %v3484 = vmul.f32 %v3481, %v3483
    %v3485 = vadd.f32 %v3481, %v3484
    %vm3486 = vweird.f32 %v3429
    %vm3487 = vweird.f32 %v3481
    %vm3488 = vmor %vm3486, %vm3487
    %v3489 = vsel %vm3488, %v3481, %v3485
    %v3490 = vand.u32 2147483647, %v3429
    %vm3491 = vcmp.eq.f32.partialorder %v3490, 8.507059e+37
    %v3492 = vand.u32 %v3429, 2147483648
    %v3493 = vor.u32 1.1754944e-38, %v3492
    %v3494 = vsel %vm3491, %v3493, %v3489
    %v3495 = vmul.f32 %v3406, %v3494
    %v3496 = vrcp.pop %v3432
    %v3497 = vmul.f32 %v3432, %v3496
    %v3498 = vsub.f32 1.0, %v3497
    %v3499 = vmul.f32 %v3496, %v3498
    %v3500 = vadd.f32 %v3496, %v3499
    %vm3501 = vweird.f32 %v3432
    %vm3502 = vweird.f32 %v3496
    %vm3503 = vmor %vm3501, %vm3502
    %v3504 = vsel %vm3503, %v3496, %v3500
    %v3505 = vand.u32 2147483647, %v3432
    %vm3506 = vcmp.eq.f32.partialorder %v3505, 8.507059e+37
    %v3507 = vand.u32 %v3432, 2147483648
    %v3508 = vor.u32 1.1754944e-38, %v3507
    %v3509 = vsel %vm3506, %v3508, %v3504
    %v3510 = vmul.f32 %v3408, %v3509
    %v3511 = vrcp.pop %v3435
    %v3512 = vmul.f32 %v3435, %v3511
    %v3513 = vsub.f32 1.0, %v3512
    %v3514 = vmul.f32 %v3511, %v3513
    %v3515 = vadd.f32 %v3511, %v3514
    %vm3516 = vweird.f32 %v3435
    %vm3517 = vweird.f32 %v3511
    %vm3518 = vmor %vm3516, %vm3517
    %v3519 = vsel %vm3518, %v3511, %v3515
    %v3520 = vand.u32 2147483647, %v3435
    %vm3521 = vcmp.eq.f32.partialorder %v3520, 8.507059e+37
    %v3522 = vand.u32 %v3435, 2147483648
    %v3523 = vor.u32 1.1754944e-38, %v3522
    %v3524 = vsel %vm3521, %v3523, %v3519
    %v3525 = vmul.f32 %v3410, %v3524
    %v3526 = vrcp.pop %v3438
    %v3527 = vmul.f32 %v3438, %v3526
    %v3528 = vsub.f32 1.0, %v3527
    %v3529 = vmul.f32 %v3526, %v3528
    %v3530 = vadd.f32 %v3526, %v3529
    %vm3531 = vweird.f32 %v3438
    %vm3532 = vweird.f32 %v3526
    %vm3533 = vmor %vm3531, %vm3532
    %v3534 = vsel %vm3533, %v3526, %v3530
    %v3535 = vand.u32 2147483647, %v3438
    %vm3536 = vcmp.eq.f32.partialorder %v3535, 8.507059e+37
    %v3537 = vand.u32 %v3438, 2147483648
    %v3538 = vor.u32 1.1754944e-38, %v3537
    %v3539 = vsel %vm3536, %v3538, %v3534
    %v3540 = vmul.f32 %v3412, %v3539
    %v3541 = vrcp.pop %v3441
    %v3542 = vmul.f32 %v3441, %v3541
    %v3543 = vsub.f32 1.0, %v3542
    %v3544 = vmul.f32 %v3541, %v3543
    %v3545 = vadd.f32 %v3541, %v3544
    %vm3546 = vweird.f32 %v3441
    %vm3547 = vweird.f32 %v3541
    %vm3548 = vmor %vm3546, %vm3547
    %v3549 = vsel %vm3548, %v3541, %v3545
    %v3550 = vand.u32 2147483647, %v3441
    %vm3551 = vcmp.eq.f32.partialorder %v3550, 8.507059e+37
    %v3552 = vand.u32 %v3441, 2147483648
    %v3553 = vor.u32 1.1754944e-38, %v3552
    %v3554 = vsel %vm3551, %v3553, %v3549
    %v3555 = vmul.f32 %v3414, %v3554
    %v3556 = vrcp.pop %v3444
    %v3557 = vmul.f32 %v3444, %v3556
    %v3558 = vsub.f32 1.0, %v3557
    %v3559 = vmul.f32 %v3556, %v3558
    %v3560 = vadd.f32 %v3556, %v3559
    %vm3561 = vweird.f32 %v3444
    %vm3562 = vweird.f32 %v3556
    %vm3563 = vmor %vm3561, %vm3562
    %v3564 = vsel %vm3563, %v3556, %v3560
    %v3565 = vand.u32 2147483647, %v3444
    %vm3566 = vcmp.eq.f32.partialorder %v3565, 8.507059e+37
    %v3567 = vand.u32 %v3444, 2147483648
    %v3568 = vor.u32 1.1754944e-38, %v3567
    %v3569 = vsel %vm3566, %v3568, %v3564
    %v3570 = vmul.f32 %v3416, %v3569
    %v3571 = vrcp.pop %v3447
    %v3572 = vmul.f32 %v3447, %v3571
    %v3573 = vsub.f32 1.0, %v3572
    %v3574 = vmul.f32 %v3571, %v3573
    %v3575 = vadd.f32 %v3571, %v3574
    %vm3576 = vweird.f32 %v3447
    %vm3577 = vweird.f32 %v3571
    %vm3578 = vmor %vm3576, %vm3577
    %v3579 = vsel %vm3578, %v3571, %v3575
    %v3580 = vand.u32 2147483647, %v3447
    %vm3581 = vcmp.eq.f32.partialorder %v3580, 8.507059e+37
    %v3582 = vand.u32 %v3447, 2147483648
    %v3583 = vor.u32 1.1754944e-38, %v3582
    %v3584 = vsel %vm3581, %v3583, %v3579
    %v3585 = vmul.f32 %v3418, %v3584
    %v3586 = vrcp.pop %v3450
    %v3587 = vmul.f32 %v3450, %v3586
    %v3588 = vsub.f32 1.0, %v3587
    %v3589 = vmul.f32 %v3586, %v3588
    %v3590 = vadd.f32 %v3586, %v3589
    %vm3591 = vweird.f32 %v3450
    %vm3592 = vweird.f32 %v3586
    %vm3593 = vmor %vm3591, %vm3592
    %v3594 = vsel %vm3593, %v3586, %v3590
    %v3595 = vand.u32 2147483647, %v3450
    %vm3596 = vcmp.eq.f32.partialorder %v3595, 8.507059e+37
    %v3597 = vand.u32 %v3450, 2147483648
    %v3598 = vor.u32 1.1754944e-38, %v3597
    %v3599 = vsel %vm3596, %v3598, %v3594
    %v3600 = vmul.f32 %v3420, %v3599
    %v3601 = vsel %vm516, %v3237, 0
    %v3602 = vsel %vm516, %v3238, 0
    %v3603 = vsel %vm516, %v3239, 0
    %v3604 = vsel %vm516, %v3240, 0
    %v3605 = vsel %vm516, %v3241, 0
    %v3606 = vsel %vm516, %v3242, 0
    %v3607 = vsel %vm516, %v3243, 0
    %v3608 = vsel %vm516, %v3244, 0
    %v3609 = vsel %vm516, %v3245, 0
    %v3610 = vsel %vm516, %v3246, 0
    %v3611 = vpack.c.bf16 %v3480, %v3465
    %v3612 = vpack.c.bf16 %v3510, %v3495
    %v3613 = vpack.c.bf16 %v3540, %v3525
    %v3614 = vpack.c.bf16 %v3570, %v3555
    %v3615 = vpack.c.bf16 %v3600, %v3585
    %v3616 = vsel %vm889, %v3222, 0
    %v3617 = vsel %vm889, %v3223, 0
    %v3618 = vsel %vm889, %v3224, 0
    %v3619 = vsel %vm889, %v3225, 0
    %v3620 = vsel %vm889, %v3226, 0
    %v3621 = vsel %vm889, %v3227, 0
    %v3622 = vsel %vm889, %v3228, 0
    %v3623 = vsel %vm889, %v3229, 0
    %v3624 = vsel %vm889, %v3230, 0
    %v3625 = vsel %vm889, %v3231, 0
    %v3636 = vunpack.c.l.b16 %v3616
    %v3637 = vunpack.c.l.b16 %v3617
    %v3638 = vunpack.c.l.b16 %v3618
    %v3639 = vunpack.c.l.b16 %v3619
    %v3640 = vunpack.c.l.b16 %v3620
    %v3641 = vunpack.c.l.b16 %v3621
    %v3642 = vunpack.c.l.b16 %v3622
    %v3643 = vunpack.c.l.b16 %v3623
    %v3644 = vunpack.c.l.b16 %v3624
    %v3645 = vunpack.c.l.b16 %v3625
    %v3646 = vpack.c.b16 %v3637, %v3636
    %v3647 = vpack.c.b16 %v3639, %v3638
    %v3648 = vpack.c.b16 %v3641, %v3640
    %v3649 = vpack.c.b16 %v3643, %v3642
    %v3650 = vpack.c.b16 %v3645, %v3644
    %v3652 = vsel %vm73, %v3646, 0
    %v3655 = vsel %vm73, %v3647, 0
    %v3658 = vsel %vm73, %v3648, 0
    %v3661 = vsel %vm73, %v3649, 0
    %v3664 = vsel %vm73, %v3650, 0
    %3666 = vmatpush.bf16.xpose.msra.mxu0 0
    %3667 = vmatpush.bf16.xpose.msra.mxu0 0
    %3668 = vmatpush.bf16.xpose.msra.mxu0 0
    %3669 = vmatpush.bf16.xpose.msra.mxu0 %v3325
    %3670 = vmatpush.bf16.xpose.msra.mxu0 %v3322
    %3671 = vmatpush.bf16.xpose.msra.mxu0 %v3319
    %3672 = vmatpush.bf16.xpose.msra.mxu0 %v3316
    %3673 = vmatpush.bf16.xpose.msra.mxu0 %v3313
    %3674 = vmatmul.bf16.gmra.mxu0 %v3652
    %v3675 = vpop.f32.mrf.mxu0
    %v3676 = vadd.f32 %v347, %v3675
    %v3677 = vpop.f32.mrf.mxu0
    %v3678 = vadd.f32 %v348, %v3677
    %3679 = vmatmul.bf16.gmra.mxu0 %v3655
    %v3680 = vpop.f32.mrf.mxu0
    %v3681 = vadd.f32 %v349, %v3680
    %v3682 = vpop.f32.mrf.mxu0
    %v3683 = vadd.f32 %v350, %v3682
    %3684 = vmatmul.bf16.gmra.mxu0 %v3658
    %v3685 = vpop.f32.mrf.mxu0
    %v3686 = vadd.f32 %v351, %v3685
    %v3687 = vpop.f32.mrf.mxu0
    %v3688 = vadd.f32 %v352, %v3687
    %3689 = vmatmul.bf16.gmra.mxu0 %v3661
    %v3690 = vpop.f32.mrf.mxu0
    %v3691 = vadd.f32 %v353, %v3690
    %v3692 = vpop.f32.mrf.mxu0
    %v3693 = vadd.f32 %v354, %v3692
    %3694 = vmatmul.bf16.gmra.mxu0 %v3664
    %v3695 = vpop.f32.mrf.mxu0
    %v3696 = vadd.f32 %v355, %v3695
    %v3697 = vpop.f32.mrf.mxu0
    %v3698 = vadd.f32 %v356, %v3697
    %3699 = vdwg.mxu0
    %v3700 = vsel %vm631, %v3676, -inf
    %3701 = vmax.xlane.f32.xlu0 %v3700
    %v3702 = vpop.xlane.xlu0 %3701
    %v3703 = vsel %vm631, %v3678, -inf
    %3704 = vmax.xlane.f32.xlu0 %v3703
    %v3705 = vpop.xlane.xlu0 %3704
    %v3706 = vsel %vm631, %v3681, -inf
    %3707 = vmax.xlane.f32.xlu0 %v3706
    %v3708 = vpop.xlane.xlu0 %3707
    %v3709 = vsel %vm631, %v3683, -inf
    %3710 = vmax.xlane.f32.xlu0 %v3709
    %v3711 = vpop.xlane.xlu0 %3710
    %v3712 = vsel %vm631, %v3686, -inf
    %3713 = vmax.xlane.f32.xlu0 %v3712
    %v3714 = vpop.xlane.xlu0 %3713
    %v3715 = vsel %vm631, %v3688, -inf
    %3716 = vmax.xlane.f32.xlu0 %v3715
    %v3717 = vpop.xlane.xlu0 %3716
    %v3718 = vsel %vm631, %v3691, -inf
    %3719 = vmax.xlane.f32.xlu0 %v3718
    %v3720 = vpop.xlane.xlu0 %3719
    %v3721 = vsel %vm631, %v3693, -inf
    %3722 = vmax.xlane.f32.xlu0 %v3721
    %v3723 = vpop.xlane.xlu0 %3722
    %v3724 = vsel %vm631, %v3696, -inf
    %3725 = vmax.xlane.f32.xlu0 %v3724
    %v3726 = vpop.xlane.xlu0 %3725
    %v3727 = vsel %vm631, %v3698, -inf
    %3728 = vmax.xlane.f32.xlu0 %v3727
    %v3729 = vpop.xlane.xlu0 %3728
    %v3730 = vsub.f32 %v3676, %v3702
    %v3731 = vsub.f32 %v3678, %v3705
    %v3732 = vsub.f32 %v3681, %v3708
    %v3733 = vsub.f32 %v3683, %v3711
    %v3734 = vsub.f32 %v3686, %v3714
    %v3735 = vsub.f32 %v3688, %v3717
    %v3736 = vsub.f32 %v3691, %v3720
    %v3737 = vsub.f32 %v3693, %v3723
    %v3738 = vsub.f32 %v3696, %v3726
    %v3739 = vsub.f32 %v3698, %v3729
    %v3740 = vmul.f32 %v3730, 1.442695
    %v3741 = vpow.pop %v3740
    %v3742 = vmul.f32 %v3731, 1.442695
    %v3743 = vpow.pop %v3742
    %v3744 = vmul.f32 %v3732, 1.442695
    %v3745 = vpow.pop %v3744
    %v3746 = vmul.f32 %v3733, 1.442695
    %v3747 = vpow.pop %v3746
    %v3748 = vmul.f32 %v3734, 1.442695
    %v3749 = vpow.pop %v3748
    %v3750 = vmul.f32 %v3735, 1.442695
    %v3751 = vpow.pop %v3750
    %v3752 = vmul.f32 %v3736, 1.442695
    %v3753 = vpow.pop %v3752
    %v3754 = vmul.f32 %v3737, 1.442695
    %v3755 = vpow.pop %v3754
    %v3756 = vmul.f32 %v3738, 1.442695
    %v3757 = vpow.pop %v3756
    %v3758 = vmul.f32 %v3739, 1.442695
    %v3759 = vpow.pop %v3758
    %v3760 = vsel %vm631, %v3741, 0.0
    %3761 = vadd.xlane.f32.xlu0 %v3760
    %v3762 = vpop.xlane.xlu0 %3761
    %v3763 = vsel %vm631, %v3743, 0.0
    %3764 = vadd.xlane.f32.xlu0 %v3763
    %v3765 = vpop.xlane.xlu0 %3764
    %v3766 = vsel %vm631, %v3745, 0.0
    %3767 = vadd.xlane.f32.xlu0 %v3766
    %v3768 = vpop.xlane.xlu0 %3767
    %v3769 = vsel %vm631, %v3747, 0.0
    %3770 = vadd.xlane.f32.xlu0 %v3769
    %v3771 = vpop.xlane.xlu0 %3770
    %v3772 = vsel %vm631, %v3749, 0.0
    %3773 = vadd.xlane.f32.xlu0 %v3772
    %v3774 = vpop.xlane.xlu0 %3773
    %v3775 = vsel %vm631, %v3751, 0.0
    %3776 = vadd.xlane.f32.xlu0 %v3775
    %v3777 = vpop.xlane.xlu0 %3776
    %v3778 = vsel %vm631, %v3753, 0.0
    %3779 = vadd.xlane.f32.xlu0 %v3778
    %v3780 = vpop.xlane.xlu0 %3779
    %v3781 = vsel %vm631, %v3755, 0.0
    %3782 = vadd.xlane.f32.xlu0 %v3781
    %v3783 = vpop.xlane.xlu0 %3782
    %v3784 = vsel %vm631, %v3757, 0.0
    %3785 = vadd.xlane.f32.xlu0 %v3784
    %v3786 = vpop.xlane.xlu0 %3785
    %v3787 = vsel %vm631, %v3759, 0.0
    %3788 = vadd.xlane.f32.xlu0 %v3787
    %v3789 = vpop.xlane.xlu0 %3788
    %v3790 = vrcp.pop %v3762
    %v3791 = vmul.f32 %v3762, %v3790
    %v3792 = vsub.f32 1.0, %v3791
    %v3793 = vmul.f32 %v3790, %v3792
    %v3794 = vadd.f32 %v3790, %v3793
    %vm3795 = vweird.f32 %v3762
    %vm3796 = vweird.f32 %v3790
    %vm3797 = vmor %vm3795, %vm3796
    %v3798 = vsel %vm3797, %v3790, %v3794
    %v3799 = vand.u32 2147483647, %v3762
    %vm3800 = vcmp.eq.f32.partialorder %v3799, 8.507059e+37
    %v3801 = vand.u32 %v3762, 2147483648
    %v3802 = vor.u32 1.1754944e-38, %v3801
    %v3803 = vsel %vm3800, %v3802, %v3798
    %v3804 = vmul.f32 %v3741, %v3803
    %v3805 = vrcp.pop %v3765
    %v3806 = vmul.f32 %v3765, %v3805
    %v3807 = vsub.f32 1.0, %v3806
    %v3808 = vmul.f32 %v3805, %v3807
    %v3809 = vadd.f32 %v3805, %v3808
    %vm3810 = vweird.f32 %v3765
    %vm3811 = vweird.f32 %v3805
    %vm3812 = vmor %vm3810, %vm3811
    %v3813 = vsel %vm3812, %v3805, %v3809
    %v3814 = vand.u32 2147483647, %v3765
    %vm3815 = vcmp.eq.f32.partialorder %v3814, 8.507059e+37
    %v3816 = vand.u32 %v3765, 2147483648
    %v3817 = vor.u32 1.1754944e-38, %v3816
    %v3818 = vsel %vm3815, %v3817, %v3813
    %v3819 = vmul.f32 %v3743, %v3818
    %v3820 = vrcp.pop %v3768
    %v3821 = vmul.f32 %v3768, %v3820
    %v3822 = vsub.f32 1.0, %v3821
    %v3823 = vmul.f32 %v3820, %v3822
    %v3824 = vadd.f32 %v3820, %v3823
    %vm3825 = vweird.f32 %v3768
    %vm3826 = vweird.f32 %v3820
    %vm3827 = vmor %vm3825, %vm3826
    %v3828 = vsel %vm3827, %v3820, %v3824
    %v3829 = vand.u32 2147483647, %v3768
    %vm3830 = vcmp.eq.f32.partialorder %v3829, 8.507059e+37
    %v3831 = vand.u32 %v3768, 2147483648
    %v3832 = vor.u32 1.1754944e-38, %v3831
    %v3833 = vsel %vm3830, %v3832, %v3828
    %v3834 = vmul.f32 %v3745, %v3833
    %v3835 = vrcp.pop %v3771
    %v3836 = vmul.f32 %v3771, %v3835
    %v3837 = vsub.f32 1.0, %v3836
    %v3838 = vmul.f32 %v3835, %v3837
    %v3839 = vadd.f32 %v3835, %v3838
    %vm3840 = vweird.f32 %v3771
    %vm3841 = vweird.f32 %v3835
    %vm3842 = vmor %vm3840, %vm3841
    %v3843 = vsel %vm3842, %v3835, %v3839
    %v3844 = vand.u32 2147483647, %v3771
    %vm3845 = vcmp.eq.f32.partialorder %v3844, 8.507059e+37
    %v3846 = vand.u32 %v3771, 2147483648
    %v3847 = vor.u32 1.1754944e-38, %v3846
    %v3848 = vsel %vm3845, %v3847, %v3843
    %v3849 = vmul.f32 %v3747, %v3848
    %v3850 = vrcp.pop %v3774
    %v3851 = vmul.f32 %v3774, %v3850
    %v3852 = vsub.f32 1.0, %v3851
    %v3853 = vmul.f32 %v3850, %v3852
    %v3854 = vadd.f32 %v3850, %v3853
    %vm3855 = vweird.f32 %v3774
    %vm3856 = vweird.f32 %v3850
    %vm3857 = vmor %vm3855, %vm3856
    %v3858 = vsel %vm3857, %v3850, %v3854
    %v3859 = vand.u32 2147483647, %v3774
    %vm3860 = vcmp.eq.f32.partialorder %v3859, 8.507059e+37
    %v3861 = vand.u32 %v3774, 2147483648
    %v3862 = vor.u32 1.1754944e-38, %v3861
    %v3863 = vsel %vm3860, %v3862, %v3858
    %v3864 = vmul.f32 %v3749, %v3863
    %v3865 = vrcp.pop %v3777
    %v3866 = vmul.f32 %v3777, %v3865
    %v3867 = vsub.f32 1.0, %v3866
    %v3868 = vmul.f32 %v3865, %v3867
    %v3869 = vadd.f32 %v3865, %v3868
    %vm3870 = vweird.f32 %v3777
    %vm3871 = vweird.f32 %v3865
    %vm3872 = vmor %vm3870, %vm3871
    %v3873 = vsel %vm3872, %v3865, %v3869
    %v3874 = vand.u32 2147483647, %v3777
    %vm3875 = vcmp.eq.f32.partialorder %v3874, 8.507059e+37
    %v3876 = vand.u32 %v3777, 2147483648
    %v3877 = vor.u32 1.1754944e-38, %v3876
    %v3878 = vsel %vm3875, %v3877, %v3873
    %v3879 = vmul.f32 %v3751, %v3878
    %v3880 = vrcp.pop %v3780
    %v3881 = vmul.f32 %v3780, %v3880
    %v3882 = vsub.f32 1.0, %v3881
    %v3883 = vmul.f32 %v3880, %v3882
    %v3884 = vadd.f32 %v3880, %v3883
    %vm3885 = vweird.f32 %v3780
    %vm3886 = vweird.f32 %v3880
    %vm3887 = vmor %vm3885, %vm3886
    %v3888 = vsel %vm3887, %v3880, %v3884
    %v3889 = vand.u32 2147483647, %v3780
    %vm3890 = vcmp.eq.f32.partialorder %v3889, 8.507059e+37
    %v3891 = vand.u32 %v3780, 2147483648
    %v3892 = vor.u32 1.1754944e-38, %v3891
    %v3893 = vsel %vm3890, %v3892, %v3888
    %v3894 = vmul.f32 %v3753, %v3893
    %v3895 = vrcp.pop %v3783
    %v3896 = vmul.f32 %v3783, %v3895
    %v3897 = vsub.f32 1.0, %v3896
    %v3898 = vmul.f32 %v3895, %v3897
    %v3899 = vadd.f32 %v3895, %v3898
    %vm3900 = vweird.f32 %v3783
    %vm3901 = vweird.f32 %v3895
    %vm3902 = vmor %vm3900, %vm3901
    %v3903 = vsel %vm3902, %v3895, %v3899
    %v3904 = vand.u32 2147483647, %v3783
    %vm3905 = vcmp.eq.f32.partialorder %v3904, 8.507059e+37
    %v3906 = vand.u32 %v3783, 2147483648
    %v3907 = vor.u32 1.1754944e-38, %v3906
    %v3908 = vsel %vm3905, %v3907, %v3903
    %v3909 = vmul.f32 %v3755, %v3908
    %v3910 = vrcp.pop %v3786
    %v3911 = vmul.f32 %v3786, %v3910
    %v3912 = vsub.f32 1.0, %v3911
    %v3913 = vmul.f32 %v3910, %v3912
    %v3914 = vadd.f32 %v3910, %v3913
    %vm3915 = vweird.f32 %v3786
    %vm3916 = vweird.f32 %v3910
    %vm3917 = vmor %vm3915, %vm3916
    %v3918 = vsel %vm3917, %v3910, %v3914
    %v3919 = vand.u32 2147483647, %v3786
    %vm3920 = vcmp.eq.f32.partialorder %v3919, 8.507059e+37
    %v3921 = vand.u32 %v3786, 2147483648
    %v3922 = vor.u32 1.1754944e-38, %v3921
    %v3923 = vsel %vm3920, %v3922, %v3918
    %v3924 = vmul.f32 %v3757, %v3923
    %v3925 = vrcp.pop %v3789
    %v3926 = vmul.f32 %v3789, %v3925
    %v3927 = vsub.f32 1.0, %v3926
    %v3928 = vmul.f32 %v3925, %v3927
    %v3929 = vadd.f32 %v3925, %v3928
    %vm3930 = vweird.f32 %v3789
    %vm3931 = vweird.f32 %v3925
    %vm3932 = vmor %vm3930, %vm3931
    %v3933 = vsel %vm3932, %v3925, %v3929
    %v3934 = vand.u32 2147483647, %v3789
    %vm3935 = vcmp.eq.f32.partialorder %v3934, 8.507059e+37
    %v3936 = vand.u32 %v3789, 2147483648
    %v3937 = vor.u32 1.1754944e-38, %v3936
    %v3938 = vsel %vm3935, %v3937, %v3933
    %v3939 = vmul.f32 %v3759, %v3938
    %v3940 = vsel %vm889, %v3237, 0
    %v3941 = vsel %vm889, %v3238, 0
    %v3942 = vsel %vm889, %v3239, 0
    %v3943 = vsel %vm889, %v3240, 0
    %v3944 = vsel %vm889, %v3241, 0
    %v3945 = vsel %vm889, %v3242, 0
    %v3946 = vsel %vm889, %v3243, 0
    %v3947 = vsel %vm889, %v3244, 0
    %v3948 = vsel %vm889, %v3245, 0
    %v3949 = vsel %vm889, %v3246, 0
    %v3950 = vpack.c.bf16 %v3819, %v3804
    %v3951 = vpack.c.bf16 %v3849, %v3834
    %v3952 = vpack.c.bf16 %v3879, %v3864
    %v3953 = vpack.c.bf16 %v3909, %v3894
    %v3954 = vpack.c.bf16 %v3939, %v3924
    %v3965 = vunpack.c.l.b16 %v3940
    %v3966 = vunpack.c.l.b16 %v3941
    %v3967 = vunpack.c.l.b16 %v3942
    %v3968 = vunpack.c.l.b16 %v3943
    %v3969 = vunpack.c.l.b16 %v3944
    %v3970 = vunpack.c.l.b16 %v3945
    %v3971 = vunpack.c.l.b16 %v3946
    %v3972 = vunpack.c.l.b16 %v3947
    %v3973 = vunpack.c.l.b16 %v3948
    %v3974 = vunpack.c.l.b16 %v3949
    %v3975 = vpack.c.b16 %v3966, %v3965
    %v3976 = vpack.c.b16 %v3968, %v3967
    %v3977 = vpack.c.b16 %v3970, %v3969
    %v3978 = vpack.c.b16 %v3972, %v3971
    %v3979 = vpack.c.b16 %v3974, %v3973
    %v3986 = vsel %vm631, %v3950, 0
    %v3989 = vsel %vm631, %v3951, 0
    %v3992 = vsel %vm631, %v3952, 0
    %v3995 = vsel %vm631, %v3953, 0
    %v3998 = vsel %vm631, %v3954, 0
    %4000 = vmatpush.bf16.msra.mxu0 0
    %4001 = vmatpush.bf16.msra.mxu0 0
    %4002 = vmatpush.bf16.msra.mxu0 0
    %4003 = vmatpush.bf16.msra.mxu0 %v3979
    %4004 = vmatpush.bf16.msra.mxu0 %v3978
    %4005 = vmatpush.bf16.msra.mxu0 %v3977
    %4006 = vmatpush.bf16.msra.mxu0 %v3976
    %4007 = vmatpush.bf16.msra.mxu0 %v3975
    %4008 = vmatmul.bf16.gmra.mxu0 %v3986
    %v4009 = vpop.f32.mrf.mxu0
    %v4010 = vadd.f32 0.0, %v4009
    %v4011 = vpop.f32.mrf.mxu0
    %v4012 = vadd.f32 0.0, %v4011
    %4013 = vmatmul.bf16.gmra.mxu0 %v3989
    %v4014 = vpop.f32.mrf.mxu0
    %v4015 = vadd.f32 0.0, %v4014
    %v4016 = vpop.f32.mrf.mxu0
    %v4017 = vadd.f32 0.0, %v4016
    %4018 = vmatmul.bf16.gmra.mxu0 %v3992
    %v4019 = vpop.f32.mrf.mxu0
    %v4020 = vadd.f32 0.0, %v4019
    %v4021 = vpop.f32.mrf.mxu0
    %v4022 = vadd.f32 0.0, %v4021
    %4023 = vmatmul.bf16.gmra.mxu0 %v3995
    %v4024 = vpop.f32.mrf.mxu0
    %v4025 = vadd.f32 0.0, %v4024
    %v4026 = vpop.f32.mrf.mxu0
    %v4027 = vadd.f32 0.0, %v4026
    %4028 = vmatmul.bf16.gmra.mxu0 %v3998
    %v4029 = vpop.f32.mrf.mxu0
    %v4030 = vadd.f32 0.0, %v4029
    %v4031 = vpop.f32.mrf.mxu0
    %v4032 = vadd.f32 0.0, %v4031
    %4033 = vdwg.mxu0
    %v4044 = vunpack.c.l.b16 %v3601
    %v4045 = vunpack.c.l.b16 %v3602
    %v4046 = vunpack.c.l.b16 %v3603
    %v4047 = vunpack.c.l.b16 %v3604
    %v4048 = vunpack.c.l.b16 %v3605
    %v4049 = vunpack.c.l.b16 %v3606
    %v4050 = vunpack.c.l.b16 %v3607
    %v4051 = vunpack.c.l.b16 %v3608
    %v4052 = vunpack.c.l.b16 %v3609
    %v4053 = vunpack.c.l.b16 %v3610
    %v4054 = vpack.c.b16 %v4045, %v4044
    %v4055 = vpack.c.b16 %v4047, %v4046
    %v4056 = vpack.c.b16 %v4049, %v4048
    %v4057 = vpack.c.b16 %v4051, %v4050
    %v4058 = vpack.c.b16 %v4053, %v4052
    %v4065 = vsel %vm631, %v3611, 0
    %v4068 = vsel %vm631, %v3612, 0
    %v4071 = vsel %vm631, %v3613, 0
    %v4074 = vsel %vm631, %v3614, 0
    %v4077 = vsel %vm631, %v3615, 0
    %4079 = vmatpush.bf16.msra.mxu0 0
    %4080 = vmatpush.bf16.msra.mxu0 0
    %4081 = vmatpush.bf16.msra.mxu0 0
    %4082 = vmatpush.bf16.msra.mxu0 %v4058
    %4083 = vmatpush.bf16.msra.mxu0 %v4057
    %4084 = vmatpush.bf16.msra.mxu0 %v4056
    %4085 = vmatpush.bf16.msra.mxu0 %v4055
    %4086 = vmatpush.bf16.msra.mxu0 %v4054
    %4087 = vmatmul.bf16.gmra.mxu0 %v4065
    %v4088 = vpop.f32.mrf.mxu0
    %v4089 = vadd.f32 %v4010, %v4088
    %v4090 = vpop.f32.mrf.mxu0
    %v4091 = vadd.f32 %v4012, %v4090
    %4092 = vmatmul.bf16.gmra.mxu0 %v4068
    %v4093 = vpop.f32.mrf.mxu0
    %v4094 = vadd.f32 %v4015, %v4093
    %v4095 = vpop.f32.mrf.mxu0
    %v4096 = vadd.f32 %v4017, %v4095
    %4097 = vmatmul.bf16.gmra.mxu0 %v4071
    %v4098 = vpop.f32.mrf.mxu0
    %v4099 = vadd.f32 %v4020, %v4098
    %v4100 = vpop.f32.mrf.mxu0
    %v4101 = vadd.f32 %v4022, %v4100
    %4102 = vmatmul.bf16.gmra.mxu0 %v4074
    %v4103 = vpop.f32.mrf.mxu0
    %v4104 = vadd.f32 %v4025, %v4103
    %v4105 = vpop.f32.mrf.mxu0
    %v4106 = vadd.f32 %v4027, %v4105
    %4107 = vmatmul.bf16.gmra.mxu0 %v4077
    %v4108 = vpop.f32.mrf.mxu0
    %v4109 = vadd.f32 %v4030, %v4108
    %v4110 = vpop.f32.mrf.mxu0
    %v4111 = vadd.f32 %v4032, %v4110
    %4112 = vdwg.mxu0
    %v4113 = vsel %vm1389, %v3222, 0
    %v4114 = vsel %vm1389, %v3223, 0
    %v4115 = vsel %vm1389, %v3224, 0
    %v4116 = vsel %vm1389, %v3225, 0
    %v4117 = vsel %vm1389, %v3226, 0
    %v4118 = vsel %vm1389, %v3227, 0
    %v4119 = vsel %vm1389, %v3228, 0
    %v4120 = vsel %vm1389, %v3229, 0
    %v4121 = vsel %vm1389, %v3230, 0
    %v4122 = vsel %vm1389, %v3231, 0
    %v4133 = vunpack.c.l.b16 %v4113
    %v4134 = vunpack.c.l.b16 %v4114
    %v4135 = vunpack.c.l.b16 %v4115
    %v4136 = vunpack.c.l.b16 %v4116
    %v4137 = vunpack.c.l.b16 %v4117
    %v4138 = vunpack.c.l.b16 %v4118
    %v4139 = vunpack.c.l.b16 %v4119
    %v4140 = vunpack.c.l.b16 %v4120
    %v4141 = vunpack.c.l.b16 %v4121
    %v4142 = vunpack.c.l.b16 %v4122
    %v4143 = vpack.c.b16 %v4134, %v4133
    %v4144 = vpack.c.b16 %v4136, %v4135
    %v4145 = vpack.c.b16 %v4138, %v4137
    %v4146 = vpack.c.b16 %v4140, %v4139
    %v4147 = vpack.c.b16 %v4142, %v4141
    %v4149 = vsel %vm73, %v4143, 0
    %v4152 = vsel %vm73, %v4144, 0
    %v4155 = vsel %vm73, %v4145, 0
    %v4158 = vsel %vm73, %v4146, 0
    %v4161 = vsel %vm73, %v4147, 0
    %4163 = vmatpush.bf16.xpose.msra.mxu0 0
    %4164 = vmatpush.bf16.xpose.msra.mxu0 0
    %4165 = vmatpush.bf16.xpose.msra.mxu0 0
    %4166 = vmatpush.bf16.xpose.msra.mxu0 %v3325
    %4167 = vmatpush.bf16.xpose.msra.mxu0 %v3322
    %4168 = vmatpush.bf16.xpose.msra.mxu0 %v3319
    %4169 = vmatpush.bf16.xpose.msra.mxu0 %v3316
    %4170 = vmatpush.bf16.xpose.msra.mxu0 %v3313
    %4171 = vmatmul.bf16.gmra.mxu0 %v4149
    %v4172 = vpop.f32.mrf.mxu0
    %v4173 = vadd.f32 %v347, %v4172
    %v4174 = vpop.f32.mrf.mxu0
    %v4175 = vadd.f32 %v348, %v4174
    %4176 = vmatmul.bf16.gmra.mxu0 %v4152
    %v4177 = vpop.f32.mrf.mxu0
    %v4178 = vadd.f32 %v349, %v4177
    %v4179 = vpop.f32.mrf.mxu0
    %v4180 = vadd.f32 %v350, %v4179
    %4181 = vmatmul.bf16.gmra.mxu0 %v4155
    %v4182 = vpop.f32.mrf.mxu0
    %v4183 = vadd.f32 %v351, %v4182
    %v4184 = vpop.f32.mrf.mxu0
    %v4185 = vadd.f32 %v352, %v4184
    %4186 = vmatmul.bf16.gmra.mxu0 %v4158
    %v4187 = vpop.f32.mrf.mxu0
    %v4188 = vadd.f32 %v353, %v4187
    %v4189 = vpop.f32.mrf.mxu0
    %v4190 = vadd.f32 %v354, %v4189
    %4191 = vmatmul.bf16.gmra.mxu0 %v4161
    %v4192 = vpop.f32.mrf.mxu0
    %v4193 = vadd.f32 %v355, %v4192
    %v4194 = vpop.f32.mrf.mxu0
    %v4195 = vadd.f32 %v356, %v4194
    %4196 = vdwg.mxu0
    %v4197 = vsel %vm631, %v4173, -inf
    %4198 = vmax.xlane.f32.xlu0 %v4197
    %v4199 = vpop.xlane.xlu0 %4198
    %v4200 = vsel %vm631, %v4175, -inf
    %4201 = vmax.xlane.f32.xlu0 %v4200
    %v4202 = vpop.xlane.xlu0 %4201
    %v4203 = vsel %vm631, %v4178, -inf
    %4204 = vmax.xlane.f32.xlu0 %v4203
    %v4205 = vpop.xlane.xlu0 %4204
    %v4206 = vsel %vm631, %v4180, -inf
    %4207 = vmax.xlane.f32.xlu0 %v4206
    %v4208 = vpop.xlane.xlu0 %4207
    %v4209 = vsel %vm631, %v4183, -inf
    %4210 = vmax.xlane.f32.xlu0 %v4209
    %v4211 = vpop.xlane.xlu0 %4210
    %v4212 = vsel %vm631, %v4185, -inf
    %4213 = vmax.xlane.f32.xlu0 %v4212
    %v4214 = vpop.xlane.xlu0 %4213
    %v4215 = vsel %vm631, %v4188, -inf
    %4216 = vmax.xlane.f32.xlu0 %v4215
    %v4217 = vpop.xlane.xlu0 %4216
    %v4218 = vsel %vm631, %v4190, -inf
    %4219 = vmax.xlane.f32.xlu0 %v4218
    %v4220 = vpop.xlane.xlu0 %4219
    %v4221 = vsel %vm631, %v4193, -inf
    %4222 = vmax.xlane.f32.xlu0 %v4221
    %v4223 = vpop.xlane.xlu0 %4222
    %v4224 = vsel %vm631, %v4195, -inf
    %4225 = vmax.xlane.f32.xlu0 %v4224
    %v4226 = vpop.xlane.xlu0 %4225
    %v4227 = vsub.f32 %v4173, %v4199
    %v4228 = vsub.f32 %v4175, %v4202
    %v4229 = vsub.f32 %v4178, %v4205
    %v4230 = vsub.f32 %v4180, %v4208
    %v4231 = vsub.f32 %v4183, %v4211
    %v4232 = vsub.f32 %v4185, %v4214
    %v4233 = vsub.f32 %v4188, %v4217
    %v4234 = vsub.f32 %v4190, %v4220
    %v4235 = vsub.f32 %v4193, %v4223
    %v4236 = vsub.f32 %v4195, %v4226
    %v4237 = vmul.f32 %v4227, 1.442695
    %v4238 = vpow.pop %v4237
    %v4239 = vmul.f32 %v4228, 1.442695
    %v4240 = vpow.pop %v4239
    %v4241 = vmul.f32 %v4229, 1.442695
    %v4242 = vpow.pop %v4241
    %v4243 = vmul.f32 %v4230, 1.442695
    %v4244 = vpow.pop %v4243
    %v4245 = vmul.f32 %v4231, 1.442695
    %v4246 = vpow.pop %v4245
    %v4247 = vmul.f32 %v4232, 1.442695
    %v4248 = vpow.pop %v4247
    %v4249 = vmul.f32 %v4233, 1.442695
    %v4250 = vpow.pop %v4249
    %v4251 = vmul.f32 %v4234, 1.442695
    %v4252 = vpow.pop %v4251
    %v4253 = vmul.f32 %v4235, 1.442695
    %v4254 = vpow.pop %v4253
    %v4255 = vmul.f32 %v4236, 1.442695
    %v4256 = vpow.pop %v4255
    %v4257 = vsel %vm631, %v4238, 0.0
    %4258 = vadd.xlane.f32.xlu0 %v4257
    %v4259 = vpop.xlane.xlu0 %4258
    %v4260 = vsel %vm631, %v4240, 0.0
    %4261 = vadd.xlane.f32.xlu0 %v4260
    %v4262 = vpop.xlane.xlu0 %4261
    %v4263 = vsel %vm631, %v4242, 0.0
    %4264 = vadd.xlane.f32.xlu0 %v4263
    %v4265 = vpop.xlane.xlu0 %4264
    %v4266 = vsel %vm631, %v4244, 0.0
    %4267 = vadd.xlane.f32.xlu0 %v4266
    %v4268 = vpop.xlane.xlu0 %4267
    %v4269 = vsel %vm631, %v4246, 0.0
    %4270 = vadd.xlane.f32.xlu0 %v4269
    %v4271 = vpop.xlane.xlu0 %4270
    %v4272 = vsel %vm631, %v4248, 0.0
    %4273 = vadd.xlane.f32.xlu0 %v4272
    %v4274 = vpop.xlane.xlu0 %4273
    %v4275 = vsel %vm631, %v4250, 0.0
    %4276 = vadd.xlane.f32.xlu0 %v4275
    %v4277 = vpop.xlane.xlu0 %4276
    %v4278 = vsel %vm631, %v4252, 0.0
    %4279 = vadd.xlane.f32.xlu0 %v4278
    %v4280 = vpop.xlane.xlu0 %4279
    %v4281 = vsel %vm631, %v4254, 0.0
    %4282 = vadd.xlane.f32.xlu0 %v4281
    %v4283 = vpop.xlane.xlu0 %4282
    %v4284 = vsel %vm631, %v4256, 0.0
    %4285 = vadd.xlane.f32.xlu0 %v4284
    %v4286 = vpop.xlane.xlu0 %4285
    %v4287 = vrcp.pop %v4259
    %v4288 = vmul.f32 %v4259, %v4287
    %v4289 = vsub.f32 1.0, %v4288
    %v4290 = vmul.f32 %v4287, %v4289
    %v4291 = vadd.f32 %v4287, %v4290
    %vm4292 = vweird.f32 %v4259
    %vm4293 = vweird.f32 %v4287
    %vm4294 = vmor %vm4292, %vm4293
    %v4295 = vsel %vm4294, %v4287, %v4291
    %v4296 = vand.u32 2147483647, %v4259
    %vm4297 = vcmp.eq.f32.partialorder %v4296, 8.507059e+37
    %v4298 = vand.u32 %v4259, 2147483648
    %v4299 = vor.u32 1.1754944e-38, %v4298
    %v4300 = vsel %vm4297, %v4299, %v4295
    %v4301 = vmul.f32 %v4238, %v4300
    %v4302 = vrcp.pop %v4262
    %v4303 = vmul.f32 %v4262, %v4302
    %v4304 = vsub.f32 1.0, %v4303
    %v4305 = vmul.f32 %v4302, %v4304
    %v4306 = vadd.f32 %v4302, %v4305
    %vm4307 = vweird.f32 %v4262
    %vm4308 = vweird.f32 %v4302
    %vm4309 = vmor %vm4307, %vm4308
    %v4310 = vsel %vm4309, %v4302, %v4306
    %v4311 = vand.u32 2147483647, %v4262
    %vm4312 = vcmp.eq.f32.partialorder %v4311, 8.507059e+37
    %v4313 = vand.u32 %v4262, 2147483648
    %v4314 = vor.u32 1.1754944e-38, %v4313
    %v4315 = vsel %vm4312, %v4314, %v4310
    %v4316 = vmul.f32 %v4240, %v4315
    %v4317 = vrcp.pop %v4265
    %v4318 = vmul.f32 %v4265, %v4317
    %v4319 = vsub.f32 1.0, %v4318
    %v4320 = vmul.f32 %v4317, %v4319
    %v4321 = vadd.f32 %v4317, %v4320
    %vm4322 = vweird.f32 %v4265
    %vm4323 = vweird.f32 %v4317
    %vm4324 = vmor %vm4322, %vm4323
    %v4325 = vsel %vm4324, %v4317, %v4321
    %v4326 = vand.u32 2147483647, %v4265
    %vm4327 = vcmp.eq.f32.partialorder %v4326, 8.507059e+37
    %v4328 = vand.u32 %v4265, 2147483648
    %v4329 = vor.u32 1.1754944e-38, %v4328
    %v4330 = vsel %vm4327, %v4329, %v4325
    %v4331 = vmul.f32 %v4242, %v4330
    %v4332 = vrcp.pop %v4268
    %v4333 = vmul.f32 %v4268, %v4332
    %v4334 = vsub.f32 1.0, %v4333
    %v4335 = vmul.f32 %v4332, %v4334
    %v4336 = vadd.f32 %v4332, %v4335
    %vm4337 = vweird.f32 %v4268
    %vm4338 = vweird.f32 %v4332
    %vm4339 = vmor %vm4337, %vm4338
    %v4340 = vsel %vm4339, %v4332, %v4336
    %v4341 = vand.u32 2147483647, %v4268
    %vm4342 = vcmp.eq.f32.partialorder %v4341, 8.507059e+37
    %v4343 = vand.u32 %v4268, 2147483648
    %v4344 = vor.u32 1.1754944e-38, %v4343
    %v4345 = vsel %vm4342, %v4344, %v4340
    %v4346 = vmul.f32 %v4244, %v4345
    %v4347 = vrcp.pop %v4271
    %v4348 = vmul.f32 %v4271, %v4347
    %v4349 = vsub.f32 1.0, %v4348
    %v4350 = vmul.f32 %v4347, %v4349
    %v4351 = vadd.f32 %v4347, %v4350
    %vm4352 = vweird.f32 %v4271
    %vm4353 = vweird.f32 %v4347
    %vm4354 = vmor %vm4352, %vm4353
    %v4355 = vsel %vm4354, %v4347, %v4351
    %v4356 = vand.u32 2147483647, %v4271
    %vm4357 = vcmp.eq.f32.partialorder %v4356, 8.507059e+37
    %v4358 = vand.u32 %v4271, 2147483648
    %v4359 = vor.u32 1.1754944e-38, %v4358
    %v4360 = vsel %vm4357, %v4359, %v4355
    %v4361 = vmul.f32 %v4246, %v4360
    %v4362 = vrcp.pop %v4274
    %v4363 = vmul.f32 %v4274, %v4362
    %v4364 = vsub.f32 1.0, %v4363
    %v4365 = vmul.f32 %v4362, %v4364
    %v4366 = vadd.f32 %v4362, %v4365
    %vm4367 = vweird.f32 %v4274
    %vm4368 = vweird.f32 %v4362
    %vm4369 = vmor %vm4367, %vm4368
    %v4370 = vsel %vm4369, %v4362, %v4366
    %v4371 = vand.u32 2147483647, %v4274
    %vm4372 = vcmp.eq.f32.partialorder %v4371, 8.507059e+37
    %v4373 = vand.u32 %v4274, 2147483648
    %v4374 = vor.u32 1.1754944e-38, %v4373
    %v4375 = vsel %vm4372, %v4374, %v4370
    %v4376 = vmul.f32 %v4248, %v4375
    %v4377 = vrcp.pop %v4277
    %v4378 = vmul.f32 %v4277, %v4377
    %v4379 = vsub.f32 1.0, %v4378
    %v4380 = vmul.f32 %v4377, %v4379
    %v4381 = vadd.f32 %v4377, %v4380
    %vm4382 = vweird.f32 %v4277
    %vm4383 = vweird.f32 %v4377
    %vm4384 = vmor %vm4382, %vm4383
    %v4385 = vsel %vm4384, %v4377, %v4381
    %v4386 = vand.u32 2147483647, %v4277
    %vm4387 = vcmp.eq.f32.partialorder %v4386, 8.507059e+37
    %v4388 = vand.u32 %v4277, 2147483648
    %v4389 = vor.u32 1.1754944e-38, %v4388
    %v4390 = vsel %vm4387, %v4389, %v4385
    %v4391 = vmul.f32 %v4250, %v4390
    %v4392 = vrcp.pop %v4280
    %v4393 = vmul.f32 %v4280, %v4392
    %v4394 = vsub.f32 1.0, %v4393
    %v4395 = vmul.f32 %v4392, %v4394
    %v4396 = vadd.f32 %v4392, %v4395
    %vm4397 = vweird.f32 %v4280
    %vm4398 = vweird.f32 %v4392
    %vm4399 = vmor %vm4397, %vm4398
    %v4400 = vsel %vm4399, %v4392, %v4396
    %v4401 = vand.u32 2147483647, %v4280
    %vm4402 = vcmp.eq.f32.partialorder %v4401, 8.507059e+37
    %v4403 = vand.u32 %v4280, 2147483648
    %v4404 = vor.u32 1.1754944e-38, %v4403
    %v4405 = vsel %vm4402, %v4404, %v4400
    %v4406 = vmul.f32 %v4252, %v4405
    %v4407 = vrcp.pop %v4283
    %v4408 = vmul.f32 %v4283, %v4407
    %v4409 = vsub.f32 1.0, %v4408
    %v4410 = vmul.f32 %v4407, %v4409
    %v4411 = vadd.f32 %v4407, %v4410
    %vm4412 = vweird.f32 %v4283
    %vm4413 = vweird.f32 %v4407
    %vm4414 = vmor %vm4412, %vm4413
    %v4415 = vsel %vm4414, %v4407, %v4411
    %v4416 = vand.u32 2147483647, %v4283
    %vm4417 = vcmp.eq.f32.partialorder %v4416, 8.507059e+37
    %v4418 = vand.u32 %v4283, 2147483648
    %v4419 = vor.u32 1.1754944e-38, %v4418
    %v4420 = vsel %vm4417, %v4419, %v4415
    %v4421 = vmul.f32 %v4254, %v4420
    %v4422 = vrcp.pop %v4286
    %v4423 = vmul.f32 %v4286, %v4422
    %v4424 = vsub.f32 1.0, %v4423
    %v4425 = vmul.f32 %v4422, %v4424
    %v4426 = vadd.f32 %v4422, %v4425
    %vm4427 = vweird.f32 %v4286
    %vm4428 = vweird.f32 %v4422
    %vm4429 = vmor %vm4427, %vm4428
    %v4430 = vsel %vm4429, %v4422, %v4426
    %v4431 = vand.u32 2147483647, %v4286
    %vm4432 = vcmp.eq.f32.partialorder %v4431, 8.507059e+37
    %v4433 = vand.u32 %v4286, 2147483648
    %v4434 = vor.u32 1.1754944e-38, %v4433
    %v4435 = vsel %vm4432, %v4434, %v4430
    %v4436 = vmul.f32 %v4256, %v4435
    %v4437 = vsel %vm1389, %v3237, 0
    %v4438 = vsel %vm1389, %v3238, 0
    %v4439 = vsel %vm1389, %v3239, 0
    %v4440 = vsel %vm1389, %v3240, 0
    %v4441 = vsel %vm1389, %v3241, 0
    %v4442 = vsel %vm1389, %v3242, 0
    %v4443 = vsel %vm1389, %v3243, 0
    %v4444 = vsel %vm1389, %v3244, 0
    %v4445 = vsel %vm1389, %v3245, 0
    %v4446 = vsel %vm1389, %v3246, 0
    %v4447 = vpack.c.bf16 %v4316, %v4301
    %v4448 = vpack.c.bf16 %v4346, %v4331
    %v4449 = vpack.c.bf16 %v4376, %v4361
    %v4450 = vpack.c.bf16 %v4406, %v4391
    %v4451 = vpack.c.bf16 %v4436, %v4421
    %v4462 = vunpack.c.l.b16 %v4437
    %v4463 = vunpack.c.l.b16 %v4438
    %v4464 = vunpack.c.l.b16 %v4439
    %v4465 = vunpack.c.l.b16 %v4440
    %v4466 = vunpack.c.l.b16 %v4441
    %v4467 = vunpack.c.l.b16 %v4442
    %v4468 = vunpack.c.l.b16 %v4443
    %v4469 = vunpack.c.l.b16 %v4444
    %v4470 = vunpack.c.l.b16 %v4445
    %v4471 = vunpack.c.l.b16 %v4446
    %v4472 = vpack.c.b16 %v4463, %v4462
    %v4473 = vpack.c.b16 %v4465, %v4464
    %v4474 = vpack.c.b16 %v4467, %v4466
    %v4475 = vpack.c.b16 %v4469, %v4468
    %v4476 = vpack.c.b16 %v4471, %v4470
    %v4483 = vsel %vm631, %v4447, 0
    %v4486 = vsel %vm631, %v4448, 0
    %v4489 = vsel %vm631, %v4449, 0
    %v4492 = vsel %vm631, %v4450, 0
    %v4495 = vsel %vm631, %v4451, 0
    %4497 = vmatpush.bf16.msra.mxu0 0
    %4498 = vmatpush.bf16.msra.mxu0 0
    %4499 = vmatpush.bf16.msra.mxu0 0
    %4500 = vmatpush.bf16.msra.mxu0 %v4476
    %4501 = vmatpush.bf16.msra.mxu0 %v4475
    %4502 = vmatpush.bf16.msra.mxu0 %v4474
    %4503 = vmatpush.bf16.msra.mxu0 %v4473
    %4504 = vmatpush.bf16.msra.mxu0 %v4472
    %4505 = vmatmul.bf16.gmra.mxu0 %v4483
    %v4506 = vpop.f32.mrf.mxu0
    %v4507 = vadd.f32 0.0, %v4506
    %v4508 = vpop.f32.mrf.mxu0
    %v4509 = vadd.f32 0.0, %v4508
    %4510 = vmatmul.bf16.gmra.mxu0 %v4486
    %v4511 = vpop.f32.mrf.mxu0
    %v4512 = vadd.f32 0.0, %v4511
    %v4513 = vpop.f32.mrf.mxu0
    %v4514 = vadd.f32 0.0, %v4513
    %4515 = vmatmul.bf16.gmra.mxu0 %v4489
    %v4516 = vpop.f32.mrf.mxu0
    %v4517 = vadd.f32 0.0, %v4516
    %v4518 = vpop.f32.mrf.mxu0
    %v4519 = vadd.f32 0.0, %v4518
    %4520 = vmatmul.bf16.gmra.mxu0 %v4492
    %v4521 = vpop.f32.mrf.mxu0
    %v4522 = vadd.f32 0.0, %v4521
    %v4523 = vpop.f32.mrf.mxu0
    %v4524 = vadd.f32 0.0, %v4523
    %4525 = vmatmul.bf16.gmra.mxu0 %v4495
    %v4526 = vpop.f32.mrf.mxu0
    %v4527 = vadd.f32 0.0, %v4526
    %v4528 = vpop.f32.mrf.mxu0
    %v4529 = vadd.f32 0.0, %v4528
    %4530 = vdwg.mxu0
    %v4531 = vadd.f32 %v4089, %v4507
    %v4532 = vadd.f32 %v4091, %v4509
    %v4533 = vadd.f32 %v4094, %v4512
    %v4534 = vadd.f32 %v4096, %v4514
    %v4535 = vadd.f32 %v4099, %v4517
    %v4536 = vadd.f32 %v4101, %v4519
    %v4537 = vadd.f32 %v4104, %v4522
    %v4538 = vadd.f32 %v4106, %v4524
    %v4539 = vadd.f32 %v4109, %v4527
    %v4540 = vadd.f32 %v4111, %v4529
    %v4541 = vsel %vm1820, %v3222, 0
    %v4542 = vsel %vm1820, %v3223, 0
    %v4543 = vsel %vm1820, %v3224, 0
    %v4544 = vsel %vm1820, %v3225, 0
    %v4545 = vsel %vm1820, %v3226, 0
    %v4546 = vsel %vm1820, %v3227, 0
    %v4547 = vsel %vm1820, %v3228, 0
    %v4548 = vsel %vm1820, %v3229, 0
    %v4549 = vsel %vm1820, %v3230, 0
    %v4550 = vsel %vm1820, %v3231, 0
    %v4561 = vunpack.c.l.b16 %v4541
    %v4562 = vunpack.c.l.b16 %v4542
    %v4563 = vunpack.c.l.b16 %v4543
    %v4564 = vunpack.c.l.b16 %v4544
    %v4565 = vunpack.c.l.b16 %v4545
    %v4566 = vunpack.c.l.b16 %v4546
    %v4567 = vunpack.c.l.b16 %v4547
    %v4568 = vunpack.c.l.b16 %v4548
    %v4569 = vunpack.c.l.b16 %v4549
    %v4570 = vunpack.c.l.b16 %v4550
    %v4571 = vpack.c.b16 %v4562, %v4561
    %v4572 = vpack.c.b16 %v4564, %v4563
    %v4573 = vpack.c.b16 %v4566, %v4565
    %v4574 = vpack.c.b16 %v4568, %v4567
    %v4575 = vpack.c.b16 %v4570, %v4569
    %v4577 = vsel %vm73, %v4571, 0
    %v4580 = vsel %vm73, %v4572, 0
    %v4583 = vsel %vm73, %v4573, 0
    %v4586 = vsel %vm73, %v4574, 0
    %v4589 = vsel %vm73, %v4575, 0
    %4591 = vmatpush.bf16.xpose.msra.mxu0 0
    %4592 = vmatpush.bf16.xpose.msra.mxu0 0
    %4593 = vmatpush.bf16.xpose.msra.mxu0 0
    %4594 = vmatpush.bf16.xpose.msra.mxu0 %v3325
    %4595 = vmatpush.bf16.xpose.msra.mxu0 %v3322
    %4596 = vmatpush.bf16.xpose.msra.mxu0 %v3319
    %4597 = vmatpush.bf16.xpose.msra.mxu0 %v3316
    %4598 = vmatpush.bf16.xpose.msra.mxu0 %v3313
    %4599 = vmatmul.bf16.gmra.mxu0 %v4577
    %v4600 = vpop.f32.mrf.mxu0
    %v4601 = vadd.f32 %v347, %v4600
    %v4602 = vpop.f32.mrf.mxu0
    %v4603 = vadd.f32 %v348, %v4602
    %4604 = vmatmul.bf16.gmra.mxu0 %v4580
    %v4605 = vpop.f32.mrf.mxu0
    %v4606 = vadd.f32 %v349, %v4605
    %v4607 = vpop.f32.mrf.mxu0
    %v4608 = vadd.f32 %v350, %v4607
    %4609 = vmatmul.bf16.gmra.mxu0 %v4583
    %v4610 = vpop.f32.mrf.mxu0
    %v4611 = vadd.f32 %v351, %v4610
    %v4612 = vpop.f32.mrf.mxu0
    %v4613 = vadd.f32 %v352, %v4612
    %4614 = vmatmul.bf16.gmra.mxu0 %v4586
    %v4615 = vpop.f32.mrf.mxu0
    %v4616 = vadd.f32 %v353, %v4615
    %v4617 = vpop.f32.mrf.mxu0
    %v4618 = vadd.f32 %v354, %v4617
    %4619 = vmatmul.bf16.gmra.mxu0 %v4589
    %v4620 = vpop.f32.mrf.mxu0
    %v4621 = vadd.f32 %v355, %v4620
    %v4622 = vpop.f32.mrf.mxu0
    %v4623 = vadd.f32 %v356, %v4622
    %4624 = vdwg.mxu0
    %v4625 = vsel %vm631, %v4601, -inf
    %4626 = vmax.xlane.f32.xlu0 %v4625
    %v4627 = vpop.xlane.xlu0 %4626
    %v4628 = vsel %vm631, %v4603, -inf
    %4629 = vmax.xlane.f32.xlu0 %v4628
    %v4630 = vpop.xlane.xlu0 %4629
    %v4631 = vsel %vm631, %v4606, -inf
    %4632 = vmax.xlane.f32.xlu0 %v4631
    %v4633 = vpop.xlane.xlu0 %4632
    %v4634 = vsel %vm631, %v4608, -inf
    %4635 = vmax.xlane.f32.xlu0 %v4634
    %v4636 = vpop.xlane.xlu0 %4635
    %v4637 = vsel %vm631, %v4611, -inf
    %4638 = vmax.xlane.f32.xlu0 %v4637
    %v4639 = vpop.xlane.xlu0 %4638
    %v4640 = vsel %vm631, %v4613, -inf
    %4641 = vmax.xlane.f32.xlu0 %v4640
    %v4642 = vpop.xlane.xlu0 %4641
    %v4643 = vsel %vm631, %v4616, -inf
    %4644 = vmax.xlane.f32.xlu0 %v4643
    %v4645 = vpop.xlane.xlu0 %4644
    %v4646 = vsel %vm631, %v4618, -inf
    %4647 = vmax.xlane.f32.xlu0 %v4646
    %v4648 = vpop.xlane.xlu0 %4647
    %v4649 = vsel %vm631, %v4621, -inf
    %4650 = vmax.xlane.f32.xlu0 %v4649
    %v4651 = vpop.xlane.xlu0 %4650
    %v4652 = vsel %vm631, %v4623, -inf
    %4653 = vmax.xlane.f32.xlu0 %v4652
    %v4654 = vpop.xlane.xlu0 %4653
    %v4655 = vsub.f32 %v4601, %v4627
    %v4656 = vsub.f32 %v4603, %v4630
    %v4657 = vsub.f32 %v4606, %v4633
    %v4658 = vsub.f32 %v4608, %v4636
    %v4659 = vsub.f32 %v4611, %v4639
    %v4660 = vsub.f32 %v4613, %v4642
    %v4661 = vsub.f32 %v4616, %v4645
    %v4662 = vsub.f32 %v4618, %v4648
    %v4663 = vsub.f32 %v4621, %v4651
    %v4664 = vsub.f32 %v4623, %v4654
    %v4665 = vmul.f32 %v4655, 1.442695
    %v4666 = vpow.pop %v4665
    %v4667 = vmul.f32 %v4656, 1.442695
    %v4668 = vpow.pop %v4667
    %v4669 = vmul.f32 %v4657, 1.442695
    %v4670 = vpow.pop %v4669
    %v4671 = vmul.f32 %v4658, 1.442695
    %v4672 = vpow.pop %v4671
    %v4673 = vmul.f32 %v4659, 1.442695
    %v4674 = vpow.pop %v4673
    %v4675 = vmul.f32 %v4660, 1.442695
    %v4676 = vpow.pop %v4675
    %v4677 = vmul.f32 %v4661, 1.442695
    %v4678 = vpow.pop %v4677
    %v4679 = vmul.f32 %v4662, 1.442695
    %v4680 = vpow.pop %v4679
    %v4681 = vmul.f32 %v4663, 1.442695
    %v4682 = vpow.pop %v4681
    %v4683 = vmul.f32 %v4664, 1.442695
    %v4684 = vpow.pop %v4683
    %v4685 = vsel %vm631, %v4666, 0.0
    %4686 = vadd.xlane.f32.xlu0 %v4685
    %v4687 = vpop.xlane.xlu0 %4686
    %v4688 = vsel %vm631, %v4668, 0.0
    %4689 = vadd.xlane.f32.xlu0 %v4688
    %v4690 = vpop.xlane.xlu0 %4689
    %v4691 = vsel %vm631, %v4670, 0.0
    %4692 = vadd.xlane.f32.xlu0 %v4691
    %v4693 = vpop.xlane.xlu0 %4692
    %v4694 = vsel %vm631, %v4672, 0.0
    %4695 = vadd.xlane.f32.xlu0 %v4694
    %v4696 = vpop.xlane.xlu0 %4695
    %v4697 = vsel %vm631, %v4674, 0.0
    %4698 = vadd.xlane.f32.xlu0 %v4697
    %v4699 = vpop.xlane.xlu0 %4698
    %v4700 = vsel %vm631, %v4676, 0.0
    %4701 = vadd.xlane.f32.xlu0 %v4700
    %v4702 = vpop.xlane.xlu0 %4701
    %v4703 = vsel %vm631, %v4678, 0.0
    %4704 = vadd.xlane.f32.xlu0 %v4703
    %v4705 = vpop.xlane.xlu0 %4704
    %v4706 = vsel %vm631, %v4680, 0.0
    %4707 = vadd.xlane.f32.xlu0 %v4706
    %v4708 = vpop.xlane.xlu0 %4707
    %v4709 = vsel %vm631, %v4682, 0.0
    %4710 = vadd.xlane.f32.xlu0 %v4709
    %v4711 = vpop.xlane.xlu0 %4710
    %v4712 = vsel %vm631, %v4684, 0.0
    %4713 = vadd.xlane.f32.xlu0 %v4712
    %v4714 = vpop.xlane.xlu0 %4713
    %v4715 = vrcp.pop %v4687
    %v4716 = vmul.f32 %v4687, %v4715
    %v4717 = vsub.f32 1.0, %v4716
    %v4718 = vmul.f32 %v4715, %v4717
    %v4719 = vadd.f32 %v4715, %v4718
    %vm4720 = vweird.f32 %v4687
    %vm4721 = vweird.f32 %v4715
    %vm4722 = vmor %vm4720, %vm4721
    %v4723 = vsel %vm4722, %v4715, %v4719
    %v4724 = vand.u32 2147483647, %v4687
    %vm4725 = vcmp.eq.f32.partialorder %v4724, 8.507059e+37
    %v4726 = vand.u32 %v4687, 2147483648
    %v4727 = vor.u32 1.1754944e-38, %v4726
    %v4728 = vsel %vm4725, %v4727, %v4723
    %v4729 = vmul.f32 %v4666, %v4728
    %v4730 = vrcp.pop %v4690
    %v4731 = vmul.f32 %v4690, %v4730
    %v4732 = vsub.f32 1.0, %v4731
    %v4733 = vmul.f32 %v4730, %v4732
    %v4734 = vadd.f32 %v4730, %v4733
    %vm4735 = vweird.f32 %v4690
    %vm4736 = vweird.f32 %v4730
    %vm4737 = vmor %vm4735, %vm4736
    %v4738 = vsel %vm4737, %v4730, %v4734
    %v4739 = vand.u32 2147483647, %v4690
    %vm4740 = vcmp.eq.f32.partialorder %v4739, 8.507059e+37
    %v4741 = vand.u32 %v4690, 2147483648
    %v4742 = vor.u32 1.1754944e-38, %v4741
    %v4743 = vsel %vm4740, %v4742, %v4738
    %v4744 = vmul.f32 %v4668, %v4743
    %v4745 = vrcp.pop %v4693
    %v4746 = vmul.f32 %v4693, %v4745
    %v4747 = vsub.f32 1.0, %v4746
    %v4748 = vmul.f32 %v4745, %v4747
    %v4749 = vadd.f32 %v4745, %v4748
    %vm4750 = vweird.f32 %v4693
    %vm4751 = vweird.f32 %v4745
    %vm4752 = vmor %vm4750, %vm4751
    %v4753 = vsel %vm4752, %v4745, %v4749
    %v4754 = vand.u32 2147483647, %v4693
    %vm4755 = vcmp.eq.f32.partialorder %v4754, 8.507059e+37
    %v4756 = vand.u32 %v4693, 2147483648
    %v4757 = vor.u32 1.1754944e-38, %v4756
    %v4758 = vsel %vm4755, %v4757, %v4753
    %v4759 = vmul.f32 %v4670, %v4758
    %v4760 = vrcp.pop %v4696
    %v4761 = vmul.f32 %v4696, %v4760
    %v4762 = vsub.f32 1.0, %v4761
    %v4763 = vmul.f32 %v4760, %v4762
    %v4764 = vadd.f32 %v4760, %v4763
    %vm4765 = vweird.f32 %v4696
    %vm4766 = vweird.f32 %v4760
    %vm4767 = vmor %vm4765, %vm4766
    %v4768 = vsel %vm4767, %v4760, %v4764
    %v4769 = vand.u32 2147483647, %v4696
    %vm4770 = vcmp.eq.f32.partialorder %v4769, 8.507059e+37
    %v4771 = vand.u32 %v4696, 2147483648
    %v4772 = vor.u32 1.1754944e-38, %v4771
    %v4773 = vsel %vm4770, %v4772, %v4768
    %v4774 = vmul.f32 %v4672, %v4773
    %v4775 = vrcp.pop %v4699
    %v4776 = vmul.f32 %v4699, %v4775
    %v4777 = vsub.f32 1.0, %v4776
    %v4778 = vmul.f32 %v4775, %v4777
    %v4779 = vadd.f32 %v4775, %v4778
    %vm4780 = vweird.f32 %v4699
    %vm4781 = vweird.f32 %v4775
    %vm4782 = vmor %vm4780, %vm4781
    %v4783 = vsel %vm4782, %v4775, %v4779
    %v4784 = vand.u32 2147483647, %v4699
    %vm4785 = vcmp.eq.f32.partialorder %v4784, 8.507059e+37
    %v4786 = vand.u32 %v4699, 2147483648
    %v4787 = vor.u32 1.1754944e-38, %v4786
    %v4788 = vsel %vm4785, %v4787, %v4783
    %v4789 = vmul.f32 %v4674, %v4788
    %v4790 = vrcp.pop %v4702
    %v4791 = vmul.f32 %v4702, %v4790
    %v4792 = vsub.f32 1.0, %v4791
    %v4793 = vmul.f32 %v4790, %v4792
    %v4794 = vadd.f32 %v4790, %v4793
    %vm4795 = vweird.f32 %v4702
    %vm4796 = vweird.f32 %v4790
    %vm4797 = vmor %vm4795, %vm4796
    %v4798 = vsel %vm4797, %v4790, %v4794
    %v4799 = vand.u32 2147483647, %v4702
    %vm4800 = vcmp.eq.f32.partialorder %v4799, 8.507059e+37
    %v4801 = vand.u32 %v4702, 2147483648
    %v4802 = vor.u32 1.1754944e-38, %v4801
    %v4803 = vsel %vm4800, %v4802, %v4798
    %v4804 = vmul.f32 %v4676, %v4803
    %v4805 = vrcp.pop %v4705
    %v4806 = vmul.f32 %v4705, %v4805
    %v4807 = vsub.f32 1.0, %v4806
    %v4808 = vmul.f32 %v4805, %v4807
    %v4809 = vadd.f32 %v4805, %v4808
    %vm4810 = vweird.f32 %v4705
    %vm4811 = vweird.f32 %v4805
    %vm4812 = vmor %vm4810, %vm4811
    %v4813 = vsel %vm4812, %v4805, %v4809
    %v4814 = vand.u32 2147483647, %v4705
    %vm4815 = vcmp.eq.f32.partialorder %v4814, 8.507059e+37
    %v4816 = vand.u32 %v4705, 2147483648
    %v4817 = vor.u32 1.1754944e-38, %v4816
    %v4818 = vsel %vm4815, %v4817, %v4813
    %v4819 = vmul.f32 %v4678, %v4818
    %v4820 = vrcp.pop %v4708
    %v4821 = vmul.f32 %v4708, %v4820
    %v4822 = vsub.f32 1.0, %v4821
    %v4823 = vmul.f32 %v4820, %v4822
    %v4824 = vadd.f32 %v4820, %v4823
    %vm4825 = vweird.f32 %v4708
    %vm4826 = vweird.f32 %v4820
    %vm4827 = vmor %vm4825, %vm4826
    %v4828 = vsel %vm4827, %v4820, %v4824
    %v4829 = vand.u32 2147483647, %v4708
    %vm4830 = vcmp.eq.f32.partialorder %v4829, 8.507059e+37
    %v4831 = vand.u32 %v4708, 2147483648
    %v4832 = vor.u32 1.1754944e-38, %v4831
    %v4833 = vsel %vm4830, %v4832, %v4828
    %v4834 = vmul.f32 %v4680, %v4833
    %v4835 = vrcp.pop %v4711
    %v4836 = vmul.f32 %v4711, %v4835
    %v4837 = vsub.f32 1.0, %v4836
    %v4838 = vmul.f32 %v4835, %v4837
    %v4839 = vadd.f32 %v4835, %v4838
    %vm4840 = vweird.f32 %v4711
    %vm4841 = vweird.f32 %v4835
    %vm4842 = vmor %vm4840, %vm4841
    %v4843 = vsel %vm4842, %v4835, %v4839
    %v4844 = vand.u32 2147483647, %v4711
    %vm4845 = vcmp.eq.f32.partialorder %v4844, 8.507059e+37
    %v4846 = vand.u32 %v4711, 2147483648
    %v4847 = vor.u32 1.1754944e-38, %v4846
    %v4848 = vsel %vm4845, %v4847, %v4843
    %v4849 = vmul.f32 %v4682, %v4848
    %v4850 = vrcp.pop %v4714
    %v4851 = vmul.f32 %v4714, %v4850
    %v4852 = vsub.f32 1.0, %v4851
    %v4853 = vmul.f32 %v4850, %v4852
    %v4854 = vadd.f32 %v4850, %v4853
    %vm4855 = vweird.f32 %v4714
    %vm4856 = vweird.f32 %v4850
    %vm4857 = vmor %vm4855, %vm4856
    %v4858 = vsel %vm4857, %v4850, %v4854
    %v4859 = vand.u32 2147483647, %v4714
    %vm4860 = vcmp.eq.f32.partialorder %v4859, 8.507059e+37
    %v4861 = vand.u32 %v4714, 2147483648
    %v4862 = vor.u32 1.1754944e-38, %v4861
    %v4863 = vsel %vm4860, %v4862, %v4858
    %v4864 = vmul.f32 %v4684, %v4863
    %v4865 = vsel %vm1820, %v3237, 0
    %v4866 = vsel %vm1820, %v3238, 0
    %v4867 = vsel %vm1820, %v3239, 0
    %v4868 = vsel %vm1820, %v3240, 0
    %v4869 = vsel %vm1820, %v3241, 0
    %v4870 = vsel %vm1820, %v3242, 0
    %v4871 = vsel %vm1820, %v3243, 0
    %v4872 = vsel %vm1820, %v3244, 0
    %v4873 = vsel %vm1820, %v3245, 0
    %v4874 = vsel %vm1820, %v3246, 0
    %v4875 = vpack.c.bf16 %v4744, %v4729
    %v4876 = vpack.c.bf16 %v4774, %v4759
    %v4877 = vpack.c.bf16 %v4804, %v4789
    %v4878 = vpack.c.bf16 %v4834, %v4819
    %v4879 = vpack.c.bf16 %v4864, %v4849
    %v4890 = vunpack.c.l.b16 %v4865
    %v4891 = vunpack.c.l.b16 %v4866
    %v4892 = vunpack.c.l.b16 %v4867
    %v4893 = vunpack.c.l.b16 %v4868
    %v4894 = vunpack.c.l.b16 %v4869
    %v4895 = vunpack.c.l.b16 %v4870
    %v4896 = vunpack.c.l.b16 %v4871
    %v4897 = vunpack.c.l.b16 %v4872
    %v4898 = vunpack.c.l.b16 %v4873
    %v4899 = vunpack.c.l.b16 %v4874
    %v4900 = vpack.c.b16 %v4891, %v4890
    %v4901 = vpack.c.b16 %v4893, %v4892
    %v4902 = vpack.c.b16 %v4895, %v4894
    %v4903 = vpack.c.b16 %v4897, %v4896
    %v4904 = vpack.c.b16 %v4899, %v4898
    %v4911 = vsel %vm631, %v4875, 0
    %v4914 = vsel %vm631, %v4876, 0
    %v4917 = vsel %vm631, %v4877, 0
    %v4920 = vsel %vm631, %v4878, 0
    %v4923 = vsel %vm631, %v4879, 0
    %4925 = vmatpush.bf16.msra.mxu0 0
    %4926 = vmatpush.bf16.msra.mxu0 0
    %4927 = vmatpush.bf16.msra.mxu0 0
    %4928 = vmatpush.bf16.msra.mxu0 %v4904
    %4929 = vmatpush.bf16.msra.mxu0 %v4903
    %4930 = vmatpush.bf16.msra.mxu0 %v4902
    %4931 = vmatpush.bf16.msra.mxu0 %v4901
    %4932 = vmatpush.bf16.msra.mxu0 %v4900
    %4933 = vmatmul.bf16.gmra.mxu0 %v4911
    %v4934 = vpop.f32.mrf.mxu0
    %v4935 = vadd.f32 0.0, %v4934
    %v4936 = vpop.f32.mrf.mxu0
    %v4937 = vadd.f32 0.0, %v4936
    %4938 = vmatmul.bf16.gmra.mxu0 %v4914
    %v4939 = vpop.f32.mrf.mxu0
    %v4940 = vadd.f32 0.0, %v4939
    %v4941 = vpop.f32.mrf.mxu0
    %v4942 = vadd.f32 0.0, %v4941
    %4943 = vmatmul.bf16.gmra.mxu0 %v4917
    %v4944 = vpop.f32.mrf.mxu0
    %v4945 = vadd.f32 0.0, %v4944
    %v4946 = vpop.f32.mrf.mxu0
    %v4947 = vadd.f32 0.0, %v4946
    %4948 = vmatmul.bf16.gmra.mxu0 %v4920
    %v4949 = vpop.f32.mrf.mxu0
    %v4950 = vadd.f32 0.0, %v4949
    %v4951 = vpop.f32.mrf.mxu0
    %v4952 = vadd.f32 0.0, %v4951
    %4953 = vmatmul.bf16.gmra.mxu0 %v4923
    %v4954 = vpop.f32.mrf.mxu0
    %v4955 = vadd.f32 0.0, %v4954
    %v4956 = vpop.f32.mrf.mxu0
    %v4957 = vadd.f32 0.0, %v4956
    %4958 = vdwg.mxu0
    %v4959 = vadd.f32 %v4531, %v4935
    %v4960 = vadd.f32 %v4532, %v4937
    %v4961 = vadd.f32 %v4533, %v4940
    %v4962 = vadd.f32 %v4534, %v4942
    %v4963 = vadd.f32 %v4535, %v4945
    %v4964 = vadd.f32 %v4536, %v4947
    %v4965 = vadd.f32 %v4537, %v4950
    %v4966 = vadd.f32 %v4538, %v4952
    %v4967 = vadd.f32 %v4539, %v4955
    %v4968 = vadd.f32 %v4540, %v4957
    %v4969 = vpack.c.bf16 %v4960, %v4959
    %v4970 = vpack.c.bf16 %v4962, %v4961
    %v4971 = vpack.c.bf16 %v4964, %v4963
    %v4972 = vpack.c.bf16 %v4966, %v4965
    %v4973 = vpack.c.bf16 %v4968, %v4967
    %s4974 = scalar_lea.vmem %s6, 64
    %v4975 = vld [vmem:[%s4974] sm:$0xff]
    %v4976 = vld [vmem:[%s4974 + $0x8] sm:$0xff]
    %v4977 = vld [vmem:[%s4974 + $0x10] sm:$0xff]
    %v4978 = vld [vmem:[%s4974 + $0x18] sm:$0xff]
    %v4979 = vld [vmem:[%s4974 + $0x20] sm:$0xff]
    %v4980 = vld [vmem:[%s4974 + $0x28] sm:$0xff]
    %v4981 = vld [vmem:[%s4974 + $0x30] sm:$0xff]
    %v4982 = vld [vmem:[%s4974 + $0x38] sm:$0xff]
    %v4983 = vpack.c.bf16 %v4976, %v4975
    %v4984 = vpack.c.bf16 %v4978, %v4977
    %v4985 = vpack.c.bf16 %v4980, %v4979
    %v4986 = vpack.c.bf16 %v4982, %v4981
    %s4987 = scalar_lea.vmem %s7, 1
    %v4988 = vld [vmem:[%s4987] sm:$0x1]
    %v4990 = vperm.slane %v4988, 0
    %v4993 = vsel %vm73, %v4969, 0
    %v4996 = vsel %vm73, %v4970, 0
    %v4999 = vsel %vm73, %v4971, 0
    %v5002 = vsel %vm73, %v4972, 0
    %v5005 = vsel %vm73, %v4973, 0
    %5007 = vmatpush.bf16.msra.mxu0 0
    %5008 = vmatpush.bf16.msra.mxu0 0
    %5009 = vmatpush.bf16.msra.mxu0 0
    %5010 = vmatpush.bf16.msra.mxu0 0
    %5011 = vmatpush.bf16.msra.mxu0 %v4986
    %5012 = vmatpush.bf16.msra.mxu0 %v4985
    %5013 = vmatpush.bf16.msra.mxu0 %v4984
    %5014 = vmatpush.bf16.msra.mxu0 %v4983
    %5015 = vmatmul.bf16.gmra.mxu0 %v4993
    %v5016 = vpop.f32.mrf.mxu0
    %v5017 = vadd.f32 %v4990, %v5016
    %v5018 = vpop.f32.mrf.mxu0
    %v5019 = vadd.f32 %v4990, %v5018
    %5020 = vmatmul.bf16.gmra.mxu0 %v4996
    %v5021 = vpop.f32.mrf.mxu0
    %v5022 = vadd.f32 %v4990, %v5021
    %v5023 = vpop.f32.mrf.mxu0
    %v5024 = vadd.f32 %v4990, %v5023
    %5025 = vmatmul.bf16.gmra.mxu0 %v4999
    %v5026 = vpop.f32.mrf.mxu0
    %v5027 = vadd.f32 %v4990, %v5026
    %v5028 = vpop.f32.mrf.mxu0
    %v5029 = vadd.f32 %v4990, %v5028
    %5030 = vmatmul.bf16.gmra.mxu0 %v5002
    %v5031 = vpop.f32.mrf.mxu0
    %v5032 = vadd.f32 %v4990, %v5031
    %v5033 = vpop.f32.mrf.mxu0
    %v5034 = vadd.f32 %v4990, %v5033
    %5035 = vmatmul.bf16.gmra.mxu0 %v5005
    %v5036 = vpop.f32.mrf.mxu0
    %v5037 = vadd.f32 %v4990, %v5036
    %v5038 = vpop.f32.mrf.mxu0
    %v5039 = vadd.f32 %v4990, %v5038
    %5040 = vdwg.mxu0
    %v5041 = vadd.f32 %v3092, %v5017
    %v5042 = vadd.f32 %v3093, %v5019
    %v5043 = vadd.f32 %v3094, %v5022
    %v5044 = vadd.f32 %v3095, %v5024
    %v5045 = vadd.f32 %v3096, %v5027
    %v5046 = vadd.f32 %v3097, %v5029
    %v5047 = vadd.f32 %v3098, %v5032
    %v5048 = vadd.f32 %v3099, %v5034
    %v5049 = vadd.f32 %v3100, %v5037
    %v5050 = vadd.f32 %v3101, %v5039
    %s5051 = scalar_lea.vmem %s8, 1
    %v5052 = vld [vmem:[%s5051] sm:$0x1]
    %s5053 = scalar_lea.vmem %s9, 1
    %v5054 = vld [vmem:[%s5053] sm:$0x1]
    %v5055 = vsel %vm73, %v5041, 0.0
    %5056 = vadd.xlane.f32.xlu0 %v5055
    %v5057 = vpop.xlane.xlu0 %5056
    %v5058 = vsel %vm73, %v5042, 0.0
    %5059 = vadd.xlane.f32.xlu0 %v5058
    %v5060 = vpop.xlane.xlu0 %5059
    %v5061 = vsel %vm73, %v5043, 0.0
    %5062 = vadd.xlane.f32.xlu0 %v5061
    %v5063 = vpop.xlane.xlu0 %5062
    %v5064 = vsel %vm73, %v5044, 0.0
    %5065 = vadd.xlane.f32.xlu0 %v5064
    %v5066 = vpop.xlane.xlu0 %5065
    %v5067 = vsel %vm73, %v5045, 0.0
    %5068 = vadd.xlane.f32.xlu0 %v5067
    %v5069 = vpop.xlane.xlu0 %5068
    %v5070 = vsel %vm73, %v5046, 0.0
    %5071 = vadd.xlane.f32.xlu0 %v5070
    %v5072 = vpop.xlane.xlu0 %5071
    %v5073 = vsel %vm73, %v5047, 0.0
    %5074 = vadd.xlane.f32.xlu0 %v5073
    %v5075 = vpop.xlane.xlu0 %5074
    %v5076 = vsel %vm73, %v5048, 0.0
    %5077 = vadd.xlane.f32.xlu0 %v5076
    %v5078 = vpop.xlane.xlu0 %5077
    %v5079 = vsel %vm73, %v5049, 0.0
    %5080 = vadd.xlane.f32.xlu0 %v5079
    %v5081 = vpop.xlane.xlu0 %5080
    %v5082 = vsel %vm73, %v5050, 0.0
    %5083 = vadd.xlane.f32.xlu0 %v5082
    %v5084 = vpop.xlane.xlu0 %5083
    %v5085 = vmul.f32 %v5057, %v110
    %v5086 = vmul.f32 %v5060, %v110
    %v5087 = vmul.f32 %v5063, %v110
    %v5088 = vmul.f32 %v5066, %v110
    %v5089 = vmul.f32 %v5069, %v110
    %v5090 = vmul.f32 %v5072, %v110
    %v5091 = vmul.f32 %v5075, %v110
    %v5092 = vmul.f32 %v5078, %v110
    %v5093 = vmul.f32 %v5081, %v110
    %v5094 = vmul.f32 %v5084, %v110
    %v5095 = vmul.f32 %v5041, %v5041
    %v5096 = vmul.f32 %v5042, %v5042
    %v5097 = vmul.f32 %v5043, %v5043
    %v5098 = vmul.f32 %v5044, %v5044
    %v5099 = vmul.f32 %v5045, %v5045
    %v5100 = vmul.f32 %v5046, %v5046
    %v5101 = vmul.f32 %v5047, %v5047
    %v5102 = vmul.f32 %v5048, %v5048
    %v5103 = vmul.f32 %v5049, %v5049
    %v5104 = vmul.f32 %v5050, %v5050
    %v5105 = vsel %vm73, %v5095, 0.0
    %5106 = vadd.xlane.f32.xlu0 %v5105
    %v5107 = vpop.xlane.xlu0 %5106
    %v5108 = vsel %vm73, %v5096, 0.0
    %5109 = vadd.xlane.f32.xlu0 %v5108
    %v5110 = vpop.xlane.xlu0 %5109
    %v5111 = vsel %vm73, %v5097, 0.0
    %5112 = vadd.xlane.f32.xlu0 %v5111
    %v5113 = vpop.xlane.xlu0 %5112
    %v5114 = vsel %vm73, %v5098, 0.0
    %5115 = vadd.xlane.f32.xlu0 %v5114
    %v5116 = vpop.xlane.xlu0 %5115
    %v5117 = vsel %vm73, %v5099, 0.0
    %5118 = vadd.xlane.f32.xlu0 %v5117
    %v5119 = vpop.xlane.xlu0 %5118
    %v5120 = vsel %vm73, %v5100, 0.0
    %5121 = vadd.xlane.f32.xlu0 %v5120
    %v5122 = vpop.xlane.xlu0 %5121
    %v5123 = vsel %vm73, %v5101, 0.0
    %5124 = vadd.xlane.f32.xlu0 %v5123
    %v5125 = vpop.xlane.xlu0 %5124
    %v5126 = vsel %vm73, %v5102, 0.0
    %5127 = vadd.xlane.f32.xlu0 %v5126
    %v5128 = vpop.xlane.xlu0 %5127
    %v5129 = vsel %vm73, %v5103, 0.0
    %5130 = vadd.xlane.f32.xlu0 %v5129
    %v5131 = vpop.xlane.xlu0 %5130
    %v5132 = vsel %vm73, %v5104, 0.0
    %5133 = vadd.xlane.f32.xlu0 %v5132
    %v5134 = vpop.xlane.xlu0 %5133
    %v5135 = vmul.f32 %v5107, %v110
    %v5136 = vmul.f32 %v5110, %v110
    %v5137 = vmul.f32 %v5113, %v110
    %v5138 = vmul.f32 %v5116, %v110
    %v5139 = vmul.f32 %v5119, %v110
    %v5140 = vmul.f32 %v5122, %v110
    %v5141 = vmul.f32 %v5125, %v110
    %v5142 = vmul.f32 %v5128, %v110
    %v5143 = vmul.f32 %v5131, %v110
    %v5144 = vmul.f32 %v5134, %v110
    %v5145 = vmul.f32 %v5085, %v5085
    %v5146 = vmul.f32 %v5086, %v5086
    %v5147 = vmul.f32 %v5087, %v5087
    %v5148 = vmul.f32 %v5088, %v5088
    %v5149 = vmul.f32 %v5089, %v5089
    %v5150 = vmul.f32 %v5090, %v5090
    %v5151 = vmul.f32 %v5091, %v5091
    %v5152 = vmul.f32 %v5092, %v5092
    %v5153 = vmul.f32 %v5093, %v5093
    %v5154 = vmul.f32 %v5094, %v5094
    %v5155 = vsub.f32 %v5135, %v5145
    %v5156 = vsub.f32 %v5136, %v5146
    %v5157 = vsub.f32 %v5137, %v5147
    %v5158 = vsub.f32 %v5138, %v5148
    %v5159 = vsub.f32 %v5139, %v5149
    %v5160 = vsub.f32 %v5140, %v5150
    %v5161 = vsub.f32 %v5141, %v5151
    %v5162 = vsub.f32 %v5142, %v5152
    %v5163 = vsub.f32 %v5143, %v5153
    %v5164 = vsub.f32 %v5144, %v5154
    %v5165 = vsub.f32 %v5041, %v5085
    %v5166 = vsub.f32 %v5042, %v5086
    %v5167 = vsub.f32 %v5043, %v5087
    %v5168 = vsub.f32 %v5044, %v5088
    %v5169 = vsub.f32 %v5045, %v5089
    %v5170 = vsub.f32 %v5046, %v5090
    %v5171 = vsub.f32 %v5047, %v5091
    %v5172 = vsub.f32 %v5048, %v5092
    %v5173 = vsub.f32 %v5049, %v5093
    %v5174 = vsub.f32 %v5050, %v5094
    %v5175 = vadd.f32 %v5155, 1e-12
    %v5176 = vadd.f32 %v5156, 1e-12
    %v5177 = vadd.f32 %v5157, 1e-12
    %v5178 = vadd.f32 %v5158, 1e-12
    %v5179 = vadd.f32 %v5159, 1e-12
    %v5180 = vadd.f32 %v5160, 1e-12
    %v5181 = vadd.f32 %v5161, 1e-12
    %v5182 = vadd.f32 %v5162, 1e-12
    %v5183 = vadd.f32 %v5163, 1e-12
    %v5184 = vadd.f32 %v5164, 1e-12
    %v5185 = vrsqrt.pop %v5175
    %v5186 = vmul.f32 %v5185, %v5175
    %v5187 = vmul.f32 %v5186, %v5185
    %v5188 = vmul.f32 0.5, %v5187
    %v5189 = vsub.f32 1.5, %v5188
    %v5190 = vmul.f32 %v5185, %v5189
    %vm5191 = vweird.f32 %v5175
    %vm5192 = vweird.f32 %v5185
    %vm5193 = vmor %vm5191, %vm5192
    %v5194 = vsel %vm5193, %v5185, %v5190
    %v5195 = vrsqrt.pop %v5176
    %v5196 = vmul.f32 %v5195, %v5176
    %v5197 = vmul.f32 %v5196, %v5195
    %v5198 = vmul.f32 0.5, %v5197
    %v5199 = vsub.f32 1.5, %v5198
    %v5200 = vmul.f32 %v5195, %v5199
    %vm5201 = vweird.f32 %v5176
    %vm5202 = vweird.f32 %v5195
    %vm5203 = vmor %vm5201, %vm5202
    %v5204 = vsel %vm5203, %v5195, %v5200
    %v5205 = vrsqrt.pop %v5177
    %v5206 = vmul.f32 %v5205, %v5177
    %v5207 = vmul.f32 %v5206, %v5205
    %v5208 = vmul.f32 0.5, %v5207
    %v5209 = vsub.f32 1.5, %v5208
    %v5210 = vmul.f32 %v5205, %v5209
    %vm5211 = vweird.f32 %v5177
    %vm5212 = vweird.f32 %v5205
    %vm5213 = vmor %vm5211, %vm5212
    %v5214 = vsel %vm5213, %v5205, %v5210
    %v5215 = vrsqrt.pop %v5178
    %v5216 = vmul.f32 %v5215, %v5178
    %v5217 = vmul.f32 %v5216, %v5215
    %v5218 = vmul.f32 0.5, %v5217
    %v5219 = vsub.f32 1.5, %v5218
    %v5220 = vmul.f32 %v5215, %v5219
    %vm5221 = vweird.f32 %v5178
    %vm5222 = vweird.f32 %v5215
    %vm5223 = vmor %vm5221, %vm5222
    %v5224 = vsel %vm5223, %v5215, %v5220
    %v5225 = vrsqrt.pop %v5179
    %v5226 = vmul.f32 %v5225, %v5179
    %v5227 = vmul.f32 %v5226, %v5225
    %v5228 = vmul.f32 0.5, %v5227
    %v5229 = vsub.f32 1.5, %v5228
    %v5230 = vmul.f32 %v5225, %v5229
    %vm5231 = vweird.f32 %v5179
    %vm5232 = vweird.f32 %v5225
    %vm5233 = vmor %vm5231, %vm5232
    %v5234 = vsel %vm5233, %v5225, %v5230
    %v5235 = vrsqrt.pop %v5180
    %v5236 = vmul.f32 %v5235, %v5180
    %v5237 = vmul.f32 %v5236, %v5235
    %v5238 = vmul.f32 0.5, %v5237
    %v5239 = vsub.f32 1.5, %v5238
    %v5240 = vmul.f32 %v5235, %v5239
    %vm5241 = vweird.f32 %v5180
    %vm5242 = vweird.f32 %v5235
    %vm5243 = vmor %vm5241, %vm5242
    %v5244 = vsel %vm5243, %v5235, %v5240
    %v5245 = vrsqrt.pop %v5181
    %v5246 = vmul.f32 %v5245, %v5181
    %v5247 = vmul.f32 %v5246, %v5245
    %v5248 = vmul.f32 0.5, %v5247
    %v5249 = vsub.f32 1.5, %v5248
    %v5250 = vmul.f32 %v5245, %v5249
    %vm5251 = vweird.f32 %v5181
    %vm5252 = vweird.f32 %v5245
    %vm5253 = vmor %vm5251, %vm5252
    %v5254 = vsel %vm5253, %v5245, %v5250
    %v5255 = vrsqrt.pop %v5182
    %v5256 = vmul.f32 %v5255, %v5182
    %v5257 = vmul.f32 %v5256, %v5255
    %v5258 = vmul.f32 0.5, %v5257
    %v5259 = vsub.f32 1.5, %v5258
    %v5260 = vmul.f32 %v5255, %v5259
    %vm5261 = vweird.f32 %v5182
    %vm5262 = vweird.f32 %v5255
    %vm5263 = vmor %vm5261, %vm5262
    %v5264 = vsel %vm5263, %v5255, %v5260
    %v5265 = vrsqrt.pop %v5183
    %v5266 = vmul.f32 %v5265, %v5183
    %v5267 = vmul.f32 %v5266, %v5265
    %v5268 = vmul.f32 0.5, %v5267
    %v5269 = vsub.f32 1.5, %v5268
    %v5270 = vmul.f32 %v5265, %v5269
    %vm5271 = vweird.f32 %v5183
    %vm5272 = vweird.f32 %v5265
    %vm5273 = vmor %vm5271, %vm5272
    %v5274 = vsel %vm5273, %v5265, %v5270
    %v5275 = vrsqrt.pop %v5184
    %v5276 = vmul.f32 %v5275, %v5184
    %v5277 = vmul.f32 %v5276, %v5275
    %v5278 = vmul.f32 0.5, %v5277
    %v5279 = vsub.f32 1.5, %v5278
    %v5280 = vmul.f32 %v5275, %v5279
    %vm5281 = vweird.f32 %v5184
    %vm5282 = vweird.f32 %v5275
    %vm5283 = vmor %vm5281, %vm5282
    %v5284 = vsel %vm5283, %v5275, %v5280
    %v5285 = vmul.f32 %v5165, %v5194
    %v5286 = vmul.f32 %v5166, %v5204
    %v5287 = vmul.f32 %v5167, %v5214
    %v5288 = vmul.f32 %v5168, %v5224
    %v5289 = vmul.f32 %v5169, %v5234
    %v5290 = vmul.f32 %v5170, %v5244
    %v5291 = vmul.f32 %v5171, %v5254
    %v5292 = vmul.f32 %v5172, %v5264
    %v5293 = vmul.f32 %v5173, %v5274
    %v5294 = vmul.f32 %v5174, %v5284
    %v5296 = vperm.slane %v5052, 0
    %v5298 = vmul.f32 %v5285, %v5296
    %v5299 = vmul.f32 %v5286, %v5296
    %v5300 = vmul.f32 %v5287, %v5296
    %v5301 = vmul.f32 %v5288, %v5296
    %v5302 = vmul.f32 %v5289, %v5296
    %v5303 = vmul.f32 %v5290, %v5296
    %v5304 = vmul.f32 %v5291, %v5296
    %v5305 = vmul.f32 %v5292, %v5296
    %v5306 = vmul.f32 %v5293, %v5296
    %v5307 = vmul.f32 %v5294, %v5296
    %v5309 = vperm.slane %v5054, 0
    %v5311 = vadd.f32 %v5298, %v5309
    %v5312 = vadd.f32 %v5299, %v5309
    %v5313 = vadd.f32 %v5300, %v5309
    %v5314 = vadd.f32 %v5301, %v5309
    %v5315 = vadd.f32 %v5302, %v5309
    %v5316 = vadd.f32 %v5303, %v5309
    %v5317 = vadd.f32 %v5304, %v5309
    %v5318 = vadd.f32 %v5305, %v5309
    %v5319 = vadd.f32 %v5306, %v5309
    %v5320 = vadd.f32 %v5307, %v5309
    %v5321 = vpack.c.bf16 %v5312, %v5311
    %v5322 = vpack.c.bf16 %v5314, %v5313
    %v5323 = vpack.c.bf16 %v5316, %v5315
    %v5324 = vpack.c.bf16 %v5318, %v5317
    %v5325 = vpack.c.bf16 %v5320, %v5319
    %s5326 = scalar_lea.vmem %s10, 64
    %v5327 = vld [vmem:[%s5326] sm:$0xff]
    %v5328 = vld [vmem:[%s5326 + $0x8] sm:$0xff]
    %v5329 = vld [vmem:[%s5326 + $0x10] sm:$0xff]
    %v5330 = vld [vmem:[%s5326 + $0x18] sm:$0xff]
    %v5331 = vld [vmem:[%s5326 + $0x20] sm:$0xff]
    %v5332 = vld [vmem:[%s5326 + $0x28] sm:$0xff]
    %v5333 = vld [vmem:[%s5326 + $0x30] sm:$0xff]
    %v5334 = vld [vmem:[%s5326 + $0x38] sm:$0xff]
    %v5335 = vpack.c.bf16 %v5328, %v5327
    %v5336 = vpack.c.bf16 %v5330, %v5329
    %v5337 = vpack.c.bf16 %v5332, %v5331
    %v5338 = vpack.c.bf16 %v5334, %v5333
    %s5339 = scalar_lea.vmem %s11, 1
    %v5340 = vld [vmem:[%s5339] sm:$0x1]
    %v5342 = vperm.slane %v5340, 0
    %v5345 = vsel %vm73, %v5321, 0
    %v5348 = vsel %vm73, %v5322, 0
    %v5351 = vsel %vm73, %v5323, 0
    %v5354 = vsel %vm73, %v5324, 0
    %v5357 = vsel %vm73, %v5325, 0
    %5359 = vmatpush.bf16.msra.mxu0 0
    %5360 = vmatpush.bf16.msra.mxu0 0
    %5361 = vmatpush.bf16.msra.mxu0 0
    %5362 = vmatpush.bf16.msra.mxu0 0
    %5363 = vmatpush.bf16.msra.mxu0 %v5338
    %5364 = vmatpush.bf16.msra.mxu0 %v5337
    %5365 = vmatpush.bf16.msra.mxu0 %v5336
    %5366 = vmatpush.bf16.msra.mxu0 %v5335
    %5367 = vmatmul.bf16.gmra.mxu0 %v5345
    %v5368 = vpop.f32.mrf.mxu0
    %v5369 = vadd.f32 %v5342, %v5368
    %v5370 = vpop.f32.mrf.mxu0
    %v5371 = vadd.f32 %v5342, %v5370
    %5372 = vmatmul.bf16.gmra.mxu0 %v5348
    %v5373 = vpop.f32.mrf.mxu0
    %v5374 = vadd.f32 %v5342, %v5373
    %v5375 = vpop.f32.mrf.mxu0
    %v5376 = vadd.f32 %v5342, %v5375
    %5377 = vmatmul.bf16.gmra.mxu0 %v5351
    %v5378 = vpop.f32.mrf.mxu0
    %v5379 = vadd.f32 %v5342, %v5378
    %v5380 = vpop.f32.mrf.mxu0
    %v5381 = vadd.f32 %v5342, %v5380
    %5382 = vmatmul.bf16.gmra.mxu0 %v5354
    %v5383 = vpop.f32.mrf.mxu0
    %v5384 = vadd.f32 %v5342, %v5383
    %v5385 = vpop.f32.mrf.mxu0
    %v5386 = vadd.f32 %v5342, %v5385
    %5387 = vmatmul.bf16.gmra.mxu0 %v5357
    %v5388 = vpop.f32.mrf.mxu0
    %v5389 = vadd.f32 %v5342, %v5388
    %v5390 = vpop.f32.mrf.mxu0
    %v5391 = vadd.f32 %v5342, %v5390
    %5392 = vdwg.mxu0
    %v5393 = vmul.f32 %v5369, %v5369
    %v5394 = vmul.f32 %v5371, %v5371
    %v5395 = vmul.f32 %v5374, %v5374
    %v5396 = vmul.f32 %v5376, %v5376
    %v5397 = vmul.f32 %v5379, %v5379
    %v5398 = vmul.f32 %v5381, %v5381
    %v5399 = vmul.f32 %v5384, %v5384
    %v5400 = vmul.f32 %v5386, %v5386
    %v5401 = vmul.f32 %v5389, %v5389
    %v5402 = vmul.f32 %v5391, %v5391
    %v5403 = vmul.f32 %v5369, %v5393
    %v5404 = vmul.f32 %v5371, %v5394
    %v5405 = vmul.f32 %v5374, %v5395
    %v5406 = vmul.f32 %v5376, %v5396
    %v5407 = vmul.f32 %v5379, %v5397
    %v5408 = vmul.f32 %v5381, %v5398
    %v5409 = vmul.f32 %v5384, %v5399
    %v5410 = vmul.f32 %v5386, %v5400
    %v5411 = vmul.f32 %v5389, %v5401
    %v5412 = vmul.f32 %v5391, %v5402
    %v5413 = vmul.f32 %v5403, 0.044715
    %v5414 = vmul.f32 %v5404, 0.044715
    %v5415 = vmul.f32 %v5405, 0.044715
    %v5416 = vmul.f32 %v5406, 0.044715
    %v5417 = vmul.f32 %v5407, 0.044715
    %v5418 = vmul.f32 %v5408, 0.044715
    %v5419 = vmul.f32 %v5409, 0.044715
    %v5420 = vmul.f32 %v5410, 0.044715
    %v5421 = vmul.f32 %v5411, 0.044715
    %v5422 = vmul.f32 %v5412, 0.044715
    %v5423 = vadd.f32 %v5369, %v5413
    %v5424 = vadd.f32 %v5371, %v5414
    %v5425 = vadd.f32 %v5374, %v5415
    %v5426 = vadd.f32 %v5376, %v5416
    %v5427 = vadd.f32 %v5379, %v5417
    %v5428 = vadd.f32 %v5381, %v5418
    %v5429 = vadd.f32 %v5384, %v5419
    %v5430 = vadd.f32 %v5386, %v5420
    %v5431 = vadd.f32 %v5389, %v5421
    %v5432 = vadd.f32 %v5391, %v5422
    %v5433 = vmul.f32 %v5423, 0.7978846
    %v5434 = vmul.f32 %v5424, 0.7978846
    %v5435 = vmul.f32 %v5425, 0.7978846
    %v5436 = vmul.f32 %v5426, 0.7978846
    %v5437 = vmul.f32 %v5427, 0.7978846
    %v5438 = vmul.f32 %v5428, 0.7978846
    %v5439 = vmul.f32 %v5429, 0.7978846
    %v5440 = vmul.f32 %v5430, 0.7978846
    %v5441 = vmul.f32 %v5431, 0.7978846
    %v5442 = vmul.f32 %v5432, 0.7978846
    %v5443 = vtanh.pop %v5433
    %v5444 = vtanh.pop %v5434
    %v5445 = vtanh.pop %v5435
    %v5446 = vtanh.pop %v5436
    %v5447 = vtanh.pop %v5437
    %v5448 = vtanh.pop %v5438
    %v5449 = vtanh.pop %v5439
    %v5450 = vtanh.pop %v5440
    %v5451 = vtanh.pop %v5441
    %v5452 = vtanh.pop %v5442
    %v5453 = vadd.f32 %v5443, 1.0
    %v5454 = vadd.f32 %v5444, 1.0
    %v5455 = vadd.f32 %v5445, 1.0
    %v5456 = vadd.f32 %v5446, 1.0
    %v5457 = vadd.f32 %v5447, 1.0
    %v5458 = vadd.f32 %v5448, 1.0
    %v5459 = vadd.f32 %v5449, 1.0
    %v5460 = vadd.f32 %v5450, 1.0
    %v5461 = vadd.f32 %v5451, 1.0
    %v5462 = vadd.f32 %v5452, 1.0
    %v5463 = vmul.f32 %v5453, 0.5
    %v5464 = vmul.f32 %v5454, 0.5
    %v5465 = vmul.f32 %v5455, 0.5
    %v5466 = vmul.f32 %v5456, 0.5
    %v5467 = vmul.f32 %v5457, 0.5
    %v5468 = vmul.f32 %v5458, 0.5
    %v5469 = vmul.f32 %v5459, 0.5
    %v5470 = vmul.f32 %v5460, 0.5
    %v5471 = vmul.f32 %v5461, 0.5
    %v5472 = vmul.f32 %v5462, 0.5
    %v5473 = vmul.f32 %v5369, %v5463
    %v5474 = vmul.f32 %v5371, %v5464
    %v5475 = vmul.f32 %v5374, %v5465
    %v5476 = vmul.f32 %v5376, %v5466
    %v5477 = vmul.f32 %v5379, %v5467
    %v5478 = vmul.f32 %v5381, %v5468
    %v5479 = vmul.f32 %v5384, %v5469
    %v5480 = vmul.f32 %v5386, %v5470
    %v5481 = vmul.f32 %v5389, %v5471
    %v5482 = vmul.f32 %v5391, %v5472
    %v5483 = vpack.c.bf16 %v5474, %v5473
    %v5484 = vpack.c.bf16 %v5476, %v5475
    %v5485 = vpack.c.bf16 %v5478, %v5477
    %v5486 = vpack.c.bf16 %v5480, %v5479
    %v5487 = vpack.c.bf16 %v5482, %v5481
    %s5488 = scalar_lea.vmem %s12, 128
    %v5489 = vld [vmem:[%s5488] sm:$0xff]
    %v5490 = vld [vmem:[%s5488 + $0x8] sm:$0xff]
    %v5491 = vld [vmem:[%s5488 + $0x10] sm:$0xff]
    %v5492 = vld [vmem:[%s5488 + $0x18] sm:$0xff]
    %v5493 = vld [vmem:[%s5488 + $0x20] sm:$0xff]
    %v5494 = vld [vmem:[%s5488 + $0x28] sm:$0xff]
    %v5495 = vld [vmem:[%s5488 + $0x30] sm:$0xff]
    %v5496 = vld [vmem:[%s5488 + $0x38] sm:$0xff]
    %v5497 = vld [vmem:[%s5488 + $0x40] sm:$0xff]
    %v5498 = vld [vmem:[%s5488 + $0x48] sm:$0xff]
    %v5499 = vld [vmem:[%s5488 + $0x50] sm:$0xff]
    %v5500 = vld [vmem:[%s5488 + $0x58] sm:$0xff]
    %v5501 = vld [vmem:[%s5488 + $0x60] sm:$0xff]
    %v5502 = vld [vmem:[%s5488 + $0x68] sm:$0xff]
    %v5503 = vld [vmem:[%s5488 + $0x70] sm:$0xff]
    %v5504 = vld [vmem:[%s5488 + $0x78] sm:$0xff]
    %v5505 = vpack.c.bf16 %v5490, %v5489
    %v5506 = vpack.c.bf16 %v5492, %v5491
    %v5507 = vpack.c.bf16 %v5494, %v5493
    %v5508 = vpack.c.bf16 %v5496, %v5495
    %v5509 = vpack.c.bf16 %v5498, %v5497
    %v5510 = vpack.c.bf16 %v5500, %v5499
    %v5511 = vpack.c.bf16 %v5502, %v5501
    %v5512 = vpack.c.bf16 %v5504, %v5503
    %s5513 = scalar_lea.vmem %s13, 1
    %v5514 = vld [vmem:[%s5513] sm:$0x1]
    %v5516 = vperm.slane %v5514, 0
    %5518 = vmatpush.bf16.msra.mxu0 %v5512
    %5519 = vmatpush.bf16.msra.mxu0 %v5511
    %5520 = vmatpush.bf16.msra.mxu0 %v5510
    %5521 = vmatpush.bf16.msra.mxu0 %v5509
    %5522 = vmatpush.bf16.msra.mxu0 %v5508
    %5523 = vmatpush.bf16.msra.mxu0 %v5507
    %5524 = vmatpush.bf16.msra.mxu0 %v5506
    %5525 = vmatpush.bf16.msra.mxu0 %v5505
    %5526 = vmatmul.bf16.gmra.mxu0 %v5483
    %v5527 = vpop.f32.mrf.mxu0
    %v5528 = vadd.f32 %v5516, %v5527
    %v5529 = vpop.f32.mrf.mxu0
    %v5530 = vadd.f32 %v5516, %v5529
    %5531 = vmatmul.bf16.gmra.mxu0 %v5484
    %v5532 = vpop.f32.mrf.mxu0
    %v5533 = vadd.f32 %v5516, %v5532
    %v5534 = vpop.f32.mrf.mxu0
    %v5535 = vadd.f32 %v5516, %v5534
    %5536 = vmatmul.bf16.gmra.mxu0 %v5485
    %v5537 = vpop.f32.mrf.mxu0
    %v5538 = vadd.f32 %v5516, %v5537
    %v5539 = vpop.f32.mrf.mxu0
    %v5540 = vadd.f32 %v5516, %v5539
    %5541 = vmatmul.bf16.gmra.mxu0 %v5486
    %v5542 = vpop.f32.mrf.mxu0
    %v5543 = vadd.f32 %v5516, %v5542
    %v5544 = vpop.f32.mrf.mxu0
    %v5545 = vadd.f32 %v5516, %v5544
    %5546 = vmatmul.bf16.gmra.mxu0 %v5487
    %v5547 = vpop.f32.mrf.mxu0
    %v5548 = vadd.f32 %v5516, %v5547
    %v5549 = vpop.f32.mrf.mxu0
    %v5550 = vadd.f32 %v5516, %v5549
    %5551 = vdwg.mxu0
    %v5552 = vadd.f32 %v5311, %v5528
    %v5553 = vadd.f32 %v5312, %v5530
    %v5554 = vadd.f32 %v5313, %v5533
    %v5555 = vadd.f32 %v5314, %v5535
    %v5556 = vadd.f32 %v5315, %v5538
    %v5557 = vadd.f32 %v5316, %v5540
    %v5558 = vadd.f32 %v5317, %v5543
    %v5559 = vadd.f32 %v5318, %v5545
    %v5560 = vadd.f32 %v5319, %v5548
    %v5561 = vadd.f32 %v5320, %v5550
    %s5562 = scalar_lea.vmem %s14, 1
    %v5563 = vld [vmem:[%s5562] sm:$0x1]
    %s5564 = scalar_lea.vmem %s15, 1
    %v5565 = vld [vmem:[%s5564] sm:$0x1]
    %v5566 = vsel %vm73, %v5552, 0.0
    %5567 = vadd.xlane.f32.xlu0 %v5566
    %v5568 = vpop.xlane.xlu0 %5567
    %v5569 = vsel %vm73, %v5553, 0.0
    %5570 = vadd.xlane.f32.xlu0 %v5569
    %v5571 = vpop.xlane.xlu0 %5570
    %v5572 = vsel %vm73, %v5554, 0.0
    %5573 = vadd.xlane.f32.xlu0 %v5572
    %v5574 = vpop.xlane.xlu0 %5573
    %v5575 = vsel %vm73, %v5555, 0.0
    %5576 = vadd.xlane.f32.xlu0 %v5575
    %v5577 = vpop.xlane.xlu0 %5576
    %v5578 = vsel %vm73, %v5556, 0.0
    %5579 = vadd.xlane.f32.xlu0 %v5578
    %v5580 = vpop.xlane.xlu0 %5579
    %v5581 = vsel %vm73, %v5557, 0.0
    %5582 = vadd.xlane.f32.xlu0 %v5581
    %v5583 = vpop.xlane.xlu0 %5582
    %v5584 = vsel %vm73, %v5558, 0.0
    %5585 = vadd.xlane.f32.xlu0 %v5584
    %v5586 = vpop.xlane.xlu0 %5585
    %v5587 = vsel %vm73, %v5559, 0.0
    %5588 = vadd.xlane.f32.xlu0 %v5587
    %v5589 = vpop.xlane.xlu0 %5588
    %v5590 = vsel %vm73, %v5560, 0.0
    %5591 = vadd.xlane.f32.xlu0 %v5590
    %v5592 = vpop.xlane.xlu0 %5591
    %v5593 = vsel %vm73, %v5561, 0.0
    %5594 = vadd.xlane.f32.xlu0 %v5593
    %v5595 = vpop.xlane.xlu0 %5594
    %v5596 = vmul.f32 %v5568, %v110
    %v5597 = vmul.f32 %v5571, %v110
    %v5598 = vmul.f32 %v5574, %v110
    %v5599 = vmul.f32 %v5577, %v110
    %v5600 = vmul.f32 %v5580, %v110
    %v5601 = vmul.f32 %v5583, %v110
    %v5602 = vmul.f32 %v5586, %v110
    %v5603 = vmul.f32 %v5589, %v110
    %v5604 = vmul.f32 %v5592, %v110
    %v5605 = vmul.f32 %v5595, %v110
    %v5606 = vmul.f32 %v5552, %v5552
    %v5607 = vmul.f32 %v5553, %v5553
    %v5608 = vmul.f32 %v5554, %v5554
    %v5609 = vmul.f32 %v5555, %v5555
    %v5610 = vmul.f32 %v5556, %v5556
    %v5611 = vmul.f32 %v5557, %v5557
    %v5612 = vmul.f32 %v5558, %v5558
    %v5613 = vmul.f32 %v5559, %v5559
    %v5614 = vmul.f32 %v5560, %v5560
    %v5615 = vmul.f32 %v5561, %v5561
    %v5616 = vsel %vm73, %v5606, 0.0
    %5617 = vadd.xlane.f32.xlu0 %v5616
    %v5618 = vpop.xlane.xlu0 %5617
    %v5619 = vsel %vm73, %v5607, 0.0
    %5620 = vadd.xlane.f32.xlu0 %v5619
    %v5621 = vpop.xlane.xlu0 %5620
    %v5622 = vsel %vm73, %v5608, 0.0
    %5623 = vadd.xlane.f32.xlu0 %v5622
    %v5624 = vpop.xlane.xlu0 %5623
    %v5625 = vsel %vm73, %v5609, 0.0
    %5626 = vadd.xlane.f32.xlu0 %v5625
    %v5627 = vpop.xlane.xlu0 %5626
    %v5628 = vsel %vm73, %v5610, 0.0
    %5629 = vadd.xlane.f32.xlu0 %v5628
    %v5630 = vpop.xlane.xlu0 %5629
    %v5631 = vsel %vm73, %v5611, 0.0
    %5632 = vadd.xlane.f32.xlu0 %v5631
    %v5633 = vpop.xlane.xlu0 %5632
    %v5634 = vsel %vm73, %v5612, 0.0
    %5635 = vadd.xlane.f32.xlu0 %v5634
    %v5636 = vpop.xlane.xlu0 %5635
    %v5637 = vsel %vm73, %v5613, 0.0
    %5638 = vadd.xlane.f32.xlu0 %v5637
    %v5639 = vpop.xlane.xlu0 %5638
    %v5640 = vsel %vm73, %v5614, 0.0
    %5641 = vadd.xlane.f32.xlu0 %v5640
    %v5642 = vpop.xlane.xlu0 %5641
    %v5643 = vsel %vm73, %v5615, 0.0
    %5644 = vadd.xlane.f32.xlu0 %v5643
    %v5645 = vpop.xlane.xlu0 %5644
    %v5646 = vmul.f32 %v5618, %v110
    %v5647 = vmul.f32 %v5621, %v110
    %v5648 = vmul.f32 %v5624, %v110
    %v5649 = vmul.f32 %v5627, %v110
    %v5650 = vmul.f32 %v5630, %v110
    %v5651 = vmul.f32 %v5633, %v110
    %v5652 = vmul.f32 %v5636, %v110
    %v5653 = vmul.f32 %v5639, %v110
    %v5654 = vmul.f32 %v5642, %v110
    %v5655 = vmul.f32 %v5645, %v110
    %v5656 = vmul.f32 %v5596, %v5596
    %v5657 = vmul.f32 %v5597, %v5597
    %v5658 = vmul.f32 %v5598, %v5598
    %v5659 = vmul.f32 %v5599, %v5599
    %v5660 = vmul.f32 %v5600, %v5600
    %v5661 = vmul.f32 %v5601, %v5601
    %v5662 = vmul.f32 %v5602, %v5602
    %v5663 = vmul.f32 %v5603, %v5603
    %v5664 = vmul.f32 %v5604, %v5604
    %v5665 = vmul.f32 %v5605, %v5605
    %v5666 = vsub.f32 %v5646, %v5656
    %v5667 = vsub.f32 %v5647, %v5657
    %v5668 = vsub.f32 %v5648, %v5658
    %v5669 = vsub.f32 %v5649, %v5659
    %v5670 = vsub.f32 %v5650, %v5660
    %v5671 = vsub.f32 %v5651, %v5661
    %v5672 = vsub.f32 %v5652, %v5662
    %v5673 = vsub.f32 %v5653, %v5663
    %v5674 = vsub.f32 %v5654, %v5664
    %v5675 = vsub.f32 %v5655, %v5665
    %v5676 = vsub.f32 %v5552, %v5596
    %v5677 = vsub.f32 %v5553, %v5597
    %v5678 = vsub.f32 %v5554, %v5598
    %v5679 = vsub.f32 %v5555, %v5599
    %v5680 = vsub.f32 %v5556, %v5600
    %v5681 = vsub.f32 %v5557, %v5601
    %v5682 = vsub.f32 %v5558, %v5602
    %v5683 = vsub.f32 %v5559, %v5603
    %v5684 = vsub.f32 %v5560, %v5604
    %v5685 = vsub.f32 %v5561, %v5605
    %v5686 = vadd.f32 %v5666, 1e-12
    %v5687 = vadd.f32 %v5667, 1e-12
    %v5688 = vadd.f32 %v5668, 1e-12
    %v5689 = vadd.f32 %v5669, 1e-12
    %v5690 = vadd.f32 %v5670, 1e-12
    %v5691 = vadd.f32 %v5671, 1e-12
    %v5692 = vadd.f32 %v5672, 1e-12
    %v5693 = vadd.f32 %v5673, 1e-12
    %v5694 = vadd.f32 %v5674, 1e-12
    %v5695 = vadd.f32 %v5675, 1e-12
    %v5696 = vrsqrt.pop %v5686
    %v5697 = vmul.f32 %v5696, %v5686
    %v5698 = vmul.f32 %v5697, %v5696
    %v5699 = vmul.f32 0.5, %v5698
    %v5700 = vsub.f32 1.5, %v5699
    %v5701 = vmul.f32 %v5696, %v5700
    %vm5702 = vweird.f32 %v5686
    %vm5703 = vweird.f32 %v5696
    %vm5704 = vmor %vm5702, %vm5703
    %v5705 = vsel %vm5704, %v5696, %v5701
    %v5706 = vrsqrt.pop %v5687
    %v5707 = vmul.f32 %v5706, %v5687
    %v5708 = vmul.f32 %v5707, %v5706
    %v5709 = vmul.f32 0.5, %v5708
    %v5710 = vsub.f32 1.5, %v5709
    %v5711 = vmul.f32 %v5706, %v5710
    %vm5712 = vweird.f32 %v5687
    %vm5713 = vweird.f32 %v5706
    %vm5714 = vmor %vm5712, %vm5713
    %v5715 = vsel %vm5714, %v5706, %v5711
    %v5716 = vrsqrt.pop %v5688
    %v5717 = vmul.f32 %v5716, %v5688
    %v5718 = vmul.f32 %v5717, %v5716
    %v5719 = vmul.f32 0.5, %v5718
    %v5720 = vsub.f32 1.5, %v5719
    %v5721 = vmul.f32 %v5716, %v5720
    %vm5722 = vweird.f32 %v5688
    %vm5723 = vweird.f32 %v5716
    %vm5724 = vmor %vm5722, %vm5723
    %v5725 = vsel %vm5724, %v5716, %v5721
    %v5726 = vrsqrt.pop %v5689
    %v5727 = vmul.f32 %v5726, %v5689
    %v5728 = vmul.f32 %v5727, %v5726
    %v5729 = vmul.f32 0.5, %v5728
    %v5730 = vsub.f32 1.5, %v5729
    %v5731 = vmul.f32 %v5726, %v5730
    %vm5732 = vweird.f32 %v5689
    %vm5733 = vweird.f32 %v5726
    %vm5734 = vmor %vm5732, %vm5733
    %v5735 = vsel %vm5734, %v5726, %v5731
    %v5736 = vrsqrt.pop %v5690
    %v5737 = vmul.f32 %v5736, %v5690
    %v5738 = vmul.f32 %v5737, %v5736
    %v5739 = vmul.f32 0.5, %v5738
    %v5740 = vsub.f32 1.5, %v5739
    %v5741 = vmul.f32 %v5736, %v5740
    %vm5742 = vweird.f32 %v5690
    %vm5743 = vweird.f32 %v5736
    %vm5744 = vmor %vm5742, %vm5743
    %v5745 = vsel %vm5744, %v5736, %v5741
    %v5746 = vrsqrt.pop %v5691
    %v5747 = vmul.f32 %v5746, %v5691
    %v5748 = vmul.f32 %v5747, %v5746
    %v5749 = vmul.f32 0.5, %v5748
    %v5750 = vsub.f32 1.5, %v5749
    %v5751 = vmul.f32 %v5746, %v5750
    %vm5752 = vweird.f32 %v5691
    %vm5753 = vweird.f32 %v5746
    %vm5754 = vmor %vm5752, %vm5753
    %v5755 = vsel %vm5754, %v5746, %v5751
    %v5756 = vrsqrt.pop %v5692
    %v5757 = vmul.f32 %v5756, %v5692
    %v5758 = vmul.f32 %v5757, %v5756
    %v5759 = vmul.f32 0.5, %v5758
    %v5760 = vsub.f32 1.5, %v5759
    %v5761 = vmul.f32 %v5756, %v5760
    %vm5762 = vweird.f32 %v5692
    %vm5763 = vweird.f32 %v5756
    %vm5764 = vmor %vm5762, %vm5763
    %v5765 = vsel %vm5764, %v5756, %v5761
    %v5766 = vrsqrt.pop %v5693
    %v5767 = vmul.f32 %v5766, %v5693
    %v5768 = vmul.f32 %v5767, %v5766
    %v5769 = vmul.f32 0.5, %v5768
    %v5770 = vsub.f32 1.5, %v5769
    %v5771 = vmul.f32 %v5766, %v5770
    %vm5772 = vweird.f32 %v5693
    %vm5773 = vweird.f32 %v5766
    %vm5774 = vmor %vm5772, %vm5773
    %v5775 = vsel %vm5774, %v5766, %v5771
    %v5776 = vrsqrt.pop %v5694
    %v5777 = vmul.f32 %v5776, %v5694
    %v5778 = vmul.f32 %v5777, %v5776
    %v5779 = vmul.f32 0.5, %v5778
    %v5780 = vsub.f32 1.5, %v5779
    %v5781 = vmul.f32 %v5776, %v5780
    %vm5782 = vweird.f32 %v5694
    %vm5783 = vweird.f32 %v5776
    %vm5784 = vmor %vm5782, %vm5783
    %v5785 = vsel %vm5784, %v5776, %v5781
    %v5786 = vrsqrt.pop %v5695
    %v5787 = vmul.f32 %v5786, %v5695
    %v5788 = vmul.f32 %v5787, %v5786
    %v5789 = vmul.f32 0.5, %v5788
    %v5790 = vsub.f32 1.5, %v5789
    %v5791 = vmul.f32 %v5786, %v5790
    %vm5792 = vweird.f32 %v5695
    %vm5793 = vweird.f32 %v5786
    %vm5794 = vmor %vm5792, %vm5793
    %v5795 = vsel %vm5794, %v5786, %v5791
    %v5796 = vmul.f32 %v5676, %v5705
    %v5797 = vmul.f32 %v5677, %v5715
    %v5798 = vmul.f32 %v5678, %v5725
    %v5799 = vmul.f32 %v5679, %v5735
    %v5800 = vmul.f32 %v5680, %v5745
    %v5801 = vmul.f32 %v5681, %v5755
    %v5802 = vmul.f32 %v5682, %v5765
    %v5803 = vmul.f32 %v5683, %v5775
    %v5804 = vmul.f32 %v5684, %v5785
    %v5805 = vmul.f32 %v5685, %v5795
    %v5807 = vperm.slane %v5563, 0
    %v5809 = vmul.f32 %v5796, %v5807
    %v5810 = vmul.f32 %v5797, %v5807
    %v5811 = vmul.f32 %v5798, %v5807
    %v5812 = vmul.f32 %v5799, %v5807
    %v5813 = vmul.f32 %v5800, %v5807
    %v5814 = vmul.f32 %v5801, %v5807
    %v5815 = vmul.f32 %v5802, %v5807
    %v5816 = vmul.f32 %v5803, %v5807
    %v5817 = vmul.f32 %v5804, %v5807
    %v5818 = vmul.f32 %v5805, %v5807
    %v5820 = vperm.slane %v5565, 0
    %v5822 = vadd.f32 %v5809, %v5820
    %v5823 = vadd.f32 %v5810, %v5820
    %v5824 = vadd.f32 %v5811, %v5820
    %v5825 = vadd.f32 %v5812, %v5820
    %v5826 = vadd.f32 %v5813, %v5820
    %v5827 = vadd.f32 %v5814, %v5820
    %v5828 = vadd.f32 %v5815, %v5820
    %v5829 = vadd.f32 %v5816, %v5820
    %v5830 = vadd.f32 %v5817, %v5820
    %v5831 = vadd.f32 %v5818, %v5820
    %v5832 = vpack.c.bf16 %v5823, %v5822
    %v5833 = vpack.c.bf16 %v5825, %v5824
    %v5834 = vpack.c.bf16 %v5827, %v5826
    %v5835 = vpack.c.bf16 %v5829, %v5828
    %v5836 = vpack.c.bf16 %v5831, %v5830
    %v5837 = vld [vmem:[%s16] sm:$0xff]
    %v5838 = vld [vmem:[%s16 + $0x8] sm:$0xff]
    %v5839 = vld [vmem:[%s16 + $0x10] sm:$0xff]
    %v5840 = vld [vmem:[%s16 + $0x18] sm:$0xff]
    %v5841 = vld [vmem:[%s16 + $0x20] sm:$0xff]
    %v5842 = vld [vmem:[%s16 + $0x28] sm:$0xff]
    %v5843 = vld [vmem:[%s16 + $0x30] sm:$0xff]
    %v5844 = vld [vmem:[%s16 + $0x38] sm:$0xff]
    %v5845 = vpack.c.bf16 %v5838, %v5837
    %v5846 = vpack.c.bf16 %v5840, %v5839
    %v5847 = vpack.c.bf16 %v5842, %v5841
    %v5848 = vpack.c.bf16 %v5844, %v5843
    %v5849 = vld [vmem:[%s17] sm:$0x1]
    %v5851 = vperm.slane %v5849, 0
    %v5854 = vsel %vm73, %v5832, 0
    %v5857 = vsel %vm73, %v5833, 0
    %v5860 = vsel %vm73, %v5834, 0
    %v5863 = vsel %vm73, %v5835, 0
    %v5866 = vsel %vm73, %v5836, 0
    %5868 = vmatpush.bf16.msra.mxu0 0
    %5869 = vmatpush.bf16.msra.mxu0 0
    %5870 = vmatpush.bf16.msra.mxu0 0
    %5871 = vmatpush.bf16.msra.mxu0 0
    %5872 = vmatpush.bf16.msra.mxu0 %v5848
    %5873 = vmatpush.bf16.msra.mxu0 %v5847
    %5874 = vmatpush.bf16.msra.mxu0 %v5846
    %5875 = vmatpush.bf16.msra.mxu0 %v5845
    %5876 = vmatmul.bf16.gmra.mxu0 %v5854
    %v5877 = vpop.f32.mrf.mxu0
    %v5878 = vadd.f32 %v5851, %v5877
    %v5879 = vpop.f32.mrf.mxu0
    %v5880 = vadd.f32 %v5851, %v5879
    %5881 = vmatmul.bf16.gmra.mxu0 %v5857
    %v5882 = vpop.f32.mrf.mxu0
    %v5883 = vadd.f32 %v5851, %v5882
    %v5884 = vpop.f32.mrf.mxu0
    %v5885 = vadd.f32 %v5851, %v5884
    %5886 = vmatmul.bf16.gmra.mxu0 %v5860
    %v5887 = vpop.f32.mrf.mxu0
    %v5888 = vadd.f32 %v5851, %v5887
    %v5889 = vpop.f32.mrf.mxu0
    %v5890 = vadd.f32 %v5851, %v5889
    %5891 = vmatmul.bf16.gmra.mxu0 %v5863
    %v5892 = vpop.f32.mrf.mxu0
    %v5893 = vadd.f32 %v5851, %v5892
    %v5894 = vpop.f32.mrf.mxu0
    %v5895 = vadd.f32 %v5851, %v5894
    %5896 = vmatmul.bf16.gmra.mxu0 %v5866
    %v5897 = vpop.f32.mrf.mxu0
    %v5898 = vadd.f32 %v5851, %v5897
    %v5899 = vpop.f32.mrf.mxu0
    %v5900 = vadd.f32 %v5851, %v5899
    %5901 = vdwg.mxu0
    %5902 = vmax.xlane.f32.xlu0 %v5878
    %v5903 = vpop.xlane.xlu0 %5902
    %5904 = vmax.xlane.f32.xlu0 %v5880
    %v5905 = vpop.xlane.xlu0 %5904
    %5906 = vmax.xlane.f32.xlu0 %v5883
    %v5907 = vpop.xlane.xlu0 %5906
    %5908 = vmax.xlane.f32.xlu0 %v5885
    %v5909 = vpop.xlane.xlu0 %5908
    %5910 = vmax.xlane.f32.xlu0 %v5888
    %v5911 = vpop.xlane.xlu0 %5910
    %5912 = vmax.xlane.f32.xlu0 %v5890
    %v5913 = vpop.xlane.xlu0 %5912
    %5914 = vmax.xlane.f32.xlu0 %v5893
    %v5915 = vpop.xlane.xlu0 %5914
    %5916 = vmax.xlane.f32.xlu0 %v5895
    %v5917 = vpop.xlane.xlu0 %5916
    %5918 = vmax.xlane.f32.xlu0 %v5898
    %v5919 = vpop.xlane.xlu0 %5918
    %5920 = vmax.xlane.f32.xlu0 %v5900
    %v5921 = vpop.xlane.xlu0 %5920
    %v5922 = vsub.f32 %v5878, %v5903
    %v5923 = vsub.f32 %v5880, %v5905
    %v5924 = vsub.f32 %v5883, %v5907
    %v5925 = vsub.f32 %v5885, %v5909
    %v5926 = vsub.f32 %v5888, %v5911
    %v5927 = vsub.f32 %v5890, %v5913
    %v5928 = vsub.f32 %v5893, %v5915
    %v5929 = vsub.f32 %v5895, %v5917
    %v5930 = vsub.f32 %v5898, %v5919
    %v5931 = vsub.f32 %v5900, %v5921
    %v5932 = vmul.f32 %v5922, 1.442695
    %v5933 = vpow.pop %v5932
    %v5934 = vmul.f32 %v5923, 1.442695
    %v5935 = vpow.pop %v5934
    %v5936 = vmul.f32 %v5924, 1.442695
    %v5937 = vpow.pop %v5936
    %v5938 = vmul.f32 %v5925, 1.442695
    %v5939 = vpow.pop %v5938
    %v5940 = vmul.f32 %v5926, 1.442695
    %v5941 = vpow.pop %v5940
    %v5942 = vmul.f32 %v5927, 1.442695
    %v5943 = vpow.pop %v5942
    %v5944 = vmul.f32 %v5928, 1.442695
    %v5945 = vpow.pop %v5944
    %v5946 = vmul.f32 %v5929, 1.442695
    %v5947 = vpow.pop %v5946
    %v5948 = vmul.f32 %v5930, 1.442695
    %v5949 = vpow.pop %v5948
    %v5950 = vmul.f32 %v5931, 1.442695
    %v5951 = vpow.pop %v5950
    %5952 = vadd.xlane.f32.xlu0 %v5933
    %v5953 = vpop.xlane.xlu0 %5952
    %5954 = vadd.xlane.f32.xlu0 %v5935
    %v5955 = vpop.xlane.xlu0 %5954
    %5956 = vadd.xlane.f32.xlu0 %v5937
    %v5957 = vpop.xlane.xlu0 %5956
    %5958 = vadd.xlane.f32.xlu0 %v5939
    %v5959 = vpop.xlane.xlu0 %5958
    %5960 = vadd.xlane.f32.xlu0 %v5941
    %v5961 = vpop.xlane.xlu0 %5960
    %5962 = vadd.xlane.f32.xlu0 %v5943
    %v5963 = vpop.xlane.xlu0 %5962
    %5964 = vadd.xlane.f32.xlu0 %v5945
    %v5965 = vpop.xlane.xlu0 %5964
    %5966 = vadd.xlane.f32.xlu0 %v5947
    %v5967 = vpop.xlane.xlu0 %5966
    %5968 = vadd.xlane.f32.xlu0 %v5949
    %v5969 = vpop.xlane.xlu0 %5968
    %5970 = vadd.xlane.f32.xlu0 %v5951
    %v5971 = vpop.xlane.xlu0 %5970
    %v5972 = vrcp.pop %v5953
    %v5973 = vmul.f32 %v5953, %v5972
    %v5974 = vsub.f32 1.0, %v5973
    %v5975 = vmul.f32 %v5972, %v5974
    %v5976 = vadd.f32 %v5972, %v5975
    %vm5977 = vweird.f32 %v5953
    %vm5978 = vweird.f32 %v5972
    %vm5979 = vmor %vm5977, %vm5978
    %v5980 = vsel %vm5979, %v5972, %v5976
    %v5981 = vand.u32 2147483647, %v5953
    %vm5982 = vcmp.eq.f32.partialorder %v5981, 8.507059e+37
    %v5983 = vand.u32 %v5953, 2147483648
    %v5984 = vor.u32 1.1754944e-38, %v5983
    %v5985 = vsel %vm5982, %v5984, %v5980
    %v5986 = vmul.f32 %v5933, %v5985
    %v5987 = vrcp.pop %v5955
    %v5988 = vmul.f32 %v5955, %v5987
    %v5989 = vsub.f32 1.0, %v5988
    %v5990 = vmul.f32 %v5987, %v5989
    %v5991 = vadd.f32 %v5987, %v5990
    %vm5992 = vweird.f32 %v5955
    %vm5993 = vweird.f32 %v5987
    %vm5994 = vmor %vm5992, %vm5993
    %v5995 = vsel %vm5994, %v5987, %v5991
    %v5996 = vand.u32 2147483647, %v5955
    %vm5997 = vcmp.eq.f32.partialorder %v5996, 8.507059e+37
    %v5998 = vand.u32 %v5955, 2147483648
    %v5999 = vor.u32 1.1754944e-38, %v5998
    %v6000 = vsel %vm5997, %v5999, %v5995
    %v6001 = vmul.f32 %v5935, %v6000
    %v6002 = vrcp.pop %v5957
    %v6003 = vmul.f32 %v5957, %v6002
    %v6004 = vsub.f32 1.0, %v6003
    %v6005 = vmul.f32 %v6002, %v6004
    %v6006 = vadd.f32 %v6002, %v6005
    %vm6007 = vweird.f32 %v5957
    %vm6008 = vweird.f32 %v6002
    %vm6009 = vmor %vm6007, %vm6008
    %v6010 = vsel %vm6009, %v6002, %v6006
    %v6011 = vand.u32 2147483647, %v5957
    %vm6012 = vcmp.eq.f32.partialorder %v6011, 8.507059e+37
    %v6013 = vand.u32 %v5957, 2147483648
    %v6014 = vor.u32 1.1754944e-38, %v6013
    %v6015 = vsel %vm6012, %v6014, %v6010
    %v6016 = vmul.f32 %v5937, %v6015
    %v6017 = vrcp.pop %v5959
    %v6018 = vmul.f32 %v5959, %v6017
    %v6019 = vsub.f32 1.0, %v6018
    %v6020 = vmul.f32 %v6017, %v6019
    %v6021 = vadd.f32 %v6017, %v6020
    %vm6022 = vweird.f32 %v5959
    %vm6023 = vweird.f32 %v6017
    %vm6024 = vmor %vm6022, %vm6023
    %v6025 = vsel %vm6024, %v6017, %v6021
    %v6026 = vand.u32 2147483647, %v5959
    %vm6027 = vcmp.eq.f32.partialorder %v6026, 8.507059e+37
    %v6028 = vand.u32 %v5959, 2147483648
    %v6029 = vor.u32 1.1754944e-38, %v6028
    %v6030 = vsel %vm6027, %v6029, %v6025
    %v6031 = vmul.f32 %v5939, %v6030
    %v6032 = vrcp.pop %v5961
    %v6033 = vmul.f32 %v5961, %v6032
    %v6034 = vsub.f32 1.0, %v6033
    %v6035 = vmul.f32 %v6032, %v6034
    %v6036 = vadd.f32 %v6032, %v6035
    %vm6037 = vweird.f32 %v5961
    %vm6038 = vweird.f32 %v6032
    %vm6039 = vmor %vm6037, %vm6038
    %v6040 = vsel %vm6039, %v6032, %v6036
    %v6041 = vand.u32 2147483647, %v5961
    %vm6042 = vcmp.eq.f32.partialorder %v6041, 8.507059e+37
    %v6043 = vand.u32 %v5961, 2147483648
    %v6044 = vor.u32 1.1754944e-38, %v6043
    %v6045 = vsel %vm6042, %v6044, %v6040
    %v6046 = vmul.f32 %v5941, %v6045
    %v6047 = vrcp.pop %v5963
    %v6048 = vmul.f32 %v5963, %v6047
    %v6049 = vsub.f32 1.0, %v6048
    %v6050 = vmul.f32 %v6047, %v6049
    %v6051 = vadd.f32 %v6047, %v6050
    %vm6052 = vweird.f32 %v5963
    %vm6053 = vweird.f32 %v6047
    %vm6054 = vmor %vm6052, %vm6053
    %v6055 = vsel %vm6054, %v6047, %v6051
    %v6056 = vand.u32 2147483647, %v5963
    %vm6057 = vcmp.eq.f32.partialorder %v6056, 8.507059e+37
    %v6058 = vand.u32 %v5963, 2147483648
    %v6059 = vor.u32 1.1754944e-38, %v6058
    %v6060 = vsel %vm6057, %v6059, %v6055
    %v6061 = vmul.f32 %v5943, %v6060
    %v6062 = vrcp.pop %v5965
    %v6063 = vmul.f32 %v5965, %v6062
    %v6064 = vsub.f32 1.0, %v6063
    %v6065 = vmul.f32 %v6062, %v6064
    %v6066 = vadd.f32 %v6062, %v6065
    %vm6067 = vweird.f32 %v5965
    %vm6068 = vweird.f32 %v6062
    %vm6069 = vmor %vm6067, %vm6068
    %v6070 = vsel %vm6069, %v6062, %v6066
    %v6071 = vand.u32 2147483647, %v5965
    %vm6072 = vcmp.eq.f32.partialorder %v6071, 8.507059e+37
    %v6073 = vand.u32 %v5965, 2147483648
    %v6074 = vor.u32 1.1754944e-38, %v6073
    %v6075 = vsel %vm6072, %v6074, %v6070
    %v6076 = vmul.f32 %v5945, %v6075
    %v6077 = vrcp.pop %v5967
    %v6078 = vmul.f32 %v5967, %v6077
    %v6079 = vsub.f32 1.0, %v6078
    %v6080 = vmul.f32 %v6077, %v6079
    %v6081 = vadd.f32 %v6077, %v6080
    %vm6082 = vweird.f32 %v5967
    %vm6083 = vweird.f32 %v6077
    %vm6084 = vmor %vm6082, %vm6083
    %v6085 = vsel %vm6084, %v6077, %v6081
    %v6086 = vand.u32 2147483647, %v5967
    %vm6087 = vcmp.eq.f32.partialorder %v6086, 8.507059e+37
    %v6088 = vand.u32 %v5967, 2147483648
    %v6089 = vor.u32 1.1754944e-38, %v6088
    %v6090 = vsel %vm6087, %v6089, %v6085
    %v6091 = vmul.f32 %v5947, %v6090
    %v6092 = vrcp.pop %v5969
    %v6093 = vmul.f32 %v5969, %v6092
    %v6094 = vsub.f32 1.0, %v6093
    %v6095 = vmul.f32 %v6092, %v6094
    %v6096 = vadd.f32 %v6092, %v6095
    %vm6097 = vweird.f32 %v5969
    %vm6098 = vweird.f32 %v6092
    %vm6099 = vmor %vm6097, %vm6098
    %v6100 = vsel %vm6099, %v6092, %v6096
    %v6101 = vand.u32 2147483647, %v5969
    %vm6102 = vcmp.eq.f32.partialorder %v6101, 8.507059e+37
    %v6103 = vand.u32 %v5969, 2147483648
    %v6104 = vor.u32 1.1754944e-38, %v6103
    %v6105 = vsel %vm6102, %v6104, %v6100
    %v6106 = vmul.f32 %v5949, %v6105
    %v6107 = vrcp.pop %v5971
    %v6108 = vmul.f32 %v5971, %v6107
    %v6109 = vsub.f32 1.0, %v6108
    %v6110 = vmul.f32 %v6107, %v6109
    %v6111 = vadd.f32 %v6107, %v6110
    %vm6112 = vweird.f32 %v5971
    %vm6113 = vweird.f32 %v6107
    %vm6114 = vmor %vm6112, %vm6113
    %v6115 = vsel %vm6114, %v6107, %v6111
    %v6116 = vand.u32 2147483647, %v5971
    %vm6117 = vcmp.eq.f32.partialorder %v6116, 8.507059e+37
    %v6118 = vand.u32 %v5971, 2147483648
    %v6119 = vor.u32 1.1754944e-38, %v6118
    %v6120 = vsel %vm6117, %v6119, %v6115
    %v6121 = vmul.f32 %v5951, %v6120
    %6122 = vst [vmem:[#allocation2] sm:$0xff] %v5986
    %6123 = vst [vmem:[#allocation2 + $0x8] sm:$0xff] %v6001
    %6124 = vst [vmem:[#allocation2 + $0x10] sm:$0xff] %v6016
    %6125 = vst [vmem:[#allocation2 + $0x18] sm:$0xff] %v6031
    %6126 = vst [vmem:[#allocation2 + $0x20] sm:$0xff] %v6046
    %6127 = vst [vmem:[#allocation2 + $0x28] sm:$0xff] %v6061
    %6128 = vst [vmem:[#allocation2 + $0x30] sm:$0xff] %v6076
    %6129 = vst [vmem:[#allocation2 + $0x38] sm:$0xff] %v6091
    %6130 = vst [vmem:[#allocation2 + $0x40] sm:$0xff] %v6106
    %6131 = vst [vmem:[#allocation2 + $0x48] sm:$0xff] %v6121
    // Predicated region
    $region74: #{language_model_forward.1} parent=1 // pred_check
      _
    $region75: #{language_model_forward.1} parent=1 // pred_check_branch
      %6133 = sbr.rel (0) target = $region77
    $region76: #{language_model_forward.1} parent=1 // pred_region
      %6135 = vsyncadd [#allocation3], 0
      %s6136 = sshll.u32 [#allocation2], 4
      %s6137 = int_to_ptr.vmem [resolvable:$true] %s6136
      %s6138 = sshll.u32 %s18, 4
      %s6139 = int_to_ptr.hbm [resolvable:$true] %s6138
      %6144 = dma.vmem_to_hbm [thread:$0]  %s6137, 1280, %s6139, [#allocation3], 128, 128, 8
    $region77: #{language_model_forward.1} parent=1 // pred_fallthru
      _
    // Predicated region
    $region78: #{language_model_forward.1} parent=1 // pred_check
      _
    $region79: #{language_model_forward.1} parent=1 // pred_check_branch
      %6146 = sbr.rel (0) target = $region81
    $region80: #{language_model_forward.1} parent=1 // pred_region
      %6148 = dma.done [#allocation3], 1280
    $region81: #{language_model_forward.1} parent=1 // pred_fallthru
      _
    %6149 = vsyncpa [#allocation3], 1

</llo_original>
